<compile_context>
chip_gen: v7x
topology: tpu7x:2x2x1
jax: 0.10.0
libtpu: 0.0.40
codegen_flags: <defaults>
</compile_context>

<pallas_src>
import math

import jax
import jax.numpy as jnp
from jax.experimental import pallas as pl
from jax.experimental.pallas import tpu as pltpu


def _layer_norm(x, gamma, beta, eps=1e-5):
    mean = jnp.mean(x, axis=-1, keepdims=True)
    var = jnp.mean((x - mean) ** 2, axis=-1, keepdims=True)
    return (x - mean) * jax.lax.rsqrt(var + eps) * gamma + beta


def make_sakt_kernel(n_heads, block_b, seq_len, hidden, compute_dtype,
                     causal, approx_recip):
    d = hidden // n_heads
    scale = 1.0 / math.sqrt(d)
    M = block_b * seq_len
    S = seq_len
    H = hidden
    f32 = jnp.float32
    cdt = compute_dtype

    def kernel(q_ref, x_ref, wq_ref, wiq_ref, wk_ref, wv_ref, wo_ref,
               wf0_ref, wf1_ref, rows_ref, out_ref):
        # (block_b, S, H) -> (M, H): leading-dim merge only (minor dim unchanged).
        q_emb = q_ref[...].reshape(M, H)
        x_in = x_ref[...].reshape(M, H)
        rows = rows_ref[...]                          # (16, H) packed params, f32

        # SAKT query projection (linear[2]) — f32 result feeds the residual.
        q_res = jnp.dot(q_emb, wq_ref[...], preferred_element_type=f32) + rows[0:1]
        q_c = q_res.astype(cdt)

        # Full-width MHA in-projections (single (M,H)x(H,H) dots).
        qp = (jnp.dot(q_c, wiq_ref[...], preferred_element_type=f32)
              + rows[1:2]) * scale
        kp = jnp.dot(x_in, wk_ref[...], preferred_element_type=f32) + rows[2:3]
        vp = jnp.dot(x_in, wv_ref[...], preferred_element_type=f32) + rows[3:4]
        qp = qp.astype(cdt)
        kp = kp.astype(cdt)
        vp = vp.astype(cdt)

        # Additive causal mask built on the VPU (no (S,S) f32 VMEM operand).
        if causal:
            r_idx = jax.lax.broadcasted_iota(jnp.int32, (S, S), 0)
            c_idx = jax.lax.broadcasted_iota(jnp.int32, (S, S), 1)
            mask = jnp.where(c_idx > r_idx, jnp.float32(-1e30), jnp.float32(0.0))

        # Per-(b, head) attention: score / softmax / PV stay per head (K=d is
        # inherent to MHA); lane-slice the full projections, blessed batched
        # einsum over block_b, then lane-concat the head outputs.
        heads_out = []
        for h in range(n_heads):
            sl = slice(h * d, (h + 1) * d)
            qh = qp[:, sl].reshape(block_b, S, d)
            kh = kp[:, sl].reshape(block_b, S, d)
            vh = vp[:, sl].reshape(block_b, S, d)

            s = jnp.einsum('bqd,bkd->bqk', qh, kh,
                           preferred_element_type=f32)          # (Bb, S, S) f32
            if causal:
                s = s + mask
            s = s - jnp.max(s, axis=-1, keepdims=True)
            p = jnp.exp(s)
            p = p * pl.reciprocal(jnp.sum(p, axis=-1, keepdims=True),
                                  approx=approx_recip)
            heads_out.append(jnp.einsum('bqk,bkd->bqd', p.astype(cdt), vh,
                                        preferred_element_type=f32))
        o = jnp.concatenate(heads_out, axis=-1).reshape(M, H)   # (M, H) f32

        # Single full-width out-projection against the unsplit weight.
        attn = jnp.dot(o.astype(cdt), wo_ref[...],
                       preferred_element_type=f32) + rows[4:5]

        # Residual + LayerNorm 1  (dropout = identity at inference).
        y = _layer_norm(q_res + attn, rows[7:8], rows[8:9])

        # FFN.
        f = jnp.dot(y.astype(cdt), wf0_ref[...], preferred_element_type=f32) + rows[5:6]
        f = jnp.maximum(f, 0.0)
        f = jnp.dot(f.astype(cdt), wf1_ref[...], preferred_element_type=f32) + rows[6:7]

        # Residual + LayerNorm 2.
        z = _layer_norm(f + y, rows[9:10], rows[10:11])

        # Output head: lane-dense VPU reduction + sigmoid, stored as (1, M).
        z3 = z.reshape(block_b, S, H)
        logit = jnp.sum(z3 * rows[11:12], axis=-1)              # (block_b, S)
        logit = logit.reshape(1, M) + rows[12:13, 0:1]          # + bout (folded)
        out_ref[0] = jax.nn.sigmoid(logit)

    return kernel


def sakt_forward(question, interaction, params, *, n_heads,
                 attn_direction="uni", block_b=None,
                 compute_dtype=jnp.bfloat16):
    B, S = question.shape
    H = params["embd_ex"].shape[1]
    assert H % n_heads == 0
    f32 = jnp.float32
    cdt = compute_dtype
    causal = (attn_direction == "uni")
    approx_recip = (cdt != jnp.float32)   # exact reciprocal on the f32 check path

    # ---- plain-JAX glue: embedding gathers + positional add ----
    # TODO(synk): interaction_type == 2 branch (concat(query, inter) -> in_proj)
    # is not implemented; this covers the other interaction types.
    q_emb = params["embd_ex"][question].astype(f32)               # (B, S, H)
    pos = params["embd_pos"][jnp.arange(S)].astype(f32)           # (S, H)
    x_in = params["embd_in"][interaction].astype(f32) + pos[None]

    # ---- offline weight fusion (f32) ----
    wk_f = params["wk"] @ params["wik"]
    bk_f = params["bk"] @ params["wik"] + params["bik"]
    wv_f = params["wv"] @ params["wiv"]
    bv_f = params["bv"] @ params["wiv"] + params["biv"]

    # All small (1,H) params (+ bout + wout) packed into one (16,H) array.
    rows = jnp.concatenate([
        params["bq"], params["biq"], bk_f, bv_f,
        params["bo"], params["bf0"], params["bf1"],
        params["ln1_g"], params["ln1_b"], params["ln2_g"], params["ln2_b"],
        params["wout"].reshape(1, H),
        jnp.broadcast_to(params["bout"], (1, H)),
        jnp.zeros((3, H), f32),
    ], axis=0).astype(f32)                                        # (16, H)

    # ---- batch blocking: block_b sequences per grid step ----
    if block_b is None:
        # Target >= ~256 MXU rows per step (amortise ~0.35us/step, fill the
        # 256-wide MXU on v6e/v7x); prefer block_b*S % 128 == 0 so output
        # stores are unmasked lane-dense vst; keep >= 2 grid steps for
        # megacore; cap by a VMEM estimate sized for v7x's 64 MiB.
        lane_b = 128 // math.gcd(128, S)          # smallest b with b*S % 128 == 0
        block_b = lane_b * max(1, -(-256 // (lane_b * S)))
        # ~12 live f32 (M,H) slabs + per-head (S,S) score/prob blocks per seq.
        per_seq_bytes = S * H * 4 * 12 + S * S * 4 * 3
        vmem_budget = 40 * 1024 * 1024
        block_b = min(block_b, max(1, vmem_budget // max(1, per_seq_bytes)))
        block_b = max(1, min(block_b, -(-B // 2)))
    nb = pl.cdiv(B, block_b)
    # Prefer an even grid length so both v7x TensorCores get equal work
    # (best effort; only applied when it actually fixes parity).
    if nb > 1 and nb % 2 == 1:
        cand = pl.cdiv(B, nb + 1)
        if pl.cdiv(B, cand) % 2 == 0:
            block_b = cand
            nb = pl.cdiv(B, cand)
    b_pad = nb * block_b
    if b_pad != B:
        pad = ((0, b_pad - B), (0, 0), (0, 0))
        q_emb = jnp.pad(q_emb, pad)
        x_in = jnp.pad(x_in, pad)

    weight_args = [
        params["wq"].astype(cdt), params["wiq"].astype(cdt),
        wk_f.astype(cdt), wv_f.astype(cdt),
        params["wo"].astype(cdt),
        params["wf0"].astype(cdt), params["wf1"].astype(cdt),
        rows,
    ]
    call_args = (q_emb.astype(cdt), x_in.astype(cdt), *weight_args)

    kernel = make_sakt_kernel(n_heads, block_b, S, H, cdt, causal, approx_recip)

    def _build(single_buffer_consts):
        def const_spec(a):
            r = a.ndim
            kw = {}
            if single_buffer_consts:
                # Constants never change across the grid: single-buffer them
                # to halve their VMEM footprint.
                kw["pipeline_mode"] = pl.Buffered(1)
            return pl.BlockSpec(a.shape, lambda i, _r=r: (0,) * _r, **kw)

        act_spec = pl.BlockSpec((block_b, S, H), lambda i: (i, 0, 0))
        in_specs = [act_spec, act_spec] + [const_spec(a) for a in weight_args]
        return pl.pallas_call(
            kernel,
            out_shape=jax.ShapeDtypeStruct((nb, 1, block_b * S), jnp.float32),
            grid_spec=pltpu.PrefetchScalarGridSpec(
                num_scalar_prefetch=0,
                grid=(nb,),
                in_specs=in_specs,
                out_specs=pl.BlockSpec((1, 1, block_b * S), lambda i: (i, 0, 0)),
            ),
            compiler_params=pltpu.CompilerParams(
                dimension_semantics=("parallel",),
                vmem_limit_bytes=48 * 1024 * 1024),
        )

    try:
        out = jax.block_until_ready(_build(True)(*call_args))
    except Exception:
        # Fallback for JAX builds that reject single-buffered (Buffered(1))
        # constant inputs; semantics identical, constants just double-buffered.
        out = _build(False)(*call_args)

    return out.reshape(b_pad, S)[:B]                              # (B, S)


def sakt_reference(question, interaction, params, *, n_heads, attn_direction="uni"):
    """Pure-JAX f32 reference mirroring the torch module (inference mode)."""
    B, S = question.shape
    H = params["embd_ex"].shape[1]
    d = H // n_heads
    hp = jax.lax.Precision.HIGHEST

    def lin(a, w, b):
        return jnp.einsum('bsi,io->bso', a, w, precision=hp) + b

    q_emb = params["embd_ex"][question]
    pos = params["embd_pos"][jnp.arange(S)]
    x = params["embd_in"][interaction] + pos[None]

    v = lin(x, params["wv"], params["bv"])
    k = lin(x, params["wk"], params["bk"])
    q = lin(q_emb, params["wq"], params["bq"])

    qp = lin(q, params["wiq"], params["biq"]) / math.sqrt(d)
    kp = lin(k, params["wik"], params["bik"])
    vp = lin(v, params["wiv"], params["biv"])

    qh = qp.reshape(B, S, n_heads, d)
    kh = kp.reshape(B, S, n_heads, d)
    vh = vp.reshape(B, S, n_heads, d)
    s = jnp.einsum('bqnd,bknd->bnqk', qh, kh, precision=hp)
    if attn_direction == "uni":
        causal = jnp.arange(S)[None, :] > jnp.arange(S)[:, None]
        s = jnp.where(causal[None, None], -jnp.inf, s)
    p = jax.nn.softmax(s, axis=-1)
    o = jnp.einsum('bnqk,bknd->bqnd', p, vh, precision=hp).reshape(B, S, H)
    attn = lin(o, params["wo"], params["bo"])

    y = _layer_norm(q + attn, params["ln1_g"], params["ln1_b"])
    f = jax.nn.relu(lin(y, params["wf0"], params["bf0"]))
    f = lin(f, params["wf1"], params["bf1"])
    z = _layer_norm(f + y, params["ln2_g"], params["ln2_b"])
    logit = jnp.einsum('bsi,io->bso', z, params["wout"], precision=hp) + params["bout"]
    return jax.nn.sigmoid(logit[..., 0])


def init_params(key, *, hidden_dim, n_questions, max_seq_len, interaction_size):
    keys = jax.random.split(key, 32)
    key_iter = iter(keys)

    def nrm(shape, scale=0.1):
        return scale * jax.random.normal(next(key_iter), shape, dtype=jnp.float32)

    H = hidden_dim
    params = {}
    params["embd_in"] = nrm((interaction_size + 1, H)).at[0].set(0.0)  # padding_idx=0
    params["embd_ex"] = nrm((n_questions + 1, H)).at[0].set(0.0)       # padding_idx=0
    params["embd_pos"] = nrm((max_seq_len, H))
    # All linear weights stored pre-transposed to (in, out).
    for name in ("wv", "wk", "wq", "wiq", "wik", "wiv", "wo", "wf0", "wf1"):
        params[name] = nrm((H, H))
    for name in ("bv", "bk", "bq", "biq", "bik", "biv", "bo", "bf0", "bf1"):
        params[name] = nrm((1, H))
    params["ln1_g"] = jnp.ones((1, H), jnp.float32)
    params["ln1_b"] = jnp.zeros((1, H), jnp.float32)
    params["ln2_g"] = jnp.ones((1, H), jnp.float32)
    params["ln2_b"] = jnp.zeros((1, H), jnp.float32)
    params["wout"] = nrm((H, 1))
    params["bout"] = nrm((1, 1))
    return params


if __name__ == "__main__":
    B, S, H = 5, 16, 32
    N_HEADS = 2
    N_QUESTIONS = 10
    INTERACTION_SIZE = 2   # interaction_type == 0

    key = jax.random.PRNGKey(0)
    kp, kq, ki = jax.random.split(key, 3)
    params = init_params(kp, hidden_dim=H, n_questions=N_QUESTIONS,
                         max_seq_len=S, interaction_size=INTERACTION_SIZE)

    question = jax.random.randint(kq, (B, S), 1, N_QUESTIONS + 1)
    interaction = jax.random.randint(ki, (B, S), 1, INTERACTION_SIZE + 1)

    ref = sakt_reference(question, interaction, params, n_heads=N_HEADS)

    # f32 matmul operands + exact reciprocal: tight semantic check.
    out_f32 = sakt_forward(question, interaction, params, n_heads=N_HEADS,
                           attn_direction="uni", compute_dtype=jnp.float32)
    jax.block_until_ready(out_f32)
    assert out_f32.shape == (B, S)
    assert bool(jnp.all(jnp.isfinite(out_f32)))
    assert float(jnp.max(jnp.abs(out_f32 - ref))) < 1e-2

    # Default fast path: bf16 MXU operands, f32 accumulation / softmax / LN.
    out = sakt_forward(question, interaction, params, n_heads=N_HEADS,
                       attn_direction="uni")
    jax.block_until_ready(out)
    assert out.shape == (B, S)
    assert bool(jnp.all(jnp.isfinite(out)))
    assert float(jnp.max(jnp.abs(out - ref))) < 5e-2

    print("KERNEL_OK")
</pallas_src>

<mosaic_0001>
module attributes {stable_mosaic.version = 11 : i64} {
  func.func @kernel(%arg0: i32, %arg1: memref<3x16x32xf32, #tpu.memory_space<vmem>>, %arg2: memref<3x16x32xf32, #tpu.memory_space<vmem>>, %arg3: memref<32x32xf32, #tpu.memory_space<vmem>>, %arg4: memref<32x32xf32, #tpu.memory_space<vmem>>, %arg5: memref<32x32xf32, #tpu.memory_space<vmem>>, %arg6: memref<32x32xf32, #tpu.memory_space<vmem>>, %arg7: memref<32x32xf32, #tpu.memory_space<vmem>>, %arg8: memref<32x32xf32, #tpu.memory_space<vmem>>, %arg9: memref<32x32xf32, #tpu.memory_space<vmem>>, %arg10: memref<16x32xf32, #tpu.memory_space<vmem>>, %arg11: memref<1x1x48xf32, #tpu.memory_space<vmem>>) attributes {dimension_semantics = [#tpu.dimension_semantics<parallel>], iteration_bounds = array<i64: 2>, scalar_prefetch = 0 : i64, scratch_operands = 0 : i64, tpu.core_type = #tpu.core_type<tc>, window_params = [{transform_indices = @transform_0, window_bounds = array<i64: 3, 16, 32>}, {transform_indices = @transform_1, window_bounds = array<i64: 3, 16, 32>}, {pipeline_mode = #tpu.pipeline_mode<synchronous>, transform_indices = @transform_2, window_bounds = array<i64: 32, 32>}, {pipeline_mode = #tpu.pipeline_mode<synchronous>, transform_indices = @transform_3, window_bounds = array<i64: 32, 32>}, {pipeline_mode = #tpu.pipeline_mode<synchronous>, transform_indices = @transform_4, window_bounds = array<i64: 32, 32>}, {pipeline_mode = #tpu.pipeline_mode<synchronous>, transform_indices = @transform_5, window_bounds = array<i64: 32, 32>}, {pipeline_mode = #tpu.pipeline_mode<synchronous>, transform_indices = @transform_6, window_bounds = array<i64: 32, 32>}, {pipeline_mode = #tpu.pipeline_mode<synchronous>, transform_indices = @transform_7, window_bounds = array<i64: 32, 32>}, {pipeline_mode = #tpu.pipeline_mode<synchronous>, transform_indices = @transform_8, window_bounds = array<i64: 32, 32>}, {pipeline_mode = #tpu.pipeline_mode<synchronous>, transform_indices = @transform_9, window_bounds = array<i64: 16, 32>}, {transform_indices = @transform_10, window_bounds = array<i64: 1, 1, 48>}]} {
    %c0 = arith.constant 0 : index
    %c0_0 = arith.constant 0 : index
    %c0_1 = arith.constant 0 : index
    %0 = vector.load %arg1[%c0, %c0_0, %c0_1] : memref<3x16x32xf32, #tpu.memory_space<vmem>>, vector<3x16x32xf32>
    %1 = vector.shape_cast %0 : vector<3x16x32xf32> to vector<48x32xf32>
    %c0_2 = arith.constant 0 : index
    %c0_3 = arith.constant 0 : index
    %c0_4 = arith.constant 0 : index
    %2 = vector.load %arg2[%c0_2, %c0_3, %c0_4] : memref<3x16x32xf32, #tpu.memory_space<vmem>>, vector<3x16x32xf32>
    %3 = vector.shape_cast %2 : vector<3x16x32xf32> to vector<48x32xf32>
    %c0_5 = arith.constant 0 : index
    %c0_6 = arith.constant 0 : index
    %4 = vector.load %arg10[%c0_5, %c0_6] : memref<16x32xf32, #tpu.memory_space<vmem>>, vector<16x32xf32>
    %c0_7 = arith.constant 0 : index
    %c0_8 = arith.constant 0 : index
    %5 = vector.load %arg3[%c0_7, %c0_8] : memref<32x32xf32, #tpu.memory_space<vmem>>, vector<32x32xf32>
    %cst = arith.constant dense<0.000000e+00> : vector<48x32xf32>
    %6 = tpu.matmul %1, %5, %cst {dimension_numbers = #tpu.dot_dimension_numbers<[1], [0], [0], [1], [0, 0, 1, 1], [], []>} : vector<48x32xf32>, vector<32x32xf32>, vector<48x32xf32> -> vector<48x32xf32>
    %7 = vector.extract_strided_slice %4 {offsets = [0, 0], sizes = [1, 32], strides = [1, 1]} : vector<16x32xf32> to vector<1x32xf32>
    %8 = vector.broadcast %7 : vector<1x32xf32> to vector<48x32xf32>
    %9 = arith.addf %6, %8 : vector<48x32xf32>
    %c0_9 = arith.constant 0 : index
    %c0_10 = arith.constant 0 : index
    %10 = vector.load %arg4[%c0_9, %c0_10] : memref<32x32xf32, #tpu.memory_space<vmem>>, vector<32x32xf32>
    %cst_11 = arith.constant dense<0.000000e+00> : vector<48x32xf32>
    %11 = tpu.matmul %9, %10, %cst_11 {dimension_numbers = #tpu.dot_dimension_numbers<[1], [0], [0], [1], [0, 0, 1, 1], [], []>} : vector<48x32xf32>, vector<32x32xf32>, vector<48x32xf32> -> vector<48x32xf32>
    %12 = vector.extract_strided_slice %4 {offsets = [1, 0], sizes = [1, 32], strides = [1, 1]} : vector<16x32xf32> to vector<1x32xf32>
    %13 = vector.broadcast %12 : vector<1x32xf32> to vector<48x32xf32>
    %14 = arith.addf %11, %13 : vector<48x32xf32>
    %cst_12 = arith.constant 2.500000e-01 : f32
    %15 = vector.broadcast %cst_12 : f32 to vector<48x32xf32>
    %16 = arith.mulf %14, %15 : vector<48x32xf32>
    %c0_13 = arith.constant 0 : index
    %c0_14 = arith.constant 0 : index
    %17 = vector.load %arg5[%c0_13, %c0_14] : memref<32x32xf32, #tpu.memory_space<vmem>>, vector<32x32xf32>
    %cst_15 = arith.constant dense<0.000000e+00> : vector<48x32xf32>
    %18 = tpu.matmul %3, %17, %cst_15 {dimension_numbers = #tpu.dot_dimension_numbers<[1], [0], [0], [1], [0, 0, 1, 1], [], []>} : vector<48x32xf32>, vector<32x32xf32>, vector<48x32xf32> -> vector<48x32xf32>
    %19 = vector.extract_strided_slice %4 {offsets = [2, 0], sizes = [1, 32], strides = [1, 1]} : vector<16x32xf32> to vector<1x32xf32>
    %20 = vector.broadcast %19 : vector<1x32xf32> to vector<48x32xf32>
    %21 = arith.addf %18, %20 : vector<48x32xf32>
    %c0_16 = arith.constant 0 : index
    %c0_17 = arith.constant 0 : index
    %22 = vector.load %arg6[%c0_16, %c0_17] : memref<32x32xf32, #tpu.memory_space<vmem>>, vector<32x32xf32>
    %cst_18 = arith.constant dense<0.000000e+00> : vector<48x32xf32>
    %23 = tpu.matmul %3, %22, %cst_18 {dimension_numbers = #tpu.dot_dimension_numbers<[1], [0], [0], [1], [0, 0, 1, 1], [], []>} : vector<48x32xf32>, vector<32x32xf32>, vector<48x32xf32> -> vector<48x32xf32>
    %24 = vector.extract_strided_slice %4 {offsets = [3, 0], sizes = [1, 32], strides = [1, 1]} : vector<16x32xf32> to vector<1x32xf32>
    %25 = vector.broadcast %24 : vector<1x32xf32> to vector<48x32xf32>
    %26 = arith.addf %23, %25 : vector<48x32xf32>
    %27 = tpu.iota {dimensions = array<i32: 0>} : vector<16x16xi32>
    %28 = tpu.iota {dimensions = array<i32: 1>} : vector<16x16xi32>
    %29 = arith.cmpi sgt, %28, %27 : vector<16x16xi32>
    %cst_19 = arith.constant -1.000000e+30 : f32
    %cst_20 = arith.constant 0.000000e+00 : f32
    %30 = vector.broadcast %cst_19 : f32 to vector<16x16xf32>
    %31 = vector.broadcast %cst_20 : f32 to vector<16x16xf32>
    %32 = arith.select %29, %30, %31 : vector<16x16xi1>, vector<16x16xf32>
    %33 = vector.extract_strided_slice %16 {offsets = [0, 0], sizes = [48, 16], strides = [1, 1]} : vector<48x32xf32> to vector<48x16xf32>
    %34 = vector.shape_cast %33 : vector<48x16xf32> to vector<3x16x16xf32>
    %35 = vector.extract_strided_slice %21 {offsets = [0, 0], sizes = [48, 16], strides = [1, 1]} : vector<48x32xf32> to vector<48x16xf32>
    %36 = vector.shape_cast %35 : vector<48x16xf32> to vector<3x16x16xf32>
    %37 = vector.extract_strided_slice %26 {offsets = [0, 0], sizes = [48, 16], strides = [1, 1]} : vector<48x32xf32> to vector<48x16xf32>
    %38 = vector.shape_cast %37 : vector<48x16xf32> to vector<3x16x16xf32>
    "tpu.trace_start"() <{level = 10 : i32, message = "bqd,bkd->bqk"}> : () -> ()
    %cst_21 = arith.constant dense<0.000000e+00> : vector<3x16x16xf32>
    %39 = tpu.matmul %34, %36, %cst_21 {dimension_numbers = #tpu.dot_dimension_numbers<[2], [2], [1], [1], [0, 0, 0, 1, 1, 1], [0], [0]>} : vector<3x16x16xf32>, vector<3x16x16xf32>, vector<3x16x16xf32> -> vector<3x16x16xf32>
    "tpu.trace_stop"() : () -> ()
    %40 = vector.shape_cast %32 : vector<16x16xf32> to vector<1x16x16xf32>
    %41 = vector.broadcast %40 : vector<1x16x16xf32> to vector<3x16x16xf32>
    %42 = arith.addf %39, %41 : vector<3x16x16xf32>
    %cst_22 = arith.constant dense<0xFF800000> : vector<3x16xf32>
    %43 = vector.multi_reduction <maximumf>, %42, %cst_22 [2] : vector<3x16x16xf32> to vector<3x16xf32>
    %44 = vector.shape_cast %43 : vector<3x16xf32> to vector<3x16x1xf32>
    %45 = vector.broadcast %44 : vector<3x16x1xf32> to vector<3x16x16xf32>
    %46 = arith.subf %42, %45 : vector<3x16x16xf32>
    %47 = math.exp %46 : vector<3x16x16xf32>
    %cst_23 = arith.constant dense<0.000000e+00> : vector<3x16xf32>
    %48 = vector.multi_reduction <add>, %47, %cst_23 [2] : vector<3x16x16xf32> to vector<3x16xf32>
    %49 = vector.shape_cast %48 : vector<3x16xf32> to vector<3x16x1xf32>
    %50 = tpu.reciprocal %49 : vector<3x16x1xf32> -> vector<3x16x1xf32>
    %51 = vector.broadcast %50 : vector<3x16x1xf32> to vector<3x16x16xf32>
    %52 = arith.mulf %47, %51 : vector<3x16x16xf32>
    "tpu.trace_start"() <{level = 10 : i32, message = "bqk,bkd->bqd"}> : () -> ()
    %cst_24 = arith.constant dense<0.000000e+00> : vector<3x16x16xf32>
    %53 = tpu.matmul %52, %38, %cst_24 {dimension_numbers = #tpu.dot_dimension_numbers<[2], [1], [1], [2], [0, 0, 0, 1, 1, 2], [0], [0]>} : vector<3x16x16xf32>, vector<3x16x16xf32>, vector<3x16x16xf32> -> vector<3x16x16xf32>
    "tpu.trace_stop"() : () -> ()
    %54 = vector.extract_strided_slice %16 {offsets = [0, 16], sizes = [48, 16], strides = [1, 1]} : vector<48x32xf32> to vector<48x16xf32>
    %55 = vector.shape_cast %54 : vector<48x16xf32> to vector<3x16x16xf32>
    %56 = vector.extract_strided_slice %21 {offsets = [0, 16], sizes = [48, 16], strides = [1, 1]} : vector<48x32xf32> to vector<48x16xf32>
    %57 = vector.shape_cast %56 : vector<48x16xf32> to vector<3x16x16xf32>
    %58 = vector.extract_strided_slice %26 {offsets = [0, 16], sizes = [48, 16], strides = [1, 1]} : vector<48x32xf32> to vector<48x16xf32>
    %59 = vector.shape_cast %58 : vector<48x16xf32> to vector<3x16x16xf32>
    "tpu.trace_start"() <{level = 10 : i32, message = "bqd,bkd->bqk"}> : () -> ()
    %cst_25 = arith.constant dense<0.000000e+00> : vector<3x16x16xf32>
    %60 = tpu.matmul %55, %57, %cst_25 {dimension_numbers = #tpu.dot_dimension_numbers<[2], [2], [1], [1], [0, 0, 0, 1, 1, 1], [0], [0]>} : vector<3x16x16xf32>, vector<3x16x16xf32>, vector<3x16x16xf32> -> vector<3x16x16xf32>
    "tpu.trace_stop"() : () -> ()
    %61 = vector.shape_cast %32 : vector<16x16xf32> to vector<1x16x16xf32>
    %62 = vector.broadcast %61 : vector<1x16x16xf32> to vector<3x16x16xf32>
    %63 = arith.addf %60, %62 : vector<3x16x16xf32>
    %cst_26 = arith.constant dense<0xFF800000> : vector<3x16xf32>
    %64 = vector.multi_reduction <maximumf>, %63, %cst_26 [2] : vector<3x16x16xf32> to vector<3x16xf32>
    %65 = vector.shape_cast %64 : vector<3x16xf32> to vector<3x16x1xf32>
    %66 = vector.broadcast %65 : vector<3x16x1xf32> to vector<3x16x16xf32>
    %67 = arith.subf %63, %66 : vector<3x16x16xf32>
    %68 = math.exp %67 : vector<3x16x16xf32>
    %cst_27 = arith.constant dense<0.000000e+00> : vector<3x16xf32>
    %69 = vector.multi_reduction <add>, %68, %cst_27 [2] : vector<3x16x16xf32> to vector<3x16xf32>
    %70 = vector.shape_cast %69 : vector<3x16xf32> to vector<3x16x1xf32>
    %71 = tpu.reciprocal %70 : vector<3x16x1xf32> -> vector<3x16x1xf32>
    %72 = vector.broadcast %71 : vector<3x16x1xf32> to vector<3x16x16xf32>
    %73 = arith.mulf %68, %72 : vector<3x16x16xf32>
    "tpu.trace_start"() <{level = 10 : i32, message = "bqk,bkd->bqd"}> : () -> ()
    %cst_28 = arith.constant dense<0.000000e+00> : vector<3x16x16xf32>
    %74 = tpu.matmul %73, %59, %cst_28 {dimension_numbers = #tpu.dot_dimension_numbers<[2], [1], [1], [2], [0, 0, 0, 1, 1, 2], [0], [0]>} : vector<3x16x16xf32>, vector<3x16x16xf32>, vector<3x16x16xf32> -> vector<3x16x16xf32>
    "tpu.trace_stop"() : () -> ()
    %75 = tpu.concatenate %53, %74 in 2 : vector<3x16x16xf32>, vector<3x16x16xf32> -> vector<3x16x32xf32>
    %76 = vector.shape_cast %75 : vector<3x16x32xf32> to vector<48x32xf32>
    %c0_29 = arith.constant 0 : index
    %c0_30 = arith.constant 0 : index
    %77 = vector.load %arg7[%c0_29, %c0_30] : memref<32x32xf32, #tpu.memory_space<vmem>>, vector<32x32xf32>
    %cst_31 = arith.constant dense<0.000000e+00> : vector<48x32xf32>
    %78 = tpu.matmul %76, %77, %cst_31 {dimension_numbers = #tpu.dot_dimension_numbers<[1], [0], [0], [1], [0, 0, 1, 1], [], []>} : vector<48x32xf32>, vector<32x32xf32>, vector<48x32xf32> -> vector<48x32xf32>
    %79 = vector.extract_strided_slice %4 {offsets = [4, 0], sizes = [1, 32], strides = [1, 1]} : vector<16x32xf32> to vector<1x32xf32>
    %80 = vector.broadcast %79 : vector<1x32xf32> to vector<48x32xf32>
    %81 = arith.addf %78, %80 : vector<48x32xf32>
    %82 = arith.addf %9, %81 : vector<48x32xf32>
    %83 = vector.extract_strided_slice %4 {offsets = [7, 0], sizes = [1, 32], strides = [1, 1]} : vector<16x32xf32> to vector<1x32xf32>
    %84 = vector.extract_strided_slice %4 {offsets = [8, 0], sizes = [1, 32], strides = [1, 1]} : vector<16x32xf32> to vector<1x32xf32>
    %cst_32 = arith.constant dense<0.000000e+00> : vector<48xf32>
    %85 = vector.multi_reduction <add>, %82, %cst_32 [1] : vector<48x32xf32> to vector<48xf32>
    %86 = vector.shape_cast %85 : vector<48xf32> to vector<48x1xf32>
    %cst_33 = arith.constant 3.200000e+01 : f32
    %87 = vector.broadcast %cst_33 : f32 to vector<48x1xf32>
    %88 = arith.divf %86, %87 : vector<48x1xf32>
    %89 = vector.broadcast %88 : vector<48x1xf32> to vector<48x32xf32>
    %90 = arith.subf %82, %89 : vector<48x32xf32>
    %91 = arith.mulf %90, %90 : vector<48x32xf32>
    %cst_34 = arith.constant dense<0.000000e+00> : vector<48xf32>
    %92 = vector.multi_reduction <add>, %91, %cst_34 [1] : vector<48x32xf32> to vector<48xf32>
    %93 = vector.shape_cast %92 : vector<48xf32> to vector<48x1xf32>
    %cst_35 = arith.constant 3.200000e+01 : f32
    %94 = vector.broadcast %cst_35 : f32 to vector<48x1xf32>
    %95 = arith.divf %93, %94 : vector<48x1xf32>
    %96 = vector.broadcast %88 : vector<48x1xf32> to vector<48x32xf32>
    %97 = arith.subf %82, %96 : vector<48x32xf32>
    %cst_36 = arith.constant 9.99999974E-6 : f32
    %98 = vector.broadcast %cst_36 : f32 to vector<48x1xf32>
    %99 = arith.addf %95, %98 : vector<48x1xf32>
    %100 = math.rsqrt %99 : vector<48x1xf32>
    %101 = vector.broadcast %100 : vector<48x1xf32> to vector<48x32xf32>
    %102 = arith.mulf %97, %101 : vector<48x32xf32>
    %103 = vector.broadcast %83 : vector<1x32xf32> to vector<48x32xf32>
    %104 = arith.mulf %102, %103 : vector<48x32xf32>
    %105 = vector.broadcast %84 : vector<1x32xf32> to vector<48x32xf32>
    %106 = arith.addf %104, %105 : vector<48x32xf32>
    %c0_37 = arith.constant 0 : index
    %c0_38 = arith.constant 0 : index
    %107 = vector.load %arg8[%c0_37, %c0_38] : memref<32x32xf32, #tpu.memory_space<vmem>>, vector<32x32xf32>
    %cst_39 = arith.constant dense<0.000000e+00> : vector<48x32xf32>
    %108 = tpu.matmul %106, %107, %cst_39 {dimension_numbers = #tpu.dot_dimension_numbers<[1], [0], [0], [1], [0, 0, 1, 1], [], []>} : vector<48x32xf32>, vector<32x32xf32>, vector<48x32xf32> -> vector<48x32xf32>
    %109 = vector.extract_strided_slice %4 {offsets = [5, 0], sizes = [1, 32], strides = [1, 1]} : vector<16x32xf32> to vector<1x32xf32>
    %110 = vector.broadcast %109 : vector<1x32xf32> to vector<48x32xf32>
    %111 = arith.addf %108, %110 : vector<48x32xf32>
    %cst_40 = arith.constant 0.000000e+00 : f32
    %112 = vector.broadcast %cst_40 : f32 to vector<48x32xf32>
    %113 = arith.maximumf %111, %112 : vector<48x32xf32>
    %c0_41 = arith.constant 0 : index
    %c0_42 = arith.constant 0 : index
    %114 = vector.load %arg9[%c0_41, %c0_42] : memref<32x32xf32, #tpu.memory_space<vmem>>, vector<32x32xf32>
    %cst_43 = arith.constant dense<0.000000e+00> : vector<48x32xf32>
    %115 = tpu.matmul %113, %114, %cst_43 {dimension_numbers = #tpu.dot_dimension_numbers<[1], [0], [0], [1], [0, 0, 1, 1], [], []>} : vector<48x32xf32>, vector<32x32xf32>, vector<48x32xf32> -> vector<48x32xf32>
    %116 = vector.extract_strided_slice %4 {offsets = [6, 0], sizes = [1, 32], strides = [1, 1]} : vector<16x32xf32> to vector<1x32xf32>
    %117 = vector.broadcast %116 : vector<1x32xf32> to vector<48x32xf32>
    %118 = arith.addf %115, %117 : vector<48x32xf32>
    %119 = arith.addf %118, %106 : vector<48x32xf32>
    %120 = vector.extract_strided_slice %4 {offsets = [9, 0], sizes = [1, 32], strides = [1, 1]} : vector<16x32xf32> to vector<1x32xf32>
    %121 = vector.extract_strided_slice %4 {offsets = [10, 0], sizes = [1, 32], strides = [1, 1]} : vector<16x32xf32> to vector<1x32xf32>
    %cst_44 = arith.constant dense<0.000000e+00> : vector<48xf32>
    %122 = vector.multi_reduction <add>, %119, %cst_44 [1] : vector<48x32xf32> to vector<48xf32>
    %123 = vector.shape_cast %122 : vector<48xf32> to vector<48x1xf32>
    %cst_45 = arith.constant 3.200000e+01 : f32
    %124 = vector.broadcast %cst_45 : f32 to vector<48x1xf32>
    %125 = arith.divf %123, %124 : vector<48x1xf32>
    %126 = vector.broadcast %125 : vector<48x1xf32> to vector<48x32xf32>
    %127 = arith.subf %119, %126 : vector<48x32xf32>
    %128 = arith.mulf %127, %127 : vector<48x32xf32>
    %cst_46 = arith.constant dense<0.000000e+00> : vector<48xf32>
    %129 = vector.multi_reduction <add>, %128, %cst_46 [1] : vector<48x32xf32> to vector<48xf32>
    %130 = vector.shape_cast %129 : vector<48xf32> to vector<48x1xf32>
    %cst_47 = arith.constant 3.200000e+01 : f32
    %131 = vector.broadcast %cst_47 : f32 to vector<48x1xf32>
    %132 = arith.divf %130, %131 : vector<48x1xf32>
    %133 = vector.broadcast %125 : vector<48x1xf32> to vector<48x32xf32>
    %134 = arith.subf %119, %133 : vector<48x32xf32>
    %cst_48 = arith.constant 9.99999974E-6 : f32
    %135 = vector.broadcast %cst_48 : f32 to vector<48x1xf32>
    %136 = arith.addf %132, %135 : vector<48x1xf32>
    %137 = math.rsqrt %136 : vector<48x1xf32>
    %138 = vector.broadcast %137 : vector<48x1xf32> to vector<48x32xf32>
    %139 = arith.mulf %134, %138 : vector<48x32xf32>
    %140 = vector.broadcast %120 : vector<1x32xf32> to vector<48x32xf32>
    %141 = arith.mulf %139, %140 : vector<48x32xf32>
    %142 = vector.broadcast %121 : vector<1x32xf32> to vector<48x32xf32>
    %143 = arith.addf %141, %142 : vector<48x32xf32>
    %144 = vector.shape_cast %143 : vector<48x32xf32> to vector<3x16x32xf32>
    %145 = vector.extract_strided_slice %4 {offsets = [11, 0], sizes = [1, 32], strides = [1, 1]} : vector<16x32xf32> to vector<1x32xf32>
    %146 = vector.shape_cast %145 : vector<1x32xf32> to vector<1x1x32xf32>
    %147 = vector.broadcast %146 : vector<1x1x32xf32> to vector<3x16x32xf32>
    %148 = arith.mulf %144, %147 : vector<3x16x32xf32>
    %cst_49 = arith.constant dense<0.000000e+00> : vector<3x16xf32>
    %149 = vector.multi_reduction <add>, %148, %cst_49 [2] : vector<3x16x32xf32> to vector<3x16xf32>
    %150 = vector.shape_cast %149 : vector<3x16xf32> to vector<1x48xf32>
    %151 = vector.extract_strided_slice %4 {offsets = [12, 0], sizes = [1, 1], strides = [1, 1]} : vector<16x32xf32> to vector<1x1xf32>
    %152 = vector.broadcast %151 : vector<1x1xf32> to vector<1x48xf32>
    %153 = arith.addf %150, %152 : vector<1x48xf32>
    %154 = arith.negf %153 : vector<1x48xf32>
    %155 = math.exp %154 : vector<1x48xf32>
    %cst_50 = arith.constant 1.000000e+00 : f32
    %156 = vector.broadcast %cst_50 : f32 to vector<1x48xf32>
    %157 = arith.addf %156, %155 : vector<1x48xf32>
    %158 = arith.divf %156, %157 : vector<1x48xf32>
    %c0_51 = arith.constant 0 : index
    %c0_52 = arith.constant 0 : index
    %c0_53 = arith.constant 0 : index
    %159 = vector.load %arg11[%c0_51, %c0_52, %c0_53] : memref<1x1x48xf32, #tpu.memory_space<vmem>>, vector<1x1x48xf32>
    %160 = vector.shape_cast %159 : vector<1x1x48xf32> to vector<1x48xf32>
    %161 = vector.shape_cast %158 : vector<1x48xf32> to vector<1x1x48xf32>
    tpu.vector_store %arg11[%c0_51, %c0_52, %c0_53], %161 {strides = array<i32>} : memref<1x1x48xf32, #tpu.memory_space<vmem>>, vector<1x1x48xf32>,
    return
  }
  func.func @transform_0(%arg0: i32) -> (i32, i32, i32) {
    %c0_i32 = arith.constant 0 : i32
    %c0_i32_0 = arith.constant 0 : i32
    %c0_i32_1 = arith.constant 0 : i32
    return %arg0, %c0_i32, %c0_i32_0 : i32, i32, i32
  }
  func.func @transform_1(%arg0: i32) -> (i32, i32, i32) {
    %c0_i32 = arith.constant 0 : i32
    %c0_i32_0 = arith.constant 0 : i32
    %c0_i32_1 = arith.constant 0 : i32
    return %arg0, %c0_i32, %c0_i32_0 : i32, i32, i32
  }
  func.func @transform_2(%arg0: i32) -> (i32, i32) {
    %c0_i32 = arith.constant 0 : i32
    %c0_i32_0 = arith.constant 0 : i32
    %c0_i32_1 = arith.constant 0 : i32
    return %c0_i32, %c0_i32_0 : i32, i32
  }
  func.func @transform_3(%arg0: i32) -> (i32, i32) {
    %c0_i32 = arith.constant 0 : i32
    %c0_i32_0 = arith.constant 0 : i32
    %c0_i32_1 = arith.constant 0 : i32
    return %c0_i32, %c0_i32_0 : i32, i32
  }
  func.func @transform_4(%arg0: i32) -> (i32, i32) {
    %c0_i32 = arith.constant 0 : i32
    %c0_i32_0 = arith.constant 0 : i32
    %c0_i32_1 = arith.constant 0 : i32
    return %c0_i32, %c0_i32_0 : i32, i32
  }
  func.func @transform_5(%arg0: i32) -> (i32, i32) {
    %c0_i32 = arith.constant 0 : i32
    %c0_i32_0 = arith.constant 0 : i32
    %c0_i32_1 = arith.constant 0 : i32
    return %c0_i32, %c0_i32_0 : i32, i32
  }
  func.func @transform_6(%arg0: i32) -> (i32, i32) {
    %c0_i32 = arith.constant 0 : i32
    %c0_i32_0 = arith.constant 0 : i32
    %c0_i32_1 = arith.constant 0 : i32
    return %c0_i32, %c0_i32_0 : i32, i32
  }
  func.func @transform_7(%arg0: i32) -> (i32, i32) {
    %c0_i32 = arith.constant 0 : i32
    %c0_i32_0 = arith.constant 0 : i32
    %c0_i32_1 = arith.constant 0 : i32
    return %c0_i32, %c0_i32_0 : i32, i32
  }
  func.func @transform_8(%arg0: i32) -> (i32, i32) {
    %c0_i32 = arith.constant 0 : i32
    %c0_i32_0 = arith.constant 0 : i32
    %c0_i32_1 = arith.constant 0 : i32
    return %c0_i32, %c0_i32_0 : i32, i32
  }
  func.func @transform_9(%arg0: i32) -> (i32, i32) {
    %c0_i32 = arith.constant 0 : i32
    %c0_i32_0 = arith.constant 0 : i32
    %c0_i32_1 = arith.constant 0 : i32
    return %c0_i32, %c0_i32_0 : i32, i32
  }
  func.func @transform_10(%arg0: i32) -> (i32, i32, i32) {
    %c0_i32 = arith.constant 0 : i32
    %c0_i32_0 = arith.constant 0 : i32
    %c0_i32_1 = arith.constant 0 : i32
    return %arg0, %c0_i32, %c0_i32_0 : i32, i32, i32
  }
}

module attributes {stable_mosaic.version = 11 : i64} {
  func.func @kernel(%arg0: i32, %arg1: memref<3x16x32xf32, #tpu.memory_space<vmem>>, %arg2: memref<3x16x32xf32, #tpu.memory_space<vmem>>, %arg3: memref<32x32xf32, #tpu.memory_space<vmem>>, %arg4: memref<32x32xf32, #tpu.memory_space<vmem>>, %arg5: memref<32x32xf32, #tpu.memory_space<vmem>>, %arg6: memref<32x32xf32, #tpu.memory_space<vmem>>, %arg7: memref<32x32xf32, #tpu.memory_space<vmem>>, %arg8: memref<32x32xf32, #tpu.memory_space<vmem>>, %arg9: memref<32x32xf32, #tpu.memory_space<vmem>>, %arg10: memref<16x32xf32, #tpu.memory_space<vmem>>, %arg11: memref<1x1x48xf32, #tpu.memory_space<vmem>>) attributes {dimension_semantics = [#tpu.dimension_semantics<parallel>], iteration_bounds = array<i64: 2>, scalar_prefetch = 0 : i64, scratch_operands = 0 : i64, tpu.core_type = #tpu.core_type<tc>, window_params = [{transform_indices = @transform_0, window_bounds = array<i64: 3, 16, 32>}, {transform_indices = @transform_1, window_bounds = array<i64: 3, 16, 32>}, {pipeline_mode = #tpu.pipeline_mode<synchronous>, transform_indices = @transform_2, window_bounds = array<i64: 32, 32>}, {pipeline_mode = #tpu.pipeline_mode<synchronous>, transform_indices = @transform_3, window_bounds = array<i64: 32, 32>}, {pipeline_mode = #tpu.pipeline_mode<synchronous>, transform_indices = @transform_4, window_bounds = array<i64: 32, 32>}, {pipeline_mode = #tpu.pipeline_mode<synchronous>, transform_indices = @transform_5, window_bounds = array<i64: 32, 32>}, {pipeline_mode = #tpu.pipeline_mode<synchronous>, transform_indices = @transform_6, window_bounds = array<i64: 32, 32>}, {pipeline_mode = #tpu.pipeline_mode<synchronous>, transform_indices = @transform_7, window_bounds = array<i64: 32, 32>}, {pipeline_mode = #tpu.pipeline_mode<synchronous>, transform_indices = @transform_8, window_bounds = array<i64: 32, 32>}, {pipeline_mode = #tpu.pipeline_mode<synchronous>, transform_indices = @transform_9, window_bounds = array<i64: 16, 32>}, {transform_indices = @transform_10, window_bounds = array<i64: 1, 1, 48>}]} {
    %c0 = arith.constant 0 : index
    %c0_0 = arith.constant 0 : index
    %c0_1 = arith.constant 0 : index
    %0 = vector.load %arg1[%c0, %c0_0, %c0_1] : memref<3x16x32xf32, #tpu.memory_space<vmem>>, vector<3x16x32xf32>
    %1 = vector.shape_cast %0 : vector<3x16x32xf32> to vector<48x32xf32>
    %c0_2 = arith.constant 0 : index
    %c0_3 = arith.constant 0 : index
    %c0_4 = arith.constant 0 : index
    %2 = vector.load %arg2[%c0_2, %c0_3, %c0_4] : memref<3x16x32xf32, #tpu.memory_space<vmem>>, vector<3x16x32xf32>
    %3 = vector.shape_cast %2 : vector<3x16x32xf32> to vector<48x32xf32>
    %c0_5 = arith.constant 0 : index
    %c0_6 = arith.constant 0 : index
    %4 = vector.load %arg10[%c0_5, %c0_6] : memref<16x32xf32, #tpu.memory_space<vmem>>, vector<16x32xf32>
    %c0_7 = arith.constant 0 : index
    %c0_8 = arith.constant 0 : index
    %5 = vector.load %arg3[%c0_7, %c0_8] : memref<32x32xf32, #tpu.memory_space<vmem>>, vector<32x32xf32>
    %cst = arith.constant dense<0.000000e+00> : vector<48x32xf32>
    %6 = tpu.matmul %1, %5, %cst {dimension_numbers = #tpu.dot_dimension_numbers<[1], [0], [0], [1], [0, 0, 1, 1], [], []>} : vector<48x32xf32>, vector<32x32xf32>, vector<48x32xf32> -> vector<48x32xf32>
    %7 = vector.extract_strided_slice %4 {offsets = [0, 0], sizes = [1, 32], strides = [1, 1]} : vector<16x32xf32> to vector<1x32xf32>
    %8 = vector.broadcast %7 : vector<1x32xf32> to vector<48x32xf32>
    %9 = arith.addf %6, %8 : vector<48x32xf32>
    %c0_9 = arith.constant 0 : index
    %c0_10 = arith.constant 0 : index
    %10 = vector.load %arg4[%c0_9, %c0_10] : memref<32x32xf32, #tpu.memory_space<vmem>>, vector<32x32xf32>
    %cst_11 = arith.constant dense<0.000000e+00> : vector<48x32xf32>
    %11 = tpu.matmul %9, %10, %cst_11 {dimension_numbers = #tpu.dot_dimension_numbers<[1], [0], [0], [1], [0, 0, 1, 1], [], []>} : vector<48x32xf32>, vector<32x32xf32>, vector<48x32xf32> -> vector<48x32xf32>
    %12 = vector.extract_strided_slice %4 {offsets = [1, 0], sizes = [1, 32], strides = [1, 1]} : vector<16x32xf32> to vector<1x32xf32>
    %13 = vector.broadcast %12 : vector<1x32xf32> to vector<48x32xf32>
    %14 = arith.addf %11, %13 : vector<48x32xf32>
    %cst_12 = arith.constant 2.500000e-01 : f32
    %15 = vector.broadcast %cst_12 : f32 to vector<48x32xf32>
    %16 = arith.mulf %14, %15 : vector<48x32xf32>
    %c0_13 = arith.constant 0 : index
    %c0_14 = arith.constant 0 : index
    %17 = vector.load %arg5[%c0_13, %c0_14] : memref<32x32xf32, #tpu.memory_space<vmem>>, vector<32x32xf32>
    %cst_15 = arith.constant dense<0.000000e+00> : vector<48x32xf32>
    %18 = tpu.matmul %3, %17, %cst_15 {dimension_numbers = #tpu.dot_dimension_numbers<[1], [0], [0], [1], [0, 0, 1, 1], [], []>} : vector<48x32xf32>, vector<32x32xf32>, vector<48x32xf32> -> vector<48x32xf32>
    %19 = vector.extract_strided_slice %4 {offsets = [2, 0], sizes = [1, 32], strides = [1, 1]} : vector<16x32xf32> to vector<1x32xf32>
    %20 = vector.broadcast %19 : vector<1x32xf32> to vector<48x32xf32>
    %21 = arith.addf %18, %20 : vector<48x32xf32>
    %c0_16 = arith.constant 0 : index
    %c0_17 = arith.constant 0 : index
    %22 = vector.load %arg6[%c0_16, %c0_17] : memref<32x32xf32, #tpu.memory_space<vmem>>, vector<32x32xf32>
    %cst_18 = arith.constant dense<0.000000e+00> : vector<48x32xf32>
    %23 = tpu.matmul %3, %22, %cst_18 {dimension_numbers = #tpu.dot_dimension_numbers<[1], [0], [0], [1], [0, 0, 1, 1], [], []>} : vector<48x32xf32>, vector<32x32xf32>, vector<48x32xf32> -> vector<48x32xf32>
    %24 = vector.extract_strided_slice %4 {offsets = [3, 0], sizes = [1, 32], strides = [1, 1]} : vector<16x32xf32> to vector<1x32xf32>
    %25 = vector.broadcast %24 : vector<1x32xf32> to vector<48x32xf32>
    %26 = arith.addf %23, %25 : vector<48x32xf32>
    %27 = tpu.iota {dimensions = array<i32: 0>} : vector<16x16xi32>
    %28 = tpu.iota {dimensions = array<i32: 1>} : vector<16x16xi32>
    %29 = arith.cmpi sgt, %28, %27 : vector<16x16xi32>
    %cst_19 = arith.constant -1.000000e+30 : f32
    %cst_20 = arith.constant 0.000000e+00 : f32
    %30 = vector.broadcast %cst_19 : f32 to vector<16x16xf32>
    %31 = vector.broadcast %cst_20 : f32 to vector<16x16xf32>
    %32 = arith.select %29, %30, %31 : vector<16x16xi1>, vector<16x16xf32>
    %33 = vector.extract_strided_slice %16 {offsets = [0, 0], sizes = [48, 16], strides = [1, 1]} : vector<48x32xf32> to vector<48x16xf32>
    %34 = vector.shape_cast %33 : vector<48x16xf32> to vector<3x16x16xf32>
    %35 = vector.extract_strided_slice %21 {offsets = [0, 0], sizes = [48, 16], strides = [1, 1]} : vector<48x32xf32> to vector<48x16xf32>
    %36 = vector.shape_cast %35 : vector<48x16xf32> to vector<3x16x16xf32>
    %37 = vector.extract_strided_slice %26 {offsets = [0, 0], sizes = [48, 16], strides = [1, 1]} : vector<48x32xf32> to vector<48x16xf32>
    %38 = vector.shape_cast %37 : vector<48x16xf32> to vector<3x16x16xf32>
    "tpu.trace_start"() <{level = 10 : i32, message = "bqd,bkd->bqk"}> : () -> ()
    %cst_21 = arith.constant dense<0.000000e+00> : vector<3x16x16xf32>
    %39 = tpu.matmul %34, %36, %cst_21 {dimension_numbers = #tpu.dot_dimension_numbers<[2], [2], [1], [1], [0, 0, 0, 1, 1, 1], [0], [0]>} : vector<3x16x16xf32>, vector<3x16x16xf32>, vector<3x16x16xf32> -> vector<3x16x16xf32>
    "tpu.trace_stop"() : () -> ()
    %40 = vector.shape_cast %32 : vector<16x16xf32> to vector<1x16x16xf32>
    %41 = vector.broadcast %40 : vector<1x16x16xf32> to vector<3x16x16xf32>
    %42 = arith.addf %39, %41 : vector<3x16x16xf32>
    %cst_22 = arith.constant dense<0xFF800000> : vector<3x16xf32>
    %43 = vector.multi_reduction <maximumf>, %42, %cst_22 [2] : vector<3x16x16xf32> to vector<3x16xf32>
    %44 = vector.shape_cast %43 : vector<3x16xf32> to vector<3x16x1xf32>
    %45 = vector.broadcast %44 : vector<3x16x1xf32> to vector<3x16x16xf32>
    %46 = arith.subf %42, %45 : vector<3x16x16xf32>
    %47 = math.exp %46 : vector<3x16x16xf32>
    %cst_23 = arith.constant dense<0.000000e+00> : vector<3x16xf32>
    %48 = vector.multi_reduction <add>, %47, %cst_23 [2] : vector<3x16x16xf32> to vector<3x16xf32>
    %49 = vector.shape_cast %48 : vector<3x16xf32> to vector<3x16x1xf32>
    %50 = tpu.reciprocal %49 : vector<3x16x1xf32> -> vector<3x16x1xf32>
    %51 = vector.broadcast %50 : vector<3x16x1xf32> to vector<3x16x16xf32>
    %52 = arith.mulf %47, %51 : vector<3x16x16xf32>
    "tpu.trace_start"() <{level = 10 : i32, message = "bqk,bkd->bqd"}> : () -> ()
    %cst_24 = arith.constant dense<0.000000e+00> : vector<3x16x16xf32>
    %53 = tpu.matmul %52, %38, %cst_24 {dimension_numbers = #tpu.dot_dimension_numbers<[2], [1], [1], [2], [0, 0, 0, 1, 1, 2], [0], [0]>} : vector<3x16x16xf32>, vector<3x16x16xf32>, vector<3x16x16xf32> -> vector<3x16x16xf32>
    "tpu.trace_stop"() : () -> ()
    %54 = vector.extract_strided_slice %16 {offsets = [0, 16], sizes = [48, 16], strides = [1, 1]} : vector<48x32xf32> to vector<48x16xf32>
    %55 = vector.shape_cast %54 : vector<48x16xf32> to vector<3x16x16xf32>
    %56 = vector.extract_strided_slice %21 {offsets = [0, 16], sizes = [48, 16], strides = [1, 1]} : vector<48x32xf32> to vector<48x16xf32>
    %57 = vector.shape_cast %56 : vector<48x16xf32> to vector<3x16x16xf32>
    %58 = vector.extract_strided_slice %26 {offsets = [0, 16], sizes = [48, 16], strides = [1, 1]} : vector<48x32xf32> to vector<48x16xf32>
    %59 = vector.shape_cast %58 : vector<48x16xf32> to vector<3x16x16xf32>
    "tpu.trace_start"() <{level = 10 : i32, message = "bqd,bkd->bqk"}> : () -> ()
    %cst_25 = arith.constant dense<0.000000e+00> : vector<3x16x16xf32>
    %60 = tpu.matmul %55, %57, %cst_25 {dimension_numbers = #tpu.dot_dimension_numbers<[2], [2], [1], [1], [0, 0, 0, 1, 1, 1], [0], [0]>} : vector<3x16x16xf32>, vector<3x16x16xf32>, vector<3x16x16xf32> -> vector<3x16x16xf32>
    "tpu.trace_stop"() : () -> ()
    %61 = vector.shape_cast %32 : vector<16x16xf32> to vector<1x16x16xf32>
    %62 = vector.broadcast %61 : vector<1x16x16xf32> to vector<3x16x16xf32>
    %63 = arith.addf %60, %62 : vector<3x16x16xf32>
    %cst_26 = arith.constant dense<0xFF800000> : vector<3x16xf32>
    %64 = vector.multi_reduction <maximumf>, %63, %cst_26 [2] : vector<3x16x16xf32> to vector<3x16xf32>
    %65 = vector.shape_cast %64 : vector<3x16xf32> to vector<3x16x1xf32>
    %66 = vector.broadcast %65 : vector<3x16x1xf32> to vector<3x16x16xf32>
    %67 = arith.subf %63, %66 : vector<3x16x16xf32>
    %68 = math.exp %67 : vector<3x16x16xf32>
    %cst_27 = arith.constant dense<0.000000e+00> : vector<3x16xf32>
    %69 = vector.multi_reduction <add>, %68, %cst_27 [2] : vector<3x16x16xf32> to vector<3x16xf32>
    %70 = vector.shape_cast %69 : vector<3x16xf32> to vector<3x16x1xf32>
    %71 = tpu.reciprocal %70 : vector<3x16x1xf32> -> vector<3x16x1xf32>
    %72 = vector.broadcast %71 : vector<3x16x1xf32> to vector<3x16x16xf32>
    %73 = arith.mulf %68, %72 : vector<3x16x16xf32>
    "tpu.trace_start"() <{level = 10 : i32, message = "bqk,bkd->bqd"}> : () -> ()
    %cst_28 = arith.constant dense<0.000000e+00> : vector<3x16x16xf32>
    %74 = tpu.matmul %73, %59, %cst_28 {dimension_numbers = #tpu.dot_dimension_numbers<[2], [1], [1], [2], [0, 0, 0, 1, 1, 2], [0], [0]>} : vector<3x16x16xf32>, vector<3x16x16xf32>, vector<3x16x16xf32> -> vector<3x16x16xf32>
    "tpu.trace_stop"() : () -> ()
    %75 = tpu.concatenate %53, %74 in 2 : vector<3x16x16xf32>, vector<3x16x16xf32> -> vector<3x16x32xf32>
    %76 = vector.shape_cast %75 : vector<3x16x32xf32> to vector<48x32xf32>
    %c0_29 = arith.constant 0 : index
    %c0_30 = arith.constant 0 : index
    %77 = vector.load %arg7[%c0_29, %c0_30] : memref<32x32xf32, #tpu.memory_space<vmem>>, vector<32x32xf32>
    %cst_31 = arith.constant dense<0.000000e+00> : vector<48x32xf32>
    %78 = tpu.matmul %76, %77, %cst_31 {dimension_numbers = #tpu.dot_dimension_numbers<[1], [0], [0], [1], [0, 0, 1, 1], [], []>} : vector<48x32xf32>, vector<32x32xf32>, vector<48x32xf32> -> vector<48x32xf32>
    %79 = vector.extract_strided_slice %4 {offsets = [4, 0], sizes = [1, 32], strides = [1, 1]} : vector<16x32xf32> to vector<1x32xf32>
    %80 = vector.broadcast %79 : vector<1x32xf32> to vector<48x32xf32>
    %81 = arith.addf %78, %80 : vector<48x32xf32>
    %82 = arith.addf %9, %81 : vector<48x32xf32>
    %83 = vector.extract_strided_slice %4 {offsets = [7, 0], sizes = [1, 32], strides = [1, 1]} : vector<16x32xf32> to vector<1x32xf32>
    %84 = vector.extract_strided_slice %4 {offsets = [8, 0], sizes = [1, 32], strides = [1, 1]} : vector<16x32xf32> to vector<1x32xf32>
    %cst_32 = arith.constant dense<0.000000e+00> : vector<48xf32>
    %85 = vector.multi_reduction <add>, %82, %cst_32 [1] : vector<48x32xf32> to vector<48xf32>
    %86 = vector.shape_cast %85 : vector<48xf32> to vector<48x1xf32>
    %cst_33 = arith.constant 3.200000e+01 : f32
    %87 = vector.broadcast %cst_33 : f32 to vector<48x1xf32>
    %88 = arith.divf %86, %87 : vector<48x1xf32>
    %89 = vector.broadcast %88 : vector<48x1xf32> to vector<48x32xf32>
    %90 = arith.subf %82, %89 : vector<48x32xf32>
    %91 = arith.mulf %90, %90 : vector<48x32xf32>
    %cst_34 = arith.constant dense<0.000000e+00> : vector<48xf32>
    %92 = vector.multi_reduction <add>, %91, %cst_34 [1] : vector<48x32xf32> to vector<48xf32>
    %93 = vector.shape_cast %92 : vector<48xf32> to vector<48x1xf32>
    %cst_35 = arith.constant 3.200000e+01 : f32
    %94 = vector.broadcast %cst_35 : f32 to vector<48x1xf32>
    %95 = arith.divf %93, %94 : vector<48x1xf32>
    %96 = vector.broadcast %88 : vector<48x1xf32> to vector<48x32xf32>
    %97 = arith.subf %82, %96 : vector<48x32xf32>
    %cst_36 = arith.constant 9.99999974E-6 : f32
    %98 = vector.broadcast %cst_36 : f32 to vector<48x1xf32>
    %99 = arith.addf %95, %98 : vector<48x1xf32>
    %100 = math.rsqrt %99 : vector<48x1xf32>
    %101 = vector.broadcast %100 : vector<48x1xf32> to vector<48x32xf32>
    %102 = arith.mulf %97, %101 : vector<48x32xf32>
    %103 = vector.broadcast %83 : vector<1x32xf32> to vector<48x32xf32>
    %104 = arith.mulf %102, %103 : vector<48x32xf32>
    %105 = vector.broadcast %84 : vector<1x32xf32> to vector<48x32xf32>
    %106 = arith.addf %104, %105 : vector<48x32xf32>
    %c0_37 = arith.constant 0 : index
    %c0_38 = arith.constant 0 : index
    %107 = vector.load %arg8[%c0_37, %c0_38] : memref<32x32xf32, #tpu.memory_space<vmem>>, vector<32x32xf32>
    %cst_39 = arith.constant dense<0.000000e+00> : vector<48x32xf32>
    %108 = tpu.matmul %106, %107, %cst_39 {dimension_numbers = #tpu.dot_dimension_numbers<[1], [0], [0], [1], [0, 0, 1, 1], [], []>} : vector<48x32xf32>, vector<32x32xf32>, vector<48x32xf32> -> vector<48x32xf32>
    %109 = vector.extract_strided_slice %4 {offsets = [5, 0], sizes = [1, 32], strides = [1, 1]} : vector<16x32xf32> to vector<1x32xf32>
    %110 = vector.broadcast %109 : vector<1x32xf32> to vector<48x32xf32>
    %111 = arith.addf %108, %110 : vector<48x32xf32>
    %cst_40 = arith.constant 0.000000e+00 : f32
    %112 = vector.broadcast %cst_40 : f32 to vector<48x32xf32>
    %113 = arith.maximumf %111, %112 : vector<48x32xf32>
    %c0_41 = arith.constant 0 : index
    %c0_42 = arith.constant 0 : index
    %114 = vector.load %arg9[%c0_41, %c0_42] : memref<32x32xf32, #tpu.memory_space<vmem>>, vector<32x32xf32>
    %cst_43 = arith.constant dense<0.000000e+00> : vector<48x32xf32>
    %115 = tpu.matmul %113, %114, %cst_43 {dimension_numbers = #tpu.dot_dimension_numbers<[1], [0], [0], [1], [0, 0, 1, 1], [], []>} : vector<48x32xf32>, vector<32x32xf32>, vector<48x32xf32> -> vector<48x32xf32>
    %116 = vector.extract_strided_slice %4 {offsets = [6, 0], sizes = [1, 32], strides = [1, 1]} : vector<16x32xf32> to vector<1x32xf32>
    %117 = vector.broadcast %116 : vector<1x32xf32> to vector<48x32xf32>
    %118 = arith.addf %115, %117 : vector<48x32xf32>
    %119 = arith.addf %118, %106 : vector<48x32xf32>
    %120 = vector.extract_strided_slice %4 {offsets = [9, 0], sizes = [1, 32], strides = [1, 1]} : vector<16x32xf32> to vector<1x32xf32>
    %121 = vector.extract_strided_slice %4 {offsets = [10, 0], sizes = [1, 32], strides = [1, 1]} : vector<16x32xf32> to vector<1x32xf32>
    %cst_44 = arith.constant dense<0.000000e+00> : vector<48xf32>
    %122 = vector.multi_reduction <add>, %119, %cst_44 [1] : vector<48x32xf32> to vector<48xf32>
    %123 = vector.shape_cast %122 : vector<48xf32> to vector<48x1xf32>
    %cst_45 = arith.constant 3.200000e+01 : f32
    %124 = vector.broadcast %cst_45 : f32 to vector<48x1xf32>
    %125 = arith.divf %123, %124 : vector<48x1xf32>
    %126 = vector.broadcast %125 : vector<48x1xf32> to vector<48x32xf32>
    %127 = arith.subf %119, %126 : vector<48x32xf32>
    %128 = arith.mulf %127, %127 : vector<48x32xf32>
    %cst_46 = arith.constant dense<0.000000e+00> : vector<48xf32>
    %129 = vector.multi_reduction <add>, %128, %cst_46 [1] : vector<48x32xf32> to vector<48xf32>
    %130 = vector.shape_cast %129 : vector<48xf32> to vector<48x1xf32>
    %cst_47 = arith.constant 3.200000e+01 : f32
    %131 = vector.broadcast %cst_47 : f32 to vector<48x1xf32>
    %132 = arith.divf %130, %131 : vector<48x1xf32>
    %133 = vector.broadcast %125 : vector<48x1xf32> to vector<48x32xf32>
    %134 = arith.subf %119, %133 : vector<48x32xf32>
    %cst_48 = arith.constant 9.99999974E-6 : f32
    %135 = vector.broadcast %cst_48 : f32 to vector<48x1xf32>
    %136 = arith.addf %132, %135 : vector<48x1xf32>
    %137 = math.rsqrt %136 : vector<48x1xf32>
    %138 = vector.broadcast %137 : vector<48x1xf32> to vector<48x32xf32>
    %139 = arith.mulf %134, %138 : vector<48x32xf32>
    %140 = vector.broadcast %120 : vector<1x32xf32> to vector<48x32xf32>
    %141 = arith.mulf %139, %140 : vector<48x32xf32>
    %142 = vector.broadcast %121 : vector<1x32xf32> to vector<48x32xf32>
    %143 = arith.addf %141, %142 : vector<48x32xf32>
    %144 = vector.shape_cast %143 : vector<48x32xf32> to vector<3x16x32xf32>
    %145 = vector.extract_strided_slice %4 {offsets = [11, 0], sizes = [1, 32], strides = [1, 1]} : vector<16x32xf32> to vector<1x32xf32>
    %146 = vector.shape_cast %145 : vector<1x32xf32> to vector<1x1x32xf32>
    %147 = vector.broadcast %146 : vector<1x1x32xf32> to vector<3x16x32xf32>
    %148 = arith.mulf %144, %147 : vector<3x16x32xf32>
    %cst_49 = arith.constant dense<0.000000e+00> : vector<3x16xf32>
    %149 = vector.multi_reduction <add>, %148, %cst_49 [2] : vector<3x16x32xf32> to vector<3x16xf32>
    %150 = vector.shape_cast %149 : vector<3x16xf32> to vector<1x48xf32>
    %151 = vector.extract_strided_slice %4 {offsets = [12, 0], sizes = [1, 1], strides = [1, 1]} : vector<16x32xf32> to vector<1x1xf32>
    %152 = vector.broadcast %151 : vector<1x1xf32> to vector<1x48xf32>
    %153 = arith.addf %150, %152 : vector<1x48xf32>
    %154 = arith.negf %153 : vector<1x48xf32>
    %155 = math.exp %154 : vector<1x48xf32>
    %cst_50 = arith.constant 1.000000e+00 : f32
    %156 = vector.broadcast %cst_50 : f32 to vector<1x48xf32>
    %157 = arith.addf %156, %155 : vector<1x48xf32>
    %158 = arith.divf %156, %157 : vector<1x48xf32>
    %c0_51 = arith.constant 0 : index
    %c0_52 = arith.constant 0 : index
    %c0_53 = arith.constant 0 : index
    %159 = vector.load %arg11[%c0_51, %c0_52, %c0_53] : memref<1x1x48xf32, #tpu.memory_space<vmem>>, vector<1x1x48xf32>
    %160 = vector.shape_cast %159 : vector<1x1x48xf32> to vector<1x48xf32>
    %161 = vector.shape_cast %158 : vector<1x48xf32> to vector<1x1x48xf32>
    tpu.vector_store %arg11[%c0_51, %c0_52, %c0_53], %161 {strides = array<i32>} : memref<1x1x48xf32, #tpu.memory_space<vmem>>, vector<1x1x48xf32>,
    return
  }
  func.func @transform_0(%arg0: i32) -> (i32, i32, i32) {
    %c0_i32 = arith.constant 0 : i32
    %c0_i32_0 = arith.constant 0 : i32
    %c0_i32_1 = arith.constant 0 : i32
    return %arg0, %c0_i32, %c0_i32_0 : i32, i32, i32
  }
  func.func @transform_1(%arg0: i32) -> (i32, i32, i32) {
    %c0_i32 = arith.constant 0 : i32
    %c0_i32_0 = arith.constant 0 : i32
    %c0_i32_1 = arith.constant 0 : i32
    return %arg0, %c0_i32, %c0_i32_0 : i32, i32, i32
  }
  func.func @transform_2(%arg0: i32) -> (i32, i32) {
    %c0_i32 = arith.constant 0 : i32
    %c0_i32_0 = arith.constant 0 : i32
    %c0_i32_1 = arith.constant 0 : i32
    return %c0_i32, %c0_i32_0 : i32, i32
  }
  func.func @transform_3(%arg0: i32) -> (i32, i32) {
    %c0_i32 = arith.constant 0 : i32
    %c0_i32_0 = arith.constant 0 : i32
    %c0_i32_1 = arith.constant 0 : i32
    return %c0_i32, %c0_i32_0 : i32, i32
  }
  func.func @transform_4(%arg0: i32) -> (i32, i32) {
    %c0_i32 = arith.constant 0 : i32
    %c0_i32_0 = arith.constant 0 : i32
    %c0_i32_1 = arith.constant 0 : i32
    return %c0_i32, %c0_i32_0 : i32, i32
  }
  func.func @transform_5(%arg0: i32) -> (i32, i32) {
    %c0_i32 = arith.constant 0 : i32
    %c0_i32_0 = arith.constant 0 : i32
    %c0_i32_1 = arith.constant 0 : i32
    return %c0_i32, %c0_i32_0 : i32, i32
  }
  func.func @transform_6(%arg0: i32) -> (i32, i32) {
    %c0_i32 = arith.constant 0 : i32
    %c0_i32_0 = arith.constant 0 : i32
    %c0_i32_1 = arith.constant 0 : i32
    return %c0_i32, %c0_i32_0 : i32, i32
  }
  func.func @transform_7(%arg0: i32) -> (i32, i32) {
    %c0_i32 = arith.constant 0 : i32
    %c0_i32_0 = arith.constant 0 : i32
    %c0_i32_1 = arith.constant 0 : i32
    return %c0_i32, %c0_i32_0 : i32, i32
  }
  func.func @transform_8(%arg0: i32) -> (i32, i32) {
    %c0_i32 = arith.constant 0 : i32
    %c0_i32_0 = arith.constant 0 : i32
    %c0_i32_1 = arith.constant 0 : i32
    return %c0_i32, %c0_i32_0 : i32, i32
  }
  func.func @transform_9(%arg0: i32) -> (i32, i32) {
    %c0_i32 = arith.constant 0 : i32
    %c0_i32_0 = arith.constant 0 : i32
    %c0_i32_1 = arith.constant 0 : i32
    return %c0_i32, %c0_i32_0 : i32, i32
  }
  func.func @transform_10(%arg0: i32) -> (i32, i32, i32) {
    %c0_i32 = arith.constant 0 : i32
    %c0_i32_0 = arith.constant 0 : i32
    %c0_i32_1 = arith.constant 0 : i32
    return %arg0, %c0_i32, %c0_i32_0 : i32, i32, i32
  }
}

</mosaic_0001>

<llo_original>
// kernel: tpu_custom_call.1
$region0: #{tpu_custom_call.1}
  #allocation0 [shape = 'u32[]', space=smem, size = 0x4, offset = 0x4, fixed_abs, tag = 'smem constant byte address 0x4 - core index']
  #allocation1 [shape = 'u32[144,128]{1,0:T(1,128)}', space=vmem, size = 0x12000, scoped, tag = 'internal scratch']
  %s0 = inlined_call_operand.hbm [shape: f32[6,16,32], index: 0, kind: input, shape index: {}]
  %s1 = inlined_call_operand.hbm [shape: f32[6,16,32], index: 1, kind: input, shape index: {}]
  %s2 = inlined_call_operand.hbm [shape: f32[32,32], index: 2, kind: input, shape index: {}]
  %s3 = inlined_call_operand.hbm [shape: f32[32,32], index: 3, kind: input, shape index: {}]
  %s4 = inlined_call_operand.hbm [shape: f32[32,32], index: 4, kind: input, shape index: {}]
  %s5 = inlined_call_operand.hbm [shape: f32[32,32], index: 5, kind: input, shape index: {}]
  %s6 = inlined_call_operand.hbm [shape: f32[32,32], index: 6, kind: input, shape index: {}]
  %s7 = inlined_call_operand.hbm [shape: f32[32,32], index: 7, kind: input, shape index: {}]
  %s8 = inlined_call_operand.hbm [shape: f32[32,32], index: 8, kind: input, shape index: {}]
  %s9 = inlined_call_operand.vmem [shape: f32[16,32], index: 9, kind: input, shape index: {}]
  %s10 = inlined_call_operand.hbm [shape: f32[2,1,48], index: 10, kind: output, shape index: {}]
  %s11 = sld [smem:[#allocation0]]
  $region109: #{tpu_custom_call.1} parent=0
    _
  %s13 = ssub.s32 1, %s11
  %s14 = scalar_select 0, %s13, %s11
  $region1: #{tpu_custom_call.1} parent=0
    #allocation2 [shape = 'u8[49152]{0}', space=vmem, size = 0xc000, scoped, tag = 'input window, operand 0']
    #allocation3 [shape = 's32[2]{0}', space=sflag, size = 0x8, scoped, tag = 'scoped memory for tpu_custom_call.1']
    #allocation4 [shape = 's32[2]{0}', space=sflag, size = 0x8, scoped, tag = 'scoped memory for tpu_custom_call.1']
    #allocation5 [shape = 'u8[49152]{0}', space=vmem, size = 0xc000, scoped, tag = 'input window, operand 1']
    #allocation6 [shape = 's32[2]{0}', space=sflag, size = 0x8, scoped, tag = 'scoped memory for tpu_custom_call.1']
    #allocation7 [shape = 'u8[16384]{0}', space=vmem, size = 0x4000, scoped, tag = 'input window, operand 2, single buffered']
    #allocation8 [shape = 'u8[16384]{0}', space=vmem, size = 0x4000, scoped, tag = 'input window, operand 3, single buffered']
    #allocation9 [shape = 's32[1]{0}', space=sflag, size = 0x4, scoped, tag = 'scoped memory for tpu_custom_call.1']
    #allocation10 [shape = 'u8[16384]{0}', space=vmem, size = 0x4000, scoped, tag = 'input window, operand 4, single buffered']
    #allocation11 [shape = 'u8[16384]{0}', space=vmem, size = 0x4000, scoped, tag = 'input window, operand 5, single buffered']
    #allocation12 [shape = 's32[1]{0}', space=sflag, size = 0x4, scoped, tag = 'scoped memory for tpu_custom_call.1']
    #allocation13 [shape = 'u8[16384]{0}', space=vmem, size = 0x4000, scoped, tag = 'input window, operand 6, single buffered']
    #allocation14 [shape = 'u8[16384]{0}', space=vmem, size = 0x4000, scoped, tag = 'input window, operand 7, single buffered']
    #allocation15 [shape = 's32[1]{0}', space=sflag, size = 0x4, scoped, tag = 'scoped memory for tpu_custom_call.1']
    #allocation16 [shape = 'u8[16384]{0}', space=vmem, size = 0x4000, scoped, tag = 'input window, operand 8, single buffered']
    #allocation17 [shape = 'u8[1024]{0}', space=vmem, size = 0x400, scoped, tag = 'output window, operand 0']
    %15 = vsyncpa [#allocation3], 0
    %s16 = scalar_lea.sflag [#allocation3], 1
    %17 = vsyncpa %s16, 0
    %18 = vsyncpa [#allocation6], 0
    %s19 = scalar_lea.sflag [#allocation6], 1
    %20 = vsyncpa %s19, 0
    %21 = vsyncpa [#allocation9], 0
    %22 = vsyncpa [#allocation12], 0
    %23 = vsyncpa [#allocation15], 0
    %24 = vsyncpa [#allocation4], 0
    %s25 = scalar_lea.sflag [#allocation4], 1
    %26 = vsyncpa %s25, 0
    loop: start=0, step=1, limit=4
    $region2: #{tpu_custom_call.1} parent=1 // loop_pre_header
      _
    $region3: #{tpu_custom_call.1} parent=1 // loop_header
      %s28 = sphi 0, %s32
      %p29 = scmp.ge.s32.totalorder %s28, 4
      %s38 = sphi 0, %s40
      %s41 = sphi 0, %s38
      %s42 = sphi 0, %s41
      %s58 = sphi 0, %s42
      %s64 = sphi 0, %s66
      %s67 = sphi 0, %s64
      %s68 = sphi 0, %s67
      %s84 = sphi 0, %s68
      %s88 = sphi 0, %s88
      %s90 = sphi 0, %s88
      %s91 = sphi 0, %s90
      %s105 = sphi 0, %s91
      %s109 = sphi 0, %s109
      %s111 = sphi 0, %s109
      %s112 = sphi 0, %s111
      %s126 = sphi 0, %s112
      %s130 = sphi 0, %s130
      %s132 = sphi 0, %s130
      %s133 = sphi 0, %s132
      %s147 = sphi 0, %s133
      %s151 = sphi 0, %s151
      %s153 = sphi 0, %s151
      %s154 = sphi 0, %s153
      %s168 = sphi 0, %s154
      %s172 = sphi 0, %s172
      %s174 = sphi 0, %s172
      %s175 = sphi 0, %s174
      %s189 = sphi 0, %s175
      %s193 = sphi 0, %s193
      %s195 = sphi 0, %s193
      %s196 = sphi 0, %s195
      %s210 = sphi 0, %s196
      %s214 = sphi 0, %s214
      %s216 = sphi 0, %s214
      %s217 = sphi 0, %s216
      %s231 = sphi 0, %s217
      %s235 = sphi 0, %s235
      %s237 = sphi 0, %s235
      %s238 = sphi 0, %s237
      %s252 = sphi 0, %s238
      %s258 = sphi 0, %s260
      %s261 = sphi 0, %s258
      %s262 = sphi 0, %s261
      %s278 = sphi 0, %s262
    $region4: #{tpu_custom_call.1} parent=1 // loop_header_branch
      %31 = sbr.rel (%p29) target = $region8
    $region5: #{tpu_custom_call.1} parent=1 // loop_body
      %s33 = ssub.s32 %s28, 1
      %s34 = ssub.s32 %s28, 2
      %s35 = sadd.s32 %s28, 1
      %s36 = ssub.s32 %s28, %s35
      %p37 = scmp.eq.s32.totalorder %s36, 0
      %s39 = sadd.s32 %s38, 1
      %s40 = scalar_select %p37, %s38, %s39
      %p43 = pneg %p37
      %p44 = scmp.eq.s32.totalorder %s28, 1
      %p45 = por %p43, %p44
      %p46 = scmp.ne.s32.totalorder %s38, %s41
      %p47 = scmp.eq.s32.totalorder %s28, 0
      %p48 = por %p46, %p47
      %p49 = scmp.ne.s32.totalorder %s38, %s41
      %p50 = scmp.eq.s32.totalorder %s33, 1
      %p51 = por %p49, %p50
      %p52 = scmp.ne.s32.totalorder %s41, %s42
      %p53 = scmp.eq.s32.totalorder %s33, 0
      %p54 = por %p52, %p53
      %p55 = scmp.ne.s32.totalorder %s41, %s42
      %p56 = scmp.eq.s32.totalorder %s34, 1
      %p57 = por %p55, %p56
      %p59 = scmp.ne.s32.totalorder %s42, %s58
      %p60 = scmp.eq.s32.totalorder %s34, 0
      %p61 = por %p59, %p60
      %s62 = ssub.s32 %s28, %s35
      %p63 = scmp.eq.s32.totalorder %s62, 0
      %s65 = sadd.s32 %s64, 1
      %s66 = scalar_select %p63, %s64, %s65
      %p69 = pneg %p63
      %p70 = scmp.eq.s32.totalorder %s28, 1
      %p71 = por %p69, %p70
      %p72 = scmp.ne.s32.totalorder %s64, %s67
      %p73 = scmp.eq.s32.totalorder %s28, 0
      %p74 = por %p72, %p73
      %p75 = scmp.ne.s32.totalorder %s64, %s67
      %p76 = scmp.eq.s32.totalorder %s33, 1
      %p77 = por %p75, %p76
      %p78 = scmp.ne.s32.totalorder %s67, %s68
      %p79 = scmp.eq.s32.totalorder %s33, 0
      %p80 = por %p78, %p79
      %p81 = scmp.ne.s32.totalorder %s67, %s68
      %p82 = scmp.eq.s32.totalorder %s34, 1
      %p83 = por %p81, %p82
      %p85 = scmp.ne.s32.totalorder %s68, %s84
      %p86 = scmp.eq.s32.totalorder %s34, 0
      %p87 = por %p85, %p86
      %s89 = sadd.s32 %s88, 1
      %p92 = scmp.eq.s32.totalorder %s28, 1
      %p93 = scmp.ne.s32.totalorder %s88, %s90
      %p94 = scmp.eq.s32.totalorder %s28, 0
      %p95 = por %p93, %p94
      %p96 = scmp.ne.s32.totalorder %s88, %s90
      %p97 = scmp.eq.s32.totalorder %s33, 1
      %p98 = por %p96, %p97
      %p99 = scmp.ne.s32.totalorder %s90, %s91
      %p100 = scmp.eq.s32.totalorder %s33, 0
      %p101 = por %p99, %p100
      %p102 = scmp.ne.s32.totalorder %s90, %s91
      %p103 = scmp.eq.s32.totalorder %s34, 1
      %p104 = por %p102, %p103
      %p106 = scmp.ne.s32.totalorder %s91, %s105
      %p107 = scmp.eq.s32.totalorder %s34, 0
      %p108 = por %p106, %p107
      %s110 = sadd.s32 %s109, 1
      %p113 = scmp.eq.s32.totalorder %s28, 1
      %p114 = scmp.ne.s32.totalorder %s109, %s111
      %p115 = scmp.eq.s32.totalorder %s28, 0
      %p116 = por %p114, %p115
      %p117 = scmp.ne.s32.totalorder %s109, %s111
      %p118 = scmp.eq.s32.totalorder %s33, 1
      %p119 = por %p117, %p118
      %p120 = scmp.ne.s32.totalorder %s111, %s112
      %p121 = scmp.eq.s32.totalorder %s33, 0
      %p122 = por %p120, %p121
      %p123 = scmp.ne.s32.totalorder %s111, %s112
      %p124 = scmp.eq.s32.totalorder %s34, 1
      %p125 = por %p123, %p124
      %p127 = scmp.ne.s32.totalorder %s112, %s126
      %p128 = scmp.eq.s32.totalorder %s34, 0
      %p129 = por %p127, %p128
      %s131 = sadd.s32 %s130, 1
      %p134 = scmp.eq.s32.totalorder %s28, 1
      %p135 = scmp.ne.s32.totalorder %s130, %s132
      %p136 = scmp.eq.s32.totalorder %s28, 0
      %p137 = por %p135, %p136
      %p138 = scmp.ne.s32.totalorder %s130, %s132
      %p139 = scmp.eq.s32.totalorder %s33, 1
      %p140 = por %p138, %p139
      %p141 = scmp.ne.s32.totalorder %s132, %s133
      %p142 = scmp.eq.s32.totalorder %s33, 0
      %p143 = por %p141, %p142
      %p144 = scmp.ne.s32.totalorder %s132, %s133
      %p145 = scmp.eq.s32.totalorder %s34, 1
      %p146 = por %p144, %p145
      %p148 = scmp.ne.s32.totalorder %s133, %s147
      %p149 = scmp.eq.s32.totalorder %s34, 0
      %p150 = por %p148, %p149
      %s152 = sadd.s32 %s151, 1
      %p155 = scmp.eq.s32.totalorder %s28, 1
      %p156 = scmp.ne.s32.totalorder %s151, %s153
      %p157 = scmp.eq.s32.totalorder %s28, 0
      %p158 = por %p156, %p157
      %p159 = scmp.ne.s32.totalorder %s151, %s153
      %p160 = scmp.eq.s32.totalorder %s33, 1
      %p161 = por %p159, %p160
      %p162 = scmp.ne.s32.totalorder %s153, %s154
      %p163 = scmp.eq.s32.totalorder %s33, 0
      %p164 = por %p162, %p163
      %p165 = scmp.ne.s32.totalorder %s153, %s154
      %p166 = scmp.eq.s32.totalorder %s34, 1
      %p167 = por %p165, %p166
      %p169 = scmp.ne.s32.totalorder %s154, %s168
      %p170 = scmp.eq.s32.totalorder %s34, 0
      %p171 = por %p169, %p170
      %s173 = sadd.s32 %s172, 1
      %p176 = scmp.eq.s32.totalorder %s28, 1
      %p177 = scmp.ne.s32.totalorder %s172, %s174
      %p178 = scmp.eq.s32.totalorder %s28, 0
      %p179 = por %p177, %p178
      %p180 = scmp.ne.s32.totalorder %s172, %s174
      %p181 = scmp.eq.s32.totalorder %s33, 1
      %p182 = por %p180, %p181
      %p183 = scmp.ne.s32.totalorder %s174, %s175
      %p184 = scmp.eq.s32.totalorder %s33, 0
      %p185 = por %p183, %p184
      %p186 = scmp.ne.s32.totalorder %s174, %s175
      %p187 = scmp.eq.s32.totalorder %s34, 1
      %p188 = por %p186, %p187
      %p190 = scmp.ne.s32.totalorder %s175, %s189
      %p191 = scmp.eq.s32.totalorder %s34, 0
      %p192 = por %p190, %p191
      %s194 = sadd.s32 %s193, 1
      %p197 = scmp.eq.s32.totalorder %s28, 1
      %p198 = scmp.ne.s32.totalorder %s193, %s195
      %p199 = scmp.eq.s32.totalorder %s28, 0
      %p200 = por %p198, %p199
      %p201 = scmp.ne.s32.totalorder %s193, %s195
      %p202 = scmp.eq.s32.totalorder %s33, 1
      %p203 = por %p201, %p202
      %p204 = scmp.ne.s32.totalorder %s195, %s196
      %p205 = scmp.eq.s32.totalorder %s33, 0
      %p206 = por %p204, %p205
      %p207 = scmp.ne.s32.totalorder %s195, %s196
      %p208 = scmp.eq.s32.totalorder %s34, 1
      %p209 = por %p207, %p208
      %p211 = scmp.ne.s32.totalorder %s196, %s210
      %p212 = scmp.eq.s32.totalorder %s34, 0
      %p213 = por %p211, %p212
      %s215 = sadd.s32 %s214, 1
      %p218 = scmp.eq.s32.totalorder %s28, 1
      %p219 = scmp.ne.s32.totalorder %s214, %s216
      %p220 = scmp.eq.s32.totalorder %s28, 0
      %p221 = por %p219, %p220
      %p222 = scmp.ne.s32.totalorder %s214, %s216
      %p223 = scmp.eq.s32.totalorder %s33, 1
      %p224 = por %p222, %p223
      %p225 = scmp.ne.s32.totalorder %s216, %s217
      %p226 = scmp.eq.s32.totalorder %s33, 0
      %p227 = por %p225, %p226
      %p228 = scmp.ne.s32.totalorder %s216, %s217
      %p229 = scmp.eq.s32.totalorder %s34, 1
      %p230 = por %p228, %p229
      %p232 = scmp.ne.s32.totalorder %s217, %s231
      %p233 = scmp.eq.s32.totalorder %s34, 0
      %p234 = por %p232, %p233
      %s236 = sadd.s32 %s235, 1
      %p239 = scmp.eq.s32.totalorder %s28, 1
      %p240 = scmp.ne.s32.totalorder %s235, %s237
      %p241 = scmp.eq.s32.totalorder %s28, 0
      %p242 = por %p240, %p241
      %p243 = scmp.ne.s32.totalorder %s235, %s237
      %p244 = scmp.eq.s32.totalorder %s33, 1
      %p245 = por %p243, %p244
      %p246 = scmp.ne.s32.totalorder %s237, %s238
      %p247 = scmp.eq.s32.totalorder %s33, 0
      %p248 = por %p246, %p247
      %p249 = scmp.ne.s32.totalorder %s237, %s238
      %p250 = scmp.eq.s32.totalorder %s34, 1
      %p251 = por %p249, %p250
      %p253 = scmp.ne.s32.totalorder %s238, %s252
      %p254 = scmp.eq.s32.totalorder %s34, 0
      %p255 = por %p253, %p254
      %s256 = ssub.s32 %s28, %s35
      %p257 = scmp.eq.s32.totalorder %s256, 0
      %s259 = sadd.s32 %s258, 1
      %s260 = scalar_select %p257, %s258, %s259
      %p263 = pneg %p257
      %p264 = scmp.eq.s32.totalorder %s28, 1
      %p265 = por %p263, %p264
      %p266 = scmp.ne.s32.totalorder %s258, %s261
      %p267 = scmp.eq.s32.totalorder %s28, 0
      %p268 = por %p266, %p267
      %p269 = scmp.ne.s32.totalorder %s258, %s261
      %p270 = scmp.eq.s32.totalorder %s33, 1
      %p271 = por %p269, %p270
      %p272 = scmp.ne.s32.totalorder %s261, %s262
      %p273 = scmp.eq.s32.totalorder %s33, 0
      %p274 = por %p272, %p273
      %p275 = scmp.ne.s32.totalorder %s261, %s262
      %p276 = scmp.eq.s32.totalorder %s34, 1
      %p277 = por %p275, %p276
      %p279 = scmp.ne.s32.totalorder %s262, %s278
      %p280 = scmp.eq.s32.totalorder %s34, 0
      %p281 = por %p279, %p280
      %p282 = scmp.le.s32.totalorder 1, %s28
      %p283 = scmp.lt.s32.totalorder %s28, 3
      %p284 = pnand %p282, %p283
      %p285 = pneg %p284
      // Predicated region
      $region9: #{tpu_custom_call.1} parent=5 // pred_check
        _
      $region10: #{tpu_custom_call.1} parent=5 // pred_check_branch
        %287 = sbr.rel (%p284) target = $region12
      $region11: #{tpu_custom_call.1} parent=5 // pred_region
        %s288 = ssub.s32 %s28, 1
        // Predicated region
        $region13: #{tpu_custom_call.1} parent=11 // pred_check
          %p289 = pneg %p101
        $region14: #{tpu_custom_call.1} parent=11 // pred_check_branch
          %291 = sbr.rel (%p289) target = $region16
        $region15: #{tpu_custom_call.1} parent=11 // pred_region
          %s293 = ssub.s32 512, 512
          %294 = vsyncadd [#allocation6], %s293
          %s295 = sshll.u32 [#allocation7], 4
          %s296 = int_to_ptr.vmem [resolvable:$true] %s295
          %301 = dma.hbm_to_vmem [thread:$0]  %s2, 512, %s296, [#allocation6], 128, 128, 8
        $region16: #{tpu_custom_call.1} parent=11 // pred_fallthru
          _
        // Predicated region
        $region17: #{tpu_custom_call.1} parent=11 // pred_check
          %p302 = pneg %p122
        $region18: #{tpu_custom_call.1} parent=11 // pred_check_branch
          %304 = sbr.rel (%p302) target = $region20
        $region19: #{tpu_custom_call.1} parent=11 // pred_region
          %s306 = ssub.s32 512, 512
          %307 = vsyncadd [#allocation9], %s306
          %s308 = sshll.u32 [#allocation8], 4
          %s309 = int_to_ptr.vmem [resolvable:$true] %s308
          %314 = dma.hbm_to_vmem [thread:$0]  %s3, 512, %s309, [#allocation9], 128, 128, 8
        $region20: #{tpu_custom_call.1} parent=11 // pred_fallthru
          _
        // Predicated region
        $region21: #{tpu_custom_call.1} parent=11 // pred_check
          %p315 = pneg %p143
        $region22: #{tpu_custom_call.1} parent=11 // pred_check_branch
          %317 = sbr.rel (%p315) target = $region24
        $region23: #{tpu_custom_call.1} parent=11 // pred_region
          %s319 = ssub.s32 512, 512
          %320 = vsyncadd [#allocation9], %s319
          %s321 = sshll.u32 [#allocation10], 4
          %s322 = int_to_ptr.vmem [resolvable:$true] %s321
          %327 = dma.hbm_to_vmem [thread:$0]  %s4, 512, %s322, [#allocation9], 128, 128, 8
        $region24: #{tpu_custom_call.1} parent=11 // pred_fallthru
          _
        // Predicated region
        $region25: #{tpu_custom_call.1} parent=11 // pred_check
          %p328 = pneg %p164
        $region26: #{tpu_custom_call.1} parent=11 // pred_check_branch
          %330 = sbr.rel (%p328) target = $region28
        $region27: #{tpu_custom_call.1} parent=11 // pred_region
          %s332 = ssub.s32 512, 512
          %333 = vsyncadd [#allocation12], %s332
          %s334 = sshll.u32 [#allocation11], 4
          %s335 = int_to_ptr.vmem [resolvable:$true] %s334
          %340 = dma.hbm_to_vmem [thread:$0]  %s5, 512, %s335, [#allocation12], 128, 128, 8
        $region28: #{tpu_custom_call.1} parent=11 // pred_fallthru
          _
        // Predicated region
        $region29: #{tpu_custom_call.1} parent=11 // pred_check
          %p341 = pneg %p185
        $region30: #{tpu_custom_call.1} parent=11 // pred_check_branch
          %343 = sbr.rel (%p341) target = $region32
        $region31: #{tpu_custom_call.1} parent=11 // pred_region
          %s345 = ssub.s32 512, 512
          %346 = vsyncadd [#allocation12], %s345
          %s347 = sshll.u32 [#allocation13], 4
          %s348 = int_to_ptr.vmem [resolvable:$true] %s347
          %353 = dma.hbm_to_vmem [thread:$0]  %s6, 512, %s348, [#allocation12], 128, 128, 8
        $region32: #{tpu_custom_call.1} parent=11 // pred_fallthru
          _
        // Predicated region
        $region33: #{tpu_custom_call.1} parent=11 // pred_check
          %p354 = pneg %p206
        $region34: #{tpu_custom_call.1} parent=11 // pred_check_branch
          %356 = sbr.rel (%p354) target = $region36
        $region35: #{tpu_custom_call.1} parent=11 // pred_region
          %s358 = ssub.s32 512, 512
          %359 = vsyncadd [#allocation15], %s358
          %s360 = sshll.u32 [#allocation14], 4
          %s361 = int_to_ptr.vmem [resolvable:$true] %s360
          %366 = dma.hbm_to_vmem [thread:$0]  %s7, 512, %s361, [#allocation15], 128, 128, 8
        $region36: #{tpu_custom_call.1} parent=11 // pred_fallthru
          _
        // Predicated region
        $region37: #{tpu_custom_call.1} parent=11 // pred_check
          %p367 = pneg %p227
        $region38: #{tpu_custom_call.1} parent=11 // pred_check_branch
          %369 = sbr.rel (%p367) target = $region40
        $region39: #{tpu_custom_call.1} parent=11 // pred_region
          %s371 = ssub.s32 512, 512
          %372 = vsyncadd [#allocation15], %s371
          %s373 = sshll.u32 [#allocation16], 4
          %s374 = int_to_ptr.vmem [resolvable:$true] %s373
          %379 = dma.hbm_to_vmem [thread:$0]  %s8, 512, %s374, [#allocation15], 128, 128, 8
        $region40: #{tpu_custom_call.1} parent=11 // pred_fallthru
          _
        // Predicated region
        $region41: #{tpu_custom_call.1} parent=11 // pred_check
          %p380 = pneg %p248
        $region42: #{tpu_custom_call.1} parent=11 // pred_check_branch
          %382 = sbr.rel (%p380) target = $region44
        $region43: #{tpu_custom_call.1} parent=11 // pred_region
          _
        $region44: #{tpu_custom_call.1} parent=11 // pred_fallthru
          _
      $region12: #{tpu_custom_call.1} parent=5 // pred_fallthru
        _
      %p383 = scmp.lt.s32.totalorder %s28, 2
      // Predicated region
      $region45: #{tpu_custom_call.1} parent=5 // pred_check
        %p384 = pneg %p383
      $region46: #{tpu_custom_call.1} parent=5 // pred_check_branch
        %386 = sbr.rel (%p384) target = $region48
      $region47: #{tpu_custom_call.1} parent=5 // pred_region
        // Predicated region
        $region49: #{tpu_custom_call.1} parent=47 // pred_check
          %p387 = pneg %p48
        $region50: #{tpu_custom_call.1} parent=47 // pred_check_branch
          %389 = sbr.rel (%p387) target = $region52
        $region51: #{tpu_custom_call.1} parent=47 // pred_region
          %s390 = sand.u32 %s38, 1
          %s391 = scalar_lea.sflag [#allocation3], %s390
          %s392 = sand.u32 %s38, 1
          %s393 = smul.addr %s392, 48
          %s394 = scalar_lea.vmem [#allocation2], %s393
          %s395 = smul.u32 3, %s28
          %s397 = ssub.s32 768, 768
          %398 = vsyncadd %s391, %s397
          %s399 = smul.addr %s395, 2
          %s400 = smul.addr %s399, 128
          %s401 = scalar_lea.hbm %s0, %s400
          %s402 = sshll.u32 %s394, 4
          %s403 = int_to_ptr.vmem [resolvable:$true] %s402
          %408 = dma.hbm_to_vmem [thread:$0]  %s401, 768, %s403, %s391, 128, 128, 8
        $region52: #{tpu_custom_call.1} parent=47 // pred_fallthru
          _
        // Predicated region
        $region53: #{tpu_custom_call.1} parent=47 // pred_check
          %p409 = pneg %p74
        $region54: #{tpu_custom_call.1} parent=47 // pred_check_branch
          %411 = sbr.rel (%p409) target = $region56
        $region55: #{tpu_custom_call.1} parent=47 // pred_region
          %s412 = sand.u32 %s28, 1
          %s413 = scalar_lea.sflag [#allocation6], %s412
          %s414 = sand.u32 %s64, 1
          %s415 = smul.addr %s414, 48
          %s416 = scalar_lea.vmem [#allocation5], %s415
          %s417 = smul.u32 3, %s28
          %s419 = ssub.s32 768, 768
          %420 = vsyncadd %s413, %s419
          %s421 = smul.addr %s417, 2
          %s422 = smul.addr %s421, 128
          %s423 = scalar_lea.hbm %s1, %s422
          %s424 = sshll.u32 %s416, 4
          %s425 = int_to_ptr.vmem [resolvable:$true] %s424
          %430 = dma.hbm_to_vmem [thread:$0]  %s423, 768, %s425, %s413, 128, 128, 8
        $region56: #{tpu_custom_call.1} parent=47 // pred_fallthru
          _
      $region48: #{tpu_custom_call.1} parent=5 // pred_fallthru
        _
      %p431 = scmp.le.s32.totalorder 1, %s28
      %p432 = scmp.lt.s32.totalorder %s28, 3
      %p433 = pnand %p431, %p432
      %p434 = pneg %p433
      // Predicated region
      $region57: #{tpu_custom_call.1} parent=5 // pred_check
        _
      $region58: #{tpu_custom_call.1} parent=5 // pred_check_branch
        %436 = sbr.rel (%p433) target = $region60
      $region59: #{tpu_custom_call.1} parent=5 // pred_region
        %s437 = ssub.s32 %s28, 1
        %s438 = sand.u32 %s41, 1
        %s439 = scalar_lea.sflag [#allocation3], %s438
        %s440 = sand.u32 %s41, 1
        %s441 = smul.addr %s440, 48
        %s442 = scalar_lea.vmem [#allocation2], %s441
        // Predicated region
        $region61: #{tpu_custom_call.1} parent=59 // pred_check
          %p443 = pneg %p54
        $region62: #{tpu_custom_call.1} parent=59 // pred_check_branch
          %445 = sbr.rel (%p443) target = $region64
        $region63: #{tpu_custom_call.1} parent=59 // pred_region
          %446 = dma.done %s439, 768
        $region64: #{tpu_custom_call.1} parent=59 // pred_fallthru
          _
        %s447 = sand.u32 %s33, 1
        %s448 = scalar_lea.sflag [#allocation6], %s447
        %s449 = sand.u32 %s67, 1
        %s450 = smul.addr %s449, 48
        %s451 = scalar_lea.vmem [#allocation5], %s450
        // Predicated region
        $region65: #{tpu_custom_call.1} parent=59 // pred_check
          %p452 = pneg %p80
        $region66: #{tpu_custom_call.1} parent=59 // pred_check_branch
          %454 = sbr.rel (%p452) target = $region68
        $region67: #{tpu_custom_call.1} parent=59 // pred_region
          %455 = dma.done %s448, 768
        $region68: #{tpu_custom_call.1} parent=59 // pred_fallthru
          _
        // Predicated region
        $region69: #{tpu_custom_call.1} parent=59 // pred_check
          %p456 = pneg %p101
        $region70: #{tpu_custom_call.1} parent=59 // pred_check_branch
          %458 = sbr.rel (%p456) target = $region72
        $region71: #{tpu_custom_call.1} parent=59 // pred_region
          %459 = dma.done [#allocation6], 512
        $region72: #{tpu_custom_call.1} parent=59 // pred_fallthru
          _
        // Predicated region
        $region73: #{tpu_custom_call.1} parent=59 // pred_check
          %p460 = pneg %p122
        $region74: #{tpu_custom_call.1} parent=59 // pred_check_branch
          %462 = sbr.rel (%p460) target = $region76
        $region75: #{tpu_custom_call.1} parent=59 // pred_region
          %463 = dma.done [#allocation9], 512
        $region76: #{tpu_custom_call.1} parent=59 // pred_fallthru
          _
        // Predicated region
        $region77: #{tpu_custom_call.1} parent=59 // pred_check
          %p464 = pneg %p143
        $region78: #{tpu_custom_call.1} parent=59 // pred_check_branch
          %466 = sbr.rel (%p464) target = $region80
        $region79: #{tpu_custom_call.1} parent=59 // pred_region
          %467 = dma.done [#allocation9], 512
        $region80: #{tpu_custom_call.1} parent=59 // pred_fallthru
          _
        // Predicated region
        $region81: #{tpu_custom_call.1} parent=59 // pred_check
          %p468 = pneg %p164
        $region82: #{tpu_custom_call.1} parent=59 // pred_check_branch
          %470 = sbr.rel (%p468) target = $region84
        $region83: #{tpu_custom_call.1} parent=59 // pred_region
          %471 = dma.done [#allocation12], 512
        $region84: #{tpu_custom_call.1} parent=59 // pred_fallthru
          _
        // Predicated region
        $region85: #{tpu_custom_call.1} parent=59 // pred_check
          %p472 = pneg %p185
        $region86: #{tpu_custom_call.1} parent=59 // pred_check_branch
          %474 = sbr.rel (%p472) target = $region88
        $region87: #{tpu_custom_call.1} parent=59 // pred_region
          %475 = dma.done [#allocation12], 512
        $region88: #{tpu_custom_call.1} parent=59 // pred_fallthru
          _
        // Predicated region
        $region89: #{tpu_custom_call.1} parent=59 // pred_check
          %p476 = pneg %p206
        $region90: #{tpu_custom_call.1} parent=59 // pred_check_branch
          %478 = sbr.rel (%p476) target = $region92
        $region91: #{tpu_custom_call.1} parent=59 // pred_region
          %479 = dma.done [#allocation15], 512
        $region92: #{tpu_custom_call.1} parent=59 // pred_fallthru
          _
        // Predicated region
        $region93: #{tpu_custom_call.1} parent=59 // pred_check
          %p480 = pneg %p227
        $region94: #{tpu_custom_call.1} parent=59 // pred_check_branch
          %482 = sbr.rel (%p480) target = $region96
        $region95: #{tpu_custom_call.1} parent=59 // pred_region
          %483 = dma.done [#allocation15], 512
        $region96: #{tpu_custom_call.1} parent=59 // pred_fallthru
          _
        %s484 = sand.u32 %s41, 1
        %s485 = scalar_lea.sflag [#allocation3], %s484
        %s486 = sand.u32 %s41, 1
        %s487 = smul.addr %s486, 48
        %s488 = scalar_lea.vmem [#allocation2], %s487
        %p489 = pneg %p54
        %p490 = pneg %p51
        %s491 = sand.u32 %s33, 1
        %s492 = scalar_lea.sflag [#allocation6], %s491
        %s493 = sand.u32 %s67, 1
        %s494 = smul.addr %s493, 48
        %s495 = scalar_lea.vmem [#allocation5], %s494
        %p496 = pneg %p80
        %p497 = pneg %p77
        %p498 = pneg %p101
        %p499 = pneg %p98
        %p500 = pneg %p122
        %p501 = pneg %p119
        %p502 = pneg %p143
        %p503 = pneg %p140
        %p504 = pneg %p164
        %p505 = pneg %p161
        %p506 = pneg %p185
        %p507 = pneg %p182
        %p508 = pneg %p206
        %p509 = pneg %p203
        %p510 = pneg %p227
        %p511 = pneg %p224
        %p512 = pneg %p248
        %p513 = pneg %p245
        %p514 = pneg %p274
        %p515 = pneg %p271
        %s516 = sand.u32 %s261, 1
        %s517 = scalar_lea.sflag [#allocation4], %s516
        %s518 = sand.u32 %s261, 1
        %s519 = scalar_lea.vmem [#allocation17], %s518
        %s520 = smul.u32 3, %s33
        %s521 = smul.u32 3, %s33
        %v522 = vld [vmem:[%s442] sm:$0xff]
        %v523 = vld [vmem:[%s442 + $0x8] sm:$0xff]
        %v524 = vld [vmem:[%s442 + $0x10] sm:$0xff]
        %v525 = vld [vmem:[%s442 + $0x18] sm:$0xff]
        %v526 = vld [vmem:[%s442 + $0x20] sm:$0xff]
        %v527 = vld [vmem:[%s442 + $0x28] sm:$0xff]
        %v528 = vld [vmem:[%s451] sm:$0xff]
        %v529 = vld [vmem:[%s451 + $0x8] sm:$0xff]
        %v530 = vld [vmem:[%s451 + $0x10] sm:$0xff]
        %v531 = vld [vmem:[%s451 + $0x18] sm:$0xff]
        %v532 = vld [vmem:[%s451 + $0x20] sm:$0xff]
        %v533 = vld [vmem:[%s451 + $0x28] sm:$0xff]
        %v534 = vld [vmem:[%s9] sm:$0xff]
        %v535 = vld [vmem:[%s9 + $0x8] sm:$0xff]
        %v536 = vld [vmem:[#allocation7] sm:$0xff]
        %v537 = vld [vmem:[#allocation7 + $0x8] sm:$0xff]
        %v538 = vld [vmem:[#allocation7 + $0x10] sm:$0xff]
        %v539 = vld [vmem:[#allocation7 + $0x18] sm:$0xff]
        %v540 = vlaneseq
        %v541 = vshrl.u32 %v540, 7
        %v542 = vsub.s32 0, %v541
        %v543 = vrot.slane %v534, %v542
        %vm544 = vcmask 261120
        %v546 = vsel %vm544, %v522, 0
        %v549 = vsel %vm544, %v523, 0
        %v552 = vsel %vm544, %v524, 0
        %v555 = vsel %vm544, %v525, 0
        %v558 = vsel %vm544, %v526, 0
        %v561 = vsel %vm544, %v527, 0
        %563 = vmatprep.subr.mxu0 0.0
        %564 = vmatpush1.msra.mxu0 %v536
        %565 = vmatprep.subr.mxu0 0.0
        %566 = vmatpush1.msra.mxu0 %v537
        %567 = vmatprep.subr.mxu0 0.0
        %568 = vmatpush1.msra.mxu0 %v538
        %569 = vmatprep.subr.mxu0 0.0
        %570 = vmatpush1.msra.mxu0 %v539
        %571 = vmatprep.subr.mxu0 0.0
        %572 = vmatpush1.msra.mxu0 0.0
        %573 = vmatprep.subr.mxu0 0.0
        %574 = vmatpush1.msra.mxu0 0.0
        %575 = vmatprep.subr.mxu0 0.0
        %576 = vmatpush1.msra.mxu0 0.0
        %577 = vmatprep.subr.mxu0 0.0
        %578 = vmatpush1.msra.mxu0 0.0
        %579 = vmatprep.subr.mxu0 0.0
        %580 = vmatpush1.msra.mxu0 0.0
        %581 = vmatprep.subr.mxu0 0.0
        %582 = vmatpush1.msra.mxu0 0.0
        %583 = vmatprep.subr.mxu0 0.0
        %584 = vmatpush1.msra.mxu0 0.0
        %585 = vmatprep.subr.mxu0 0.0
        %586 = vmatpush1.msra.mxu0 0.0
        %587 = vmatprep.subr.mxu0 0.0
        %588 = vmatpush1.msra.mxu0 0.0
        %589 = vmatprep.subr.mxu0 0.0
        %590 = vmatpush1.msra.mxu0 0.0
        %591 = vmatprep.subr.mxu0 0.0
        %592 = vmatpush1.msra.mxu0 0.0
        %593 = vmatprep.subr.mxu0 0.0
        %594 = vmatpush1.msra.mxu0 0.0
        %595 = vmatprep.subr.mxu0 0.0
        %596 = vmatpush1.msra.mxu0 0.0
        %597 = vmatprep.subr.mxu0 0.0
        %598 = vmatpush1.msra.mxu0 0.0
        %599 = vmatprep.subr.mxu0 0.0
        %600 = vmatpush1.msra.mxu0 0.0
        %601 = vmatprep.subr.mxu0 0.0
        %602 = vmatpush1.msra.mxu0 0.0
        %603 = vmatprep.subr.mxu0 0.0
        %604 = vmatpush1.msra.mxu0 0.0
        %605 = vmatprep.subr.mxu0 0.0
        %606 = vmatpush1.msra.mxu0 0.0
        %607 = vmatprep.subr.mxu0 0.0
        %608 = vmatpush1.msra.mxu0 0.0
        %609 = vmatprep.subr.mxu0 0.0
        %610 = vmatpush1.msra.mxu0 0.0
        %611 = vmatprep.subr.mxu0 0.0
        %612 = vmatpush1.msra.mxu0 0.0
        %613 = vmatprep.subr.mxu0 0.0
        %614 = vmatpush1.msra.mxu0 0.0
        %615 = vmatprep.subr.mxu0 0.0
        %616 = vmatpush1.msra.mxu0 0.0
        %617 = vmatprep.subr.mxu0 0.0
        %618 = vmatpush1.msra.mxu0 0.0
        %619 = vmatprep.subr.mxu0 0.0
        %620 = vmatpush1.msra.mxu0 0.0
        %621 = vmatprep.subr.mxu0 0.0
        %622 = vmatpush1.msra.mxu0 0.0
        %623 = vmatprep.subr.mxu0 0.0
        %624 = vmatpush1.msra.mxu0 0.0
        %625 = vmatprep.subr.mxu0 0.0
        %626 = vmatpush1.msra.mxu0 0.0
        %627 = vmatprep.mubr.f32.mxu0 0.0
        %628 = vmatmul.mubr.f32.gmra.mrb[0].mxu0 %v546
        %v629 = vpop.f32.mrb[0].mxu0
        %v630 = vadd.f32 %v543, %v629
        %v631 = vpop.f32.mrb[0].mxu0
        %632 = vmatprep.mubr.f32.mxu0 0.0
        %633 = vmatmul.mubr.f32.gmra.mrb[0].mxu0 %v549
        %v634 = vpop.f32.mrb[0].mxu0
        %v635 = vadd.f32 %v543, %v634
        %v636 = vpop.f32.mrb[0].mxu0
        %637 = vmatprep.mubr.f32.mxu0 0.0
        %638 = vmatmul.mubr.f32.gmra.mrb[0].mxu0 %v552
        %v639 = vpop.f32.mrb[0].mxu0
        %v640 = vadd.f32 %v543, %v639
        %v641 = vpop.f32.mrb[0].mxu0
        %642 = vmatprep.mubr.f32.mxu0 0.0
        %643 = vmatmul.mubr.f32.gmra.mrb[0].mxu0 %v555
        %v644 = vpop.f32.mrb[0].mxu0
        %v645 = vadd.f32 %v543, %v644
        %v646 = vpop.f32.mrb[0].mxu0
        %647 = vmatprep.mubr.f32.mxu0 0.0
        %648 = vmatmul.mubr.f32.gmra.mrb[0].mxu0 %v558
        %v649 = vpop.f32.mrb[0].mxu0
        %v650 = vadd.f32 %v543, %v649
        %v651 = vpop.f32.mrb[0].mxu0
        %652 = vmatprep.mubr.f32.mxu0 0.0
        %653 = vmatmul.mubr.f32.gmra.mrb[0].mxu0 %v561
        %v654 = vpop.f32.mrb[0].mxu0
        %v655 = vadd.f32 %v543, %v654
        %v656 = vpop.f32.mrb[0].mxu0
        %657 = vdwg.mxu0
        %v658 = vld [vmem:[#allocation8] sm:$0xff]
        %v659 = vld [vmem:[#allocation8 + $0x8] sm:$0xff]
        %v660 = vld [vmem:[#allocation8 + $0x10] sm:$0xff]
        %v661 = vld [vmem:[#allocation8 + $0x18] sm:$0xff]
        %v662 = vlaneseq
        %v663 = vshrl.u32 %v662, 7
        %v664 = vsub.s32 1, %v663
        %v665 = vrot.slane %v534, %v664
        %v667 = vsel %vm544, %v630, 0
        %v670 = vsel %vm544, %v635, 0
        %v673 = vsel %vm544, %v640, 0
        %v676 = vsel %vm544, %v645, 0
        %v679 = vsel %vm544, %v650, 0
        %v682 = vsel %vm544, %v655, 0
        %684 = vmatprep.subr.mxu0 0.0
        %685 = vmatpush1.msra.mxu0 %v658
        %686 = vmatprep.subr.mxu0 0.0
        %687 = vmatpush1.msra.mxu0 %v659
        %688 = vmatprep.subr.mxu0 0.0
        %689 = vmatpush1.msra.mxu0 %v660
        %690 = vmatprep.subr.mxu0 0.0
        %691 = vmatpush1.msra.mxu0 %v661
        %692 = vmatprep.subr.mxu0 0.0
        %693 = vmatpush1.msra.mxu0 0.0
        %694 = vmatprep.subr.mxu0 0.0
        %695 = vmatpush1.msra.mxu0 0.0
        %696 = vmatprep.subr.mxu0 0.0
        %697 = vmatpush1.msra.mxu0 0.0
        %698 = vmatprep.subr.mxu0 0.0
        %699 = vmatpush1.msra.mxu0 0.0
        %700 = vmatprep.subr.mxu0 0.0
        %701 = vmatpush1.msra.mxu0 0.0
        %702 = vmatprep.subr.mxu0 0.0
        %703 = vmatpush1.msra.mxu0 0.0
        %704 = vmatprep.subr.mxu0 0.0
        %705 = vmatpush1.msra.mxu0 0.0
        %706 = vmatprep.subr.mxu0 0.0
        %707 = vmatpush1.msra.mxu0 0.0
        %708 = vmatprep.subr.mxu0 0.0
        %709 = vmatpush1.msra.mxu0 0.0
        %710 = vmatprep.subr.mxu0 0.0
        %711 = vmatpush1.msra.mxu0 0.0
        %712 = vmatprep.subr.mxu0 0.0
        %713 = vmatpush1.msra.mxu0 0.0
        %714 = vmatprep.subr.mxu0 0.0
        %715 = vmatpush1.msra.mxu0 0.0
        %716 = vmatprep.subr.mxu0 0.0
        %717 = vmatpush1.msra.mxu0 0.0
        %718 = vmatprep.subr.mxu0 0.0
        %719 = vmatpush1.msra.mxu0 0.0
        %720 = vmatprep.subr.mxu0 0.0
        %721 = vmatpush1.msra.mxu0 0.0
        %722 = vmatprep.subr.mxu0 0.0
        %723 = vmatpush1.msra.mxu0 0.0
        %724 = vmatprep.subr.mxu0 0.0
        %725 = vmatpush1.msra.mxu0 0.0
        %726 = vmatprep.subr.mxu0 0.0
        %727 = vmatpush1.msra.mxu0 0.0
        %728 = vmatprep.subr.mxu0 0.0
        %729 = vmatpush1.msra.mxu0 0.0
        %730 = vmatprep.subr.mxu0 0.0
        %731 = vmatpush1.msra.mxu0 0.0
        %732 = vmatprep.subr.mxu0 0.0
        %733 = vmatpush1.msra.mxu0 0.0
        %734 = vmatprep.subr.mxu0 0.0
        %735 = vmatpush1.msra.mxu0 0.0
        %736 = vmatprep.subr.mxu0 0.0
        %737 = vmatpush1.msra.mxu0 0.0
        %738 = vmatprep.subr.mxu0 0.0
        %739 = vmatpush1.msra.mxu0 0.0
        %740 = vmatprep.subr.mxu0 0.0
        %741 = vmatpush1.msra.mxu0 0.0
        %742 = vmatprep.subr.mxu0 0.0
        %743 = vmatpush1.msra.mxu0 0.0
        %744 = vmatprep.subr.mxu0 0.0
        %745 = vmatpush1.msra.mxu0 0.0
        %746 = vmatprep.subr.mxu0 0.0
        %747 = vmatpush1.msra.mxu0 0.0
        %748 = vmatprep.mubr.f32.mxu0 0.0
        %749 = vmatmul.mubr.f32.gmra.mrb[0].mxu0 %v667
        %v750 = vpop.f32.mrb[0].mxu0
        %v751 = vadd.f32 %v665, %v750
        %v752 = vpop.f32.mrb[0].mxu0
        %753 = vmatprep.mubr.f32.mxu0 0.0
        %754 = vmatmul.mubr.f32.gmra.mrb[0].mxu0 %v670
        %v755 = vpop.f32.mrb[0].mxu0
        %v756 = vadd.f32 %v665, %v755
        %v757 = vpop.f32.mrb[0].mxu0
        %758 = vmatprep.mubr.f32.mxu0 0.0
        %759 = vmatmul.mubr.f32.gmra.mrb[0].mxu0 %v673
        %v760 = vpop.f32.mrb[0].mxu0
        %v761 = vadd.f32 %v665, %v760
        %v762 = vpop.f32.mrb[0].mxu0
        %763 = vmatprep.mubr.f32.mxu0 0.0
        %764 = vmatmul.mubr.f32.gmra.mrb[0].mxu0 %v676
        %v765 = vpop.f32.mrb[0].mxu0
        %v766 = vadd.f32 %v665, %v765
        %v767 = vpop.f32.mrb[0].mxu0
        %768 = vmatprep.mubr.f32.mxu0 0.0
        %769 = vmatmul.mubr.f32.gmra.mrb[0].mxu0 %v679
        %v770 = vpop.f32.mrb[0].mxu0
        %v771 = vadd.f32 %v665, %v770
        %v772 = vpop.f32.mrb[0].mxu0
        %773 = vmatprep.mubr.f32.mxu0 0.0
        %774 = vmatmul.mubr.f32.gmra.mrb[0].mxu0 %v682
        %v775 = vpop.f32.mrb[0].mxu0
        %v776 = vadd.f32 %v665, %v775
        %v777 = vpop.f32.mrb[0].mxu0
        %778 = vdwg.mxu0
        %v779 = vmul.f32 %v751, 0.25
        %v780 = vmul.f32 %v756, 0.25
        %v781 = vmul.f32 %v761, 0.25
        %v782 = vmul.f32 %v766, 0.25
        %v783 = vmul.f32 %v771, 0.25
        %v784 = vmul.f32 %v776, 0.25
        %v785 = vld [vmem:[#allocation10] sm:$0xff]
        %v786 = vld [vmem:[#allocation10 + $0x8] sm:$0xff]
        %v787 = vld [vmem:[#allocation10 + $0x10] sm:$0xff]
        %v788 = vld [vmem:[#allocation10 + $0x18] sm:$0xff]
        %v789 = vlaneseq
        %v790 = vshrl.u32 %v789, 7
        %v791 = vsub.s32 2, %v790
        %v792 = vrot.slane %v534, %v791
        %v794 = vsel %vm544, %v528, 0
        %v797 = vsel %vm544, %v529, 0
        %v800 = vsel %vm544, %v530, 0
        %v803 = vsel %vm544, %v531, 0
        %v806 = vsel %vm544, %v532, 0
        %v809 = vsel %vm544, %v533, 0
        %811 = vmatprep.subr.mxu0 0.0
        %812 = vmatpush1.msra.mxu0 %v785
        %813 = vmatprep.subr.mxu0 0.0
        %814 = vmatpush1.msra.mxu0 %v786
        %815 = vmatprep.subr.mxu0 0.0
        %816 = vmatpush1.msra.mxu0 %v787
        %817 = vmatprep.subr.mxu0 0.0
        %818 = vmatpush1.msra.mxu0 %v788
        %819 = vmatprep.subr.mxu0 0.0
        %820 = vmatpush1.msra.mxu0 0.0
        %821 = vmatprep.subr.mxu0 0.0
        %822 = vmatpush1.msra.mxu0 0.0
        %823 = vmatprep.subr.mxu0 0.0
        %824 = vmatpush1.msra.mxu0 0.0
        %825 = vmatprep.subr.mxu0 0.0
        %826 = vmatpush1.msra.mxu0 0.0
        %827 = vmatprep.subr.mxu0 0.0
        %828 = vmatpush1.msra.mxu0 0.0
        %829 = vmatprep.subr.mxu0 0.0
        %830 = vmatpush1.msra.mxu0 0.0
        %831 = vmatprep.subr.mxu0 0.0
        %832 = vmatpush1.msra.mxu0 0.0
        %833 = vmatprep.subr.mxu0 0.0
        %834 = vmatpush1.msra.mxu0 0.0
        %835 = vmatprep.subr.mxu0 0.0
        %836 = vmatpush1.msra.mxu0 0.0
        %837 = vmatprep.subr.mxu0 0.0
        %838 = vmatpush1.msra.mxu0 0.0
        %839 = vmatprep.subr.mxu0 0.0
        %840 = vmatpush1.msra.mxu0 0.0
        %841 = vmatprep.subr.mxu0 0.0
        %842 = vmatpush1.msra.mxu0 0.0
        %843 = vmatprep.subr.mxu0 0.0
        %844 = vmatpush1.msra.mxu0 0.0
        %845 = vmatprep.subr.mxu0 0.0
        %846 = vmatpush1.msra.mxu0 0.0
        %847 = vmatprep.subr.mxu0 0.0
        %848 = vmatpush1.msra.mxu0 0.0
        %849 = vmatprep.subr.mxu0 0.0
        %850 = vmatpush1.msra.mxu0 0.0
        %851 = vmatprep.subr.mxu0 0.0
        %852 = vmatpush1.msra.mxu0 0.0
        %853 = vmatprep.subr.mxu0 0.0
        %854 = vmatpush1.msra.mxu0 0.0
        %855 = vmatprep.subr.mxu0 0.0
        %856 = vmatpush1.msra.mxu0 0.0
        %857 = vmatprep.subr.mxu0 0.0
        %858 = vmatpush1.msra.mxu0 0.0
        %859 = vmatprep.subr.mxu0 0.0
        %860 = vmatpush1.msra.mxu0 0.0
        %861 = vmatprep.subr.mxu0 0.0
        %862 = vmatpush1.msra.mxu0 0.0
        %863 = vmatprep.subr.mxu0 0.0
        %864 = vmatpush1.msra.mxu0 0.0
        %865 = vmatprep.subr.mxu0 0.0
        %866 = vmatpush1.msra.mxu0 0.0
        %867 = vmatprep.subr.mxu0 0.0
        %868 = vmatpush1.msra.mxu0 0.0
        %869 = vmatprep.subr.mxu0 0.0
        %870 = vmatpush1.msra.mxu0 0.0
        %871 = vmatprep.subr.mxu0 0.0
        %872 = vmatpush1.msra.mxu0 0.0
        %873 = vmatprep.subr.mxu0 0.0
        %874 = vmatpush1.msra.mxu0 0.0
        %875 = vmatprep.mubr.f32.mxu0 0.0
        %876 = vmatmul.mubr.f32.gmra.mrb[0].mxu0 %v794
        %v877 = vpop.f32.mrb[0].mxu0
        %v878 = vadd.f32 %v792, %v877
        %v879 = vpop.f32.mrb[0].mxu0
        %880 = vmatprep.mubr.f32.mxu0 0.0
        %881 = vmatmul.mubr.f32.gmra.mrb[0].mxu0 %v797
        %v882 = vpop.f32.mrb[0].mxu0
        %v883 = vadd.f32 %v792, %v882
        %v884 = vpop.f32.mrb[0].mxu0
        %885 = vmatprep.mubr.f32.mxu0 0.0
        %886 = vmatmul.mubr.f32.gmra.mrb[0].mxu0 %v800
        %v887 = vpop.f32.mrb[0].mxu0
        %v888 = vadd.f32 %v792, %v887
        %v889 = vpop.f32.mrb[0].mxu0
        %890 = vmatprep.mubr.f32.mxu0 0.0
        %891 = vmatmul.mubr.f32.gmra.mrb[0].mxu0 %v803
        %v892 = vpop.f32.mrb[0].mxu0
        %v893 = vadd.f32 %v792, %v892
        %v894 = vpop.f32.mrb[0].mxu0
        %895 = vmatprep.mubr.f32.mxu0 0.0
        %896 = vmatmul.mubr.f32.gmra.mrb[0].mxu0 %v806
        %v897 = vpop.f32.mrb[0].mxu0
        %v898 = vadd.f32 %v792, %v897
        %v899 = vpop.f32.mrb[0].mxu0
        %900 = vmatprep.mubr.f32.mxu0 0.0
        %901 = vmatmul.mubr.f32.gmra.mrb[0].mxu0 %v809
        %v902 = vpop.f32.mrb[0].mxu0
        %v903 = vadd.f32 %v792, %v902
        %v904 = vpop.f32.mrb[0].mxu0
        %905 = vdwg.mxu0
        %v906 = vld [vmem:[#allocation11] sm:$0xff]
        %v907 = vld [vmem:[#allocation11 + $0x8] sm:$0xff]
        %v908 = vld [vmem:[#allocation11 + $0x10] sm:$0xff]
        %v909 = vld [vmem:[#allocation11 + $0x18] sm:$0xff]
        %v910 = vlaneseq
        %v911 = vshrl.u32 %v910, 7
        %v912 = vsub.s32 3, %v911
        %v913 = vrot.slane %v534, %v912
        %914 = vmatprep.subr.mxu0 0.0
        %915 = vmatpush1.msra.mxu0 %v906
        %916 = vmatprep.subr.mxu0 0.0
        %917 = vmatpush1.msra.mxu0 %v907
        %918 = vmatprep.subr.mxu0 0.0
        %919 = vmatpush1.msra.mxu0 %v908
        %920 = vmatprep.subr.mxu0 0.0
        %921 = vmatpush1.msra.mxu0 %v909
        %922 = vmatprep.subr.mxu0 0.0
        %923 = vmatpush1.msra.mxu0 0.0
        %924 = vmatprep.subr.mxu0 0.0
        %925 = vmatpush1.msra.mxu0 0.0
        %926 = vmatprep.subr.mxu0 0.0
        %927 = vmatpush1.msra.mxu0 0.0
        %928 = vmatprep.subr.mxu0 0.0
        %929 = vmatpush1.msra.mxu0 0.0
        %930 = vmatprep.subr.mxu0 0.0
        %931 = vmatpush1.msra.mxu0 0.0
        %932 = vmatprep.subr.mxu0 0.0
        %933 = vmatpush1.msra.mxu0 0.0
        %934 = vmatprep.subr.mxu0 0.0
        %935 = vmatpush1.msra.mxu0 0.0
        %936 = vmatprep.subr.mxu0 0.0
        %937 = vmatpush1.msra.mxu0 0.0
        %938 = vmatprep.subr.mxu0 0.0
        %939 = vmatpush1.msra.mxu0 0.0
        %940 = vmatprep.subr.mxu0 0.0
        %941 = vmatpush1.msra.mxu0 0.0
        %942 = vmatprep.subr.mxu0 0.0
        %943 = vmatpush1.msra.mxu0 0.0
        %944 = vmatprep.subr.mxu0 0.0
        %945 = vmatpush1.msra.mxu0 0.0
        %946 = vmatprep.subr.mxu0 0.0
        %947 = vmatpush1.msra.mxu0 0.0
        %948 = vmatprep.subr.mxu0 0.0
        %949 = vmatpush1.msra.mxu0 0.0
        %950 = vmatprep.subr.mxu0 0.0
        %951 = vmatpush1.msra.mxu0 0.0
        %952 = vmatprep.subr.mxu0 0.0
        %953 = vmatpush1.msra.mxu0 0.0
        %954 = vmatprep.subr.mxu0 0.0
        %955 = vmatpush1.msra.mxu0 0.0
        %956 = vmatprep.subr.mxu0 0.0
        %957 = vmatpush1.msra.mxu0 0.0
        %958 = vmatprep.subr.mxu0 0.0
        %959 = vmatpush1.msra.mxu0 0.0
        %960 = vmatprep.subr.mxu0 0.0
        %961 = vmatpush1.msra.mxu0 0.0
        %962 = vmatprep.subr.mxu0 0.0
        %963 = vmatpush1.msra.mxu0 0.0
        %964 = vmatprep.subr.mxu0 0.0
        %965 = vmatpush1.msra.mxu0 0.0
        %966 = vmatprep.subr.mxu0 0.0
        %967 = vmatpush1.msra.mxu0 0.0
        %968 = vmatprep.subr.mxu0 0.0
        %969 = vmatpush1.msra.mxu0 0.0
        %970 = vmatprep.subr.mxu0 0.0
        %971 = vmatpush1.msra.mxu0 0.0
        %972 = vmatprep.subr.mxu0 0.0
        %973 = vmatpush1.msra.mxu0 0.0
        %974 = vmatprep.subr.mxu0 0.0
        %975 = vmatpush1.msra.mxu0 0.0
        %976 = vmatprep.subr.mxu0 0.0
        %977 = vmatpush1.msra.mxu0 0.0
        %978 = vmatprep.mubr.f32.mxu0 0.0
        %979 = vmatmul.mubr.f32.gmra.mrb[0].mxu0 %v794
        %v980 = vpop.f32.mrb[0].mxu0
        %v981 = vadd.f32 %v913, %v980
        %v982 = vpop.f32.mrb[0].mxu0
        %983 = vmatprep.mubr.f32.mxu0 0.0
        %984 = vmatmul.mubr.f32.gmra.mrb[0].mxu0 %v797
        %v985 = vpop.f32.mrb[0].mxu0
        %v986 = vadd.f32 %v913, %v985
        %v987 = vpop.f32.mrb[0].mxu0
        %988 = vmatprep.mubr.f32.mxu0 0.0
        %989 = vmatmul.mubr.f32.gmra.mrb[0].mxu0 %v800
        %v990 = vpop.f32.mrb[0].mxu0
        %v991 = vadd.f32 %v913, %v990
        %v992 = vpop.f32.mrb[0].mxu0
        %993 = vmatprep.mubr.f32.mxu0 0.0
        %994 = vmatmul.mubr.f32.gmra.mrb[0].mxu0 %v803
        %v995 = vpop.f32.mrb[0].mxu0
        %v996 = vadd.f32 %v913, %v995
        %v997 = vpop.f32.mrb[0].mxu0
        %998 = vmatprep.mubr.f32.mxu0 0.0
        %999 = vmatmul.mubr.f32.gmra.mrb[0].mxu0 %v806
        %v1000 = vpop.f32.mrb[0].mxu0
        %v1001 = vadd.f32 %v913, %v1000
        %v1002 = vpop.f32.mrb[0].mxu0
        %1003 = vmatprep.mubr.f32.mxu0 0.0
        %1004 = vmatmul.mubr.f32.gmra.mrb[0].mxu0 %v809
        %v1005 = vpop.f32.mrb[0].mxu0
        %v1006 = vadd.f32 %v913, %v1005
        %v1007 = vpop.f32.mrb[0].mxu0
        %1008 = vdwg.mxu0
        %v1009 = vlaneseq
        %v1010 = vshrl.u32 %v1009, 7
        %v1011 = vadd.s32 %v1010, 8
        %v1012 = vlaneseq
        %v1013 = vand.u32 %v1012, 127
        %vm1014 = vcmp.gt.s32.totalorder %v1013, %v1010
        %vm1015 = vcmp.gt.s32.totalorder %v1013, %v1011
        %v1016 = vsel %vm1014, -1e+30, 0.0
        %v1017 = vsel %vm1015, -1e+30, 0.0
        %vm1018 = vcmask 130048
        %v1020 = vsel %vm1018, %v779, 0
        %v1023 = vsel %vm1018, %v780, 0
        %v1026 = vsel %vm1018, %v878, 0
        %v1029 = vsel %vm1018, %v883, 0
        %1031 = vmatprep.subr.mxu0 0.0
        %1032 = vmatpush1.xpose.msra.mxu0 %v1026
        %1033 = vmatprep.subr.mxu0 0.0
        %1034 = vmatpush1.xpose.msra.mxu0 %v1029
        %1035 = vmatprep.subr.mxu0 0.0
        %1036 = vmatpush1.xpose.msra.mxu0 0.0
        %1037 = vmatprep.subr.mxu0 0.0
        %1038 = vmatpush1.xpose.msra.mxu0 0.0
        %1039 = vmatprep.subr.mxu0 0.0
        %1040 = vmatpush1.xpose.msra.mxu0 0.0
        %1041 = vmatprep.subr.mxu0 0.0
        %1042 = vmatpush1.xpose.msra.mxu0 0.0
        %1043 = vmatprep.subr.mxu0 0.0
        %1044 = vmatpush1.xpose.msra.mxu0 0.0
        %1045 = vmatprep.subr.mxu0 0.0
        %1046 = vmatpush1.xpose.msra.mxu0 0.0
        %1047 = vmatprep.subr.mxu0 0.0
        %1048 = vmatpush1.xpose.msra.mxu0 0.0
        %1049 = vmatprep.subr.mxu0 0.0
        %1050 = vmatpush1.xpose.msra.mxu0 0.0
        %1051 = vmatprep.subr.mxu0 0.0
        %1052 = vmatpush1.xpose.msra.mxu0 0.0
        %1053 = vmatprep.subr.mxu0 0.0
        %1054 = vmatpush1.xpose.msra.mxu0 0.0
        %1055 = vmatprep.subr.mxu0 0.0
        %1056 = vmatpush1.xpose.msra.mxu0 0.0
        %1057 = vmatprep.subr.mxu0 0.0
        %1058 = vmatpush1.xpose.msra.mxu0 0.0
        %1059 = vmatprep.subr.mxu0 0.0
        %1060 = vmatpush1.xpose.msra.mxu0 0.0
        %1061 = vmatprep.subr.mxu0 0.0
        %1062 = vmatpush1.xpose.msra.mxu0 0.0
        %1063 = vmatprep.subr.mxu0 0.0
        %1064 = vmatpush1.xpose.msra.mxu0 0.0
        %1065 = vmatprep.subr.mxu0 0.0
        %1066 = vmatpush1.xpose.msra.mxu0 0.0
        %1067 = vmatprep.subr.mxu0 0.0
        %1068 = vmatpush1.xpose.msra.mxu0 0.0
        %1069 = vmatprep.subr.mxu0 0.0
        %1070 = vmatpush1.xpose.msra.mxu0 0.0
        %1071 = vmatprep.subr.mxu0 0.0
        %1072 = vmatpush1.xpose.msra.mxu0 0.0
        %1073 = vmatprep.subr.mxu0 0.0
        %1074 = vmatpush1.xpose.msra.mxu0 0.0
        %1075 = vmatprep.subr.mxu0 0.0
        %1076 = vmatpush1.xpose.msra.mxu0 0.0
        %1077 = vmatprep.subr.mxu0 0.0
        %1078 = vmatpush1.xpose.msra.mxu0 0.0
        %1079 = vmatprep.subr.mxu0 0.0
        %1080 = vmatpush1.xpose.msra.mxu0 0.0
        %1081 = vmatprep.subr.mxu0 0.0
        %1082 = vmatpush1.xpose.msra.mxu0 0.0
        %1083 = vmatprep.subr.mxu0 0.0
        %1084 = vmatpush1.xpose.msra.mxu0 0.0
        %1085 = vmatprep.subr.mxu0 0.0
        %1086 = vmatpush1.xpose.msra.mxu0 0.0
        %1087 = vmatprep.subr.mxu0 0.0
        %1088 = vmatpush1.xpose.msra.mxu0 0.0
        %1089 = vmatprep.subr.mxu0 0.0
        %1090 = vmatpush1.xpose.msra.mxu0 0.0
        %1091 = vmatprep.subr.mxu0 0.0
        %1092 = vmatpush1.xpose.msra.mxu0 0.0
        %1093 = vmatprep.subr.mxu0 0.0
        %1094 = vmatpush1.xpose.msra.mxu0 0.0
        %1095 = vmatprep.mubr.f32.mxu0 0.0
        %1096 = vmatmul.mubr.f32.gmra.mrb[0].mxu0 %v1020
        %v1097 = vpop.f32.mrb[0].mxu0
        %v1098 = vadd.f32 %v1016, %v1097
        %v1099 = vpop.f32.mrb[0].mxu0
        %1100 = vmatprep.mubr.f32.mxu0 0.0
        %1101 = vmatmul.mubr.f32.gmra.mrb[0].mxu0 %v1023
        %v1102 = vpop.f32.mrb[0].mxu0
        %v1103 = vadd.f32 %v1017, %v1102
        %v1104 = vpop.f32.mrb[0].mxu0
        %1105 = vdwg.mxu0
        %v1107 = vsel %vm1018, %v781, 0
        %v1110 = vsel %vm1018, %v782, 0
        %v1113 = vsel %vm1018, %v888, 0
        %v1116 = vsel %vm1018, %v893, 0
        %1118 = vmatprep.subr.mxu0 0.0
        %1119 = vmatpush1.xpose.msra.mxu0 %v1113
        %1120 = vmatprep.subr.mxu0 0.0
        %1121 = vmatpush1.xpose.msra.mxu0 %v1116
        %1122 = vmatprep.subr.mxu0 0.0
        %1123 = vmatpush1.xpose.msra.mxu0 0.0
        %1124 = vmatprep.subr.mxu0 0.0
        %1125 = vmatpush1.xpose.msra.mxu0 0.0
        %1126 = vmatprep.subr.mxu0 0.0
        %1127 = vmatpush1.xpose.msra.mxu0 0.0
        %1128 = vmatprep.subr.mxu0 0.0
        %1129 = vmatpush1.xpose.msra.mxu0 0.0
        %1130 = vmatprep.subr.mxu0 0.0
        %1131 = vmatpush1.xpose.msra.mxu0 0.0
        %1132 = vmatprep.subr.mxu0 0.0
        %1133 = vmatpush1.xpose.msra.mxu0 0.0
        %1134 = vmatprep.subr.mxu0 0.0
        %1135 = vmatpush1.xpose.msra.mxu0 0.0
        %1136 = vmatprep.subr.mxu0 0.0
        %1137 = vmatpush1.xpose.msra.mxu0 0.0
        %1138 = vmatprep.subr.mxu0 0.0
        %1139 = vmatpush1.xpose.msra.mxu0 0.0
        %1140 = vmatprep.subr.mxu0 0.0
        %1141 = vmatpush1.xpose.msra.mxu0 0.0
        %1142 = vmatprep.subr.mxu0 0.0
        %1143 = vmatpush1.xpose.msra.mxu0 0.0
        %1144 = vmatprep.subr.mxu0 0.0
        %1145 = vmatpush1.xpose.msra.mxu0 0.0
        %1146 = vmatprep.subr.mxu0 0.0
        %1147 = vmatpush1.xpose.msra.mxu0 0.0
        %1148 = vmatprep.subr.mxu0 0.0
        %1149 = vmatpush1.xpose.msra.mxu0 0.0
        %1150 = vmatprep.subr.mxu0 0.0
        %1151 = vmatpush1.xpose.msra.mxu0 0.0
        %1152 = vmatprep.subr.mxu0 0.0
        %1153 = vmatpush1.xpose.msra.mxu0 0.0
        %1154 = vmatprep.subr.mxu0 0.0
        %1155 = vmatpush1.xpose.msra.mxu0 0.0
        %1156 = vmatprep.subr.mxu0 0.0
        %1157 = vmatpush1.xpose.msra.mxu0 0.0
        %1158 = vmatprep.subr.mxu0 0.0
        %1159 = vmatpush1.xpose.msra.mxu0 0.0
        %1160 = vmatprep.subr.mxu0 0.0
        %1161 = vmatpush1.xpose.msra.mxu0 0.0
        %1162 = vmatprep.subr.mxu0 0.0
        %1163 = vmatpush1.xpose.msra.mxu0 0.0
        %1164 = vmatprep.subr.mxu0 0.0
        %1165 = vmatpush1.xpose.msra.mxu0 0.0
        %1166 = vmatprep.subr.mxu0 0.0
        %1167 = vmatpush1.xpose.msra.mxu0 0.0
        %1168 = vmatprep.subr.mxu0 0.0
        %1169 = vmatpush1.xpose.msra.mxu0 0.0
        %1170 = vmatprep.subr.mxu0 0.0
        %1171 = vmatpush1.xpose.msra.mxu0 0.0
        %1172 = vmatprep.subr.mxu0 0.0
        %1173 = vmatpush1.xpose.msra.mxu0 0.0
        %1174 = vmatprep.subr.mxu0 0.0
        %1175 = vmatpush1.xpose.msra.mxu0 0.0
        %1176 = vmatprep.subr.mxu0 0.0
        %1177 = vmatpush1.xpose.msra.mxu0 0.0
        %1178 = vmatprep.subr.mxu0 0.0
        %1179 = vmatpush1.xpose.msra.mxu0 0.0
        %1180 = vmatprep.subr.mxu0 0.0
        %1181 = vmatpush1.xpose.msra.mxu0 0.0
        %1182 = vmatprep.mubr.f32.mxu0 0.0
        %1183 = vmatmul.mubr.f32.gmra.mrb[0].mxu0 %v1107
        %v1184 = vpop.f32.mrb[0].mxu0
        %v1185 = vadd.f32 %v1016, %v1184
        %v1186 = vpop.f32.mrb[0].mxu0
        %1187 = vmatprep.mubr.f32.mxu0 0.0
        %1188 = vmatmul.mubr.f32.gmra.mrb[0].mxu0 %v1110
        %v1189 = vpop.f32.mrb[0].mxu0
        %v1190 = vadd.f32 %v1017, %v1189
        %v1191 = vpop.f32.mrb[0].mxu0
        %1192 = vdwg.mxu0
        %v1194 = vsel %vm1018, %v783, 0
        %v1197 = vsel %vm1018, %v784, 0
        %v1200 = vsel %vm1018, %v898, 0
        %v1203 = vsel %vm1018, %v903, 0
        %1205 = vmatprep.subr.mxu0 0.0
        %1206 = vmatpush1.xpose.msra.mxu0 %v1200
        %1207 = vmatprep.subr.mxu0 0.0
        %1208 = vmatpush1.xpose.msra.mxu0 %v1203
        %1209 = vmatprep.subr.mxu0 0.0
        %1210 = vmatpush1.xpose.msra.mxu0 0.0
        %1211 = vmatprep.subr.mxu0 0.0
        %1212 = vmatpush1.xpose.msra.mxu0 0.0
        %1213 = vmatprep.subr.mxu0 0.0
        %1214 = vmatpush1.xpose.msra.mxu0 0.0
        %1215 = vmatprep.subr.mxu0 0.0
        %1216 = vmatpush1.xpose.msra.mxu0 0.0
        %1217 = vmatprep.subr.mxu0 0.0
        %1218 = vmatpush1.xpose.msra.mxu0 0.0
        %1219 = vmatprep.subr.mxu0 0.0
        %1220 = vmatpush1.xpose.msra.mxu0 0.0
        %1221 = vmatprep.subr.mxu0 0.0
        %1222 = vmatpush1.xpose.msra.mxu0 0.0
        %1223 = vmatprep.subr.mxu0 0.0
        %1224 = vmatpush1.xpose.msra.mxu0 0.0
        %1225 = vmatprep.subr.mxu0 0.0
        %1226 = vmatpush1.xpose.msra.mxu0 0.0
        %1227 = vmatprep.subr.mxu0 0.0
        %1228 = vmatpush1.xpose.msra.mxu0 0.0
        %1229 = vmatprep.subr.mxu0 0.0
        %1230 = vmatpush1.xpose.msra.mxu0 0.0
        %1231 = vmatprep.subr.mxu0 0.0
        %1232 = vmatpush1.xpose.msra.mxu0 0.0
        %1233 = vmatprep.subr.mxu0 0.0
        %1234 = vmatpush1.xpose.msra.mxu0 0.0
        %1235 = vmatprep.subr.mxu0 0.0
        %1236 = vmatpush1.xpose.msra.mxu0 0.0
        %1237 = vmatprep.subr.mxu0 0.0
        %1238 = vmatpush1.xpose.msra.mxu0 0.0
        %1239 = vmatprep.subr.mxu0 0.0
        %1240 = vmatpush1.xpose.msra.mxu0 0.0
        %1241 = vmatprep.subr.mxu0 0.0
        %1242 = vmatpush1.xpose.msra.mxu0 0.0
        %1243 = vmatprep.subr.mxu0 0.0
        %1244 = vmatpush1.xpose.msra.mxu0 0.0
        %1245 = vmatprep.subr.mxu0 0.0
        %1246 = vmatpush1.xpose.msra.mxu0 0.0
        %1247 = vmatprep.subr.mxu0 0.0
        %1248 = vmatpush1.xpose.msra.mxu0 0.0
        %1249 = vmatprep.subr.mxu0 0.0
        %1250 = vmatpush1.xpose.msra.mxu0 0.0
        %1251 = vmatprep.subr.mxu0 0.0
        %1252 = vmatpush1.xpose.msra.mxu0 0.0
        %1253 = vmatprep.subr.mxu0 0.0
        %1254 = vmatpush1.xpose.msra.mxu0 0.0
        %1255 = vmatprep.subr.mxu0 0.0
        %1256 = vmatpush1.xpose.msra.mxu0 0.0
        %1257 = vmatprep.subr.mxu0 0.0
        %1258 = vmatpush1.xpose.msra.mxu0 0.0
        %1259 = vmatprep.subr.mxu0 0.0
        %1260 = vmatpush1.xpose.msra.mxu0 0.0
        %1261 = vmatprep.subr.mxu0 0.0
        %1262 = vmatpush1.xpose.msra.mxu0 0.0
        %1263 = vmatprep.subr.mxu0 0.0
        %1264 = vmatpush1.xpose.msra.mxu0 0.0
        %1265 = vmatprep.subr.mxu0 0.0
        %1266 = vmatpush1.xpose.msra.mxu0 0.0
        %1267 = vmatprep.subr.mxu0 0.0
        %1268 = vmatpush1.xpose.msra.mxu0 0.0
        %1269 = vmatprep.mubr.f32.mxu0 0.0
        %1270 = vmatmul.mubr.f32.gmra.mrb[0].mxu0 %v1194
        %v1271 = vpop.f32.mrb[0].mxu0
        %v1272 = vadd.f32 %v1016, %v1271
        %v1273 = vpop.f32.mrb[0].mxu0
        %1274 = vmatprep.mubr.f32.mxu0 0.0
        %1275 = vmatmul.mubr.f32.gmra.mrb[0].mxu0 %v1197
        %v1276 = vpop.f32.mrb[0].mxu0
        %v1277 = vadd.f32 %v1017, %v1276
        %v1278 = vpop.f32.mrb[0].mxu0
        %1279 = vdwg.mxu0
        %v1280 = vsel %vm1018, %v1098, -inf
        %1281 = vmax.xlane.f32.xlu0 %v1280
        %v1282 = vpop.xlane.xlu0 %1281
        %v1283 = vsel %vm1018, %v1103, -inf
        %1284 = vmax.xlane.f32.xlu0 %v1283
        %v1285 = vpop.xlane.xlu0 %1284
        %v1286 = vsel %vm1018, %v1185, -inf
        %1287 = vmax.xlane.f32.xlu0 %v1286
        %v1288 = vpop.xlane.xlu0 %1287
        %v1289 = vsel %vm1018, %v1190, -inf
        %1290 = vmax.xlane.f32.xlu0 %v1289
        %v1291 = vpop.xlane.xlu0 %1290
        %v1292 = vsel %vm1018, %v1272, -inf
        %1293 = vmax.xlane.f32.xlu0 %v1292
        %v1294 = vpop.xlane.xlu0 %1293
        %v1295 = vsel %vm1018, %v1277, -inf
        %1296 = vmax.xlane.f32.xlu0 %v1295
        %v1297 = vpop.xlane.xlu0 %1296
        %v1298 = vsub.f32 %v1098, %v1282
        %v1299 = vsub.f32 %v1103, %v1285
        %v1300 = vsub.f32 %v1185, %v1288
        %v1301 = vsub.f32 %v1190, %v1291
        %v1302 = vsub.f32 %v1272, %v1294
        %v1303 = vsub.f32 %v1277, %v1297
        %v1304 = vmul.f32 %v1298, 1.442695
        %v1305 = vpow.pop %v1304
        %v1306 = vmul.f32 %v1299, 1.442695
        %v1307 = vpow.pop %v1306
        %v1308 = vmul.f32 %v1300, 1.442695
        %v1309 = vpow.pop %v1308
        %v1310 = vmul.f32 %v1301, 1.442695
        %v1311 = vpow.pop %v1310
        %v1312 = vmul.f32 %v1302, 1.442695
        %v1313 = vpow.pop %v1312
        %v1314 = vmul.f32 %v1303, 1.442695
        %v1315 = vpow.pop %v1314
        %v1316 = vsel %vm1018, %v1305, 0.0
        %1317 = vadd.xlane.f32.xlu0 %v1316
        %v1318 = vpop.xlane.xlu0 %1317
        %v1319 = vsel %vm1018, %v1307, 0.0
        %1320 = vadd.xlane.f32.xlu0 %v1319
        %v1321 = vpop.xlane.xlu0 %1320
        %v1322 = vsel %vm1018, %v1309, 0.0
        %1323 = vadd.xlane.f32.xlu0 %v1322
        %v1324 = vpop.xlane.xlu0 %1323
        %v1325 = vsel %vm1018, %v1311, 0.0
        %1326 = vadd.xlane.f32.xlu0 %v1325
        %v1327 = vpop.xlane.xlu0 %1326
        %v1328 = vsel %vm1018, %v1313, 0.0
        %1329 = vadd.xlane.f32.xlu0 %v1328
        %v1330 = vpop.xlane.xlu0 %1329
        %v1331 = vsel %vm1018, %v1315, 0.0
        %1332 = vadd.xlane.f32.xlu0 %v1331
        %v1333 = vpop.xlane.xlu0 %1332
        %v1334 = vrcp.pop %v1318
        %v1335 = vrcp.pop %v1321
        %v1336 = vrcp.pop %v1324
        %v1337 = vrcp.pop %v1327
        %v1338 = vrcp.pop %v1330
        %v1339 = vrcp.pop %v1333
        %v1340 = vmul.f32 %v1305, %v1334
        %v1341 = vmul.f32 %v1307, %v1335
        %v1342 = vmul.f32 %v1309, %v1336
        %v1343 = vmul.f32 %v1311, %v1337
        %v1344 = vmul.f32 %v1313, %v1338
        %v1345 = vmul.f32 %v1315, %v1339
        %v1347 = vsel %vm1018, %v1340, 0
        %v1350 = vsel %vm1018, %v1341, 0
        %1352 = vmatprep.subr.mxu0 0.0
        %1353 = vmatpush1.msra.mxu0 %v981
        %1354 = vmatprep.subr.mxu0 0.0
        %1355 = vmatpush1.msra.mxu0 %v986
        %1356 = vmatprep.subr.mxu0 0.0
        %1357 = vmatpush1.msra.mxu0 0.0
        %1358 = vmatprep.subr.mxu0 0.0
        %1359 = vmatpush1.msra.mxu0 0.0
        %1360 = vmatprep.subr.mxu0 0.0
        %1361 = vmatpush1.msra.mxu0 0.0
        %1362 = vmatprep.subr.mxu0 0.0
        %1363 = vmatpush1.msra.mxu0 0.0
        %1364 = vmatprep.subr.mxu0 0.0
        %1365 = vmatpush1.msra.mxu0 0.0
        %1366 = vmatprep.subr.mxu0 0.0
        %1367 = vmatpush1.msra.mxu0 0.0
        %1368 = vmatprep.subr.mxu0 0.0
        %1369 = vmatpush1.msra.mxu0 0.0
        %1370 = vmatprep.subr.mxu0 0.0
        %1371 = vmatpush1.msra.mxu0 0.0
        %1372 = vmatprep.subr.mxu0 0.0
        %1373 = vmatpush1.msra.mxu0 0.0
        %1374 = vmatprep.subr.mxu0 0.0
        %1375 = vmatpush1.msra.mxu0 0.0
        %1376 = vmatprep.subr.mxu0 0.0
        %1377 = vmatpush1.msra.mxu0 0.0
        %1378 = vmatprep.subr.mxu0 0.0
        %1379 = vmatpush1.msra.mxu0 0.0
        %1380 = vmatprep.subr.mxu0 0.0
        %1381 = vmatpush1.msra.mxu0 0.0
        %1382 = vmatprep.subr.mxu0 0.0
        %1383 = vmatpush1.msra.mxu0 0.0
        %1384 = vmatprep.subr.mxu0 0.0
        %1385 = vmatpush1.msra.mxu0 0.0
        %1386 = vmatprep.subr.mxu0 0.0
        %1387 = vmatpush1.msra.mxu0 0.0
        %1388 = vmatprep.subr.mxu0 0.0
        %1389 = vmatpush1.msra.mxu0 0.0
        %1390 = vmatprep.subr.mxu0 0.0
        %1391 = vmatpush1.msra.mxu0 0.0
        %1392 = vmatprep.subr.mxu0 0.0
        %1393 = vmatpush1.msra.mxu0 0.0
        %1394 = vmatprep.subr.mxu0 0.0
        %1395 = vmatpush1.msra.mxu0 0.0
        %1396 = vmatprep.subr.mxu0 0.0
        %1397 = vmatpush1.msra.mxu0 0.0
        %1398 = vmatprep.subr.mxu0 0.0
        %1399 = vmatpush1.msra.mxu0 0.0
        %1400 = vmatprep.subr.mxu0 0.0
        %1401 = vmatpush1.msra.mxu0 0.0
        %1402 = vmatprep.subr.mxu0 0.0
        %1403 = vmatpush1.msra.mxu0 0.0
        %1404 = vmatprep.subr.mxu0 0.0
        %1405 = vmatpush1.msra.mxu0 0.0
        %1406 = vmatprep.subr.mxu0 0.0
        %1407 = vmatpush1.msra.mxu0 0.0
        %1408 = vmatprep.subr.mxu0 0.0
        %1409 = vmatpush1.msra.mxu0 0.0
        %1410 = vmatprep.subr.mxu0 0.0
        %1411 = vmatpush1.msra.mxu0 0.0
        %1412 = vmatprep.subr.mxu0 0.0
        %1413 = vmatpush1.msra.mxu0 0.0
        %1414 = vmatprep.subr.mxu0 0.0
        %1415 = vmatpush1.msra.mxu0 0.0
        %1416 = vmatprep.mubr.f32.mxu0 0.0
        %1417 = vmatmul.mubr.f32.gmra.mrb[0].mxu0 %v1347
        %v1418 = vpop.f32.mrb[0].mxu0
        %v1419 = vadd.f32 0.0, %v1418
        %v1420 = vpop.f32.mrb[0].mxu0
        %1421 = vmatprep.mubr.f32.mxu0 0.0
        %1422 = vmatmul.mubr.f32.gmra.mrb[0].mxu0 %v1350
        %v1423 = vpop.f32.mrb[0].mxu0
        %v1424 = vadd.f32 0.0, %v1423
        %v1425 = vpop.f32.mrb[0].mxu0
        %1426 = vdwg.mxu0
        %v1428 = vsel %vm1018, %v1342, 0
        %v1431 = vsel %vm1018, %v1343, 0
        %1433 = vmatprep.subr.mxu0 0.0
        %1434 = vmatpush1.msra.mxu0 %v991
        %1435 = vmatprep.subr.mxu0 0.0
        %1436 = vmatpush1.msra.mxu0 %v996
        %1437 = vmatprep.subr.mxu0 0.0
        %1438 = vmatpush1.msra.mxu0 0.0
        %1439 = vmatprep.subr.mxu0 0.0
        %1440 = vmatpush1.msra.mxu0 0.0
        %1441 = vmatprep.subr.mxu0 0.0
        %1442 = vmatpush1.msra.mxu0 0.0
        %1443 = vmatprep.subr.mxu0 0.0
        %1444 = vmatpush1.msra.mxu0 0.0
        %1445 = vmatprep.subr.mxu0 0.0
        %1446 = vmatpush1.msra.mxu0 0.0
        %1447 = vmatprep.subr.mxu0 0.0
        %1448 = vmatpush1.msra.mxu0 0.0
        %1449 = vmatprep.subr.mxu0 0.0
        %1450 = vmatpush1.msra.mxu0 0.0
        %1451 = vmatprep.subr.mxu0 0.0
        %1452 = vmatpush1.msra.mxu0 0.0
        %1453 = vmatprep.subr.mxu0 0.0
        %1454 = vmatpush1.msra.mxu0 0.0
        %1455 = vmatprep.subr.mxu0 0.0
        %1456 = vmatpush1.msra.mxu0 0.0
        %1457 = vmatprep.subr.mxu0 0.0
        %1458 = vmatpush1.msra.mxu0 0.0
        %1459 = vmatprep.subr.mxu0 0.0
        %1460 = vmatpush1.msra.mxu0 0.0
        %1461 = vmatprep.subr.mxu0 0.0
        %1462 = vmatpush1.msra.mxu0 0.0
        %1463 = vmatprep.subr.mxu0 0.0
        %1464 = vmatpush1.msra.mxu0 0.0
        %1465 = vmatprep.subr.mxu0 0.0
        %1466 = vmatpush1.msra.mxu0 0.0
        %1467 = vmatprep.subr.mxu0 0.0
        %1468 = vmatpush1.msra.mxu0 0.0
        %1469 = vmatprep.subr.mxu0 0.0
        %1470 = vmatpush1.msra.mxu0 0.0
        %1471 = vmatprep.subr.mxu0 0.0
        %1472 = vmatpush1.msra.mxu0 0.0
        %1473 = vmatprep.subr.mxu0 0.0
        %1474 = vmatpush1.msra.mxu0 0.0
        %1475 = vmatprep.subr.mxu0 0.0
        %1476 = vmatpush1.msra.mxu0 0.0
        %1477 = vmatprep.subr.mxu0 0.0
        %1478 = vmatpush1.msra.mxu0 0.0
        %1479 = vmatprep.subr.mxu0 0.0
        %1480 = vmatpush1.msra.mxu0 0.0
        %1481 = vmatprep.subr.mxu0 0.0
        %1482 = vmatpush1.msra.mxu0 0.0
        %1483 = vmatprep.subr.mxu0 0.0
        %1484 = vmatpush1.msra.mxu0 0.0
        %1485 = vmatprep.subr.mxu0 0.0
        %1486 = vmatpush1.msra.mxu0 0.0
        %1487 = vmatprep.subr.mxu0 0.0
        %1488 = vmatpush1.msra.mxu0 0.0
        %1489 = vmatprep.subr.mxu0 0.0
        %1490 = vmatpush1.msra.mxu0 0.0
        %1491 = vmatprep.subr.mxu0 0.0
        %1492 = vmatpush1.msra.mxu0 0.0
        %1493 = vmatprep.subr.mxu0 0.0
        %1494 = vmatpush1.msra.mxu0 0.0
        %1495 = vmatprep.subr.mxu0 0.0
        %1496 = vmatpush1.msra.mxu0 0.0
        %1497 = vmatprep.mubr.f32.mxu0 0.0
        %1498 = vmatmul.mubr.f32.gmra.mrb[0].mxu0 %v1428
        %v1499 = vpop.f32.mrb[0].mxu0
        %v1500 = vadd.f32 0.0, %v1499
        %v1501 = vpop.f32.mrb[0].mxu0
        %1502 = vmatprep.mubr.f32.mxu0 0.0
        %1503 = vmatmul.mubr.f32.gmra.mrb[0].mxu0 %v1431
        %v1504 = vpop.f32.mrb[0].mxu0
        %v1505 = vadd.f32 0.0, %v1504
        %v1506 = vpop.f32.mrb[0].mxu0
        %1507 = vdwg.mxu0
        %v1509 = vsel %vm1018, %v1344, 0
        %v1512 = vsel %vm1018, %v1345, 0
        %1514 = vmatprep.subr.mxu0 0.0
        %1515 = vmatpush1.msra.mxu0 %v1001
        %1516 = vmatprep.subr.mxu0 0.0
        %1517 = vmatpush1.msra.mxu0 %v1006
        %1518 = vmatprep.subr.mxu0 0.0
        %1519 = vmatpush1.msra.mxu0 0.0
        %1520 = vmatprep.subr.mxu0 0.0
        %1521 = vmatpush1.msra.mxu0 0.0
        %1522 = vmatprep.subr.mxu0 0.0
        %1523 = vmatpush1.msra.mxu0 0.0
        %1524 = vmatprep.subr.mxu0 0.0
        %1525 = vmatpush1.msra.mxu0 0.0
        %1526 = vmatprep.subr.mxu0 0.0
        %1527 = vmatpush1.msra.mxu0 0.0
        %1528 = vmatprep.subr.mxu0 0.0
        %1529 = vmatpush1.msra.mxu0 0.0
        %1530 = vmatprep.subr.mxu0 0.0
        %1531 = vmatpush1.msra.mxu0 0.0
        %1532 = vmatprep.subr.mxu0 0.0
        %1533 = vmatpush1.msra.mxu0 0.0
        %1534 = vmatprep.subr.mxu0 0.0
        %1535 = vmatpush1.msra.mxu0 0.0
        %1536 = vmatprep.subr.mxu0 0.0
        %1537 = vmatpush1.msra.mxu0 0.0
        %1538 = vmatprep.subr.mxu0 0.0
        %1539 = vmatpush1.msra.mxu0 0.0
        %1540 = vmatprep.subr.mxu0 0.0
        %1541 = vmatpush1.msra.mxu0 0.0
        %1542 = vmatprep.subr.mxu0 0.0
        %1543 = vmatpush1.msra.mxu0 0.0
        %1544 = vmatprep.subr.mxu0 0.0
        %1545 = vmatpush1.msra.mxu0 0.0
        %1546 = vmatprep.subr.mxu0 0.0
        %1547 = vmatpush1.msra.mxu0 0.0
        %1548 = vmatprep.subr.mxu0 0.0
        %1549 = vmatpush1.msra.mxu0 0.0
        %1550 = vmatprep.subr.mxu0 0.0
        %1551 = vmatpush1.msra.mxu0 0.0
        %1552 = vmatprep.subr.mxu0 0.0
        %1553 = vmatpush1.msra.mxu0 0.0
        %1554 = vmatprep.subr.mxu0 0.0
        %1555 = vmatpush1.msra.mxu0 0.0
        %1556 = vmatprep.subr.mxu0 0.0
        %1557 = vmatpush1.msra.mxu0 0.0
        %1558 = vmatprep.subr.mxu0 0.0
        %1559 = vmatpush1.msra.mxu0 0.0
        %1560 = vmatprep.subr.mxu0 0.0
        %1561 = vmatpush1.msra.mxu0 0.0
        %1562 = vmatprep.subr.mxu0 0.0
        %1563 = vmatpush1.msra.mxu0 0.0
        %1564 = vmatprep.subr.mxu0 0.0
        %1565 = vmatpush1.msra.mxu0 0.0
        %1566 = vmatprep.subr.mxu0 0.0
        %1567 = vmatpush1.msra.mxu0 0.0
        %1568 = vmatprep.subr.mxu0 0.0
        %1569 = vmatpush1.msra.mxu0 0.0
        %1570 = vmatprep.subr.mxu0 0.0
        %1571 = vmatpush1.msra.mxu0 0.0
        %1572 = vmatprep.subr.mxu0 0.0
        %1573 = vmatpush1.msra.mxu0 0.0
        %1574 = vmatprep.subr.mxu0 0.0
        %1575 = vmatpush1.msra.mxu0 0.0
        %1576 = vmatprep.subr.mxu0 0.0
        %1577 = vmatpush1.msra.mxu0 0.0
        %1578 = vmatprep.mubr.f32.mxu0 0.0
        %1579 = vmatmul.mubr.f32.gmra.mrb[0].mxu0 %v1509
        %v1580 = vpop.f32.mrb[0].mxu0
        %v1581 = vadd.f32 0.0, %v1580
        %v1582 = vpop.f32.mrb[0].mxu0
        %1583 = vmatprep.mubr.f32.mxu0 0.0
        %1584 = vmatmul.mubr.f32.gmra.mrb[0].mxu0 %v1512
        %v1585 = vpop.f32.mrb[0].mxu0
        %v1586 = vadd.f32 0.0, %v1585
        %v1587 = vpop.f32.mrb[0].mxu0
        %1588 = vdwg.mxu0
        %1589 = vrot.lane.b32.xlu0 %v779, 112
        %v1590 = vpop.permute.xlu0 %1589
        %1591 = vrot.lane.b32.xlu0 %v780, 112
        %v1592 = vpop.permute.xlu0 %1591
        %1593 = vrot.lane.b32.xlu0 %v878, 112
        %v1594 = vpop.permute.xlu0 %1593
        %1595 = vrot.lane.b32.xlu0 %v883, 112
        %v1596 = vpop.permute.xlu0 %1595
        %v1597 = vsel %vm1018, %v1590, 0
        %v1599 = vsel %vm1018, %v1592, 0
        %v1601 = vsel %vm1018, %v1594, 0
        %v1603 = vsel %vm1018, %v1596, 0
        %1605 = vmatprep.subr.mxu0 0.0
        %1606 = vmatpush1.xpose.msra.mxu0 %v1601
        %1607 = vmatprep.subr.mxu0 0.0
        %1608 = vmatpush1.xpose.msra.mxu0 %v1603
        %1609 = vmatprep.subr.mxu0 0.0
        %1610 = vmatpush1.xpose.msra.mxu0 0.0
        %1611 = vmatprep.subr.mxu0 0.0
        %1612 = vmatpush1.xpose.msra.mxu0 0.0
        %1613 = vmatprep.subr.mxu0 0.0
        %1614 = vmatpush1.xpose.msra.mxu0 0.0
        %1615 = vmatprep.subr.mxu0 0.0
        %1616 = vmatpush1.xpose.msra.mxu0 0.0
        %1617 = vmatprep.subr.mxu0 0.0
        %1618 = vmatpush1.xpose.msra.mxu0 0.0
        %1619 = vmatprep.subr.mxu0 0.0
        %1620 = vmatpush1.xpose.msra.mxu0 0.0
        %1621 = vmatprep.subr.mxu0 0.0
        %1622 = vmatpush1.xpose.msra.mxu0 0.0
        %1623 = vmatprep.subr.mxu0 0.0
        %1624 = vmatpush1.xpose.msra.mxu0 0.0
        %1625 = vmatprep.subr.mxu0 0.0
        %1626 = vmatpush1.xpose.msra.mxu0 0.0
        %1627 = vmatprep.subr.mxu0 0.0
        %1628 = vmatpush1.xpose.msra.mxu0 0.0
        %1629 = vmatprep.subr.mxu0 0.0
        %1630 = vmatpush1.xpose.msra.mxu0 0.0
        %1631 = vmatprep.subr.mxu0 0.0
        %1632 = vmatpush1.xpose.msra.mxu0 0.0
        %1633 = vmatprep.subr.mxu0 0.0
        %1634 = vmatpush1.xpose.msra.mxu0 0.0
        %1635 = vmatprep.subr.mxu0 0.0
        %1636 = vmatpush1.xpose.msra.mxu0 0.0
        %1637 = vmatprep.subr.mxu0 0.0
        %1638 = vmatpush1.xpose.msra.mxu0 0.0
        %1639 = vmatprep.subr.mxu0 0.0
        %1640 = vmatpush1.xpose.msra.mxu0 0.0
        %1641 = vmatprep.subr.mxu0 0.0
        %1642 = vmatpush1.xpose.msra.mxu0 0.0
        %1643 = vmatprep.subr.mxu0 0.0
        %1644 = vmatpush1.xpose.msra.mxu0 0.0
        %1645 = vmatprep.subr.mxu0 0.0
        %1646 = vmatpush1.xpose.msra.mxu0 0.0
        %1647 = vmatprep.subr.mxu0 0.0
        %1648 = vmatpush1.xpose.msra.mxu0 0.0
        %1649 = vmatprep.subr.mxu0 0.0
        %1650 = vmatpush1.xpose.msra.mxu0 0.0
        %1651 = vmatprep.subr.mxu0 0.0
        %1652 = vmatpush1.xpose.msra.mxu0 0.0
        %1653 = vmatprep.subr.mxu0 0.0
        %1654 = vmatpush1.xpose.msra.mxu0 0.0
        %1655 = vmatprep.subr.mxu0 0.0
        %1656 = vmatpush1.xpose.msra.mxu0 0.0
        %1657 = vmatprep.subr.mxu0 0.0
        %1658 = vmatpush1.xpose.msra.mxu0 0.0
        %1659 = vmatprep.subr.mxu0 0.0
        %1660 = vmatpush1.xpose.msra.mxu0 0.0
        %1661 = vmatprep.subr.mxu0 0.0
        %1662 = vmatpush1.xpose.msra.mxu0 0.0
        %1663 = vmatprep.subr.mxu0 0.0
        %1664 = vmatpush1.xpose.msra.mxu0 0.0
        %1665 = vmatprep.subr.mxu0 0.0
        %1666 = vmatpush1.xpose.msra.mxu0 0.0
        %1667 = vmatprep.subr.mxu0 0.0
        %1668 = vmatpush1.xpose.msra.mxu0 0.0
        %1669 = vmatprep.mubr.f32.mxu0 0.0
        %1670 = vmatmul.mubr.f32.gmra.mrb[0].mxu0 %v1597
        %v1671 = vpop.f32.mrb[0].mxu0
        %v1672 = vadd.f32 %v1016, %v1671
        %v1673 = vpop.f32.mrb[0].mxu0
        %1674 = vmatprep.mubr.f32.mxu0 0.0
        %1675 = vmatmul.mubr.f32.gmra.mrb[0].mxu0 %v1599
        %v1676 = vpop.f32.mrb[0].mxu0
        %v1677 = vadd.f32 %v1017, %v1676
        %v1678 = vpop.f32.mrb[0].mxu0
        %1679 = vdwg.mxu0
        %1680 = vrot.lane.b32.xlu0 %v781, 112
        %v1681 = vpop.permute.xlu0 %1680
        %1682 = vrot.lane.b32.xlu0 %v782, 112
        %v1683 = vpop.permute.xlu0 %1682
        %1684 = vrot.lane.b32.xlu0 %v888, 112
        %v1685 = vpop.permute.xlu0 %1684
        %1686 = vrot.lane.b32.xlu0 %v893, 112
        %v1687 = vpop.permute.xlu0 %1686
        %v1688 = vsel %vm1018, %v1681, 0
        %v1690 = vsel %vm1018, %v1683, 0
        %v1692 = vsel %vm1018, %v1685, 0
        %v1694 = vsel %vm1018, %v1687, 0
        %1696 = vmatprep.subr.mxu0 0.0
        %1697 = vmatpush1.xpose.msra.mxu0 %v1692
        %1698 = vmatprep.subr.mxu0 0.0
        %1699 = vmatpush1.xpose.msra.mxu0 %v1694
        %1700 = vmatprep.subr.mxu0 0.0
        %1701 = vmatpush1.xpose.msra.mxu0 0.0
        %1702 = vmatprep.subr.mxu0 0.0
        %1703 = vmatpush1.xpose.msra.mxu0 0.0
        %1704 = vmatprep.subr.mxu0 0.0
        %1705 = vmatpush1.xpose.msra.mxu0 0.0
        %1706 = vmatprep.subr.mxu0 0.0
        %1707 = vmatpush1.xpose.msra.mxu0 0.0
        %1708 = vmatprep.subr.mxu0 0.0
        %1709 = vmatpush1.xpose.msra.mxu0 0.0
        %1710 = vmatprep.subr.mxu0 0.0
        %1711 = vmatpush1.xpose.msra.mxu0 0.0
        %1712 = vmatprep.subr.mxu0 0.0
        %1713 = vmatpush1.xpose.msra.mxu0 0.0
        %1714 = vmatprep.subr.mxu0 0.0
        %1715 = vmatpush1.xpose.msra.mxu0 0.0
        %1716 = vmatprep.subr.mxu0 0.0
        %1717 = vmatpush1.xpose.msra.mxu0 0.0
        %1718 = vmatprep.subr.mxu0 0.0
        %1719 = vmatpush1.xpose.msra.mxu0 0.0
        %1720 = vmatprep.subr.mxu0 0.0
        %1721 = vmatpush1.xpose.msra.mxu0 0.0
        %1722 = vmatprep.subr.mxu0 0.0
        %1723 = vmatpush1.xpose.msra.mxu0 0.0
        %1724 = vmatprep.subr.mxu0 0.0
        %1725 = vmatpush1.xpose.msra.mxu0 0.0
        %1726 = vmatprep.subr.mxu0 0.0
        %1727 = vmatpush1.xpose.msra.mxu0 0.0
        %1728 = vmatprep.subr.mxu0 0.0
        %1729 = vmatpush1.xpose.msra.mxu0 0.0
        %1730 = vmatprep.subr.mxu0 0.0
        %1731 = vmatpush1.xpose.msra.mxu0 0.0
        %1732 = vmatprep.subr.mxu0 0.0
        %1733 = vmatpush1.xpose.msra.mxu0 0.0
        %1734 = vmatprep.subr.mxu0 0.0
        %1735 = vmatpush1.xpose.msra.mxu0 0.0
        %1736 = vmatprep.subr.mxu0 0.0
        %1737 = vmatpush1.xpose.msra.mxu0 0.0
        %1738 = vmatprep.subr.mxu0 0.0
        %1739 = vmatpush1.xpose.msra.mxu0 0.0
        %1740 = vmatprep.subr.mxu0 0.0
        %1741 = vmatpush1.xpose.msra.mxu0 0.0
        %1742 = vmatprep.subr.mxu0 0.0
        %1743 = vmatpush1.xpose.msra.mxu0 0.0
        %1744 = vmatprep.subr.mxu0 0.0
        %1745 = vmatpush1.xpose.msra.mxu0 0.0
        %1746 = vmatprep.subr.mxu0 0.0
        %1747 = vmatpush1.xpose.msra.mxu0 0.0
        %1748 = vmatprep.subr.mxu0 0.0
        %1749 = vmatpush1.xpose.msra.mxu0 0.0
        %1750 = vmatprep.subr.mxu0 0.0
        %1751 = vmatpush1.xpose.msra.mxu0 0.0
        %1752 = vmatprep.subr.mxu0 0.0
        %1753 = vmatpush1.xpose.msra.mxu0 0.0
        %1754 = vmatprep.subr.mxu0 0.0
        %1755 = vmatpush1.xpose.msra.mxu0 0.0
        %1756 = vmatprep.subr.mxu0 0.0
        %1757 = vmatpush1.xpose.msra.mxu0 0.0
        %1758 = vmatprep.subr.mxu0 0.0
        %1759 = vmatpush1.xpose.msra.mxu0 0.0
        %1760 = vmatprep.mubr.f32.mxu0 0.0
        %1761 = vmatmul.mubr.f32.gmra.mrb[0].mxu0 %v1688
        %v1762 = vpop.f32.mrb[0].mxu0
        %v1763 = vadd.f32 %v1016, %v1762
        %v1764 = vpop.f32.mrb[0].mxu0
        %1765 = vmatprep.mubr.f32.mxu0 0.0
        %1766 = vmatmul.mubr.f32.gmra.mrb[0].mxu0 %v1690
        %v1767 = vpop.f32.mrb[0].mxu0
        %v1768 = vadd.f32 %v1017, %v1767
        %v1769 = vpop.f32.mrb[0].mxu0
        %1770 = vdwg.mxu0
        %1771 = vrot.lane.b32.xlu0 %v783, 112
        %v1772 = vpop.permute.xlu0 %1771
        %1773 = vrot.lane.b32.xlu0 %v784, 112
        %v1774 = vpop.permute.xlu0 %1773
        %1775 = vrot.lane.b32.xlu0 %v898, 112
        %v1776 = vpop.permute.xlu0 %1775
        %1777 = vrot.lane.b32.xlu0 %v903, 112
        %v1778 = vpop.permute.xlu0 %1777
        %v1779 = vsel %vm1018, %v1772, 0
        %v1781 = vsel %vm1018, %v1774, 0
        %v1783 = vsel %vm1018, %v1776, 0
        %v1785 = vsel %vm1018, %v1778, 0
        %1787 = vmatprep.subr.mxu0 0.0
        %1788 = vmatpush1.xpose.msra.mxu0 %v1783
        %1789 = vmatprep.subr.mxu0 0.0
        %1790 = vmatpush1.xpose.msra.mxu0 %v1785
        %1791 = vmatprep.subr.mxu0 0.0
        %1792 = vmatpush1.xpose.msra.mxu0 0.0
        %1793 = vmatprep.subr.mxu0 0.0
        %1794 = vmatpush1.xpose.msra.mxu0 0.0
        %1795 = vmatprep.subr.mxu0 0.0
        %1796 = vmatpush1.xpose.msra.mxu0 0.0
        %1797 = vmatprep.subr.mxu0 0.0
        %1798 = vmatpush1.xpose.msra.mxu0 0.0
        %1799 = vmatprep.subr.mxu0 0.0
        %1800 = vmatpush1.xpose.msra.mxu0 0.0
        %1801 = vmatprep.subr.mxu0 0.0
        %1802 = vmatpush1.xpose.msra.mxu0 0.0
        %1803 = vmatprep.subr.mxu0 0.0
        %1804 = vmatpush1.xpose.msra.mxu0 0.0
        %1805 = vmatprep.subr.mxu0 0.0
        %1806 = vmatpush1.xpose.msra.mxu0 0.0
        %1807 = vmatprep.subr.mxu0 0.0
        %1808 = vmatpush1.xpose.msra.mxu0 0.0
        %1809 = vmatprep.subr.mxu0 0.0
        %1810 = vmatpush1.xpose.msra.mxu0 0.0
        %1811 = vmatprep.subr.mxu0 0.0
        %1812 = vmatpush1.xpose.msra.mxu0 0.0
        %1813 = vmatprep.subr.mxu0 0.0
        %1814 = vmatpush1.xpose.msra.mxu0 0.0
        %1815 = vmatprep.subr.mxu0 0.0
        %1816 = vmatpush1.xpose.msra.mxu0 0.0
        %1817 = vmatprep.subr.mxu0 0.0
        %1818 = vmatpush1.xpose.msra.mxu0 0.0
        %1819 = vmatprep.subr.mxu0 0.0
        %1820 = vmatpush1.xpose.msra.mxu0 0.0
        %1821 = vmatprep.subr.mxu0 0.0
        %1822 = vmatpush1.xpose.msra.mxu0 0.0
        %1823 = vmatprep.subr.mxu0 0.0
        %1824 = vmatpush1.xpose.msra.mxu0 0.0
        %1825 = vmatprep.subr.mxu0 0.0
        %1826 = vmatpush1.xpose.msra.mxu0 0.0
        %1827 = vmatprep.subr.mxu0 0.0
        %1828 = vmatpush1.xpose.msra.mxu0 0.0
        %1829 = vmatprep.subr.mxu0 0.0
        %1830 = vmatpush1.xpose.msra.mxu0 0.0
        %1831 = vmatprep.subr.mxu0 0.0
        %1832 = vmatpush1.xpose.msra.mxu0 0.0
        %1833 = vmatprep.subr.mxu0 0.0
        %1834 = vmatpush1.xpose.msra.mxu0 0.0
        %1835 = vmatprep.subr.mxu0 0.0
        %1836 = vmatpush1.xpose.msra.mxu0 0.0
        %1837 = vmatprep.subr.mxu0 0.0
        %1838 = vmatpush1.xpose.msra.mxu0 0.0
        %1839 = vmatprep.subr.mxu0 0.0
        %1840 = vmatpush1.xpose.msra.mxu0 0.0
        %1841 = vmatprep.subr.mxu0 0.0
        %1842 = vmatpush1.xpose.msra.mxu0 0.0
        %1843 = vmatprep.subr.mxu0 0.0
        %1844 = vmatpush1.xpose.msra.mxu0 0.0
        %1845 = vmatprep.subr.mxu0 0.0
        %1846 = vmatpush1.xpose.msra.mxu0 0.0
        %1847 = vmatprep.subr.mxu0 0.0
        %1848 = vmatpush1.xpose.msra.mxu0 0.0
        %1849 = vmatprep.subr.mxu0 0.0
        %1850 = vmatpush1.xpose.msra.mxu0 0.0
        %1851 = vmatprep.mubr.f32.mxu0 0.0
        %1852 = vmatmul.mubr.f32.gmra.mrb[0].mxu0 %v1779
        %v1853 = vpop.f32.mrb[0].mxu0
        %v1854 = vadd.f32 %v1016, %v1853
        %v1855 = vpop.f32.mrb[0].mxu0
        %1856 = vmatprep.mubr.f32.mxu0 0.0
        %1857 = vmatmul.mubr.f32.gmra.mrb[0].mxu0 %v1781
        %v1858 = vpop.f32.mrb[0].mxu0
        %v1859 = vadd.f32 %v1017, %v1858
        %v1860 = vpop.f32.mrb[0].mxu0
        %1861 = vdwg.mxu0
        %v1862 = vsel %vm1018, %v1672, -inf
        %1863 = vmax.xlane.f32.xlu0 %v1862
        %v1864 = vpop.xlane.xlu0 %1863
        %v1865 = vsel %vm1018, %v1677, -inf
        %1866 = vmax.xlane.f32.xlu0 %v1865
        %v1867 = vpop.xlane.xlu0 %1866
        %v1868 = vsel %vm1018, %v1763, -inf
        %1869 = vmax.xlane.f32.xlu0 %v1868
        %v1870 = vpop.xlane.xlu0 %1869
        %v1871 = vsel %vm1018, %v1768, -inf
        %1872 = vmax.xlane.f32.xlu0 %v1871
        %v1873 = vpop.xlane.xlu0 %1872
        %v1874 = vsel %vm1018, %v1854, -inf
        %1875 = vmax.xlane.f32.xlu0 %v1874
        %v1876 = vpop.xlane.xlu0 %1875
        %v1877 = vsel %vm1018, %v1859, -inf
        %1878 = vmax.xlane.f32.xlu0 %v1877
        %v1879 = vpop.xlane.xlu0 %1878
        %v1880 = vsub.f32 %v1672, %v1864
        %v1881 = vsub.f32 %v1677, %v1867
        %v1882 = vsub.f32 %v1763, %v1870
        %v1883 = vsub.f32 %v1768, %v1873
        %v1884 = vsub.f32 %v1854, %v1876
        %v1885 = vsub.f32 %v1859, %v1879
        %v1886 = vmul.f32 %v1880, 1.442695
        %v1887 = vpow.pop %v1886
        %v1888 = vmul.f32 %v1881, 1.442695
        %v1889 = vpow.pop %v1888
        %v1890 = vmul.f32 %v1882, 1.442695
        %v1891 = vpow.pop %v1890
        %v1892 = vmul.f32 %v1883, 1.442695
        %v1893 = vpow.pop %v1892
        %v1894 = vmul.f32 %v1884, 1.442695
        %v1895 = vpow.pop %v1894
        %v1896 = vmul.f32 %v1885, 1.442695
        %v1897 = vpow.pop %v1896
        %v1898 = vsel %vm1018, %v1887, 0.0
        %1899 = vadd.xlane.f32.xlu0 %v1898
        %v1900 = vpop.xlane.xlu0 %1899
        %v1901 = vsel %vm1018, %v1889, 0.0
        %1902 = vadd.xlane.f32.xlu0 %v1901
        %v1903 = vpop.xlane.xlu0 %1902
        %v1904 = vsel %vm1018, %v1891, 0.0
        %1905 = vadd.xlane.f32.xlu0 %v1904
        %v1906 = vpop.xlane.xlu0 %1905
        %v1907 = vsel %vm1018, %v1893, 0.0
        %1908 = vadd.xlane.f32.xlu0 %v1907
        %v1909 = vpop.xlane.xlu0 %1908
        %v1910 = vsel %vm1018, %v1895, 0.0
        %1911 = vadd.xlane.f32.xlu0 %v1910
        %v1912 = vpop.xlane.xlu0 %1911
        %v1913 = vsel %vm1018, %v1897, 0.0
        %1914 = vadd.xlane.f32.xlu0 %v1913
        %v1915 = vpop.xlane.xlu0 %1914
        %v1916 = vrcp.pop %v1900
        %v1917 = vrcp.pop %v1903
        %v1918 = vrcp.pop %v1906
        %v1919 = vrcp.pop %v1909
        %v1920 = vrcp.pop %v1912
        %v1921 = vrcp.pop %v1915
        %v1922 = vmul.f32 %v1887, %v1916
        %v1923 = vmul.f32 %v1889, %v1917
        %v1924 = vmul.f32 %v1891, %v1918
        %v1925 = vmul.f32 %v1893, %v1919
        %v1926 = vmul.f32 %v1895, %v1920
        %v1927 = vmul.f32 %v1897, %v1921
        %1930 = vrot.lane.b32.xlu0 %v981, 112
        %v1931 = vpop.permute.xlu0 %1930
        %1932 = vrot.lane.b32.xlu0 %v986, 112
        %v1933 = vpop.permute.xlu0 %1932
        %v1937 = vsel %vm1018, %v1922, 0
        %v1940 = vsel %vm1018, %v1923, 0
        %1942 = vmatprep.subr.mxu0 0.0
        %1943 = vmatpush1.msra.mxu0 %v1931
        %1944 = vmatprep.subr.mxu0 0.0
        %1945 = vmatpush1.msra.mxu0 %v1933
        %1946 = vmatprep.subr.mxu0 0.0
        %1947 = vmatpush1.msra.mxu0 0.0
        %1948 = vmatprep.subr.mxu0 0.0
        %1949 = vmatpush1.msra.mxu0 0.0
        %1950 = vmatprep.subr.mxu0 0.0
        %1951 = vmatpush1.msra.mxu0 0.0
        %1952 = vmatprep.subr.mxu0 0.0
        %1953 = vmatpush1.msra.mxu0 0.0
        %1954 = vmatprep.subr.mxu0 0.0
        %1955 = vmatpush1.msra.mxu0 0.0
        %1956 = vmatprep.subr.mxu0 0.0
        %1957 = vmatpush1.msra.mxu0 0.0
        %1958 = vmatprep.subr.mxu0 0.0
        %1959 = vmatpush1.msra.mxu0 0.0
        %1960 = vmatprep.subr.mxu0 0.0
        %1961 = vmatpush1.msra.mxu0 0.0
        %1962 = vmatprep.subr.mxu0 0.0
        %1963 = vmatpush1.msra.mxu0 0.0
        %1964 = vmatprep.subr.mxu0 0.0
        %1965 = vmatpush1.msra.mxu0 0.0
        %1966 = vmatprep.subr.mxu0 0.0
        %1967 = vmatpush1.msra.mxu0 0.0
        %1968 = vmatprep.subr.mxu0 0.0
        %1969 = vmatpush1.msra.mxu0 0.0
        %1970 = vmatprep.subr.mxu0 0.0
        %1971 = vmatpush1.msra.mxu0 0.0
        %1972 = vmatprep.subr.mxu0 0.0
        %1973 = vmatpush1.msra.mxu0 0.0
        %1974 = vmatprep.subr.mxu0 0.0
        %1975 = vmatpush1.msra.mxu0 0.0
        %1976 = vmatprep.subr.mxu0 0.0
        %1977 = vmatpush1.msra.mxu0 0.0
        %1978 = vmatprep.subr.mxu0 0.0
        %1979 = vmatpush1.msra.mxu0 0.0
        %1980 = vmatprep.subr.mxu0 0.0
        %1981 = vmatpush1.msra.mxu0 0.0
        %1982 = vmatprep.subr.mxu0 0.0
        %1983 = vmatpush1.msra.mxu0 0.0
        %1984 = vmatprep.subr.mxu0 0.0
        %1985 = vmatpush1.msra.mxu0 0.0
        %1986 = vmatprep.subr.mxu0 0.0
        %1987 = vmatpush1.msra.mxu0 0.0
        %1988 = vmatprep.subr.mxu0 0.0
        %1989 = vmatpush1.msra.mxu0 0.0
        %1990 = vmatprep.subr.mxu0 0.0
        %1991 = vmatpush1.msra.mxu0 0.0
        %1992 = vmatprep.subr.mxu0 0.0
        %1993 = vmatpush1.msra.mxu0 0.0
        %1994 = vmatprep.subr.mxu0 0.0
        %1995 = vmatpush1.msra.mxu0 0.0
        %1996 = vmatprep.subr.mxu0 0.0
        %1997 = vmatpush1.msra.mxu0 0.0
        %1998 = vmatprep.subr.mxu0 0.0
        %1999 = vmatpush1.msra.mxu0 0.0
        %2000 = vmatprep.subr.mxu0 0.0
        %2001 = vmatpush1.msra.mxu0 0.0
        %2002 = vmatprep.subr.mxu0 0.0
        %2003 = vmatpush1.msra.mxu0 0.0
        %2004 = vmatprep.subr.mxu0 0.0
        %2005 = vmatpush1.msra.mxu0 0.0
        %2006 = vmatprep.mubr.f32.mxu0 0.0
        %2007 = vmatmul.mubr.f32.gmra.mrb[0].mxu0 %v1937
        %v2008 = vpop.f32.mrb[0].mxu0
        %v2009 = vadd.f32 0.0, %v2008
        %v2010 = vpop.f32.mrb[0].mxu0
        %2011 = vmatprep.mubr.f32.mxu0 0.0
        %2012 = vmatmul.mubr.f32.gmra.mrb[0].mxu0 %v1940
        %v2013 = vpop.f32.mrb[0].mxu0
        %v2014 = vadd.f32 0.0, %v2013
        %v2015 = vpop.f32.mrb[0].mxu0
        %2016 = vdwg.mxu0
        %2019 = vrot.lane.b32.xlu0 %v991, 112
        %v2020 = vpop.permute.xlu0 %2019
        %2021 = vrot.lane.b32.xlu0 %v996, 112
        %v2022 = vpop.permute.xlu0 %2021
        %v2026 = vsel %vm1018, %v1924, 0
        %v2029 = vsel %vm1018, %v1925, 0
        %2031 = vmatprep.subr.mxu0 0.0
        %2032 = vmatpush1.msra.mxu0 %v2020
        %2033 = vmatprep.subr.mxu0 0.0
        %2034 = vmatpush1.msra.mxu0 %v2022
        %2035 = vmatprep.subr.mxu0 0.0
        %2036 = vmatpush1.msra.mxu0 0.0
        %2037 = vmatprep.subr.mxu0 0.0
        %2038 = vmatpush1.msra.mxu0 0.0
        %2039 = vmatprep.subr.mxu0 0.0
        %2040 = vmatpush1.msra.mxu0 0.0
        %2041 = vmatprep.subr.mxu0 0.0
        %2042 = vmatpush1.msra.mxu0 0.0
        %2043 = vmatprep.subr.mxu0 0.0
        %2044 = vmatpush1.msra.mxu0 0.0
        %2045 = vmatprep.subr.mxu0 0.0
        %2046 = vmatpush1.msra.mxu0 0.0
        %2047 = vmatprep.subr.mxu0 0.0
        %2048 = vmatpush1.msra.mxu0 0.0
        %2049 = vmatprep.subr.mxu0 0.0
        %2050 = vmatpush1.msra.mxu0 0.0
        %2051 = vmatprep.subr.mxu0 0.0
        %2052 = vmatpush1.msra.mxu0 0.0
        %2053 = vmatprep.subr.mxu0 0.0
        %2054 = vmatpush1.msra.mxu0 0.0
        %2055 = vmatprep.subr.mxu0 0.0
        %2056 = vmatpush1.msra.mxu0 0.0
        %2057 = vmatprep.subr.mxu0 0.0
        %2058 = vmatpush1.msra.mxu0 0.0
        %2059 = vmatprep.subr.mxu0 0.0
        %2060 = vmatpush1.msra.mxu0 0.0
        %2061 = vmatprep.subr.mxu0 0.0
        %2062 = vmatpush1.msra.mxu0 0.0
        %2063 = vmatprep.subr.mxu0 0.0
        %2064 = vmatpush1.msra.mxu0 0.0
        %2065 = vmatprep.subr.mxu0 0.0
        %2066 = vmatpush1.msra.mxu0 0.0
        %2067 = vmatprep.subr.mxu0 0.0
        %2068 = vmatpush1.msra.mxu0 0.0
        %2069 = vmatprep.subr.mxu0 0.0
        %2070 = vmatpush1.msra.mxu0 0.0
        %2071 = vmatprep.subr.mxu0 0.0
        %2072 = vmatpush1.msra.mxu0 0.0
        %2073 = vmatprep.subr.mxu0 0.0
        %2074 = vmatpush1.msra.mxu0 0.0
        %2075 = vmatprep.subr.mxu0 0.0
        %2076 = vmatpush1.msra.mxu0 0.0
        %2077 = vmatprep.subr.mxu0 0.0
        %2078 = vmatpush1.msra.mxu0 0.0
        %2079 = vmatprep.subr.mxu0 0.0
        %2080 = vmatpush1.msra.mxu0 0.0
        %2081 = vmatprep.subr.mxu0 0.0
        %2082 = vmatpush1.msra.mxu0 0.0
        %2083 = vmatprep.subr.mxu0 0.0
        %2084 = vmatpush1.msra.mxu0 0.0
        %2085 = vmatprep.subr.mxu0 0.0
        %2086 = vmatpush1.msra.mxu0 0.0
        %2087 = vmatprep.subr.mxu0 0.0
        %2088 = vmatpush1.msra.mxu0 0.0
        %2089 = vmatprep.subr.mxu0 0.0
        %2090 = vmatpush1.msra.mxu0 0.0
        %2091 = vmatprep.subr.mxu0 0.0
        %2092 = vmatpush1.msra.mxu0 0.0
        %2093 = vmatprep.subr.mxu0 0.0
        %2094 = vmatpush1.msra.mxu0 0.0
        %2095 = vmatprep.mubr.f32.mxu0 0.0
        %2096 = vmatmul.mubr.f32.gmra.mrb[0].mxu0 %v2026
        %v2097 = vpop.f32.mrb[0].mxu0
        %v2098 = vadd.f32 0.0, %v2097
        %v2099 = vpop.f32.mrb[0].mxu0
        %2100 = vmatprep.mubr.f32.mxu0 0.0
        %2101 = vmatmul.mubr.f32.gmra.mrb[0].mxu0 %v2029
        %v2102 = vpop.f32.mrb[0].mxu0
        %v2103 = vadd.f32 0.0, %v2102
        %v2104 = vpop.f32.mrb[0].mxu0
        %2105 = vdwg.mxu0
        %2108 = vrot.lane.b32.xlu0 %v1001, 112
        %v2109 = vpop.permute.xlu0 %2108
        %2110 = vrot.lane.b32.xlu0 %v1006, 112
        %v2111 = vpop.permute.xlu0 %2110
        %v2115 = vsel %vm1018, %v1926, 0
        %v2118 = vsel %vm1018, %v1927, 0
        %2120 = vmatprep.subr.mxu0 0.0
        %2121 = vmatpush1.msra.mxu0 %v2109
        %2122 = vmatprep.subr.mxu0 0.0
        %2123 = vmatpush1.msra.mxu0 %v2111
        %2124 = vmatprep.subr.mxu0 0.0
        %2125 = vmatpush1.msra.mxu0 0.0
        %2126 = vmatprep.subr.mxu0 0.0
        %2127 = vmatpush1.msra.mxu0 0.0
        %2128 = vmatprep.subr.mxu0 0.0
        %2129 = vmatpush1.msra.mxu0 0.0
        %2130 = vmatprep.subr.mxu0 0.0
        %2131 = vmatpush1.msra.mxu0 0.0
        %2132 = vmatprep.subr.mxu0 0.0
        %2133 = vmatpush1.msra.mxu0 0.0
        %2134 = vmatprep.subr.mxu0 0.0
        %2135 = vmatpush1.msra.mxu0 0.0
        %2136 = vmatprep.subr.mxu0 0.0
        %2137 = vmatpush1.msra.mxu0 0.0
        %2138 = vmatprep.subr.mxu0 0.0
        %2139 = vmatpush1.msra.mxu0 0.0
        %2140 = vmatprep.subr.mxu0 0.0
        %2141 = vmatpush1.msra.mxu0 0.0
        %2142 = vmatprep.subr.mxu0 0.0
        %2143 = vmatpush1.msra.mxu0 0.0
        %2144 = vmatprep.subr.mxu0 0.0
        %2145 = vmatpush1.msra.mxu0 0.0
        %2146 = vmatprep.subr.mxu0 0.0
        %2147 = vmatpush1.msra.mxu0 0.0
        %2148 = vmatprep.subr.mxu0 0.0
        %2149 = vmatpush1.msra.mxu0 0.0
        %2150 = vmatprep.subr.mxu0 0.0
        %2151 = vmatpush1.msra.mxu0 0.0
        %2152 = vmatprep.subr.mxu0 0.0
        %2153 = vmatpush1.msra.mxu0 0.0
        %2154 = vmatprep.subr.mxu0 0.0
        %2155 = vmatpush1.msra.mxu0 0.0
        %2156 = vmatprep.subr.mxu0 0.0
        %2157 = vmatpush1.msra.mxu0 0.0
        %2158 = vmatprep.subr.mxu0 0.0
        %2159 = vmatpush1.msra.mxu0 0.0
        %2160 = vmatprep.subr.mxu0 0.0
        %2161 = vmatpush1.msra.mxu0 0.0
        %2162 = vmatprep.subr.mxu0 0.0
        %2163 = vmatpush1.msra.mxu0 0.0
        %2164 = vmatprep.subr.mxu0 0.0
        %2165 = vmatpush1.msra.mxu0 0.0
        %2166 = vmatprep.subr.mxu0 0.0
        %2167 = vmatpush1.msra.mxu0 0.0
        %2168 = vmatprep.subr.mxu0 0.0
        %2169 = vmatpush1.msra.mxu0 0.0
        %2170 = vmatprep.subr.mxu0 0.0
        %2171 = vmatpush1.msra.mxu0 0.0
        %2172 = vmatprep.subr.mxu0 0.0
        %2173 = vmatpush1.msra.mxu0 0.0
        %2174 = vmatprep.subr.mxu0 0.0
        %2175 = vmatpush1.msra.mxu0 0.0
        %2176 = vmatprep.subr.mxu0 0.0
        %2177 = vmatpush1.msra.mxu0 0.0
        %2178 = vmatprep.subr.mxu0 0.0
        %2179 = vmatpush1.msra.mxu0 0.0
        %2180 = vmatprep.subr.mxu0 0.0
        %2181 = vmatpush1.msra.mxu0 0.0
        %2182 = vmatprep.subr.mxu0 0.0
        %2183 = vmatpush1.msra.mxu0 0.0
        %2184 = vmatprep.mubr.f32.mxu0 0.0
        %2185 = vmatmul.mubr.f32.gmra.mrb[0].mxu0 %v2115
        %v2186 = vpop.f32.mrb[0].mxu0
        %v2187 = vadd.f32 0.0, %v2186
        %v2188 = vpop.f32.mrb[0].mxu0
        %2189 = vmatprep.mubr.f32.mxu0 0.0
        %2190 = vmatmul.mubr.f32.gmra.mrb[0].mxu0 %v2118
        %v2191 = vpop.f32.mrb[0].mxu0
        %v2192 = vadd.f32 0.0, %v2191
        %v2193 = vpop.f32.mrb[0].mxu0
        %2194 = vdwg.mxu0
        %2201 = vrot.lane.b32.xlu0 %v2009, 16
        %v2202 = vpop.permute.xlu0 %2201
        %2203 = vrot.lane.b32.xlu0 %v2014, 16
        %v2204 = vpop.permute.xlu0 %2203
        %2205 = vrot.lane.b32.xlu0 %v2098, 16
        %v2206 = vpop.permute.xlu0 %2205
        %2207 = vrot.lane.b32.xlu0 %v2103, 16
        %v2208 = vpop.permute.xlu0 %2207
        %2209 = vrot.lane.b32.xlu0 %v2187, 16
        %v2210 = vpop.permute.xlu0 %2209
        %2211 = vrot.lane.b32.xlu0 %v2192, 16
        %v2212 = vpop.permute.xlu0 %2211
        %v2219 = vsel %vm1018, %v1419, %v2202
        %v2220 = vsel %vm1018, %v1424, %v2204
        %v2221 = vsel %vm1018, %v1500, %v2206
        %v2222 = vsel %vm1018, %v1505, %v2208
        %v2223 = vsel %vm1018, %v1581, %v2210
        %v2224 = vsel %vm1018, %v1586, %v2212
        %v2225 = vld [vmem:[#allocation13] sm:$0xff]
        %v2226 = vld [vmem:[#allocation13 + $0x8] sm:$0xff]
        %v2227 = vld [vmem:[#allocation13 + $0x10] sm:$0xff]
        %v2228 = vld [vmem:[#allocation13 + $0x18] sm:$0xff]
        %v2229 = vlaneseq
        %v2230 = vshrl.u32 %v2229, 7
        %v2231 = vsub.s32 4, %v2230
        %v2232 = vrot.slane %v534, %v2231
        %v2234 = vsel %vm544, %v2219, 0
        %v2237 = vsel %vm544, %v2220, 0
        %v2240 = vsel %vm544, %v2221, 0
        %v2243 = vsel %vm544, %v2222, 0
        %v2246 = vsel %vm544, %v2223, 0
        %v2249 = vsel %vm544, %v2224, 0
        %2251 = vmatprep.subr.mxu0 0.0
        %2252 = vmatpush1.msra.mxu0 %v2225
        %2253 = vmatprep.subr.mxu0 0.0
        %2254 = vmatpush1.msra.mxu0 %v2226
        %2255 = vmatprep.subr.mxu0 0.0
        %2256 = vmatpush1.msra.mxu0 %v2227
        %2257 = vmatprep.subr.mxu0 0.0
        %2258 = vmatpush1.msra.mxu0 %v2228
        %2259 = vmatprep.subr.mxu0 0.0
        %2260 = vmatpush1.msra.mxu0 0.0
        %2261 = vmatprep.subr.mxu0 0.0
        %2262 = vmatpush1.msra.mxu0 0.0
        %2263 = vmatprep.subr.mxu0 0.0
        %2264 = vmatpush1.msra.mxu0 0.0
        %2265 = vmatprep.subr.mxu0 0.0
        %2266 = vmatpush1.msra.mxu0 0.0
        %2267 = vmatprep.subr.mxu0 0.0
        %2268 = vmatpush1.msra.mxu0 0.0
        %2269 = vmatprep.subr.mxu0 0.0
        %2270 = vmatpush1.msra.mxu0 0.0
        %2271 = vmatprep.subr.mxu0 0.0
        %2272 = vmatpush1.msra.mxu0 0.0
        %2273 = vmatprep.subr.mxu0 0.0
        %2274 = vmatpush1.msra.mxu0 0.0
        %2275 = vmatprep.subr.mxu0 0.0
        %2276 = vmatpush1.msra.mxu0 0.0
        %2277 = vmatprep.subr.mxu0 0.0
        %2278 = vmatpush1.msra.mxu0 0.0
        %2279 = vmatprep.subr.mxu0 0.0
        %2280 = vmatpush1.msra.mxu0 0.0
        %2281 = vmatprep.subr.mxu0 0.0
        %2282 = vmatpush1.msra.mxu0 0.0
        %2283 = vmatprep.subr.mxu0 0.0
        %2284 = vmatpush1.msra.mxu0 0.0
        %2285 = vmatprep.subr.mxu0 0.0
        %2286 = vmatpush1.msra.mxu0 0.0
        %2287 = vmatprep.subr.mxu0 0.0
        %2288 = vmatpush1.msra.mxu0 0.0
        %2289 = vmatprep.subr.mxu0 0.0
        %2290 = vmatpush1.msra.mxu0 0.0
        %2291 = vmatprep.subr.mxu0 0.0
        %2292 = vmatpush1.msra.mxu0 0.0
        %2293 = vmatprep.subr.mxu0 0.0
        %2294 = vmatpush1.msra.mxu0 0.0
        %2295 = vmatprep.subr.mxu0 0.0
        %2296 = vmatpush1.msra.mxu0 0.0
        %2297 = vmatprep.subr.mxu0 0.0
        %2298 = vmatpush1.msra.mxu0 0.0
        %2299 = vmatprep.subr.mxu0 0.0
        %2300 = vmatpush1.msra.mxu0 0.0
        %2301 = vmatprep.subr.mxu0 0.0
        %2302 = vmatpush1.msra.mxu0 0.0
        %2303 = vmatprep.subr.mxu0 0.0
        %2304 = vmatpush1.msra.mxu0 0.0
        %2305 = vmatprep.subr.mxu0 0.0
        %2306 = vmatpush1.msra.mxu0 0.0
        %2307 = vmatprep.subr.mxu0 0.0
        %2308 = vmatpush1.msra.mxu0 0.0
        %2309 = vmatprep.subr.mxu0 0.0
        %2310 = vmatpush1.msra.mxu0 0.0
        %2311 = vmatprep.subr.mxu0 0.0
        %2312 = vmatpush1.msra.mxu0 0.0
        %2313 = vmatprep.subr.mxu0 0.0
        %2314 = vmatpush1.msra.mxu0 0.0
        %2315 = vmatprep.mubr.f32.mxu0 0.0
        %2316 = vmatmul.mubr.f32.gmra.mrb[0].mxu0 %v2234
        %v2317 = vpop.f32.mrb[0].mxu0
        %v2318 = vadd.f32 %v2232, %v2317
        %v2319 = vpop.f32.mrb[0].mxu0
        %2320 = vmatprep.mubr.f32.mxu0 0.0
        %2321 = vmatmul.mubr.f32.gmra.mrb[0].mxu0 %v2237
        %v2322 = vpop.f32.mrb[0].mxu0
        %v2323 = vadd.f32 %v2232, %v2322
        %v2324 = vpop.f32.mrb[0].mxu0
        %2325 = vmatprep.mubr.f32.mxu0 0.0
        %2326 = vmatmul.mubr.f32.gmra.mrb[0].mxu0 %v2240
        %v2327 = vpop.f32.mrb[0].mxu0
        %v2328 = vadd.f32 %v2232, %v2327
        %v2329 = vpop.f32.mrb[0].mxu0
        %2330 = vmatprep.mubr.f32.mxu0 0.0
        %2331 = vmatmul.mubr.f32.gmra.mrb[0].mxu0 %v2243
        %v2332 = vpop.f32.mrb[0].mxu0
        %v2333 = vadd.f32 %v2232, %v2332
        %v2334 = vpop.f32.mrb[0].mxu0
        %2335 = vmatprep.mubr.f32.mxu0 0.0
        %2336 = vmatmul.mubr.f32.gmra.mrb[0].mxu0 %v2246
        %v2337 = vpop.f32.mrb[0].mxu0
        %v2338 = vadd.f32 %v2232, %v2337
        %v2339 = vpop.f32.mrb[0].mxu0
        %2340 = vmatprep.mubr.f32.mxu0 0.0
        %2341 = vmatmul.mubr.f32.gmra.mrb[0].mxu0 %v2249
        %v2342 = vpop.f32.mrb[0].mxu0
        %v2343 = vadd.f32 %v2232, %v2342
        %v2344 = vpop.f32.mrb[0].mxu0
        %2345 = vdwg.mxu0
        %v2346 = vadd.f32 %v630, %v2318
        %v2347 = vadd.f32 %v635, %v2323
        %v2348 = vadd.f32 %v640, %v2328
        %v2349 = vadd.f32 %v645, %v2333
        %v2350 = vadd.f32 %v650, %v2338
        %v2351 = vadd.f32 %v655, %v2343
        %v2352 = vsel %vm544, %v2346, 0.0
        %2353 = vadd.xlane.f32.xlu0 %v2352
        %v2354 = vpop.xlane.xlu0 %2353
        %v2355 = vsel %vm544, %v2347, 0.0
        %2356 = vadd.xlane.f32.xlu0 %v2355
        %v2357 = vpop.xlane.xlu0 %2356
        %v2358 = vsel %vm544, %v2348, 0.0
        %2359 = vadd.xlane.f32.xlu0 %v2358
        %v2360 = vpop.xlane.xlu0 %2359
        %v2361 = vsel %vm544, %v2349, 0.0
        %2362 = vadd.xlane.f32.xlu0 %v2361
        %v2363 = vpop.xlane.xlu0 %2362
        %v2364 = vsel %vm544, %v2350, 0.0
        %2365 = vadd.xlane.f32.xlu0 %v2364
        %v2366 = vpop.xlane.xlu0 %2365
        %v2367 = vsel %vm544, %v2351, 0.0
        %2368 = vadd.xlane.f32.xlu0 %v2367
        %v2369 = vpop.xlane.xlu0 %2368
        %v2370 = vrcp.pop 32.0
        %v2371 = vmul.f32 %v2354, %v2370
        %v2372 = vmul.f32 %v2357, %v2370
        %v2373 = vmul.f32 %v2360, %v2370
        %v2374 = vmul.f32 %v2363, %v2370
        %v2375 = vmul.f32 %v2366, %v2370
        %v2376 = vmul.f32 %v2369, %v2370
        %v2377 = vsub.f32 %v2346, %v2371
        %v2378 = vsub.f32 %v2347, %v2372
        %v2379 = vsub.f32 %v2348, %v2373
        %v2380 = vsub.f32 %v2349, %v2374
        %v2381 = vsub.f32 %v2350, %v2375
        %v2382 = vsub.f32 %v2351, %v2376
        %v2383 = vmul.f32 %v2377, %v2377
        %v2384 = vmul.f32 %v2378, %v2378
        %v2385 = vmul.f32 %v2379, %v2379
        %v2386 = vmul.f32 %v2380, %v2380
        %v2387 = vmul.f32 %v2381, %v2381
        %v2388 = vmul.f32 %v2382, %v2382
        %v2389 = vsel %vm544, %v2383, 0.0
        %2390 = vadd.xlane.f32.xlu0 %v2389
        %v2391 = vpop.xlane.xlu0 %2390
        %v2392 = vsel %vm544, %v2384, 0.0
        %2393 = vadd.xlane.f32.xlu0 %v2392
        %v2394 = vpop.xlane.xlu0 %2393
        %v2395 = vsel %vm544, %v2385, 0.0
        %2396 = vadd.xlane.f32.xlu0 %v2395
        %v2397 = vpop.xlane.xlu0 %2396
        %v2398 = vsel %vm544, %v2386, 0.0
        %2399 = vadd.xlane.f32.xlu0 %v2398
        %v2400 = vpop.xlane.xlu0 %2399
        %v2401 = vsel %vm544, %v2387, 0.0
        %2402 = vadd.xlane.f32.xlu0 %v2401
        %v2403 = vpop.xlane.xlu0 %2402
        %v2404 = vsel %vm544, %v2388, 0.0
        %2405 = vadd.xlane.f32.xlu0 %v2404
        %v2406 = vpop.xlane.xlu0 %2405
        %v2407 = vmul.f32 %v2391, %v2370
        %v2408 = vmul.f32 %v2394, %v2370
        %v2409 = vmul.f32 %v2397, %v2370
        %v2410 = vmul.f32 %v2400, %v2370
        %v2411 = vmul.f32 %v2403, %v2370
        %v2412 = vmul.f32 %v2406, %v2370
        %v2413 = vadd.f32 %v2407, 1e-05
        %v2414 = vadd.f32 %v2408, 1e-05
        %v2415 = vadd.f32 %v2409, 1e-05
        %v2416 = vadd.f32 %v2410, 1e-05
        %v2417 = vadd.f32 %v2411, 1e-05
        %v2418 = vadd.f32 %v2412, 1e-05
        %v2419 = vrsqrt.pop %v2413
        %v2420 = vrsqrt.pop %v2414
        %v2421 = vrsqrt.pop %v2415
        %v2422 = vrsqrt.pop %v2416
        %v2423 = vrsqrt.pop %v2417
        %v2424 = vrsqrt.pop %v2418
        %v2425 = vmul.f32 %v2377, %v2419
        %v2426 = vmul.f32 %v2378, %v2420
        %v2427 = vmul.f32 %v2379, %v2421
        %v2428 = vmul.f32 %v2380, %v2422
        %v2429 = vmul.f32 %v2381, %v2423
        %v2430 = vmul.f32 %v2382, %v2424
        %v2431 = vlaneseq
        %v2432 = vshrl.u32 %v2431, 7
        %v2433 = vsub.s32 7, %v2432
        %v2434 = vrot.slane %v534, %v2433
        %v2435 = vmul.f32 %v2425, %v2434
        %v2436 = vmul.f32 %v2426, %v2434
        %v2437 = vmul.f32 %v2427, %v2434
        %v2438 = vmul.f32 %v2428, %v2434
        %v2439 = vmul.f32 %v2429, %v2434
        %v2440 = vmul.f32 %v2430, %v2434
        %v2441 = vlaneseq
        %v2442 = vshrl.u32 %v2441, 7
        %v2443 = vsub.s32 0, %v2442
        %v2444 = vrot.slane %v535, %v2443
        %v2445 = vadd.f32 %v2435, %v2444
        %v2446 = vadd.f32 %v2436, %v2444
        %v2447 = vadd.f32 %v2437, %v2444
        %v2448 = vadd.f32 %v2438, %v2444
        %v2449 = vadd.f32 %v2439, %v2444
        %v2450 = vadd.f32 %v2440, %v2444
        %v2451 = vld [vmem:[#allocation14] sm:$0xff]
        %v2452 = vld [vmem:[#allocation14 + $0x8] sm:$0xff]
        %v2453 = vld [vmem:[#allocation14 + $0x10] sm:$0xff]
        %v2454 = vld [vmem:[#allocation14 + $0x18] sm:$0xff]
        %v2455 = vlaneseq
        %v2456 = vshrl.u32 %v2455, 7
        %v2457 = vsub.s32 5, %v2456
        %v2458 = vrot.slane %v534, %v2457
        %v2460 = vsel %vm544, %v2445, 0
        %v2463 = vsel %vm544, %v2446, 0
        %v2466 = vsel %vm544, %v2447, 0
        %v2469 = vsel %vm544, %v2448, 0
        %v2472 = vsel %vm544, %v2449, 0
        %v2475 = vsel %vm544, %v2450, 0
        %2477 = vmatprep.subr.mxu0 0.0
        %2478 = vmatpush1.msra.mxu0 %v2451
        %2479 = vmatprep.subr.mxu0 0.0
        %2480 = vmatpush1.msra.mxu0 %v2452
        %2481 = vmatprep.subr.mxu0 0.0
        %2482 = vmatpush1.msra.mxu0 %v2453
        %2483 = vmatprep.subr.mxu0 0.0
        %2484 = vmatpush1.msra.mxu0 %v2454
        %2485 = vmatprep.subr.mxu0 0.0
        %2486 = vmatpush1.msra.mxu0 0.0
        %2487 = vmatprep.subr.mxu0 0.0
        %2488 = vmatpush1.msra.mxu0 0.0
        %2489 = vmatprep.subr.mxu0 0.0
        %2490 = vmatpush1.msra.mxu0 0.0
        %2491 = vmatprep.subr.mxu0 0.0
        %2492 = vmatpush1.msra.mxu0 0.0
        %2493 = vmatprep.subr.mxu0 0.0
        %2494 = vmatpush1.msra.mxu0 0.0
        %2495 = vmatprep.subr.mxu0 0.0
        %2496 = vmatpush1.msra.mxu0 0.0
        %2497 = vmatprep.subr.mxu0 0.0
        %2498 = vmatpush1.msra.mxu0 0.0
        %2499 = vmatprep.subr.mxu0 0.0
        %2500 = vmatpush1.msra.mxu0 0.0
        %2501 = vmatprep.subr.mxu0 0.0
        %2502 = vmatpush1.msra.mxu0 0.0
        %2503 = vmatprep.subr.mxu0 0.0
        %2504 = vmatpush1.msra.mxu0 0.0
        %2505 = vmatprep.subr.mxu0 0.0
        %2506 = vmatpush1.msra.mxu0 0.0
        %2507 = vmatprep.subr.mxu0 0.0
        %2508 = vmatpush1.msra.mxu0 0.0
        %2509 = vmatprep.subr.mxu0 0.0
        %2510 = vmatpush1.msra.mxu0 0.0
        %2511 = vmatprep.subr.mxu0 0.0
        %2512 = vmatpush1.msra.mxu0 0.0
        %2513 = vmatprep.subr.mxu0 0.0
        %2514 = vmatpush1.msra.mxu0 0.0
        %2515 = vmatprep.subr.mxu0 0.0
        %2516 = vmatpush1.msra.mxu0 0.0
        %2517 = vmatprep.subr.mxu0 0.0
        %2518 = vmatpush1.msra.mxu0 0.0
        %2519 = vmatprep.subr.mxu0 0.0
        %2520 = vmatpush1.msra.mxu0 0.0
        %2521 = vmatprep.subr.mxu0 0.0
        %2522 = vmatpush1.msra.mxu0 0.0
        %2523 = vmatprep.subr.mxu0 0.0
        %2524 = vmatpush1.msra.mxu0 0.0
        %2525 = vmatprep.subr.mxu0 0.0
        %2526 = vmatpush1.msra.mxu0 0.0
        %2527 = vmatprep.subr.mxu0 0.0
        %2528 = vmatpush1.msra.mxu0 0.0
        %2529 = vmatprep.subr.mxu0 0.0
        %2530 = vmatpush1.msra.mxu0 0.0
        %2531 = vmatprep.subr.mxu0 0.0
        %2532 = vmatpush1.msra.mxu0 0.0
        %2533 = vmatprep.subr.mxu0 0.0
        %2534 = vmatpush1.msra.mxu0 0.0
        %2535 = vmatprep.subr.mxu0 0.0
        %2536 = vmatpush1.msra.mxu0 0.0
        %2537 = vmatprep.subr.mxu0 0.0
        %2538 = vmatpush1.msra.mxu0 0.0
        %2539 = vmatprep.subr.mxu0 0.0
        %2540 = vmatpush1.msra.mxu0 0.0
        %2541 = vmatprep.mubr.f32.mxu0 0.0
        %2542 = vmatmul.mubr.f32.gmra.mrb[0].mxu0 %v2460
        %v2543 = vpop.f32.mrb[0].mxu0
        %v2544 = vadd.f32 %v2458, %v2543
        %v2545 = vpop.f32.mrb[0].mxu0
        %2546 = vmatprep.mubr.f32.mxu0 0.0
        %2547 = vmatmul.mubr.f32.gmra.mrb[0].mxu0 %v2463
        %v2548 = vpop.f32.mrb[0].mxu0
        %v2549 = vadd.f32 %v2458, %v2548
        %v2550 = vpop.f32.mrb[0].mxu0
        %2551 = vmatprep.mubr.f32.mxu0 0.0
        %2552 = vmatmul.mubr.f32.gmra.mrb[0].mxu0 %v2466
        %v2553 = vpop.f32.mrb[0].mxu0
        %v2554 = vadd.f32 %v2458, %v2553
        %v2555 = vpop.f32.mrb[0].mxu0
        %2556 = vmatprep.mubr.f32.mxu0 0.0
        %2557 = vmatmul.mubr.f32.gmra.mrb[0].mxu0 %v2469
        %v2558 = vpop.f32.mrb[0].mxu0
        %v2559 = vadd.f32 %v2458, %v2558
        %v2560 = vpop.f32.mrb[0].mxu0
        %2561 = vmatprep.mubr.f32.mxu0 0.0
        %2562 = vmatmul.mubr.f32.gmra.mrb[0].mxu0 %v2472
        %v2563 = vpop.f32.mrb[0].mxu0
        %v2564 = vadd.f32 %v2458, %v2563
        %v2565 = vpop.f32.mrb[0].mxu0
        %2566 = vmatprep.mubr.f32.mxu0 0.0
        %2567 = vmatmul.mubr.f32.gmra.mrb[0].mxu0 %v2475
        %v2568 = vpop.f32.mrb[0].mxu0
        %v2569 = vadd.f32 %v2458, %v2568
        %v2570 = vpop.f32.mrb[0].mxu0
        %2571 = vdwg.mxu0
        %v2572 = vmax.f32 %v2544, 0.0
        %v2573 = vmax.f32 %v2549, 0.0
        %v2574 = vmax.f32 %v2554, 0.0
        %v2575 = vmax.f32 %v2559, 0.0
        %v2576 = vmax.f32 %v2564, 0.0
        %v2577 = vmax.f32 %v2569, 0.0
        %v2578 = vld [vmem:[#allocation16] sm:$0xff]
        %v2579 = vld [vmem:[#allocation16 + $0x8] sm:$0xff]
        %v2580 = vld [vmem:[#allocation16 + $0x10] sm:$0xff]
        %v2581 = vld [vmem:[#allocation16 + $0x18] sm:$0xff]
        %v2582 = vlaneseq
        %v2583 = vshrl.u32 %v2582, 7
        %v2584 = vsub.s32 6, %v2583
        %v2585 = vrot.slane %v534, %v2584
        %v2587 = vsel %vm544, %v2572, 0
        %v2590 = vsel %vm544, %v2573, 0
        %v2593 = vsel %vm544, %v2574, 0
        %v2596 = vsel %vm544, %v2575, 0
        %v2599 = vsel %vm544, %v2576, 0
        %v2602 = vsel %vm544, %v2577, 0
        %2604 = vmatprep.subr.mxu0 0.0
        %2605 = vmatpush1.msra.mxu0 %v2578
        %2606 = vmatprep.subr.mxu0 0.0
        %2607 = vmatpush1.msra.mxu0 %v2579
        %2608 = vmatprep.subr.mxu0 0.0
        %2609 = vmatpush1.msra.mxu0 %v2580
        %2610 = vmatprep.subr.mxu0 0.0
        %2611 = vmatpush1.msra.mxu0 %v2581
        %2612 = vmatprep.subr.mxu0 0.0
        %2613 = vmatpush1.msra.mxu0 0.0
        %2614 = vmatprep.subr.mxu0 0.0
        %2615 = vmatpush1.msra.mxu0 0.0
        %2616 = vmatprep.subr.mxu0 0.0
        %2617 = vmatpush1.msra.mxu0 0.0
        %2618 = vmatprep.subr.mxu0 0.0
        %2619 = vmatpush1.msra.mxu0 0.0
        %2620 = vmatprep.subr.mxu0 0.0
        %2621 = vmatpush1.msra.mxu0 0.0
        %2622 = vmatprep.subr.mxu0 0.0
        %2623 = vmatpush1.msra.mxu0 0.0
        %2624 = vmatprep.subr.mxu0 0.0
        %2625 = vmatpush1.msra.mxu0 0.0
        %2626 = vmatprep.subr.mxu0 0.0
        %2627 = vmatpush1.msra.mxu0 0.0
        %2628 = vmatprep.subr.mxu0 0.0
        %2629 = vmatpush1.msra.mxu0 0.0
        %2630 = vmatprep.subr.mxu0 0.0
        %2631 = vmatpush1.msra.mxu0 0.0
        %2632 = vmatprep.subr.mxu0 0.0
        %2633 = vmatpush1.msra.mxu0 0.0
        %2634 = vmatprep.subr.mxu0 0.0
        %2635 = vmatpush1.msra.mxu0 0.0
        %2636 = vmatprep.subr.mxu0 0.0
        %2637 = vmatpush1.msra.mxu0 0.0
        %2638 = vmatprep.subr.mxu0 0.0
        %2639 = vmatpush1.msra.mxu0 0.0
        %2640 = vmatprep.subr.mxu0 0.0
        %2641 = vmatpush1.msra.mxu0 0.0
        %2642 = vmatprep.subr.mxu0 0.0
        %2643 = vmatpush1.msra.mxu0 0.0
        %2644 = vmatprep.subr.mxu0 0.0
        %2645 = vmatpush1.msra.mxu0 0.0
        %2646 = vmatprep.subr.mxu0 0.0
        %2647 = vmatpush1.msra.mxu0 0.0
        %2648 = vmatprep.subr.mxu0 0.0
        %2649 = vmatpush1.msra.mxu0 0.0
        %2650 = vmatprep.subr.mxu0 0.0
        %2651 = vmatpush1.msra.mxu0 0.0
        %2652 = vmatprep.subr.mxu0 0.0
        %2653 = vmatpush1.msra.mxu0 0.0
        %2654 = vmatprep.subr.mxu0 0.0
        %2655 = vmatpush1.msra.mxu0 0.0
        %2656 = vmatprep.subr.mxu0 0.0
        %2657 = vmatpush1.msra.mxu0 0.0
        %2658 = vmatprep.subr.mxu0 0.0
        %2659 = vmatpush1.msra.mxu0 0.0
        %2660 = vmatprep.subr.mxu0 0.0
        %2661 = vmatpush1.msra.mxu0 0.0
        %2662 = vmatprep.subr.mxu0 0.0
        %2663 = vmatpush1.msra.mxu0 0.0
        %2664 = vmatprep.subr.mxu0 0.0
        %2665 = vmatpush1.msra.mxu0 0.0
        %2666 = vmatprep.subr.mxu0 0.0
        %2667 = vmatpush1.msra.mxu0 0.0
        %2668 = vmatprep.mubr.f32.mxu0 0.0
        %2669 = vmatmul.mubr.f32.gmra.mrb[0].mxu0 %v2587
        %v2670 = vpop.f32.mrb[0].mxu0
        %v2671 = vadd.f32 %v2585, %v2670
        %v2672 = vpop.f32.mrb[0].mxu0
        %2673 = vmatprep.mubr.f32.mxu0 0.0
        %2674 = vmatmul.mubr.f32.gmra.mrb[0].mxu0 %v2590
        %v2675 = vpop.f32.mrb[0].mxu0
        %v2676 = vadd.f32 %v2585, %v2675
        %v2677 = vpop.f32.mrb[0].mxu0
        %2678 = vmatprep.mubr.f32.mxu0 0.0
        %2679 = vmatmul.mubr.f32.gmra.mrb[0].mxu0 %v2593
        %v2680 = vpop.f32.mrb[0].mxu0
        %v2681 = vadd.f32 %v2585, %v2680
        %v2682 = vpop.f32.mrb[0].mxu0
        %2683 = vmatprep.mubr.f32.mxu0 0.0
        %2684 = vmatmul.mubr.f32.gmra.mrb[0].mxu0 %v2596
        %v2685 = vpop.f32.mrb[0].mxu0
        %v2686 = vadd.f32 %v2585, %v2685
        %v2687 = vpop.f32.mrb[0].mxu0
        %2688 = vmatprep.mubr.f32.mxu0 0.0
        %2689 = vmatmul.mubr.f32.gmra.mrb[0].mxu0 %v2599
        %v2690 = vpop.f32.mrb[0].mxu0
        %v2691 = vadd.f32 %v2585, %v2690
        %v2692 = vpop.f32.mrb[0].mxu0
        %2693 = vmatprep.mubr.f32.mxu0 0.0
        %2694 = vmatmul.mubr.f32.gmra.mrb[0].mxu0 %v2602
        %v2695 = vpop.f32.mrb[0].mxu0
        %v2696 = vadd.f32 %v2585, %v2695
        %v2697 = vpop.f32.mrb[0].mxu0
        %2698 = vdwg.mxu0
        %v2699 = vadd.f32 %v2671, %v2445
        %v2700 = vadd.f32 %v2676, %v2446
        %v2701 = vadd.f32 %v2681, %v2447
        %v2702 = vadd.f32 %v2686, %v2448
        %v2703 = vadd.f32 %v2691, %v2449
        %v2704 = vadd.f32 %v2696, %v2450
        %v2705 = vsel %vm544, %v2699, 0.0
        %2706 = vadd.xlane.f32.xlu0 %v2705
        %v2707 = vpop.xlane.xlu0 %2706
        %v2708 = vsel %vm544, %v2700, 0.0
        %2709 = vadd.xlane.f32.xlu0 %v2708
        %v2710 = vpop.xlane.xlu0 %2709
        %v2711 = vsel %vm544, %v2701, 0.0
        %2712 = vadd.xlane.f32.xlu0 %v2711
        %v2713 = vpop.xlane.xlu0 %2712
        %v2714 = vsel %vm544, %v2702, 0.0
        %2715 = vadd.xlane.f32.xlu0 %v2714
        %v2716 = vpop.xlane.xlu0 %2715
        %v2717 = vsel %vm544, %v2703, 0.0
        %2718 = vadd.xlane.f32.xlu0 %v2717
        %v2719 = vpop.xlane.xlu0 %2718
        %v2720 = vsel %vm544, %v2704, 0.0
        %2721 = vadd.xlane.f32.xlu0 %v2720
        %v2722 = vpop.xlane.xlu0 %2721
        %v2723 = vmul.f32 %v2707, %v2370
        %v2724 = vmul.f32 %v2710, %v2370
        %v2725 = vmul.f32 %v2713, %v2370
        %v2726 = vmul.f32 %v2716, %v2370
        %v2727 = vmul.f32 %v2719, %v2370
        %v2728 = vmul.f32 %v2722, %v2370
        %v2729 = vsub.f32 %v2699, %v2723
        %v2730 = vsub.f32 %v2700, %v2724
        %v2731 = vsub.f32 %v2701, %v2725
        %v2732 = vsub.f32 %v2702, %v2726
        %v2733 = vsub.f32 %v2703, %v2727
        %v2734 = vsub.f32 %v2704, %v2728
        %v2735 = vmul.f32 %v2729, %v2729
        %v2736 = vmul.f32 %v2730, %v2730
        %v2737 = vmul.f32 %v2731, %v2731
        %v2738 = vmul.f32 %v2732, %v2732
        %v2739 = vmul.f32 %v2733, %v2733
        %v2740 = vmul.f32 %v2734, %v2734
        %v2741 = vsel %vm544, %v2735, 0.0
        %2742 = vadd.xlane.f32.xlu0 %v2741
        %v2743 = vpop.xlane.xlu0 %2742
        %v2744 = vsel %vm544, %v2736, 0.0
        %2745 = vadd.xlane.f32.xlu0 %v2744
        %v2746 = vpop.xlane.xlu0 %2745
        %v2747 = vsel %vm544, %v2737, 0.0
        %2748 = vadd.xlane.f32.xlu0 %v2747
        %v2749 = vpop.xlane.xlu0 %2748
        %v2750 = vsel %vm544, %v2738, 0.0
        %2751 = vadd.xlane.f32.xlu0 %v2750
        %v2752 = vpop.xlane.xlu0 %2751
        %v2753 = vsel %vm544, %v2739, 0.0
        %2754 = vadd.xlane.f32.xlu0 %v2753
        %v2755 = vpop.xlane.xlu0 %2754
        %v2756 = vsel %vm544, %v2740, 0.0
        %2757 = vadd.xlane.f32.xlu0 %v2756
        %v2758 = vpop.xlane.xlu0 %2757
        %v2759 = vmul.f32 %v2743, %v2370
        %v2760 = vmul.f32 %v2746, %v2370
        %v2761 = vmul.f32 %v2749, %v2370
        %v2762 = vmul.f32 %v2752, %v2370
        %v2763 = vmul.f32 %v2755, %v2370
        %v2764 = vmul.f32 %v2758, %v2370
        %v2765 = vadd.f32 %v2759, 1e-05
        %v2766 = vadd.f32 %v2760, 1e-05
        %v2767 = vadd.f32 %v2761, 1e-05
        %v2768 = vadd.f32 %v2762, 1e-05
        %v2769 = vadd.f32 %v2763, 1e-05
        %v2770 = vadd.f32 %v2764, 1e-05
        %v2771 = vrsqrt.pop %v2765
        %v2772 = vrsqrt.pop %v2766
        %v2773 = vrsqrt.pop %v2767
        %v2774 = vrsqrt.pop %v2768
        %v2775 = vrsqrt.pop %v2769
        %v2776 = vrsqrt.pop %v2770
        %v2777 = vmul.f32 %v2729, %v2771
        %v2778 = vmul.f32 %v2730, %v2772
        %v2779 = vmul.f32 %v2731, %v2773
        %v2780 = vmul.f32 %v2732, %v2774
        %v2781 = vmul.f32 %v2733, %v2775
        %v2782 = vmul.f32 %v2734, %v2776
        %v2783 = vlaneseq
        %v2784 = vshrl.u32 %v2783, 7
        %v2785 = vsub.s32 1, %v2784
        %v2786 = vrot.slane %v535, %v2785
        %v2787 = vmul.f32 %v2777, %v2786
        %v2788 = vmul.f32 %v2778, %v2786
        %v2789 = vmul.f32 %v2779, %v2786
        %v2790 = vmul.f32 %v2780, %v2786
        %v2791 = vmul.f32 %v2781, %v2786
        %v2792 = vmul.f32 %v2782, %v2786
        %v2793 = vlaneseq
        %v2794 = vshrl.u32 %v2793, 7
        %v2795 = vsub.s32 2, %v2794
        %v2796 = vrot.slane %v535, %v2795
        %v2797 = vadd.f32 %v2787, %v2796
        %v2798 = vadd.f32 %v2788, %v2796
        %v2799 = vadd.f32 %v2789, %v2796
        %v2800 = vadd.f32 %v2790, %v2796
        %v2801 = vadd.f32 %v2791, %v2796
        %v2802 = vadd.f32 %v2792, %v2796
        %v2803 = vlaneseq
        %v2804 = vshrl.u32 %v2803, 7
        %v2805 = vsub.s32 3, %v2804
        %v2806 = vrot.slane %v535, %v2805
        %v2807 = vmul.f32 %v2797, %v2806
        %v2808 = vmul.f32 %v2798, %v2806
        %v2809 = vmul.f32 %v2799, %v2806
        %v2810 = vmul.f32 %v2800, %v2806
        %v2811 = vmul.f32 %v2801, %v2806
        %v2812 = vmul.f32 %v2802, %v2806
        %v2813 = vsel %vm544, %v2807, 0.0
        %2814 = vadd.xlane.f32.xlu0 %v2813
        %v2815 = vpop.xlane.xlu0 %2814
        %v2816 = vsel %vm544, %v2808, 0.0
        %2817 = vadd.xlane.f32.xlu0 %v2816
        %v2818 = vpop.xlane.xlu0 %2817
        %v2819 = vsel %vm544, %v2809, 0.0
        %2820 = vadd.xlane.f32.xlu0 %v2819
        %v2821 = vpop.xlane.xlu0 %2820
        %v2822 = vsel %vm544, %v2810, 0.0
        %2823 = vadd.xlane.f32.xlu0 %v2822
        %v2824 = vpop.xlane.xlu0 %2823
        %v2825 = vsel %vm544, %v2811, 0.0
        %2826 = vadd.xlane.f32.xlu0 %v2825
        %v2827 = vpop.xlane.xlu0 %2826
        %v2828 = vsel %vm544, %v2812, 0.0
        %2829 = vadd.xlane.f32.xlu0 %v2828
        %v2830 = vpop.xlane.xlu0 %2829
        %2832 = vset.pattern.permute.xlu0 0
        %2833 = vperm.xlu0 %2832, %v535
        %v2834 = vpop.permute.xlu0 %2833
        %v2835 = vlaneseq
        %v2836 = vshrl.u32 %v2835, 7
        %v2837 = vsub.s32 4, %v2836
        %v2838 = vrot.slane %v2834, %v2837
        %v2840 = vadd.f32 %v2815, %v2838
        %v2841 = vadd.f32 %v2818, %v2838
        %v2842 = vadd.f32 %v2821, %v2838
        %v2843 = vadd.f32 %v2824, %v2838
        %v2844 = vadd.f32 %v2827, %v2838
        %v2845 = vadd.f32 %v2830, %v2838
        %v2846 = vxor.u32 %v2840, 2147483648
        %v2847 = vxor.u32 %v2841, 2147483648
        %v2848 = vxor.u32 %v2842, 2147483648
        %v2849 = vxor.u32 %v2843, 2147483648
        %v2850 = vxor.u32 %v2844, 2147483648
        %v2851 = vxor.u32 %v2845, 2147483648
        %v2852 = vmul.f32 %v2846, 1.442695
        %v2853 = vpow.pop %v2852
        %v2854 = vmul.f32 %v2847, 1.442695
        %v2855 = vpow.pop %v2854
        %v2856 = vmul.f32 %v2848, 1.442695
        %v2857 = vpow.pop %v2856
        %v2858 = vmul.f32 %v2849, 1.442695
        %v2859 = vpow.pop %v2858
        %v2860 = vmul.f32 %v2850, 1.442695
        %v2861 = vpow.pop %v2860
        %v2862 = vmul.f32 %v2851, 1.442695
        %v2863 = vpow.pop %v2862
        %v2864 = vadd.f32 %v2853, 1.0
        %v2865 = vadd.f32 %v2855, 1.0
        %v2866 = vadd.f32 %v2857, 1.0
        %v2867 = vadd.f32 %v2859, 1.0
        %v2868 = vadd.f32 %v2861, 1.0
        %v2869 = vadd.f32 %v2863, 1.0
        %v2870 = vrcp.pop %v2864
        %v2871 = vmul.f32 1.0, %v2870
        %v2872 = vrcp.pop %v2865
        %v2873 = vmul.f32 1.0, %v2872
        %v2874 = vrcp.pop %v2866
        %v2875 = vmul.f32 1.0, %v2874
        %v2876 = vrcp.pop %v2867
        %v2877 = vmul.f32 1.0, %v2876
        %v2878 = vrcp.pop %v2868
        %v2879 = vmul.f32 1.0, %v2878
        %v2880 = vrcp.pop %v2869
        %v2881 = vmul.f32 1.0, %v2880
        %2888 = vset.pattern.permute.xlu0 0
        %2889 = vperm.xlu0 %2888, %v2871
        %v2890 = vpop.permute.xlu0 %2889
        %2891 = vset.pattern.permute.xlu0 0
        %2892 = vperm.xlu0 %2891, %v2873
        %v2893 = vpop.permute.xlu0 %2892
        %2894 = vset.pattern.permute.xlu0 0
        %2895 = vperm.xlu0 %2894, %v2875
        %v2896 = vpop.permute.xlu0 %2895
        %2897 = vset.pattern.permute.xlu0 0
        %2898 = vperm.xlu0 %2897, %v2877
        %v2899 = vpop.permute.xlu0 %2898
        %2900 = vset.pattern.permute.xlu0 0
        %2901 = vperm.xlu0 %2900, %v2879
        %v2902 = vpop.permute.xlu0 %2901
        %2903 = vset.pattern.permute.xlu0 0
        %2904 = vperm.xlu0 %2903, %v2881
        %v2905 = vpop.permute.xlu0 %2904
        %v2906 = vlaneseq
        %v2907 = vshrl.u32 %v2906, 7
        %v2908 = vsub.s32 %v1013, %v2907
        %v2909 = vrot.slane %v2890, %v2908
        %v2910 = vadd.s32 %v1013, 4294967288
        %v2911 = vlaneseq
        %v2912 = vshrl.u32 %v2911, 7
        %v2913 = vsub.s32 %v2910, %v2912
        %v2914 = vrot.slane %v2893, %v2913
        %vm2915 = vcmask 130112
        %v2916 = vsel %vm2915, %v2914, %v2909
        %v2917 = vadd.s32 %v1013, 4294967280
        %v2918 = vlaneseq
        %v2919 = vshrl.u32 %v2918, 7
        %v2920 = vsub.s32 %v2917, %v2919
        %v2921 = vrot.slane %v2896, %v2920
        %vm2922 = vcmask 195712
        %v2923 = vsel %vm2922, %v2921, %v2916
        %v2924 = vadd.s32 %v1013, 4294967272
        %v2925 = vlaneseq
        %v2926 = vshrl.u32 %v2925, 7
        %v2927 = vsub.s32 %v2924, %v2926
        %v2928 = vrot.slane %v2899, %v2927
        %vm2929 = vcmask 261312
        %v2930 = vsel %vm2929, %v2928, %v2923
        %v2931 = vadd.s32 %v1013, 4294967264
        %v2932 = vlaneseq
        %v2933 = vshrl.u32 %v2932, 7
        %v2934 = vsub.s32 %v2931, %v2933
        %v2935 = vrot.slane %v2902, %v2934
        %vm2936 = vcmask 326912
        %v2937 = vsel %vm2936, %v2935, %v2930
        %v2938 = vadd.s32 %v1013, 4294967256
        %v2939 = vlaneseq
        %v2940 = vshrl.u32 %v2939, 7
        %v2941 = vsub.s32 %v2938, %v2940
        %v2942 = vrot.slane %v2905, %v2941
        %vm2943 = vcmask 392512
        %v2944 = vsel %vm2943, %v2942, %v2937
        %vm2946 = vcmask 385024
        %2947 = vst.msk [vmem:[%s519] sm:$0x1] %vm2946, %v2944
        %s2948 = sand.u32 %s261, 1
        %s2949 = scalar_lea.sflag [#allocation4], %s2948
        %s2950 = sand.u32 %s261, 1
        %s2951 = scalar_lea.vmem [#allocation17], %s2950
        // Predicated region
        $region97: #{tpu_custom_call.1} parent=59 // pred_check
          %p2952 = pneg %p271
        $region98: #{tpu_custom_call.1} parent=59 // pred_check_branch
          %2954 = sbr.rel (%p2952) target = $region100
        $region99: #{tpu_custom_call.1} parent=59 // pred_region
          %s2956 = ssub.s32 16, 16
          %2957 = vsyncadd %s2949, %s2956
          %s2958 = smul.addr %s33, 16
          %s2959 = scalar_lea.hbm %s10, %s2958
          %s2961 = sshll.u32 %s2951, 4
          %s2962 = int_to_ptr.vmem [resolvable:$true] %s2961
          %2964 = dma.vmem_to_hbm [thread:$0]  %s2962, 16, %s2959, %s2949
        $region100: #{tpu_custom_call.1} parent=59 // pred_fallthru
          _
      $region60: #{tpu_custom_call.1} parent=5 // pred_fallthru
        _
      %p2965 = scmp.le.s32.totalorder 2, %s28
      // Predicated region
      $region101: #{tpu_custom_call.1} parent=5 // pred_check
        %p2966 = pneg %p2965
      $region102: #{tpu_custom_call.1} parent=5 // pred_check_branch
        %2968 = sbr.rel (%p2966) target = $region104
      $region103: #{tpu_custom_call.1} parent=5 // pred_region
        %s2969 = ssub.s32 %s28, 2
        // Predicated region
        $region105: #{tpu_custom_call.1} parent=103 // pred_check
          %p2970 = pneg %p277
        $region106: #{tpu_custom_call.1} parent=103 // pred_check_branch
          %2972 = sbr.rel (%p2970) target = $region108
        $region107: #{tpu_custom_call.1} parent=103 // pred_region
          %s2973 = sand.u32 %s262, 1
          %s2974 = scalar_lea.sflag [#allocation4], %s2973
          %s2975 = sand.u32 %s262, 1
          %s2976 = scalar_lea.vmem [#allocation17], %s2975
          %2977 = dma.done %s2974, 16
        $region108: #{tpu_custom_call.1} parent=103 // pred_fallthru
          _
      $region104: #{tpu_custom_call.1} parent=5 // pred_fallthru
        _
    $region6: #{tpu_custom_call.1} parent=1 // loop_footer
      %s32 = sadd.s32 1, %s28
    $region7: #{tpu_custom_call.1} parent=1 // loop_footer_branch
      %27 = sbr.rel target = $region3
    $region8: #{tpu_custom_call.1} parent=1 // loop_exit
      _
    %2978 = vsyncpa [#allocation3], 1
    %s2979 = scalar_lea.sflag [#allocation3], 1
    %2980 = vsyncpa %s2979, 1
    %2981 = vsyncpa [#allocation6], 1
    %s2982 = scalar_lea.sflag [#allocation6], 1
    %2983 = vsyncpa %s2982, 1
    %2984 = vsyncpa [#allocation9], 1
    %2985 = vsyncpa [#allocation12], 1
    %2986 = vsyncpa [#allocation15], 1
    %2987 = vsyncpa [#allocation4], 1
    %s2988 = scalar_lea.sflag [#allocation4], 1
    %2989 = vsyncpa %s2988, 1

// kernel: tpu_custom_call.1
$region0: #{tpu_custom_call.1}
  #allocation0 [shape = 'u32[]', space=smem, size = 0x4, offset = 0x4, fixed_abs, tag = 'smem constant byte address 0x4 - core index']
  #allocation1 [shape = 'u32[144,128]{1,0:T(1,128)}', space=vmem, size = 0x12000, scoped, tag = 'internal scratch']
  %s0 = inlined_call_operand.hbm [shape: f32[6,16,32], index: 0, kind: input, shape index: {}]
  %s1 = inlined_call_operand.hbm [shape: f32[6,16,32], index: 1, kind: input, shape index: {}]
  %s2 = inlined_call_operand.hbm [shape: f32[32,32], index: 2, kind: input, shape index: {}]
  %s3 = inlined_call_operand.hbm [shape: f32[32,32], index: 3, kind: input, shape index: {}]
  %s4 = inlined_call_operand.hbm [shape: f32[32,32], index: 4, kind: input, shape index: {}]
  %s5 = inlined_call_operand.hbm [shape: f32[32,32], index: 5, kind: input, shape index: {}]
  %s6 = inlined_call_operand.hbm [shape: f32[32,32], index: 6, kind: input, shape index: {}]
  %s7 = inlined_call_operand.hbm [shape: f32[32,32], index: 7, kind: input, shape index: {}]
  %s8 = inlined_call_operand.hbm [shape: f32[32,32], index: 8, kind: input, shape index: {}]
  %s9 = inlined_call_operand.vmem [shape: f32[16,32], index: 9, kind: input, shape index: {}]
  %s10 = inlined_call_operand.hbm [shape: f32[2,1,48], index: 10, kind: output, shape index: {}]
  %s11 = sld [smem:[#allocation0]]
  $region109: #{tpu_custom_call.1} parent=0
    _
  %s13 = ssub.s32 1, %s11
  %s14 = scalar_select 0, %s13, %s11
  $region1: #{tpu_custom_call.1} parent=0
    #allocation2 [shape = 'u8[49152]{0}', space=vmem, size = 0xc000, scoped, tag = 'input window, operand 0']
    #allocation3 [shape = 's32[2]{0}', space=sflag, size = 0x8, scoped, tag = 'scoped memory for tpu_custom_call.1']
    #allocation4 [shape = 's32[2]{0}', space=sflag, size = 0x8, scoped, tag = 'scoped memory for tpu_custom_call.1']
    #allocation5 [shape = 'u8[49152]{0}', space=vmem, size = 0xc000, scoped, tag = 'input window, operand 1']
    #allocation6 [shape = 's32[2]{0}', space=sflag, size = 0x8, scoped, tag = 'scoped memory for tpu_custom_call.1']
    #allocation7 [shape = 'u8[16384]{0}', space=vmem, size = 0x4000, scoped, tag = 'input window, operand 2, single buffered']
    #allocation8 [shape = 'u8[16384]{0}', space=vmem, size = 0x4000, scoped, tag = 'input window, operand 3, single buffered']
    #allocation9 [shape = 's32[1]{0}', space=sflag, size = 0x4, scoped, tag = 'scoped memory for tpu_custom_call.1']
    #allocation10 [shape = 'u8[16384]{0}', space=vmem, size = 0x4000, scoped, tag = 'input window, operand 4, single buffered']
    #allocation11 [shape = 'u8[16384]{0}', space=vmem, size = 0x4000, scoped, tag = 'input window, operand 5, single buffered']
    #allocation12 [shape = 's32[1]{0}', space=sflag, size = 0x4, scoped, tag = 'scoped memory for tpu_custom_call.1']
    #allocation13 [shape = 'u8[16384]{0}', space=vmem, size = 0x4000, scoped, tag = 'input window, operand 6, single buffered']
    #allocation14 [shape = 'u8[16384]{0}', space=vmem, size = 0x4000, scoped, tag = 'input window, operand 7, single buffered']
    #allocation15 [shape = 's32[1]{0}', space=sflag, size = 0x4, scoped, tag = 'scoped memory for tpu_custom_call.1']
    #allocation16 [shape = 'u8[16384]{0}', space=vmem, size = 0x4000, scoped, tag = 'input window, operand 8, single buffered']
    #allocation17 [shape = 'u8[1024]{0}', space=vmem, size = 0x400, scoped, tag = 'output window, operand 0']
    %15 = vsyncpa [#allocation3], 0
    %s16 = scalar_lea.sflag [#allocation3], 1
    %17 = vsyncpa %s16, 0
    %18 = vsyncpa [#allocation6], 0
    %s19 = scalar_lea.sflag [#allocation6], 1
    %20 = vsyncpa %s19, 0
    %21 = vsyncpa [#allocation9], 0
    %22 = vsyncpa [#allocation12], 0
    %23 = vsyncpa [#allocation15], 0
    %24 = vsyncpa [#allocation4], 0
    %s25 = scalar_lea.sflag [#allocation4], 1
    %26 = vsyncpa %s25, 0
    loop: start=0, step=1, limit=4
    $region2: #{tpu_custom_call.1} parent=1 // loop_pre_header
      _
    $region3: #{tpu_custom_call.1} parent=1 // loop_header
      %s28 = sphi 0, %s32
      %p29 = scmp.ge.s32.totalorder %s28, 4
      %s38 = sphi 0, %s40
      %s41 = sphi 0, %s38
      %s42 = sphi 0, %s41
      %s58 = sphi 0, %s42
      %s64 = sphi 0, %s66
      %s67 = sphi 0, %s64
      %s68 = sphi 0, %s67
      %s84 = sphi 0, %s68
      %s88 = sphi 0, %s88
      %s90 = sphi 0, %s88
      %s91 = sphi 0, %s90
      %s105 = sphi 0, %s91
      %s109 = sphi 0, %s109
      %s111 = sphi 0, %s109
      %s112 = sphi 0, %s111
      %s126 = sphi 0, %s112
      %s130 = sphi 0, %s130
      %s132 = sphi 0, %s130
      %s133 = sphi 0, %s132
      %s147 = sphi 0, %s133
      %s151 = sphi 0, %s151
      %s153 = sphi 0, %s151
      %s154 = sphi 0, %s153
      %s168 = sphi 0, %s154
      %s172 = sphi 0, %s172
      %s174 = sphi 0, %s172
      %s175 = sphi 0, %s174
      %s189 = sphi 0, %s175
      %s193 = sphi 0, %s193
      %s195 = sphi 0, %s193
      %s196 = sphi 0, %s195
      %s210 = sphi 0, %s196
      %s214 = sphi 0, %s214
      %s216 = sphi 0, %s214
      %s217 = sphi 0, %s216
      %s231 = sphi 0, %s217
      %s235 = sphi 0, %s235
      %s237 = sphi 0, %s235
      %s238 = sphi 0, %s237
      %s252 = sphi 0, %s238
      %s258 = sphi 0, %s260
      %s261 = sphi 0, %s258
      %s262 = sphi 0, %s261
      %s278 = sphi 0, %s262
    $region4: #{tpu_custom_call.1} parent=1 // loop_header_branch
      %31 = sbr.rel (%p29) target = $region8
    $region5: #{tpu_custom_call.1} parent=1 // loop_body
      %s33 = ssub.s32 %s28, 1
      %s34 = ssub.s32 %s28, 2
      %s35 = sadd.s32 %s28, 1
      %s36 = ssub.s32 %s28, %s35
      %p37 = scmp.eq.s32.totalorder %s36, 0
      %s39 = sadd.s32 %s38, 1
      %s40 = scalar_select %p37, %s38, %s39
      %p43 = pneg %p37
      %p44 = scmp.eq.s32.totalorder %s28, 1
      %p45 = por %p43, %p44
      %p46 = scmp.ne.s32.totalorder %s38, %s41
      %p47 = scmp.eq.s32.totalorder %s28, 0
      %p48 = por %p46, %p47
      %p49 = scmp.ne.s32.totalorder %s38, %s41
      %p50 = scmp.eq.s32.totalorder %s33, 1
      %p51 = por %p49, %p50
      %p52 = scmp.ne.s32.totalorder %s41, %s42
      %p53 = scmp.eq.s32.totalorder %s33, 0
      %p54 = por %p52, %p53
      %p55 = scmp.ne.s32.totalorder %s41, %s42
      %p56 = scmp.eq.s32.totalorder %s34, 1
      %p57 = por %p55, %p56
      %p59 = scmp.ne.s32.totalorder %s42, %s58
      %p60 = scmp.eq.s32.totalorder %s34, 0
      %p61 = por %p59, %p60
      %s62 = ssub.s32 %s28, %s35
      %p63 = scmp.eq.s32.totalorder %s62, 0
      %s65 = sadd.s32 %s64, 1
      %s66 = scalar_select %p63, %s64, %s65
      %p69 = pneg %p63
      %p70 = scmp.eq.s32.totalorder %s28, 1
      %p71 = por %p69, %p70
      %p72 = scmp.ne.s32.totalorder %s64, %s67
      %p73 = scmp.eq.s32.totalorder %s28, 0
      %p74 = por %p72, %p73
      %p75 = scmp.ne.s32.totalorder %s64, %s67
      %p76 = scmp.eq.s32.totalorder %s33, 1
      %p77 = por %p75, %p76
      %p78 = scmp.ne.s32.totalorder %s67, %s68
      %p79 = scmp.eq.s32.totalorder %s33, 0
      %p80 = por %p78, %p79
      %p81 = scmp.ne.s32.totalorder %s67, %s68
      %p82 = scmp.eq.s32.totalorder %s34, 1
      %p83 = por %p81, %p82
      %p85 = scmp.ne.s32.totalorder %s68, %s84
      %p86 = scmp.eq.s32.totalorder %s34, 0
      %p87 = por %p85, %p86
      %s89 = sadd.s32 %s88, 1
      %p92 = scmp.eq.s32.totalorder %s28, 1
      %p93 = scmp.ne.s32.totalorder %s88, %s90
      %p94 = scmp.eq.s32.totalorder %s28, 0
      %p95 = por %p93, %p94
      %p96 = scmp.ne.s32.totalorder %s88, %s90
      %p97 = scmp.eq.s32.totalorder %s33, 1
      %p98 = por %p96, %p97
      %p99 = scmp.ne.s32.totalorder %s90, %s91
      %p100 = scmp.eq.s32.totalorder %s33, 0
      %p101 = por %p99, %p100
      %p102 = scmp.ne.s32.totalorder %s90, %s91
      %p103 = scmp.eq.s32.totalorder %s34, 1
      %p104 = por %p102, %p103
      %p106 = scmp.ne.s32.totalorder %s91, %s105
      %p107 = scmp.eq.s32.totalorder %s34, 0
      %p108 = por %p106, %p107
      %s110 = sadd.s32 %s109, 1
      %p113 = scmp.eq.s32.totalorder %s28, 1
      %p114 = scmp.ne.s32.totalorder %s109, %s111
      %p115 = scmp.eq.s32.totalorder %s28, 0
      %p116 = por %p114, %p115
      %p117 = scmp.ne.s32.totalorder %s109, %s111
      %p118 = scmp.eq.s32.totalorder %s33, 1
      %p119 = por %p117, %p118
      %p120 = scmp.ne.s32.totalorder %s111, %s112
      %p121 = scmp.eq.s32.totalorder %s33, 0
      %p122 = por %p120, %p121
      %p123 = scmp.ne.s32.totalorder %s111, %s112
      %p124 = scmp.eq.s32.totalorder %s34, 1
      %p125 = por %p123, %p124
      %p127 = scmp.ne.s32.totalorder %s112, %s126
      %p128 = scmp.eq.s32.totalorder %s34, 0
      %p129 = por %p127, %p128
      %s131 = sadd.s32 %s130, 1
      %p134 = scmp.eq.s32.totalorder %s28, 1
      %p135 = scmp.ne.s32.totalorder %s130, %s132
      %p136 = scmp.eq.s32.totalorder %s28, 0
      %p137 = por %p135, %p136
      %p138 = scmp.ne.s32.totalorder %s130, %s132
      %p139 = scmp.eq.s32.totalorder %s33, 1
      %p140 = por %p138, %p139
      %p141 = scmp.ne.s32.totalorder %s132, %s133
      %p142 = scmp.eq.s32.totalorder %s33, 0
      %p143 = por %p141, %p142
      %p144 = scmp.ne.s32.totalorder %s132, %s133
      %p145 = scmp.eq.s32.totalorder %s34, 1
      %p146 = por %p144, %p145
      %p148 = scmp.ne.s32.totalorder %s133, %s147
      %p149 = scmp.eq.s32.totalorder %s34, 0
      %p150 = por %p148, %p149
      %s152 = sadd.s32 %s151, 1
      %p155 = scmp.eq.s32.totalorder %s28, 1
      %p156 = scmp.ne.s32.totalorder %s151, %s153
      %p157 = scmp.eq.s32.totalorder %s28, 0
      %p158 = por %p156, %p157
      %p159 = scmp.ne.s32.totalorder %s151, %s153
      %p160 = scmp.eq.s32.totalorder %s33, 1
      %p161 = por %p159, %p160
      %p162 = scmp.ne.s32.totalorder %s153, %s154
      %p163 = scmp.eq.s32.totalorder %s33, 0
      %p164 = por %p162, %p163
      %p165 = scmp.ne.s32.totalorder %s153, %s154
      %p166 = scmp.eq.s32.totalorder %s34, 1
      %p167 = por %p165, %p166
      %p169 = scmp.ne.s32.totalorder %s154, %s168
      %p170 = scmp.eq.s32.totalorder %s34, 0
      %p171 = por %p169, %p170
      %s173 = sadd.s32 %s172, 1
      %p176 = scmp.eq.s32.totalorder %s28, 1
      %p177 = scmp.ne.s32.totalorder %s172, %s174
      %p178 = scmp.eq.s32.totalorder %s28, 0
      %p179 = por %p177, %p178
      %p180 = scmp.ne.s32.totalorder %s172, %s174
      %p181 = scmp.eq.s32.totalorder %s33, 1
      %p182 = por %p180, %p181
      %p183 = scmp.ne.s32.totalorder %s174, %s175
      %p184 = scmp.eq.s32.totalorder %s33, 0
      %p185 = por %p183, %p184
      %p186 = scmp.ne.s32.totalorder %s174, %s175
      %p187 = scmp.eq.s32.totalorder %s34, 1
      %p188 = por %p186, %p187
      %p190 = scmp.ne.s32.totalorder %s175, %s189
      %p191 = scmp.eq.s32.totalorder %s34, 0
      %p192 = por %p190, %p191
      %s194 = sadd.s32 %s193, 1
      %p197 = scmp.eq.s32.totalorder %s28, 1
      %p198 = scmp.ne.s32.totalorder %s193, %s195
      %p199 = scmp.eq.s32.totalorder %s28, 0
      %p200 = por %p198, %p199
      %p201 = scmp.ne.s32.totalorder %s193, %s195
      %p202 = scmp.eq.s32.totalorder %s33, 1
      %p203 = por %p201, %p202
      %p204 = scmp.ne.s32.totalorder %s195, %s196
      %p205 = scmp.eq.s32.totalorder %s33, 0
      %p206 = por %p204, %p205
      %p207 = scmp.ne.s32.totalorder %s195, %s196
      %p208 = scmp.eq.s32.totalorder %s34, 1
      %p209 = por %p207, %p208
      %p211 = scmp.ne.s32.totalorder %s196, %s210
      %p212 = scmp.eq.s32.totalorder %s34, 0
      %p213 = por %p211, %p212
      %s215 = sadd.s32 %s214, 1
      %p218 = scmp.eq.s32.totalorder %s28, 1
      %p219 = scmp.ne.s32.totalorder %s214, %s216
      %p220 = scmp.eq.s32.totalorder %s28, 0
      %p221 = por %p219, %p220
      %p222 = scmp.ne.s32.totalorder %s214, %s216
      %p223 = scmp.eq.s32.totalorder %s33, 1
      %p224 = por %p222, %p223
      %p225 = scmp.ne.s32.totalorder %s216, %s217
      %p226 = scmp.eq.s32.totalorder %s33, 0
      %p227 = por %p225, %p226
      %p228 = scmp.ne.s32.totalorder %s216, %s217
      %p229 = scmp.eq.s32.totalorder %s34, 1
      %p230 = por %p228, %p229
      %p232 = scmp.ne.s32.totalorder %s217, %s231
      %p233 = scmp.eq.s32.totalorder %s34, 0
      %p234 = por %p232, %p233
      %s236 = sadd.s32 %s235, 1
      %p239 = scmp.eq.s32.totalorder %s28, 1
      %p240 = scmp.ne.s32.totalorder %s235, %s237
      %p241 = scmp.eq.s32.totalorder %s28, 0
      %p242 = por %p240, %p241
      %p243 = scmp.ne.s32.totalorder %s235, %s237
      %p244 = scmp.eq.s32.totalorder %s33, 1
      %p245 = por %p243, %p244
      %p246 = scmp.ne.s32.totalorder %s237, %s238
      %p247 = scmp.eq.s32.totalorder %s33, 0
      %p248 = por %p246, %p247
      %p249 = scmp.ne.s32.totalorder %s237, %s238
      %p250 = scmp.eq.s32.totalorder %s34, 1
      %p251 = por %p249, %p250
      %p253 = scmp.ne.s32.totalorder %s238, %s252
      %p254 = scmp.eq.s32.totalorder %s34, 0
      %p255 = por %p253, %p254
      %s256 = ssub.s32 %s28, %s35
      %p257 = scmp.eq.s32.totalorder %s256, 0
      %s259 = sadd.s32 %s258, 1
      %s260 = scalar_select %p257, %s258, %s259
      %p263 = pneg %p257
      %p264 = scmp.eq.s32.totalorder %s28, 1
      %p265 = por %p263, %p264
      %p266 = scmp.ne.s32.totalorder %s258, %s261
      %p267 = scmp.eq.s32.totalorder %s28, 0
      %p268 = por %p266, %p267
      %p269 = scmp.ne.s32.totalorder %s258, %s261
      %p270 = scmp.eq.s32.totalorder %s33, 1
      %p271 = por %p269, %p270
      %p272 = scmp.ne.s32.totalorder %s261, %s262
      %p273 = scmp.eq.s32.totalorder %s33, 0
      %p274 = por %p272, %p273
      %p275 = scmp.ne.s32.totalorder %s261, %s262
      %p276 = scmp.eq.s32.totalorder %s34, 1
      %p277 = por %p275, %p276
      %p279 = scmp.ne.s32.totalorder %s262, %s278
      %p280 = scmp.eq.s32.totalorder %s34, 0
      %p281 = por %p279, %p280
      %p282 = scmp.le.s32.totalorder 1, %s28
      %p283 = scmp.lt.s32.totalorder %s28, 3
      %p284 = pnand %p282, %p283
      %p285 = pneg %p284
      // Predicated region
      $region9: #{tpu_custom_call.1} parent=5 // pred_check
        _
      $region10: #{tpu_custom_call.1} parent=5 // pred_check_branch
        %287 = sbr.rel (%p284) target = $region12
      $region11: #{tpu_custom_call.1} parent=5 // pred_region
        %s288 = ssub.s32 %s28, 1
        // Predicated region
        $region13: #{tpu_custom_call.1} parent=11 // pred_check
          %p289 = pneg %p101
        $region14: #{tpu_custom_call.1} parent=11 // pred_check_branch
          %291 = sbr.rel (%p289) target = $region16
        $region15: #{tpu_custom_call.1} parent=11 // pred_region
          %s293 = ssub.s32 512, 512
          %294 = vsyncadd [#allocation6], %s293
          %s295 = sshll.u32 [#allocation7], 4
          %s296 = int_to_ptr.vmem [resolvable:$true] %s295
          %301 = dma.hbm_to_vmem [thread:$0]  %s2, 512, %s296, [#allocation6], 128, 128, 8
        $region16: #{tpu_custom_call.1} parent=11 // pred_fallthru
          _
        // Predicated region
        $region17: #{tpu_custom_call.1} parent=11 // pred_check
          %p302 = pneg %p122
        $region18: #{tpu_custom_call.1} parent=11 // pred_check_branch
          %304 = sbr.rel (%p302) target = $region20
        $region19: #{tpu_custom_call.1} parent=11 // pred_region
          %s306 = ssub.s32 512, 512
          %307 = vsyncadd [#allocation9], %s306
          %s308 = sshll.u32 [#allocation8], 4
          %s309 = int_to_ptr.vmem [resolvable:$true] %s308
          %314 = dma.hbm_to_vmem [thread:$0]  %s3, 512, %s309, [#allocation9], 128, 128, 8
        $region20: #{tpu_custom_call.1} parent=11 // pred_fallthru
          _
        // Predicated region
        $region21: #{tpu_custom_call.1} parent=11 // pred_check
          %p315 = pneg %p143
        $region22: #{tpu_custom_call.1} parent=11 // pred_check_branch
          %317 = sbr.rel (%p315) target = $region24
        $region23: #{tpu_custom_call.1} parent=11 // pred_region
          %s319 = ssub.s32 512, 512
          %320 = vsyncadd [#allocation9], %s319
          %s321 = sshll.u32 [#allocation10], 4
          %s322 = int_to_ptr.vmem [resolvable:$true] %s321
          %327 = dma.hbm_to_vmem [thread:$0]  %s4, 512, %s322, [#allocation9], 128, 128, 8
        $region24: #{tpu_custom_call.1} parent=11 // pred_fallthru
          _
        // Predicated region
        $region25: #{tpu_custom_call.1} parent=11 // pred_check
          %p328 = pneg %p164
        $region26: #{tpu_custom_call.1} parent=11 // pred_check_branch
          %330 = sbr.rel (%p328) target = $region28
        $region27: #{tpu_custom_call.1} parent=11 // pred_region
          %s332 = ssub.s32 512, 512
          %333 = vsyncadd [#allocation12], %s332
          %s334 = sshll.u32 [#allocation11], 4
          %s335 = int_to_ptr.vmem [resolvable:$true] %s334
          %340 = dma.hbm_to_vmem [thread:$0]  %s5, 512, %s335, [#allocation12], 128, 128, 8
        $region28: #{tpu_custom_call.1} parent=11 // pred_fallthru
          _
        // Predicated region
        $region29: #{tpu_custom_call.1} parent=11 // pred_check
          %p341 = pneg %p185
        $region30: #{tpu_custom_call.1} parent=11 // pred_check_branch
          %343 = sbr.rel (%p341) target = $region32
        $region31: #{tpu_custom_call.1} parent=11 // pred_region
          %s345 = ssub.s32 512, 512
          %346 = vsyncadd [#allocation12], %s345
          %s347 = sshll.u32 [#allocation13], 4
          %s348 = int_to_ptr.vmem [resolvable:$true] %s347
          %353 = dma.hbm_to_vmem [thread:$0]  %s6, 512, %s348, [#allocation12], 128, 128, 8
        $region32: #{tpu_custom_call.1} parent=11 // pred_fallthru
          _
        // Predicated region
        $region33: #{tpu_custom_call.1} parent=11 // pred_check
          %p354 = pneg %p206
        $region34: #{tpu_custom_call.1} parent=11 // pred_check_branch
          %356 = sbr.rel (%p354) target = $region36
        $region35: #{tpu_custom_call.1} parent=11 // pred_region
          %s358 = ssub.s32 512, 512
          %359 = vsyncadd [#allocation15], %s358
          %s360 = sshll.u32 [#allocation14], 4
          %s361 = int_to_ptr.vmem [resolvable:$true] %s360
          %366 = dma.hbm_to_vmem [thread:$0]  %s7, 512, %s361, [#allocation15], 128, 128, 8
        $region36: #{tpu_custom_call.1} parent=11 // pred_fallthru
          _
        // Predicated region
        $region37: #{tpu_custom_call.1} parent=11 // pred_check
          %p367 = pneg %p227
        $region38: #{tpu_custom_call.1} parent=11 // pred_check_branch
          %369 = sbr.rel (%p367) target = $region40
        $region39: #{tpu_custom_call.1} parent=11 // pred_region
          %s371 = ssub.s32 512, 512
          %372 = vsyncadd [#allocation15], %s371
          %s373 = sshll.u32 [#allocation16], 4
          %s374 = int_to_ptr.vmem [resolvable:$true] %s373
          %379 = dma.hbm_to_vmem [thread:$0]  %s8, 512, %s374, [#allocation15], 128, 128, 8
        $region40: #{tpu_custom_call.1} parent=11 // pred_fallthru
          _
        // Predicated region
        $region41: #{tpu_custom_call.1} parent=11 // pred_check
          %p380 = pneg %p248
        $region42: #{tpu_custom_call.1} parent=11 // pred_check_branch
          %382 = sbr.rel (%p380) target = $region44
        $region43: #{tpu_custom_call.1} parent=11 // pred_region
          _
        $region44: #{tpu_custom_call.1} parent=11 // pred_fallthru
          _
      $region12: #{tpu_custom_call.1} parent=5 // pred_fallthru
        _
      %p383 = scmp.lt.s32.totalorder %s28, 2
      // Predicated region
      $region45: #{tpu_custom_call.1} parent=5 // pred_check
        %p384 = pneg %p383
      $region46: #{tpu_custom_call.1} parent=5 // pred_check_branch
        %386 = sbr.rel (%p384) target = $region48
      $region47: #{tpu_custom_call.1} parent=5 // pred_region
        // Predicated region
        $region49: #{tpu_custom_call.1} parent=47 // pred_check
          %p387 = pneg %p48
        $region50: #{tpu_custom_call.1} parent=47 // pred_check_branch
          %389 = sbr.rel (%p387) target = $region52
        $region51: #{tpu_custom_call.1} parent=47 // pred_region
          %s390 = sand.u32 %s38, 1
          %s391 = scalar_lea.sflag [#allocation3], %s390
          %s392 = sand.u32 %s38, 1
          %s393 = smul.addr %s392, 48
          %s394 = scalar_lea.vmem [#allocation2], %s393
          %s395 = smul.u32 3, %s28
          %s397 = ssub.s32 768, 768
          %398 = vsyncadd %s391, %s397
          %s399 = smul.addr %s395, 2
          %s400 = smul.addr %s399, 128
          %s401 = scalar_lea.hbm %s0, %s400
          %s402 = sshll.u32 %s394, 4
          %s403 = int_to_ptr.vmem [resolvable:$true] %s402
          %408 = dma.hbm_to_vmem [thread:$0]  %s401, 768, %s403, %s391, 128, 128, 8
        $region52: #{tpu_custom_call.1} parent=47 // pred_fallthru
          _
        // Predicated region
        $region53: #{tpu_custom_call.1} parent=47 // pred_check
          %p409 = pneg %p74
        $region54: #{tpu_custom_call.1} parent=47 // pred_check_branch
          %411 = sbr.rel (%p409) target = $region56
        $region55: #{tpu_custom_call.1} parent=47 // pred_region
          %s412 = sand.u32 %s28, 1
          %s413 = scalar_lea.sflag [#allocation6], %s412
          %s414 = sand.u32 %s64, 1
          %s415 = smul.addr %s414, 48
          %s416 = scalar_lea.vmem [#allocation5], %s415
          %s417 = smul.u32 3, %s28
          %s419 = ssub.s32 768, 768
          %420 = vsyncadd %s413, %s419
          %s421 = smul.addr %s417, 2
          %s422 = smul.addr %s421, 128
          %s423 = scalar_lea.hbm %s1, %s422
          %s424 = sshll.u32 %s416, 4
          %s425 = int_to_ptr.vmem [resolvable:$true] %s424
          %430 = dma.hbm_to_vmem [thread:$0]  %s423, 768, %s425, %s413, 128, 128, 8
        $region56: #{tpu_custom_call.1} parent=47 // pred_fallthru
          _
      $region48: #{tpu_custom_call.1} parent=5 // pred_fallthru
        _
      %p431 = scmp.le.s32.totalorder 1, %s28
      %p432 = scmp.lt.s32.totalorder %s28, 3
      %p433 = pnand %p431, %p432
      %p434 = pneg %p433
      // Predicated region
      $region57: #{tpu_custom_call.1} parent=5 // pred_check
        _
      $region58: #{tpu_custom_call.1} parent=5 // pred_check_branch
        %436 = sbr.rel (%p433) target = $region60
      $region59: #{tpu_custom_call.1} parent=5 // pred_region
        %s437 = ssub.s32 %s28, 1
        %s438 = sand.u32 %s41, 1
        %s439 = scalar_lea.sflag [#allocation3], %s438
        %s440 = sand.u32 %s41, 1
        %s441 = smul.addr %s440, 48
        %s442 = scalar_lea.vmem [#allocation2], %s441
        // Predicated region
        $region61: #{tpu_custom_call.1} parent=59 // pred_check
          %p443 = pneg %p54
        $region62: #{tpu_custom_call.1} parent=59 // pred_check_branch
          %445 = sbr.rel (%p443) target = $region64
        $region63: #{tpu_custom_call.1} parent=59 // pred_region
          %446 = dma.done %s439, 768
        $region64: #{tpu_custom_call.1} parent=59 // pred_fallthru
          _
        %s447 = sand.u32 %s33, 1
        %s448 = scalar_lea.sflag [#allocation6], %s447
        %s449 = sand.u32 %s67, 1
        %s450 = smul.addr %s449, 48
        %s451 = scalar_lea.vmem [#allocation5], %s450
        // Predicated region
        $region65: #{tpu_custom_call.1} parent=59 // pred_check
          %p452 = pneg %p80
        $region66: #{tpu_custom_call.1} parent=59 // pred_check_branch
          %454 = sbr.rel (%p452) target = $region68
        $region67: #{tpu_custom_call.1} parent=59 // pred_region
          %455 = dma.done %s448, 768
        $region68: #{tpu_custom_call.1} parent=59 // pred_fallthru
          _
        // Predicated region
        $region69: #{tpu_custom_call.1} parent=59 // pred_check
          %p456 = pneg %p101
        $region70: #{tpu_custom_call.1} parent=59 // pred_check_branch
          %458 = sbr.rel (%p456) target = $region72
        $region71: #{tpu_custom_call.1} parent=59 // pred_region
          %459 = dma.done [#allocation6], 512
        $region72: #{tpu_custom_call.1} parent=59 // pred_fallthru
          _
        // Predicated region
        $region73: #{tpu_custom_call.1} parent=59 // pred_check
          %p460 = pneg %p122
        $region74: #{tpu_custom_call.1} parent=59 // pred_check_branch
          %462 = sbr.rel (%p460) target = $region76
        $region75: #{tpu_custom_call.1} parent=59 // pred_region
          %463 = dma.done [#allocation9], 512
        $region76: #{tpu_custom_call.1} parent=59 // pred_fallthru
          _
        // Predicated region
        $region77: #{tpu_custom_call.1} parent=59 // pred_check
          %p464 = pneg %p143
        $region78: #{tpu_custom_call.1} parent=59 // pred_check_branch
          %466 = sbr.rel (%p464) target = $region80
        $region79: #{tpu_custom_call.1} parent=59 // pred_region
          %467 = dma.done [#allocation9], 512
        $region80: #{tpu_custom_call.1} parent=59 // pred_fallthru
          _
        // Predicated region
        $region81: #{tpu_custom_call.1} parent=59 // pred_check
          %p468 = pneg %p164
        $region82: #{tpu_custom_call.1} parent=59 // pred_check_branch
          %470 = sbr.rel (%p468) target = $region84
        $region83: #{tpu_custom_call.1} parent=59 // pred_region
          %471 = dma.done [#allocation12], 512
        $region84: #{tpu_custom_call.1} parent=59 // pred_fallthru
          _
        // Predicated region
        $region85: #{tpu_custom_call.1} parent=59 // pred_check
          %p472 = pneg %p185
        $region86: #{tpu_custom_call.1} parent=59 // pred_check_branch
          %474 = sbr.rel (%p472) target = $region88
        $region87: #{tpu_custom_call.1} parent=59 // pred_region
          %475 = dma.done [#allocation12], 512
        $region88: #{tpu_custom_call.1} parent=59 // pred_fallthru
          _
        // Predicated region
        $region89: #{tpu_custom_call.1} parent=59 // pred_check
          %p476 = pneg %p206
        $region90: #{tpu_custom_call.1} parent=59 // pred_check_branch
          %478 = sbr.rel (%p476) target = $region92
        $region91: #{tpu_custom_call.1} parent=59 // pred_region
          %479 = dma.done [#allocation15], 512
        $region92: #{tpu_custom_call.1} parent=59 // pred_fallthru
          _
        // Predicated region
        $region93: #{tpu_custom_call.1} parent=59 // pred_check
          %p480 = pneg %p227
        $region94: #{tpu_custom_call.1} parent=59 // pred_check_branch
          %482 = sbr.rel (%p480) target = $region96
        $region95: #{tpu_custom_call.1} parent=59 // pred_region
          %483 = dma.done [#allocation15], 512
        $region96: #{tpu_custom_call.1} parent=59 // pred_fallthru
          _
        %s484 = sand.u32 %s41, 1
        %s485 = scalar_lea.sflag [#allocation3], %s484
        %s486 = sand.u32 %s41, 1
        %s487 = smul.addr %s486, 48
        %s488 = scalar_lea.vmem [#allocation2], %s487
        %p489 = pneg %p54
        %p490 = pneg %p51
        %s491 = sand.u32 %s33, 1
        %s492 = scalar_lea.sflag [#allocation6], %s491
        %s493 = sand.u32 %s67, 1
        %s494 = smul.addr %s493, 48
        %s495 = scalar_lea.vmem [#allocation5], %s494
        %p496 = pneg %p80
        %p497 = pneg %p77
        %p498 = pneg %p101
        %p499 = pneg %p98
        %p500 = pneg %p122
        %p501 = pneg %p119
        %p502 = pneg %p143
        %p503 = pneg %p140
        %p504 = pneg %p164
        %p505 = pneg %p161
        %p506 = pneg %p185
        %p507 = pneg %p182
        %p508 = pneg %p206
        %p509 = pneg %p203
        %p510 = pneg %p227
        %p511 = pneg %p224
        %p512 = pneg %p248
        %p513 = pneg %p245
        %p514 = pneg %p274
        %p515 = pneg %p271
        %s516 = sand.u32 %s261, 1
        %s517 = scalar_lea.sflag [#allocation4], %s516
        %s518 = sand.u32 %s261, 1
        %s519 = scalar_lea.vmem [#allocation17], %s518
        %s520 = smul.u32 3, %s33
        %s521 = smul.u32 3, %s33
        %v522 = vld [vmem:[%s442] sm:$0xff]
        %v523 = vld [vmem:[%s442 + $0x8] sm:$0xff]
        %v524 = vld [vmem:[%s442 + $0x10] sm:$0xff]
        %v525 = vld [vmem:[%s442 + $0x18] sm:$0xff]
        %v526 = vld [vmem:[%s442 + $0x20] sm:$0xff]
        %v527 = vld [vmem:[%s442 + $0x28] sm:$0xff]
        %v528 = vld [vmem:[%s451] sm:$0xff]
        %v529 = vld [vmem:[%s451 + $0x8] sm:$0xff]
        %v530 = vld [vmem:[%s451 + $0x10] sm:$0xff]
        %v531 = vld [vmem:[%s451 + $0x18] sm:$0xff]
        %v532 = vld [vmem:[%s451 + $0x20] sm:$0xff]
        %v533 = vld [vmem:[%s451 + $0x28] sm:$0xff]
        %v534 = vld [vmem:[%s9] sm:$0xff]
        %v535 = vld [vmem:[%s9 + $0x8] sm:$0xff]
        %v536 = vld [vmem:[#allocation7] sm:$0xff]
        %v537 = vld [vmem:[#allocation7 + $0x8] sm:$0xff]
        %v538 = vld [vmem:[#allocation7 + $0x10] sm:$0xff]
        %v539 = vld [vmem:[#allocation7 + $0x18] sm:$0xff]
        %v540 = vlaneseq
        %v541 = vshrl.u32 %v540, 7
        %v542 = vsub.s32 0, %v541
        %v543 = vrot.slane %v534, %v542
        %vm544 = vcmask 261120
        %v546 = vsel %vm544, %v522, 0
        %v549 = vsel %vm544, %v523, 0
        %v552 = vsel %vm544, %v524, 0
        %v555 = vsel %vm544, %v525, 0
        %v558 = vsel %vm544, %v526, 0
        %v561 = vsel %vm544, %v527, 0
        %563 = vmatprep.subr.mxu0 0.0
        %564 = vmatpush1.msra.mxu0 %v536
        %565 = vmatprep.subr.mxu0 0.0
        %566 = vmatpush1.msra.mxu0 %v537
        %567 = vmatprep.subr.mxu0 0.0
        %568 = vmatpush1.msra.mxu0 %v538
        %569 = vmatprep.subr.mxu0 0.0
        %570 = vmatpush1.msra.mxu0 %v539
        %571 = vmatprep.subr.mxu0 0.0
        %572 = vmatpush1.msra.mxu0 0.0
        %573 = vmatprep.subr.mxu0 0.0
        %574 = vmatpush1.msra.mxu0 0.0
        %575 = vmatprep.subr.mxu0 0.0
        %576 = vmatpush1.msra.mxu0 0.0
        %577 = vmatprep.subr.mxu0 0.0
        %578 = vmatpush1.msra.mxu0 0.0
        %579 = vmatprep.subr.mxu0 0.0
        %580 = vmatpush1.msra.mxu0 0.0
        %581 = vmatprep.subr.mxu0 0.0
        %582 = vmatpush1.msra.mxu0 0.0
        %583 = vmatprep.subr.mxu0 0.0
        %584 = vmatpush1.msra.mxu0 0.0
        %585 = vmatprep.subr.mxu0 0.0
        %586 = vmatpush1.msra.mxu0 0.0
        %587 = vmatprep.subr.mxu0 0.0
        %588 = vmatpush1.msra.mxu0 0.0
        %589 = vmatprep.subr.mxu0 0.0
        %590 = vmatpush1.msra.mxu0 0.0
        %591 = vmatprep.subr.mxu0 0.0
        %592 = vmatpush1.msra.mxu0 0.0
        %593 = vmatprep.subr.mxu0 0.0
        %594 = vmatpush1.msra.mxu0 0.0
        %595 = vmatprep.subr.mxu0 0.0
        %596 = vmatpush1.msra.mxu0 0.0
        %597 = vmatprep.subr.mxu0 0.0
        %598 = vmatpush1.msra.mxu0 0.0
        %599 = vmatprep.subr.mxu0 0.0
        %600 = vmatpush1.msra.mxu0 0.0
        %601 = vmatprep.subr.mxu0 0.0
        %602 = vmatpush1.msra.mxu0 0.0
        %603 = vmatprep.subr.mxu0 0.0
        %604 = vmatpush1.msra.mxu0 0.0
        %605 = vmatprep.subr.mxu0 0.0
        %606 = vmatpush1.msra.mxu0 0.0
        %607 = vmatprep.subr.mxu0 0.0
        %608 = vmatpush1.msra.mxu0 0.0
        %609 = vmatprep.subr.mxu0 0.0
        %610 = vmatpush1.msra.mxu0 0.0
        %611 = vmatprep.subr.mxu0 0.0
        %612 = vmatpush1.msra.mxu0 0.0
        %613 = vmatprep.subr.mxu0 0.0
        %614 = vmatpush1.msra.mxu0 0.0
        %615 = vmatprep.subr.mxu0 0.0
        %616 = vmatpush1.msra.mxu0 0.0
        %617 = vmatprep.subr.mxu0 0.0
        %618 = vmatpush1.msra.mxu0 0.0
        %619 = vmatprep.subr.mxu0 0.0
        %620 = vmatpush1.msra.mxu0 0.0
        %621 = vmatprep.subr.mxu0 0.0
        %622 = vmatpush1.msra.mxu0 0.0
        %623 = vmatprep.subr.mxu0 0.0
        %624 = vmatpush1.msra.mxu0 0.0
        %625 = vmatprep.subr.mxu0 0.0
        %626 = vmatpush1.msra.mxu0 0.0
        %627 = vmatprep.mubr.f32.mxu0 0.0
        %628 = vmatmul.mubr.f32.gmra.mrb[0].mxu0 %v546
        %v629 = vpop.f32.mrb[0].mxu0
        %v630 = vadd.f32 %v543, %v629
        %v631 = vpop.f32.mrb[0].mxu0
        %632 = vmatprep.mubr.f32.mxu0 0.0
        %633 = vmatmul.mubr.f32.gmra.mrb[0].mxu0 %v549
        %v634 = vpop.f32.mrb[0].mxu0
        %v635 = vadd.f32 %v543, %v634
        %v636 = vpop.f32.mrb[0].mxu0
        %637 = vmatprep.mubr.f32.mxu0 0.0
        %638 = vmatmul.mubr.f32.gmra.mrb[0].mxu0 %v552
        %v639 = vpop.f32.mrb[0].mxu0
        %v640 = vadd.f32 %v543, %v639
        %v641 = vpop.f32.mrb[0].mxu0
        %642 = vmatprep.mubr.f32.mxu0 0.0
        %643 = vmatmul.mubr.f32.gmra.mrb[0].mxu0 %v555
        %v644 = vpop.f32.mrb[0].mxu0
        %v645 = vadd.f32 %v543, %v644
        %v646 = vpop.f32.mrb[0].mxu0
        %647 = vmatprep.mubr.f32.mxu0 0.0
        %648 = vmatmul.mubr.f32.gmra.mrb[0].mxu0 %v558
        %v649 = vpop.f32.mrb[0].mxu0
        %v650 = vadd.f32 %v543, %v649
        %v651 = vpop.f32.mrb[0].mxu0
        %652 = vmatprep.mubr.f32.mxu0 0.0
        %653 = vmatmul.mubr.f32.gmra.mrb[0].mxu0 %v561
        %v654 = vpop.f32.mrb[0].mxu0
        %v655 = vadd.f32 %v543, %v654
        %v656 = vpop.f32.mrb[0].mxu0
        %657 = vdwg.mxu0
        %v658 = vld [vmem:[#allocation8] sm:$0xff]
        %v659 = vld [vmem:[#allocation8 + $0x8] sm:$0xff]
        %v660 = vld [vmem:[#allocation8 + $0x10] sm:$0xff]
        %v661 = vld [vmem:[#allocation8 + $0x18] sm:$0xff]
        %v662 = vlaneseq
        %v663 = vshrl.u32 %v662, 7
        %v664 = vsub.s32 1, %v663
        %v665 = vrot.slane %v534, %v664
        %v667 = vsel %vm544, %v630, 0
        %v670 = vsel %vm544, %v635, 0
        %v673 = vsel %vm544, %v640, 0
        %v676 = vsel %vm544, %v645, 0
        %v679 = vsel %vm544, %v650, 0
        %v682 = vsel %vm544, %v655, 0
        %684 = vmatprep.subr.mxu0 0.0
        %685 = vmatpush1.msra.mxu0 %v658
        %686 = vmatprep.subr.mxu0 0.0
        %687 = vmatpush1.msra.mxu0 %v659
        %688 = vmatprep.subr.mxu0 0.0
        %689 = vmatpush1.msra.mxu0 %v660
        %690 = vmatprep.subr.mxu0 0.0
        %691 = vmatpush1.msra.mxu0 %v661
        %692 = vmatprep.subr.mxu0 0.0
        %693 = vmatpush1.msra.mxu0 0.0
        %694 = vmatprep.subr.mxu0 0.0
        %695 = vmatpush1.msra.mxu0 0.0
        %696 = vmatprep.subr.mxu0 0.0
        %697 = vmatpush1.msra.mxu0 0.0
        %698 = vmatprep.subr.mxu0 0.0
        %699 = vmatpush1.msra.mxu0 0.0
        %700 = vmatprep.subr.mxu0 0.0
        %701 = vmatpush1.msra.mxu0 0.0
        %702 = vmatprep.subr.mxu0 0.0
        %703 = vmatpush1.msra.mxu0 0.0
        %704 = vmatprep.subr.mxu0 0.0
        %705 = vmatpush1.msra.mxu0 0.0
        %706 = vmatprep.subr.mxu0 0.0
        %707 = vmatpush1.msra.mxu0 0.0
        %708 = vmatprep.subr.mxu0 0.0
        %709 = vmatpush1.msra.mxu0 0.0
        %710 = vmatprep.subr.mxu0 0.0
        %711 = vmatpush1.msra.mxu0 0.0
        %712 = vmatprep.subr.mxu0 0.0
        %713 = vmatpush1.msra.mxu0 0.0
        %714 = vmatprep.subr.mxu0 0.0
        %715 = vmatpush1.msra.mxu0 0.0
        %716 = vmatprep.subr.mxu0 0.0
        %717 = vmatpush1.msra.mxu0 0.0
        %718 = vmatprep.subr.mxu0 0.0
        %719 = vmatpush1.msra.mxu0 0.0
        %720 = vmatprep.subr.mxu0 0.0
        %721 = vmatpush1.msra.mxu0 0.0
        %722 = vmatprep.subr.mxu0 0.0
        %723 = vmatpush1.msra.mxu0 0.0
        %724 = vmatprep.subr.mxu0 0.0
        %725 = vmatpush1.msra.mxu0 0.0
        %726 = vmatprep.subr.mxu0 0.0
        %727 = vmatpush1.msra.mxu0 0.0
        %728 = vmatprep.subr.mxu0 0.0
        %729 = vmatpush1.msra.mxu0 0.0
        %730 = vmatprep.subr.mxu0 0.0
        %731 = vmatpush1.msra.mxu0 0.0
        %732 = vmatprep.subr.mxu0 0.0
        %733 = vmatpush1.msra.mxu0 0.0
        %734 = vmatprep.subr.mxu0 0.0
        %735 = vmatpush1.msra.mxu0 0.0
        %736 = vmatprep.subr.mxu0 0.0
        %737 = vmatpush1.msra.mxu0 0.0
        %738 = vmatprep.subr.mxu0 0.0
        %739 = vmatpush1.msra.mxu0 0.0
        %740 = vmatprep.subr.mxu0 0.0
        %741 = vmatpush1.msra.mxu0 0.0
        %742 = vmatprep.subr.mxu0 0.0
        %743 = vmatpush1.msra.mxu0 0.0
        %744 = vmatprep.subr.mxu0 0.0
        %745 = vmatpush1.msra.mxu0 0.0
        %746 = vmatprep.subr.mxu0 0.0
        %747 = vmatpush1.msra.mxu0 0.0
        %748 = vmatprep.mubr.f32.mxu0 0.0
        %749 = vmatmul.mubr.f32.gmra.mrb[0].mxu0 %v667
        %v750 = vpop.f32.mrb[0].mxu0
        %v751 = vadd.f32 %v665, %v750
        %v752 = vpop.f32.mrb[0].mxu0
        %753 = vmatprep.mubr.f32.mxu0 0.0
        %754 = vmatmul.mubr.f32.gmra.mrb[0].mxu0 %v670
        %v755 = vpop.f32.mrb[0].mxu0
        %v756 = vadd.f32 %v665, %v755
        %v757 = vpop.f32.mrb[0].mxu0
        %758 = vmatprep.mubr.f32.mxu0 0.0
        %759 = vmatmul.mubr.f32.gmra.mrb[0].mxu0 %v673
        %v760 = vpop.f32.mrb[0].mxu0
        %v761 = vadd.f32 %v665, %v760
        %v762 = vpop.f32.mrb[0].mxu0
        %763 = vmatprep.mubr.f32.mxu0 0.0
        %764 = vmatmul.mubr.f32.gmra.mrb[0].mxu0 %v676
        %v765 = vpop.f32.mrb[0].mxu0
        %v766 = vadd.f32 %v665, %v765
        %v767 = vpop.f32.mrb[0].mxu0
        %768 = vmatprep.mubr.f32.mxu0 0.0
        %769 = vmatmul.mubr.f32.gmra.mrb[0].mxu0 %v679
        %v770 = vpop.f32.mrb[0].mxu0
        %v771 = vadd.f32 %v665, %v770
        %v772 = vpop.f32.mrb[0].mxu0
        %773 = vmatprep.mubr.f32.mxu0 0.0
        %774 = vmatmul.mubr.f32.gmra.mrb[0].mxu0 %v682
        %v775 = vpop.f32.mrb[0].mxu0
        %v776 = vadd.f32 %v665, %v775
        %v777 = vpop.f32.mrb[0].mxu0
        %778 = vdwg.mxu0
        %v779 = vmul.f32 %v751, 0.25
        %v780 = vmul.f32 %v756, 0.25
        %v781 = vmul.f32 %v761, 0.25
        %v782 = vmul.f32 %v766, 0.25
        %v783 = vmul.f32 %v771, 0.25
        %v784 = vmul.f32 %v776, 0.25
        %v785 = vld [vmem:[#allocation10] sm:$0xff]
        %v786 = vld [vmem:[#allocation10 + $0x8] sm:$0xff]
        %v787 = vld [vmem:[#allocation10 + $0x10] sm:$0xff]
        %v788 = vld [vmem:[#allocation10 + $0x18] sm:$0xff]
        %v789 = vlaneseq
        %v790 = vshrl.u32 %v789, 7
        %v791 = vsub.s32 2, %v790
        %v792 = vrot.slane %v534, %v791
        %v794 = vsel %vm544, %v528, 0
        %v797 = vsel %vm544, %v529, 0
        %v800 = vsel %vm544, %v530, 0
        %v803 = vsel %vm544, %v531, 0
        %v806 = vsel %vm544, %v532, 0
        %v809 = vsel %vm544, %v533, 0
        %811 = vmatprep.subr.mxu0 0.0
        %812 = vmatpush1.msra.mxu0 %v785
        %813 = vmatprep.subr.mxu0 0.0
        %814 = vmatpush1.msra.mxu0 %v786
        %815 = vmatprep.subr.mxu0 0.0
        %816 = vmatpush1.msra.mxu0 %v787
        %817 = vmatprep.subr.mxu0 0.0
        %818 = vmatpush1.msra.mxu0 %v788
        %819 = vmatprep.subr.mxu0 0.0
        %820 = vmatpush1.msra.mxu0 0.0
        %821 = vmatprep.subr.mxu0 0.0
        %822 = vmatpush1.msra.mxu0 0.0
        %823 = vmatprep.subr.mxu0 0.0
        %824 = vmatpush1.msra.mxu0 0.0
        %825 = vmatprep.subr.mxu0 0.0
        %826 = vmatpush1.msra.mxu0 0.0
        %827 = vmatprep.subr.mxu0 0.0
        %828 = vmatpush1.msra.mxu0 0.0
        %829 = vmatprep.subr.mxu0 0.0
        %830 = vmatpush1.msra.mxu0 0.0
        %831 = vmatprep.subr.mxu0 0.0
        %832 = vmatpush1.msra.mxu0 0.0
        %833 = vmatprep.subr.mxu0 0.0
        %834 = vmatpush1.msra.mxu0 0.0
        %835 = vmatprep.subr.mxu0 0.0
        %836 = vmatpush1.msra.mxu0 0.0
        %837 = vmatprep.subr.mxu0 0.0
        %838 = vmatpush1.msra.mxu0 0.0
        %839 = vmatprep.subr.mxu0 0.0
        %840 = vmatpush1.msra.mxu0 0.0
        %841 = vmatprep.subr.mxu0 0.0
        %842 = vmatpush1.msra.mxu0 0.0
        %843 = vmatprep.subr.mxu0 0.0
        %844 = vmatpush1.msra.mxu0 0.0
        %845 = vmatprep.subr.mxu0 0.0
        %846 = vmatpush1.msra.mxu0 0.0
        %847 = vmatprep.subr.mxu0 0.0
        %848 = vmatpush1.msra.mxu0 0.0
        %849 = vmatprep.subr.mxu0 0.0
        %850 = vmatpush1.msra.mxu0 0.0
        %851 = vmatprep.subr.mxu0 0.0
        %852 = vmatpush1.msra.mxu0 0.0
        %853 = vmatprep.subr.mxu0 0.0
        %854 = vmatpush1.msra.mxu0 0.0
        %855 = vmatprep.subr.mxu0 0.0
        %856 = vmatpush1.msra.mxu0 0.0
        %857 = vmatprep.subr.mxu0 0.0
        %858 = vmatpush1.msra.mxu0 0.0
        %859 = vmatprep.subr.mxu0 0.0
        %860 = vmatpush1.msra.mxu0 0.0
        %861 = vmatprep.subr.mxu0 0.0
        %862 = vmatpush1.msra.mxu0 0.0
        %863 = vmatprep.subr.mxu0 0.0
        %864 = vmatpush1.msra.mxu0 0.0
        %865 = vmatprep.subr.mxu0 0.0
        %866 = vmatpush1.msra.mxu0 0.0
        %867 = vmatprep.subr.mxu0 0.0
        %868 = vmatpush1.msra.mxu0 0.0
        %869 = vmatprep.subr.mxu0 0.0
        %870 = vmatpush1.msra.mxu0 0.0
        %871 = vmatprep.subr.mxu0 0.0
        %872 = vmatpush1.msra.mxu0 0.0
        %873 = vmatprep.subr.mxu0 0.0
        %874 = vmatpush1.msra.mxu0 0.0
        %875 = vmatprep.mubr.f32.mxu0 0.0
        %876 = vmatmul.mubr.f32.gmra.mrb[0].mxu0 %v794
        %v877 = vpop.f32.mrb[0].mxu0
        %v878 = vadd.f32 %v792, %v877
        %v879 = vpop.f32.mrb[0].mxu0
        %880 = vmatprep.mubr.f32.mxu0 0.0
        %881 = vmatmul.mubr.f32.gmra.mrb[0].mxu0 %v797
        %v882 = vpop.f32.mrb[0].mxu0
        %v883 = vadd.f32 %v792, %v882
        %v884 = vpop.f32.mrb[0].mxu0
        %885 = vmatprep.mubr.f32.mxu0 0.0
        %886 = vmatmul.mubr.f32.gmra.mrb[0].mxu0 %v800
        %v887 = vpop.f32.mrb[0].mxu0
        %v888 = vadd.f32 %v792, %v887
        %v889 = vpop.f32.mrb[0].mxu0
        %890 = vmatprep.mubr.f32.mxu0 0.0
        %891 = vmatmul.mubr.f32.gmra.mrb[0].mxu0 %v803
        %v892 = vpop.f32.mrb[0].mxu0
        %v893 = vadd.f32 %v792, %v892
        %v894 = vpop.f32.mrb[0].mxu0
        %895 = vmatprep.mubr.f32.mxu0 0.0
        %896 = vmatmul.mubr.f32.gmra.mrb[0].mxu0 %v806
        %v897 = vpop.f32.mrb[0].mxu0
        %v898 = vadd.f32 %v792, %v897
        %v899 = vpop.f32.mrb[0].mxu0
        %900 = vmatprep.mubr.f32.mxu0 0.0
        %901 = vmatmul.mubr.f32.gmra.mrb[0].mxu0 %v809
        %v902 = vpop.f32.mrb[0].mxu0
        %v903 = vadd.f32 %v792, %v902
        %v904 = vpop.f32.mrb[0].mxu0
        %905 = vdwg.mxu0
        %v906 = vld [vmem:[#allocation11] sm:$0xff]
        %v907 = vld [vmem:[#allocation11 + $0x8] sm:$0xff]
        %v908 = vld [vmem:[#allocation11 + $0x10] sm:$0xff]
        %v909 = vld [vmem:[#allocation11 + $0x18] sm:$0xff]
        %v910 = vlaneseq
        %v911 = vshrl.u32 %v910, 7
        %v912 = vsub.s32 3, %v911
        %v913 = vrot.slane %v534, %v912
        %914 = vmatprep.subr.mxu0 0.0
        %915 = vmatpush1.msra.mxu0 %v906
        %916 = vmatprep.subr.mxu0 0.0
        %917 = vmatpush1.msra.mxu0 %v907
        %918 = vmatprep.subr.mxu0 0.0
        %919 = vmatpush1.msra.mxu0 %v908
        %920 = vmatprep.subr.mxu0 0.0
        %921 = vmatpush1.msra.mxu0 %v909
        %922 = vmatprep.subr.mxu0 0.0
        %923 = vmatpush1.msra.mxu0 0.0
        %924 = vmatprep.subr.mxu0 0.0
        %925 = vmatpush1.msra.mxu0 0.0
        %926 = vmatprep.subr.mxu0 0.0
        %927 = vmatpush1.msra.mxu0 0.0
        %928 = vmatprep.subr.mxu0 0.0
        %929 = vmatpush1.msra.mxu0 0.0
        %930 = vmatprep.subr.mxu0 0.0
        %931 = vmatpush1.msra.mxu0 0.0
        %932 = vmatprep.subr.mxu0 0.0
        %933 = vmatpush1.msra.mxu0 0.0
        %934 = vmatprep.subr.mxu0 0.0
        %935 = vmatpush1.msra.mxu0 0.0
        %936 = vmatprep.subr.mxu0 0.0
        %937 = vmatpush1.msra.mxu0 0.0
        %938 = vmatprep.subr.mxu0 0.0
        %939 = vmatpush1.msra.mxu0 0.0
        %940 = vmatprep.subr.mxu0 0.0
        %941 = vmatpush1.msra.mxu0 0.0
        %942 = vmatprep.subr.mxu0 0.0
        %943 = vmatpush1.msra.mxu0 0.0
        %944 = vmatprep.subr.mxu0 0.0
        %945 = vmatpush1.msra.mxu0 0.0
        %946 = vmatprep.subr.mxu0 0.0
        %947 = vmatpush1.msra.mxu0 0.0
        %948 = vmatprep.subr.mxu0 0.0
        %949 = vmatpush1.msra.mxu0 0.0
        %950 = vmatprep.subr.mxu0 0.0
        %951 = vmatpush1.msra.mxu0 0.0
        %952 = vmatprep.subr.mxu0 0.0
        %953 = vmatpush1.msra.mxu0 0.0
        %954 = vmatprep.subr.mxu0 0.0
        %955 = vmatpush1.msra.mxu0 0.0
        %956 = vmatprep.subr.mxu0 0.0
        %957 = vmatpush1.msra.mxu0 0.0
        %958 = vmatprep.subr.mxu0 0.0
        %959 = vmatpush1.msra.mxu0 0.0
        %960 = vmatprep.subr.mxu0 0.0
        %961 = vmatpush1.msra.mxu0 0.0
        %962 = vmatprep.subr.mxu0 0.0
        %963 = vmatpush1.msra.mxu0 0.0
        %964 = vmatprep.subr.mxu0 0.0
        %965 = vmatpush1.msra.mxu0 0.0
        %966 = vmatprep.subr.mxu0 0.0
        %967 = vmatpush1.msra.mxu0 0.0
        %968 = vmatprep.subr.mxu0 0.0
        %969 = vmatpush1.msra.mxu0 0.0
        %970 = vmatprep.subr.mxu0 0.0
        %971 = vmatpush1.msra.mxu0 0.0
        %972 = vmatprep.subr.mxu0 0.0
        %973 = vmatpush1.msra.mxu0 0.0
        %974 = vmatprep.subr.mxu0 0.0
        %975 = vmatpush1.msra.mxu0 0.0
        %976 = vmatprep.subr.mxu0 0.0
        %977 = vmatpush1.msra.mxu0 0.0
        %978 = vmatprep.mubr.f32.mxu0 0.0
        %979 = vmatmul.mubr.f32.gmra.mrb[0].mxu0 %v794
        %v980 = vpop.f32.mrb[0].mxu0
        %v981 = vadd.f32 %v913, %v980
        %v982 = vpop.f32.mrb[0].mxu0
        %983 = vmatprep.mubr.f32.mxu0 0.0
        %984 = vmatmul.mubr.f32.gmra.mrb[0].mxu0 %v797
        %v985 = vpop.f32.mrb[0].mxu0
        %v986 = vadd.f32 %v913, %v985
        %v987 = vpop.f32.mrb[0].mxu0
        %988 = vmatprep.mubr.f32.mxu0 0.0
        %989 = vmatmul.mubr.f32.gmra.mrb[0].mxu0 %v800
        %v990 = vpop.f32.mrb[0].mxu0
        %v991 = vadd.f32 %v913, %v990
        %v992 = vpop.f32.mrb[0].mxu0
        %993 = vmatprep.mubr.f32.mxu0 0.0
        %994 = vmatmul.mubr.f32.gmra.mrb[0].mxu0 %v803
        %v995 = vpop.f32.mrb[0].mxu0
        %v996 = vadd.f32 %v913, %v995
        %v997 = vpop.f32.mrb[0].mxu0
        %998 = vmatprep.mubr.f32.mxu0 0.0
        %999 = vmatmul.mubr.f32.gmra.mrb[0].mxu0 %v806
        %v1000 = vpop.f32.mrb[0].mxu0
        %v1001 = vadd.f32 %v913, %v1000
        %v1002 = vpop.f32.mrb[0].mxu0
        %1003 = vmatprep.mubr.f32.mxu0 0.0
        %1004 = vmatmul.mubr.f32.gmra.mrb[0].mxu0 %v809
        %v1005 = vpop.f32.mrb[0].mxu0
        %v1006 = vadd.f32 %v913, %v1005
        %v1007 = vpop.f32.mrb[0].mxu0
        %1008 = vdwg.mxu0
        %v1009 = vlaneseq
        %v1010 = vshrl.u32 %v1009, 7
        %v1011 = vadd.s32 %v1010, 8
        %v1012 = vlaneseq
        %v1013 = vand.u32 %v1012, 127
        %vm1014 = vcmp.gt.s32.totalorder %v1013, %v1010
        %vm1015 = vcmp.gt.s32.totalorder %v1013, %v1011
        %v1016 = vsel %vm1014, -1e+30, 0.0
        %v1017 = vsel %vm1015, -1e+30, 0.0
        %vm1018 = vcmask 130048
        %v1020 = vsel %vm1018, %v779, 0
        %v1023 = vsel %vm1018, %v780, 0
        %v1026 = vsel %vm1018, %v878, 0
        %v1029 = vsel %vm1018, %v883, 0
        %1031 = vmatprep.subr.mxu0 0.0
        %1032 = vmatpush1.xpose.msra.mxu0 %v1026
        %1033 = vmatprep.subr.mxu0 0.0
        %1034 = vmatpush1.xpose.msra.mxu0 %v1029
        %1035 = vmatprep.subr.mxu0 0.0
        %1036 = vmatpush1.xpose.msra.mxu0 0.0
        %1037 = vmatprep.subr.mxu0 0.0
        %1038 = vmatpush1.xpose.msra.mxu0 0.0
        %1039 = vmatprep.subr.mxu0 0.0
        %1040 = vmatpush1.xpose.msra.mxu0 0.0
        %1041 = vmatprep.subr.mxu0 0.0
        %1042 = vmatpush1.xpose.msra.mxu0 0.0
        %1043 = vmatprep.subr.mxu0 0.0
        %1044 = vmatpush1.xpose.msra.mxu0 0.0
        %1045 = vmatprep.subr.mxu0 0.0
        %1046 = vmatpush1.xpose.msra.mxu0 0.0
        %1047 = vmatprep.subr.mxu0 0.0
        %1048 = vmatpush1.xpose.msra.mxu0 0.0
        %1049 = vmatprep.subr.mxu0 0.0
        %1050 = vmatpush1.xpose.msra.mxu0 0.0
        %1051 = vmatprep.subr.mxu0 0.0
        %1052 = vmatpush1.xpose.msra.mxu0 0.0
        %1053 = vmatprep.subr.mxu0 0.0
        %1054 = vmatpush1.xpose.msra.mxu0 0.0
        %1055 = vmatprep.subr.mxu0 0.0
        %1056 = vmatpush1.xpose.msra.mxu0 0.0
        %1057 = vmatprep.subr.mxu0 0.0
        %1058 = vmatpush1.xpose.msra.mxu0 0.0
        %1059 = vmatprep.subr.mxu0 0.0
        %1060 = vmatpush1.xpose.msra.mxu0 0.0
        %1061 = vmatprep.subr.mxu0 0.0
        %1062 = vmatpush1.xpose.msra.mxu0 0.0
        %1063 = vmatprep.subr.mxu0 0.0
        %1064 = vmatpush1.xpose.msra.mxu0 0.0
        %1065 = vmatprep.subr.mxu0 0.0
        %1066 = vmatpush1.xpose.msra.mxu0 0.0
        %1067 = vmatprep.subr.mxu0 0.0
        %1068 = vmatpush1.xpose.msra.mxu0 0.0
        %1069 = vmatprep.subr.mxu0 0.0
        %1070 = vmatpush1.xpose.msra.mxu0 0.0
        %1071 = vmatprep.subr.mxu0 0.0
        %1072 = vmatpush1.xpose.msra.mxu0 0.0
        %1073 = vmatprep.subr.mxu0 0.0
        %1074 = vmatpush1.xpose.msra.mxu0 0.0
        %1075 = vmatprep.subr.mxu0 0.0
        %1076 = vmatpush1.xpose.msra.mxu0 0.0
        %1077 = vmatprep.subr.mxu0 0.0
        %1078 = vmatpush1.xpose.msra.mxu0 0.0
        %1079 = vmatprep.subr.mxu0 0.0
        %1080 = vmatpush1.xpose.msra.mxu0 0.0
        %1081 = vmatprep.subr.mxu0 0.0
        %1082 = vmatpush1.xpose.msra.mxu0 0.0
        %1083 = vmatprep.subr.mxu0 0.0
        %1084 = vmatpush1.xpose.msra.mxu0 0.0
        %1085 = vmatprep.subr.mxu0 0.0
        %1086 = vmatpush1.xpose.msra.mxu0 0.0
        %1087 = vmatprep.subr.mxu0 0.0
        %1088 = vmatpush1.xpose.msra.mxu0 0.0
        %1089 = vmatprep.subr.mxu0 0.0
        %1090 = vmatpush1.xpose.msra.mxu0 0.0
        %1091 = vmatprep.subr.mxu0 0.0
        %1092 = vmatpush1.xpose.msra.mxu0 0.0
        %1093 = vmatprep.subr.mxu0 0.0
        %1094 = vmatpush1.xpose.msra.mxu0 0.0
        %1095 = vmatprep.mubr.f32.mxu0 0.0
        %1096 = vmatmul.mubr.f32.gmra.mrb[0].mxu0 %v1020
        %v1097 = vpop.f32.mrb[0].mxu0
        %v1098 = vadd.f32 %v1016, %v1097
        %v1099 = vpop.f32.mrb[0].mxu0
        %1100 = vmatprep.mubr.f32.mxu0 0.0
        %1101 = vmatmul.mubr.f32.gmra.mrb[0].mxu0 %v1023
        %v1102 = vpop.f32.mrb[0].mxu0
        %v1103 = vadd.f32 %v1017, %v1102
        %v1104 = vpop.f32.mrb[0].mxu0
        %1105 = vdwg.mxu0
        %v1107 = vsel %vm1018, %v781, 0
        %v1110 = vsel %vm1018, %v782, 0
        %v1113 = vsel %vm1018, %v888, 0
        %v1116 = vsel %vm1018, %v893, 0
        %1118 = vmatprep.subr.mxu0 0.0
        %1119 = vmatpush1.xpose.msra.mxu0 %v1113
        %1120 = vmatprep.subr.mxu0 0.0
        %1121 = vmatpush1.xpose.msra.mxu0 %v1116
        %1122 = vmatprep.subr.mxu0 0.0
        %1123 = vmatpush1.xpose.msra.mxu0 0.0
        %1124 = vmatprep.subr.mxu0 0.0
        %1125 = vmatpush1.xpose.msra.mxu0 0.0
        %1126 = vmatprep.subr.mxu0 0.0
        %1127 = vmatpush1.xpose.msra.mxu0 0.0
        %1128 = vmatprep.subr.mxu0 0.0
        %1129 = vmatpush1.xpose.msra.mxu0 0.0
        %1130 = vmatprep.subr.mxu0 0.0
        %1131 = vmatpush1.xpose.msra.mxu0 0.0
        %1132 = vmatprep.subr.mxu0 0.0
        %1133 = vmatpush1.xpose.msra.mxu0 0.0
        %1134 = vmatprep.subr.mxu0 0.0
        %1135 = vmatpush1.xpose.msra.mxu0 0.0
        %1136 = vmatprep.subr.mxu0 0.0
        %1137 = vmatpush1.xpose.msra.mxu0 0.0
        %1138 = vmatprep.subr.mxu0 0.0
        %1139 = vmatpush1.xpose.msra.mxu0 0.0
        %1140 = vmatprep.subr.mxu0 0.0
        %1141 = vmatpush1.xpose.msra.mxu0 0.0
        %1142 = vmatprep.subr.mxu0 0.0
        %1143 = vmatpush1.xpose.msra.mxu0 0.0
        %1144 = vmatprep.subr.mxu0 0.0
        %1145 = vmatpush1.xpose.msra.mxu0 0.0
        %1146 = vmatprep.subr.mxu0 0.0
        %1147 = vmatpush1.xpose.msra.mxu0 0.0
        %1148 = vmatprep.subr.mxu0 0.0
        %1149 = vmatpush1.xpose.msra.mxu0 0.0
        %1150 = vmatprep.subr.mxu0 0.0
        %1151 = vmatpush1.xpose.msra.mxu0 0.0
        %1152 = vmatprep.subr.mxu0 0.0
        %1153 = vmatpush1.xpose.msra.mxu0 0.0
        %1154 = vmatprep.subr.mxu0 0.0
        %1155 = vmatpush1.xpose.msra.mxu0 0.0
        %1156 = vmatprep.subr.mxu0 0.0
        %1157 = vmatpush1.xpose.msra.mxu0 0.0
        %1158 = vmatprep.subr.mxu0 0.0
        %1159 = vmatpush1.xpose.msra.mxu0 0.0
        %1160 = vmatprep.subr.mxu0 0.0
        %1161 = vmatpush1.xpose.msra.mxu0 0.0
        %1162 = vmatprep.subr.mxu0 0.0
        %1163 = vmatpush1.xpose.msra.mxu0 0.0
        %1164 = vmatprep.subr.mxu0 0.0
        %1165 = vmatpush1.xpose.msra.mxu0 0.0
        %1166 = vmatprep.subr.mxu0 0.0
        %1167 = vmatpush1.xpose.msra.mxu0 0.0
        %1168 = vmatprep.subr.mxu0 0.0
        %1169 = vmatpush1.xpose.msra.mxu0 0.0
        %1170 = vmatprep.subr.mxu0 0.0
        %1171 = vmatpush1.xpose.msra.mxu0 0.0
        %1172 = vmatprep.subr.mxu0 0.0
        %1173 = vmatpush1.xpose.msra.mxu0 0.0
        %1174 = vmatprep.subr.mxu0 0.0
        %1175 = vmatpush1.xpose.msra.mxu0 0.0
        %1176 = vmatprep.subr.mxu0 0.0
        %1177 = vmatpush1.xpose.msra.mxu0 0.0
        %1178 = vmatprep.subr.mxu0 0.0
        %1179 = vmatpush1.xpose.msra.mxu0 0.0
        %1180 = vmatprep.subr.mxu0 0.0
        %1181 = vmatpush1.xpose.msra.mxu0 0.0
        %1182 = vmatprep.mubr.f32.mxu0 0.0
        %1183 = vmatmul.mubr.f32.gmra.mrb[0].mxu0 %v1107
        %v1184 = vpop.f32.mrb[0].mxu0
        %v1185 = vadd.f32 %v1016, %v1184
        %v1186 = vpop.f32.mrb[0].mxu0
        %1187 = vmatprep.mubr.f32.mxu0 0.0
        %1188 = vmatmul.mubr.f32.gmra.mrb[0].mxu0 %v1110
        %v1189 = vpop.f32.mrb[0].mxu0
        %v1190 = vadd.f32 %v1017, %v1189
        %v1191 = vpop.f32.mrb[0].mxu0
        %1192 = vdwg.mxu0
        %v1194 = vsel %vm1018, %v783, 0
        %v1197 = vsel %vm1018, %v784, 0
        %v1200 = vsel %vm1018, %v898, 0
        %v1203 = vsel %vm1018, %v903, 0
        %1205 = vmatprep.subr.mxu0 0.0
        %1206 = vmatpush1.xpose.msra.mxu0 %v1200
        %1207 = vmatprep.subr.mxu0 0.0
        %1208 = vmatpush1.xpose.msra.mxu0 %v1203
        %1209 = vmatprep.subr.mxu0 0.0
        %1210 = vmatpush1.xpose.msra.mxu0 0.0
        %1211 = vmatprep.subr.mxu0 0.0
        %1212 = vmatpush1.xpose.msra.mxu0 0.0
        %1213 = vmatprep.subr.mxu0 0.0
        %1214 = vmatpush1.xpose.msra.mxu0 0.0
        %1215 = vmatprep.subr.mxu0 0.0
        %1216 = vmatpush1.xpose.msra.mxu0 0.0
        %1217 = vmatprep.subr.mxu0 0.0
        %1218 = vmatpush1.xpose.msra.mxu0 0.0
        %1219 = vmatprep.subr.mxu0 0.0
        %1220 = vmatpush1.xpose.msra.mxu0 0.0
        %1221 = vmatprep.subr.mxu0 0.0
        %1222 = vmatpush1.xpose.msra.mxu0 0.0
        %1223 = vmatprep.subr.mxu0 0.0
        %1224 = vmatpush1.xpose.msra.mxu0 0.0
        %1225 = vmatprep.subr.mxu0 0.0
        %1226 = vmatpush1.xpose.msra.mxu0 0.0
        %1227 = vmatprep.subr.mxu0 0.0
        %1228 = vmatpush1.xpose.msra.mxu0 0.0
        %1229 = vmatprep.subr.mxu0 0.0
        %1230 = vmatpush1.xpose.msra.mxu0 0.0
        %1231 = vmatprep.subr.mxu0 0.0
        %1232 = vmatpush1.xpose.msra.mxu0 0.0
        %1233 = vmatprep.subr.mxu0 0.0
        %1234 = vmatpush1.xpose.msra.mxu0 0.0
        %1235 = vmatprep.subr.mxu0 0.0
        %1236 = vmatpush1.xpose.msra.mxu0 0.0
        %1237 = vmatprep.subr.mxu0 0.0
        %1238 = vmatpush1.xpose.msra.mxu0 0.0
        %1239 = vmatprep.subr.mxu0 0.0
        %1240 = vmatpush1.xpose.msra.mxu0 0.0
        %1241 = vmatprep.subr.mxu0 0.0
        %1242 = vmatpush1.xpose.msra.mxu0 0.0
        %1243 = vmatprep.subr.mxu0 0.0
        %1244 = vmatpush1.xpose.msra.mxu0 0.0
        %1245 = vmatprep.subr.mxu0 0.0
        %1246 = vmatpush1.xpose.msra.mxu0 0.0
        %1247 = vmatprep.subr.mxu0 0.0
        %1248 = vmatpush1.xpose.msra.mxu0 0.0
        %1249 = vmatprep.subr.mxu0 0.0
        %1250 = vmatpush1.xpose.msra.mxu0 0.0
        %1251 = vmatprep.subr.mxu0 0.0
        %1252 = vmatpush1.xpose.msra.mxu0 0.0
        %1253 = vmatprep.subr.mxu0 0.0
        %1254 = vmatpush1.xpose.msra.mxu0 0.0
        %1255 = vmatprep.subr.mxu0 0.0
        %1256 = vmatpush1.xpose.msra.mxu0 0.0
        %1257 = vmatprep.subr.mxu0 0.0
        %1258 = vmatpush1.xpose.msra.mxu0 0.0
        %1259 = vmatprep.subr.mxu0 0.0
        %1260 = vmatpush1.xpose.msra.mxu0 0.0
        %1261 = vmatprep.subr.mxu0 0.0
        %1262 = vmatpush1.xpose.msra.mxu0 0.0
        %1263 = vmatprep.subr.mxu0 0.0
        %1264 = vmatpush1.xpose.msra.mxu0 0.0
        %1265 = vmatprep.subr.mxu0 0.0
        %1266 = vmatpush1.xpose.msra.mxu0 0.0
        %1267 = vmatprep.subr.mxu0 0.0
        %1268 = vmatpush1.xpose.msra.mxu0 0.0
        %1269 = vmatprep.mubr.f32.mxu0 0.0
        %1270 = vmatmul.mubr.f32.gmra.mrb[0].mxu0 %v1194
        %v1271 = vpop.f32.mrb[0].mxu0
        %v1272 = vadd.f32 %v1016, %v1271
        %v1273 = vpop.f32.mrb[0].mxu0
        %1274 = vmatprep.mubr.f32.mxu0 0.0
        %1275 = vmatmul.mubr.f32.gmra.mrb[0].mxu0 %v1197
        %v1276 = vpop.f32.mrb[0].mxu0
        %v1277 = vadd.f32 %v1017, %v1276
        %v1278 = vpop.f32.mrb[0].mxu0
        %1279 = vdwg.mxu0
        %v1280 = vsel %vm1018, %v1098, -inf
        %1281 = vmax.xlane.f32.xlu0 %v1280
        %v1282 = vpop.xlane.xlu0 %1281
        %v1283 = vsel %vm1018, %v1103, -inf
        %1284 = vmax.xlane.f32.xlu0 %v1283
        %v1285 = vpop.xlane.xlu0 %1284
        %v1286 = vsel %vm1018, %v1185, -inf
        %1287 = vmax.xlane.f32.xlu0 %v1286
        %v1288 = vpop.xlane.xlu0 %1287
        %v1289 = vsel %vm1018, %v1190, -inf
        %1290 = vmax.xlane.f32.xlu0 %v1289
        %v1291 = vpop.xlane.xlu0 %1290
        %v1292 = vsel %vm1018, %v1272, -inf
        %1293 = vmax.xlane.f32.xlu0 %v1292
        %v1294 = vpop.xlane.xlu0 %1293
        %v1295 = vsel %vm1018, %v1277, -inf
        %1296 = vmax.xlane.f32.xlu0 %v1295
        %v1297 = vpop.xlane.xlu0 %1296
        %v1298 = vsub.f32 %v1098, %v1282
        %v1299 = vsub.f32 %v1103, %v1285
        %v1300 = vsub.f32 %v1185, %v1288
        %v1301 = vsub.f32 %v1190, %v1291
        %v1302 = vsub.f32 %v1272, %v1294
        %v1303 = vsub.f32 %v1277, %v1297
        %v1304 = vmul.f32 %v1298, 1.442695
        %v1305 = vpow.pop %v1304
        %v1306 = vmul.f32 %v1299, 1.442695
        %v1307 = vpow.pop %v1306
        %v1308 = vmul.f32 %v1300, 1.442695
        %v1309 = vpow.pop %v1308
        %v1310 = vmul.f32 %v1301, 1.442695
        %v1311 = vpow.pop %v1310
        %v1312 = vmul.f32 %v1302, 1.442695
        %v1313 = vpow.pop %v1312
        %v1314 = vmul.f32 %v1303, 1.442695
        %v1315 = vpow.pop %v1314
        %v1316 = vsel %vm1018, %v1305, 0.0
        %1317 = vadd.xlane.f32.xlu0 %v1316
        %v1318 = vpop.xlane.xlu0 %1317
        %v1319 = vsel %vm1018, %v1307, 0.0
        %1320 = vadd.xlane.f32.xlu0 %v1319
        %v1321 = vpop.xlane.xlu0 %1320
        %v1322 = vsel %vm1018, %v1309, 0.0
        %1323 = vadd.xlane.f32.xlu0 %v1322
        %v1324 = vpop.xlane.xlu0 %1323
        %v1325 = vsel %vm1018, %v1311, 0.0
        %1326 = vadd.xlane.f32.xlu0 %v1325
        %v1327 = vpop.xlane.xlu0 %1326
        %v1328 = vsel %vm1018, %v1313, 0.0
        %1329 = vadd.xlane.f32.xlu0 %v1328
        %v1330 = vpop.xlane.xlu0 %1329
        %v1331 = vsel %vm1018, %v1315, 0.0
        %1332 = vadd.xlane.f32.xlu0 %v1331
        %v1333 = vpop.xlane.xlu0 %1332
        %v1334 = vrcp.pop %v1318
        %v1335 = vrcp.pop %v1321
        %v1336 = vrcp.pop %v1324
        %v1337 = vrcp.pop %v1327
        %v1338 = vrcp.pop %v1330
        %v1339 = vrcp.pop %v1333
        %v1340 = vmul.f32 %v1305, %v1334
        %v1341 = vmul.f32 %v1307, %v1335
        %v1342 = vmul.f32 %v1309, %v1336
        %v1343 = vmul.f32 %v1311, %v1337
        %v1344 = vmul.f32 %v1313, %v1338
        %v1345 = vmul.f32 %v1315, %v1339
        %v1347 = vsel %vm1018, %v1340, 0
        %v1350 = vsel %vm1018, %v1341, 0
        %1352 = vmatprep.subr.mxu0 0.0
        %1353 = vmatpush1.msra.mxu0 %v981
        %1354 = vmatprep.subr.mxu0 0.0
        %1355 = vmatpush1.msra.mxu0 %v986
        %1356 = vmatprep.subr.mxu0 0.0
        %1357 = vmatpush1.msra.mxu0 0.0
        %1358 = vmatprep.subr.mxu0 0.0
        %1359 = vmatpush1.msra.mxu0 0.0
        %1360 = vmatprep.subr.mxu0 0.0
        %1361 = vmatpush1.msra.mxu0 0.0
        %1362 = vmatprep.subr.mxu0 0.0
        %1363 = vmatpush1.msra.mxu0 0.0
        %1364 = vmatprep.subr.mxu0 0.0
        %1365 = vmatpush1.msra.mxu0 0.0
        %1366 = vmatprep.subr.mxu0 0.0
        %1367 = vmatpush1.msra.mxu0 0.0
        %1368 = vmatprep.subr.mxu0 0.0
        %1369 = vmatpush1.msra.mxu0 0.0
        %1370 = vmatprep.subr.mxu0 0.0
        %1371 = vmatpush1.msra.mxu0 0.0
        %1372 = vmatprep.subr.mxu0 0.0
        %1373 = vmatpush1.msra.mxu0 0.0
        %1374 = vmatprep.subr.mxu0 0.0
        %1375 = vmatpush1.msra.mxu0 0.0
        %1376 = vmatprep.subr.mxu0 0.0
        %1377 = vmatpush1.msra.mxu0 0.0
        %1378 = vmatprep.subr.mxu0 0.0
        %1379 = vmatpush1.msra.mxu0 0.0
        %1380 = vmatprep.subr.mxu0 0.0
        %1381 = vmatpush1.msra.mxu0 0.0
        %1382 = vmatprep.subr.mxu0 0.0
        %1383 = vmatpush1.msra.mxu0 0.0
        %1384 = vmatprep.subr.mxu0 0.0
        %1385 = vmatpush1.msra.mxu0 0.0
        %1386 = vmatprep.subr.mxu0 0.0
        %1387 = vmatpush1.msra.mxu0 0.0
        %1388 = vmatprep.subr.mxu0 0.0
        %1389 = vmatpush1.msra.mxu0 0.0
        %1390 = vmatprep.subr.mxu0 0.0
        %1391 = vmatpush1.msra.mxu0 0.0
        %1392 = vmatprep.subr.mxu0 0.0
        %1393 = vmatpush1.msra.mxu0 0.0
        %1394 = vmatprep.subr.mxu0 0.0
        %1395 = vmatpush1.msra.mxu0 0.0
        %1396 = vmatprep.subr.mxu0 0.0
        %1397 = vmatpush1.msra.mxu0 0.0
        %1398 = vmatprep.subr.mxu0 0.0
        %1399 = vmatpush1.msra.mxu0 0.0
        %1400 = vmatprep.subr.mxu0 0.0
        %1401 = vmatpush1.msra.mxu0 0.0
        %1402 = vmatprep.subr.mxu0 0.0
        %1403 = vmatpush1.msra.mxu0 0.0
        %1404 = vmatprep.subr.mxu0 0.0
        %1405 = vmatpush1.msra.mxu0 0.0
        %1406 = vmatprep.subr.mxu0 0.0
        %1407 = vmatpush1.msra.mxu0 0.0
        %1408 = vmatprep.subr.mxu0 0.0
        %1409 = vmatpush1.msra.mxu0 0.0
        %1410 = vmatprep.subr.mxu0 0.0
        %1411 = vmatpush1.msra.mxu0 0.0
        %1412 = vmatprep.subr.mxu0 0.0
        %1413 = vmatpush1.msra.mxu0 0.0
        %1414 = vmatprep.subr.mxu0 0.0
        %1415 = vmatpush1.msra.mxu0 0.0
        %1416 = vmatprep.mubr.f32.mxu0 0.0
        %1417 = vmatmul.mubr.f32.gmra.mrb[0].mxu0 %v1347
        %v1418 = vpop.f32.mrb[0].mxu0
        %v1419 = vadd.f32 0.0, %v1418
        %v1420 = vpop.f32.mrb[0].mxu0
        %1421 = vmatprep.mubr.f32.mxu0 0.0
        %1422 = vmatmul.mubr.f32.gmra.mrb[0].mxu0 %v1350
        %v1423 = vpop.f32.mrb[0].mxu0
        %v1424 = vadd.f32 0.0, %v1423
        %v1425 = vpop.f32.mrb[0].mxu0
        %1426 = vdwg.mxu0
        %v1428 = vsel %vm1018, %v1342, 0
        %v1431 = vsel %vm1018, %v1343, 0
        %1433 = vmatprep.subr.mxu0 0.0
        %1434 = vmatpush1.msra.mxu0 %v991
        %1435 = vmatprep.subr.mxu0 0.0
        %1436 = vmatpush1.msra.mxu0 %v996
        %1437 = vmatprep.subr.mxu0 0.0
        %1438 = vmatpush1.msra.mxu0 0.0
        %1439 = vmatprep.subr.mxu0 0.0
        %1440 = vmatpush1.msra.mxu0 0.0
        %1441 = vmatprep.subr.mxu0 0.0
        %1442 = vmatpush1.msra.mxu0 0.0
        %1443 = vmatprep.subr.mxu0 0.0
        %1444 = vmatpush1.msra.mxu0 0.0
        %1445 = vmatprep.subr.mxu0 0.0
        %1446 = vmatpush1.msra.mxu0 0.0
        %1447 = vmatprep.subr.mxu0 0.0
        %1448 = vmatpush1.msra.mxu0 0.0
        %1449 = vmatprep.subr.mxu0 0.0
        %1450 = vmatpush1.msra.mxu0 0.0
        %1451 = vmatprep.subr.mxu0 0.0
        %1452 = vmatpush1.msra.mxu0 0.0
        %1453 = vmatprep.subr.mxu0 0.0
        %1454 = vmatpush1.msra.mxu0 0.0
        %1455 = vmatprep.subr.mxu0 0.0
        %1456 = vmatpush1.msra.mxu0 0.0
        %1457 = vmatprep.subr.mxu0 0.0
        %1458 = vmatpush1.msra.mxu0 0.0
        %1459 = vmatprep.subr.mxu0 0.0
        %1460 = vmatpush1.msra.mxu0 0.0
        %1461 = vmatprep.subr.mxu0 0.0
        %1462 = vmatpush1.msra.mxu0 0.0
        %1463 = vmatprep.subr.mxu0 0.0
        %1464 = vmatpush1.msra.mxu0 0.0
        %1465 = vmatprep.subr.mxu0 0.0
        %1466 = vmatpush1.msra.mxu0 0.0
        %1467 = vmatprep.subr.mxu0 0.0
        %1468 = vmatpush1.msra.mxu0 0.0
        %1469 = vmatprep.subr.mxu0 0.0
        %1470 = vmatpush1.msra.mxu0 0.0
        %1471 = vmatprep.subr.mxu0 0.0
        %1472 = vmatpush1.msra.mxu0 0.0
        %1473 = vmatprep.subr.mxu0 0.0
        %1474 = vmatpush1.msra.mxu0 0.0
        %1475 = vmatprep.subr.mxu0 0.0
        %1476 = vmatpush1.msra.mxu0 0.0
        %1477 = vmatprep.subr.mxu0 0.0
        %1478 = vmatpush1.msra.mxu0 0.0
        %1479 = vmatprep.subr.mxu0 0.0
        %1480 = vmatpush1.msra.mxu0 0.0
        %1481 = vmatprep.subr.mxu0 0.0
        %1482 = vmatpush1.msra.mxu0 0.0
        %1483 = vmatprep.subr.mxu0 0.0
        %1484 = vmatpush1.msra.mxu0 0.0
        %1485 = vmatprep.subr.mxu0 0.0
        %1486 = vmatpush1.msra.mxu0 0.0
        %1487 = vmatprep.subr.mxu0 0.0
        %1488 = vmatpush1.msra.mxu0 0.0
        %1489 = vmatprep.subr.mxu0 0.0
        %1490 = vmatpush1.msra.mxu0 0.0
        %1491 = vmatprep.subr.mxu0 0.0
        %1492 = vmatpush1.msra.mxu0 0.0
        %1493 = vmatprep.subr.mxu0 0.0
        %1494 = vmatpush1.msra.mxu0 0.0
        %1495 = vmatprep.subr.mxu0 0.0
        %1496 = vmatpush1.msra.mxu0 0.0
        %1497 = vmatprep.mubr.f32.mxu0 0.0
        %1498 = vmatmul.mubr.f32.gmra.mrb[0].mxu0 %v1428
        %v1499 = vpop.f32.mrb[0].mxu0
        %v1500 = vadd.f32 0.0, %v1499
        %v1501 = vpop.f32.mrb[0].mxu0
        %1502 = vmatprep.mubr.f32.mxu0 0.0
        %1503 = vmatmul.mubr.f32.gmra.mrb[0].mxu0 %v1431
        %v1504 = vpop.f32.mrb[0].mxu0
        %v1505 = vadd.f32 0.0, %v1504
        %v1506 = vpop.f32.mrb[0].mxu0
        %1507 = vdwg.mxu0
        %v1509 = vsel %vm1018, %v1344, 0
        %v1512 = vsel %vm1018, %v1345, 0
        %1514 = vmatprep.subr.mxu0 0.0
        %1515 = vmatpush1.msra.mxu0 %v1001
        %1516 = vmatprep.subr.mxu0 0.0
        %1517 = vmatpush1.msra.mxu0 %v1006
        %1518 = vmatprep.subr.mxu0 0.0
        %1519 = vmatpush1.msra.mxu0 0.0
        %1520 = vmatprep.subr.mxu0 0.0
        %1521 = vmatpush1.msra.mxu0 0.0
        %1522 = vmatprep.subr.mxu0 0.0
        %1523 = vmatpush1.msra.mxu0 0.0
        %1524 = vmatprep.subr.mxu0 0.0
        %1525 = vmatpush1.msra.mxu0 0.0
        %1526 = vmatprep.subr.mxu0 0.0
        %1527 = vmatpush1.msra.mxu0 0.0
        %1528 = vmatprep.subr.mxu0 0.0
        %1529 = vmatpush1.msra.mxu0 0.0
        %1530 = vmatprep.subr.mxu0 0.0
        %1531 = vmatpush1.msra.mxu0 0.0
        %1532 = vmatprep.subr.mxu0 0.0
        %1533 = vmatpush1.msra.mxu0 0.0
        %1534 = vmatprep.subr.mxu0 0.0
        %1535 = vmatpush1.msra.mxu0 0.0
        %1536 = vmatprep.subr.mxu0 0.0
        %1537 = vmatpush1.msra.mxu0 0.0
        %1538 = vmatprep.subr.mxu0 0.0
        %1539 = vmatpush1.msra.mxu0 0.0
        %1540 = vmatprep.subr.mxu0 0.0
        %1541 = vmatpush1.msra.mxu0 0.0
        %1542 = vmatprep.subr.mxu0 0.0
        %1543 = vmatpush1.msra.mxu0 0.0
        %1544 = vmatprep.subr.mxu0 0.0
        %1545 = vmatpush1.msra.mxu0 0.0
        %1546 = vmatprep.subr.mxu0 0.0
        %1547 = vmatpush1.msra.mxu0 0.0
        %1548 = vmatprep.subr.mxu0 0.0
        %1549 = vmatpush1.msra.mxu0 0.0
        %1550 = vmatprep.subr.mxu0 0.0
        %1551 = vmatpush1.msra.mxu0 0.0
        %1552 = vmatprep.subr.mxu0 0.0
        %1553 = vmatpush1.msra.mxu0 0.0
        %1554 = vmatprep.subr.mxu0 0.0
        %1555 = vmatpush1.msra.mxu0 0.0
        %1556 = vmatprep.subr.mxu0 0.0
        %1557 = vmatpush1.msra.mxu0 0.0
        %1558 = vmatprep.subr.mxu0 0.0
        %1559 = vmatpush1.msra.mxu0 0.0
        %1560 = vmatprep.subr.mxu0 0.0
        %1561 = vmatpush1.msra.mxu0 0.0
        %1562 = vmatprep.subr.mxu0 0.0
        %1563 = vmatpush1.msra.mxu0 0.0
        %1564 = vmatprep.subr.mxu0 0.0
        %1565 = vmatpush1.msra.mxu0 0.0
        %1566 = vmatprep.subr.mxu0 0.0
        %1567 = vmatpush1.msra.mxu0 0.0
        %1568 = vmatprep.subr.mxu0 0.0
        %1569 = vmatpush1.msra.mxu0 0.0
        %1570 = vmatprep.subr.mxu0 0.0
        %1571 = vmatpush1.msra.mxu0 0.0
        %1572 = vmatprep.subr.mxu0 0.0
        %1573 = vmatpush1.msra.mxu0 0.0
        %1574 = vmatprep.subr.mxu0 0.0
        %1575 = vmatpush1.msra.mxu0 0.0
        %1576 = vmatprep.subr.mxu0 0.0
        %1577 = vmatpush1.msra.mxu0 0.0
        %1578 = vmatprep.mubr.f32.mxu0 0.0
        %1579 = vmatmul.mubr.f32.gmra.mrb[0].mxu0 %v1509
        %v1580 = vpop.f32.mrb[0].mxu0
        %v1581 = vadd.f32 0.0, %v1580
        %v1582 = vpop.f32.mrb[0].mxu0
        %1583 = vmatprep.mubr.f32.mxu0 0.0
        %1584 = vmatmul.mubr.f32.gmra.mrb[0].mxu0 %v1512
        %v1585 = vpop.f32.mrb[0].mxu0
        %v1586 = vadd.f32 0.0, %v1585
        %v1587 = vpop.f32.mrb[0].mxu0
        %1588 = vdwg.mxu0
        %1589 = vrot.lane.b32.xlu0 %v779, 112
        %v1590 = vpop.permute.xlu0 %1589
        %1591 = vrot.lane.b32.xlu0 %v780, 112
        %v1592 = vpop.permute.xlu0 %1591
        %1593 = vrot.lane.b32.xlu0 %v878, 112
        %v1594 = vpop.permute.xlu0 %1593
        %1595 = vrot.lane.b32.xlu0 %v883, 112
        %v1596 = vpop.permute.xlu0 %1595
        %v1597 = vsel %vm1018, %v1590, 0
        %v1599 = vsel %vm1018, %v1592, 0
        %v1601 = vsel %vm1018, %v1594, 0
        %v1603 = vsel %vm1018, %v1596, 0
        %1605 = vmatprep.subr.mxu0 0.0
        %1606 = vmatpush1.xpose.msra.mxu0 %v1601
        %1607 = vmatprep.subr.mxu0 0.0
        %1608 = vmatpush1.xpose.msra.mxu0 %v1603
        %1609 = vmatprep.subr.mxu0 0.0
        %1610 = vmatpush1.xpose.msra.mxu0 0.0
        %1611 = vmatprep.subr.mxu0 0.0
        %1612 = vmatpush1.xpose.msra.mxu0 0.0
        %1613 = vmatprep.subr.mxu0 0.0
        %1614 = vmatpush1.xpose.msra.mxu0 0.0
        %1615 = vmatprep.subr.mxu0 0.0
        %1616 = vmatpush1.xpose.msra.mxu0 0.0
        %1617 = vmatprep.subr.mxu0 0.0
        %1618 = vmatpush1.xpose.msra.mxu0 0.0
        %1619 = vmatprep.subr.mxu0 0.0
        %1620 = vmatpush1.xpose.msra.mxu0 0.0
        %1621 = vmatprep.subr.mxu0 0.0
        %1622 = vmatpush1.xpose.msra.mxu0 0.0
        %1623 = vmatprep.subr.mxu0 0.0
        %1624 = vmatpush1.xpose.msra.mxu0 0.0
        %1625 = vmatprep.subr.mxu0 0.0
        %1626 = vmatpush1.xpose.msra.mxu0 0.0
        %1627 = vmatprep.subr.mxu0 0.0
        %1628 = vmatpush1.xpose.msra.mxu0 0.0
        %1629 = vmatprep.subr.mxu0 0.0
        %1630 = vmatpush1.xpose.msra.mxu0 0.0
        %1631 = vmatprep.subr.mxu0 0.0
        %1632 = vmatpush1.xpose.msra.mxu0 0.0
        %1633 = vmatprep.subr.mxu0 0.0
        %1634 = vmatpush1.xpose.msra.mxu0 0.0
        %1635 = vmatprep.subr.mxu0 0.0
        %1636 = vmatpush1.xpose.msra.mxu0 0.0
        %1637 = vmatprep.subr.mxu0 0.0
        %1638 = vmatpush1.xpose.msra.mxu0 0.0
        %1639 = vmatprep.subr.mxu0 0.0
        %1640 = vmatpush1.xpose.msra.mxu0 0.0
        %1641 = vmatprep.subr.mxu0 0.0
        %1642 = vmatpush1.xpose.msra.mxu0 0.0
        %1643 = vmatprep.subr.mxu0 0.0
        %1644 = vmatpush1.xpose.msra.mxu0 0.0
        %1645 = vmatprep.subr.mxu0 0.0
        %1646 = vmatpush1.xpose.msra.mxu0 0.0
        %1647 = vmatprep.subr.mxu0 0.0
        %1648 = vmatpush1.xpose.msra.mxu0 0.0
        %1649 = vmatprep.subr.mxu0 0.0
        %1650 = vmatpush1.xpose.msra.mxu0 0.0
        %1651 = vmatprep.subr.mxu0 0.0
        %1652 = vmatpush1.xpose.msra.mxu0 0.0
        %1653 = vmatprep.subr.mxu0 0.0
        %1654 = vmatpush1.xpose.msra.mxu0 0.0
        %1655 = vmatprep.subr.mxu0 0.0
        %1656 = vmatpush1.xpose.msra.mxu0 0.0
        %1657 = vmatprep.subr.mxu0 0.0
        %1658 = vmatpush1.xpose.msra.mxu0 0.0
        %1659 = vmatprep.subr.mxu0 0.0
        %1660 = vmatpush1.xpose.msra.mxu0 0.0
        %1661 = vmatprep.subr.mxu0 0.0
        %1662 = vmatpush1.xpose.msra.mxu0 0.0
        %1663 = vmatprep.subr.mxu0 0.0
        %1664 = vmatpush1.xpose.msra.mxu0 0.0
        %1665 = vmatprep.subr.mxu0 0.0
        %1666 = vmatpush1.xpose.msra.mxu0 0.0
        %1667 = vmatprep.subr.mxu0 0.0
        %1668 = vmatpush1.xpose.msra.mxu0 0.0
        %1669 = vmatprep.mubr.f32.mxu0 0.0
        %1670 = vmatmul.mubr.f32.gmra.mrb[0].mxu0 %v1597
        %v1671 = vpop.f32.mrb[0].mxu0
        %v1672 = vadd.f32 %v1016, %v1671
        %v1673 = vpop.f32.mrb[0].mxu0
        %1674 = vmatprep.mubr.f32.mxu0 0.0
        %1675 = vmatmul.mubr.f32.gmra.mrb[0].mxu0 %v1599
        %v1676 = vpop.f32.mrb[0].mxu0
        %v1677 = vadd.f32 %v1017, %v1676
        %v1678 = vpop.f32.mrb[0].mxu0
        %1679 = vdwg.mxu0
        %1680 = vrot.lane.b32.xlu0 %v781, 112
        %v1681 = vpop.permute.xlu0 %1680
        %1682 = vrot.lane.b32.xlu0 %v782, 112
        %v1683 = vpop.permute.xlu0 %1682
        %1684 = vrot.lane.b32.xlu0 %v888, 112
        %v1685 = vpop.permute.xlu0 %1684
        %1686 = vrot.lane.b32.xlu0 %v893, 112
        %v1687 = vpop.permute.xlu0 %1686
        %v1688 = vsel %vm1018, %v1681, 0
        %v1690 = vsel %vm1018, %v1683, 0
        %v1692 = vsel %vm1018, %v1685, 0
        %v1694 = vsel %vm1018, %v1687, 0
        %1696 = vmatprep.subr.mxu0 0.0
        %1697 = vmatpush1.xpose.msra.mxu0 %v1692
        %1698 = vmatprep.subr.mxu0 0.0
        %1699 = vmatpush1.xpose.msra.mxu0 %v1694
        %1700 = vmatprep.subr.mxu0 0.0
        %1701 = vmatpush1.xpose.msra.mxu0 0.0
        %1702 = vmatprep.subr.mxu0 0.0
        %1703 = vmatpush1.xpose.msra.mxu0 0.0
        %1704 = vmatprep.subr.mxu0 0.0
        %1705 = vmatpush1.xpose.msra.mxu0 0.0
        %1706 = vmatprep.subr.mxu0 0.0
        %1707 = vmatpush1.xpose.msra.mxu0 0.0
        %1708 = vmatprep.subr.mxu0 0.0
        %1709 = vmatpush1.xpose.msra.mxu0 0.0
        %1710 = vmatprep.subr.mxu0 0.0
        %1711 = vmatpush1.xpose.msra.mxu0 0.0
        %1712 = vmatprep.subr.mxu0 0.0
        %1713 = vmatpush1.xpose.msra.mxu0 0.0
        %1714 = vmatprep.subr.mxu0 0.0
        %1715 = vmatpush1.xpose.msra.mxu0 0.0
        %1716 = vmatprep.subr.mxu0 0.0
        %1717 = vmatpush1.xpose.msra.mxu0 0.0
        %1718 = vmatprep.subr.mxu0 0.0
        %1719 = vmatpush1.xpose.msra.mxu0 0.0
        %1720 = vmatprep.subr.mxu0 0.0
        %1721 = vmatpush1.xpose.msra.mxu0 0.0
        %1722 = vmatprep.subr.mxu0 0.0
        %1723 = vmatpush1.xpose.msra.mxu0 0.0
        %1724 = vmatprep.subr.mxu0 0.0
        %1725 = vmatpush1.xpose.msra.mxu0 0.0
        %1726 = vmatprep.subr.mxu0 0.0
        %1727 = vmatpush1.xpose.msra.mxu0 0.0
        %1728 = vmatprep.subr.mxu0 0.0
        %1729 = vmatpush1.xpose.msra.mxu0 0.0
        %1730 = vmatprep.subr.mxu0 0.0
        %1731 = vmatpush1.xpose.msra.mxu0 0.0
        %1732 = vmatprep.subr.mxu0 0.0
        %1733 = vmatpush1.xpose.msra.mxu0 0.0
        %1734 = vmatprep.subr.mxu0 0.0
        %1735 = vmatpush1.xpose.msra.mxu0 0.0
        %1736 = vmatprep.subr.mxu0 0.0
        %1737 = vmatpush1.xpose.msra.mxu0 0.0
        %1738 = vmatprep.subr.mxu0 0.0
        %1739 = vmatpush1.xpose.msra.mxu0 0.0
        %1740 = vmatprep.subr.mxu0 0.0
        %1741 = vmatpush1.xpose.msra.mxu0 0.0
        %1742 = vmatprep.subr.mxu0 0.0
        %1743 = vmatpush1.xpose.msra.mxu0 0.0
        %1744 = vmatprep.subr.mxu0 0.0
        %1745 = vmatpush1.xpose.msra.mxu0 0.0
        %1746 = vmatprep.subr.mxu0 0.0
        %1747 = vmatpush1.xpose.msra.mxu0 0.0
        %1748 = vmatprep.subr.mxu0 0.0
        %1749 = vmatpush1.xpose.msra.mxu0 0.0
        %1750 = vmatprep.subr.mxu0 0.0
        %1751 = vmatpush1.xpose.msra.mxu0 0.0
        %1752 = vmatprep.subr.mxu0 0.0
        %1753 = vmatpush1.xpose.msra.mxu0 0.0
        %1754 = vmatprep.subr.mxu0 0.0
        %1755 = vmatpush1.xpose.msra.mxu0 0.0
        %1756 = vmatprep.subr.mxu0 0.0
        %1757 = vmatpush1.xpose.msra.mxu0 0.0
        %1758 = vmatprep.subr.mxu0 0.0
        %1759 = vmatpush1.xpose.msra.mxu0 0.0
        %1760 = vmatprep.mubr.f32.mxu0 0.0
        %1761 = vmatmul.mubr.f32.gmra.mrb[0].mxu0 %v1688
        %v1762 = vpop.f32.mrb[0].mxu0
        %v1763 = vadd.f32 %v1016, %v1762
        %v1764 = vpop.f32.mrb[0].mxu0
        %1765 = vmatprep.mubr.f32.mxu0 0.0
        %1766 = vmatmul.mubr.f32.gmra.mrb[0].mxu0 %v1690
        %v1767 = vpop.f32.mrb[0].mxu0
        %v1768 = vadd.f32 %v1017, %v1767
        %v1769 = vpop.f32.mrb[0].mxu0
        %1770 = vdwg.mxu0
        %1771 = vrot.lane.b32.xlu0 %v783, 112
        %v1772 = vpop.permute.xlu0 %1771
        %1773 = vrot.lane.b32.xlu0 %v784, 112
        %v1774 = vpop.permute.xlu0 %1773
        %1775 = vrot.lane.b32.xlu0 %v898, 112
        %v1776 = vpop.permute.xlu0 %1775
        %1777 = vrot.lane.b32.xlu0 %v903, 112
        %v1778 = vpop.permute.xlu0 %1777
        %v1779 = vsel %vm1018, %v1772, 0
        %v1781 = vsel %vm1018, %v1774, 0
        %v1783 = vsel %vm1018, %v1776, 0
        %v1785 = vsel %vm1018, %v1778, 0
        %1787 = vmatprep.subr.mxu0 0.0
        %1788 = vmatpush1.xpose.msra.mxu0 %v1783
        %1789 = vmatprep.subr.mxu0 0.0
        %1790 = vmatpush1.xpose.msra.mxu0 %v1785
        %1791 = vmatprep.subr.mxu0 0.0
        %1792 = vmatpush1.xpose.msra.mxu0 0.0
        %1793 = vmatprep.subr.mxu0 0.0
        %1794 = vmatpush1.xpose.msra.mxu0 0.0
        %1795 = vmatprep.subr.mxu0 0.0
        %1796 = vmatpush1.xpose.msra.mxu0 0.0
        %1797 = vmatprep.subr.mxu0 0.0
        %1798 = vmatpush1.xpose.msra.mxu0 0.0
        %1799 = vmatprep.subr.mxu0 0.0
        %1800 = vmatpush1.xpose.msra.mxu0 0.0
        %1801 = vmatprep.subr.mxu0 0.0
        %1802 = vmatpush1.xpose.msra.mxu0 0.0
        %1803 = vmatprep.subr.mxu0 0.0
        %1804 = vmatpush1.xpose.msra.mxu0 0.0
        %1805 = vmatprep.subr.mxu0 0.0
        %1806 = vmatpush1.xpose.msra.mxu0 0.0
        %1807 = vmatprep.subr.mxu0 0.0
        %1808 = vmatpush1.xpose.msra.mxu0 0.0
        %1809 = vmatprep.subr.mxu0 0.0
        %1810 = vmatpush1.xpose.msra.mxu0 0.0
        %1811 = vmatprep.subr.mxu0 0.0
        %1812 = vmatpush1.xpose.msra.mxu0 0.0
        %1813 = vmatprep.subr.mxu0 0.0
        %1814 = vmatpush1.xpose.msra.mxu0 0.0
        %1815 = vmatprep.subr.mxu0 0.0
        %1816 = vmatpush1.xpose.msra.mxu0 0.0
        %1817 = vmatprep.subr.mxu0 0.0
        %1818 = vmatpush1.xpose.msra.mxu0 0.0
        %1819 = vmatprep.subr.mxu0 0.0
        %1820 = vmatpush1.xpose.msra.mxu0 0.0
        %1821 = vmatprep.subr.mxu0 0.0
        %1822 = vmatpush1.xpose.msra.mxu0 0.0
        %1823 = vmatprep.subr.mxu0 0.0
        %1824 = vmatpush1.xpose.msra.mxu0 0.0
        %1825 = vmatprep.subr.mxu0 0.0
        %1826 = vmatpush1.xpose.msra.mxu0 0.0
        %1827 = vmatprep.subr.mxu0 0.0
        %1828 = vmatpush1.xpose.msra.mxu0 0.0
        %1829 = vmatprep.subr.mxu0 0.0
        %1830 = vmatpush1.xpose.msra.mxu0 0.0
        %1831 = vmatprep.subr.mxu0 0.0
        %1832 = vmatpush1.xpose.msra.mxu0 0.0
        %1833 = vmatprep.subr.mxu0 0.0
        %1834 = vmatpush1.xpose.msra.mxu0 0.0
        %1835 = vmatprep.subr.mxu0 0.0
        %1836 = vmatpush1.xpose.msra.mxu0 0.0
        %1837 = vmatprep.subr.mxu0 0.0
        %1838 = vmatpush1.xpose.msra.mxu0 0.0
        %1839 = vmatprep.subr.mxu0 0.0
        %1840 = vmatpush1.xpose.msra.mxu0 0.0
        %1841 = vmatprep.subr.mxu0 0.0
        %1842 = vmatpush1.xpose.msra.mxu0 0.0
        %1843 = vmatprep.subr.mxu0 0.0
        %1844 = vmatpush1.xpose.msra.mxu0 0.0
        %1845 = vmatprep.subr.mxu0 0.0
        %1846 = vmatpush1.xpose.msra.mxu0 0.0
        %1847 = vmatprep.subr.mxu0 0.0
        %1848 = vmatpush1.xpose.msra.mxu0 0.0
        %1849 = vmatprep.subr.mxu0 0.0
        %1850 = vmatpush1.xpose.msra.mxu0 0.0
        %1851 = vmatprep.mubr.f32.mxu0 0.0
        %1852 = vmatmul.mubr.f32.gmra.mrb[0].mxu0 %v1779
        %v1853 = vpop.f32.mrb[0].mxu0
        %v1854 = vadd.f32 %v1016, %v1853
        %v1855 = vpop.f32.mrb[0].mxu0
        %1856 = vmatprep.mubr.f32.mxu0 0.0
        %1857 = vmatmul.mubr.f32.gmra.mrb[0].mxu0 %v1781
        %v1858 = vpop.f32.mrb[0].mxu0
        %v1859 = vadd.f32 %v1017, %v1858
        %v1860 = vpop.f32.mrb[0].mxu0
        %1861 = vdwg.mxu0
        %v1862 = vsel %vm1018, %v1672, -inf
        %1863 = vmax.xlane.f32.xlu0 %v1862
        %v1864 = vpop.xlane.xlu0 %1863
        %v1865 = vsel %vm1018, %v1677, -inf
        %1866 = vmax.xlane.f32.xlu0 %v1865
        %v1867 = vpop.xlane.xlu0 %1866
        %v1868 = vsel %vm1018, %v1763, -inf
        %1869 = vmax.xlane.f32.xlu0 %v1868
        %v1870 = vpop.xlane.xlu0 %1869
        %v1871 = vsel %vm1018, %v1768, -inf
        %1872 = vmax.xlane.f32.xlu0 %v1871
        %v1873 = vpop.xlane.xlu0 %1872
        %v1874 = vsel %vm1018, %v1854, -inf
        %1875 = vmax.xlane.f32.xlu0 %v1874
        %v1876 = vpop.xlane.xlu0 %1875
        %v1877 = vsel %vm1018, %v1859, -inf
        %1878 = vmax.xlane.f32.xlu0 %v1877
        %v1879 = vpop.xlane.xlu0 %1878
        %v1880 = vsub.f32 %v1672, %v1864
        %v1881 = vsub.f32 %v1677, %v1867
        %v1882 = vsub.f32 %v1763, %v1870
        %v1883 = vsub.f32 %v1768, %v1873
        %v1884 = vsub.f32 %v1854, %v1876
        %v1885 = vsub.f32 %v1859, %v1879
        %v1886 = vmul.f32 %v1880, 1.442695
        %v1887 = vpow.pop %v1886
        %v1888 = vmul.f32 %v1881, 1.442695
        %v1889 = vpow.pop %v1888
        %v1890 = vmul.f32 %v1882, 1.442695
        %v1891 = vpow.pop %v1890
        %v1892 = vmul.f32 %v1883, 1.442695
        %v1893 = vpow.pop %v1892
        %v1894 = vmul.f32 %v1884, 1.442695
        %v1895 = vpow.pop %v1894
        %v1896 = vmul.f32 %v1885, 1.442695
        %v1897 = vpow.pop %v1896
        %v1898 = vsel %vm1018, %v1887, 0.0
        %1899 = vadd.xlane.f32.xlu0 %v1898
        %v1900 = vpop.xlane.xlu0 %1899
        %v1901 = vsel %vm1018, %v1889, 0.0
        %1902 = vadd.xlane.f32.xlu0 %v1901
        %v1903 = vpop.xlane.xlu0 %1902
        %v1904 = vsel %vm1018, %v1891, 0.0
        %1905 = vadd.xlane.f32.xlu0 %v1904
        %v1906 = vpop.xlane.xlu0 %1905
        %v1907 = vsel %vm1018, %v1893, 0.0
        %1908 = vadd.xlane.f32.xlu0 %v1907
        %v1909 = vpop.xlane.xlu0 %1908
        %v1910 = vsel %vm1018, %v1895, 0.0
        %1911 = vadd.xlane.f32.xlu0 %v1910
        %v1912 = vpop.xlane.xlu0 %1911
        %v1913 = vsel %vm1018, %v1897, 0.0
        %1914 = vadd.xlane.f32.xlu0 %v1913
        %v1915 = vpop.xlane.xlu0 %1914
        %v1916 = vrcp.pop %v1900
        %v1917 = vrcp.pop %v1903
        %v1918 = vrcp.pop %v1906
        %v1919 = vrcp.pop %v1909
        %v1920 = vrcp.pop %v1912
        %v1921 = vrcp.pop %v1915
        %v1922 = vmul.f32 %v1887, %v1916
        %v1923 = vmul.f32 %v1889, %v1917
        %v1924 = vmul.f32 %v1891, %v1918
        %v1925 = vmul.f32 %v1893, %v1919
        %v1926 = vmul.f32 %v1895, %v1920
        %v1927 = vmul.f32 %v1897, %v1921
        %1930 = vrot.lane.b32.xlu0 %v981, 112
        %v1931 = vpop.permute.xlu0 %1930
        %1932 = vrot.lane.b32.xlu0 %v986, 112
        %v1933 = vpop.permute.xlu0 %1932
        %v1937 = vsel %vm1018, %v1922, 0
        %v1940 = vsel %vm1018, %v1923, 0
        %1942 = vmatprep.subr.mxu0 0.0
        %1943 = vmatpush1.msra.mxu0 %v1931
        %1944 = vmatprep.subr.mxu0 0.0
        %1945 = vmatpush1.msra.mxu0 %v1933
        %1946 = vmatprep.subr.mxu0 0.0
        %1947 = vmatpush1.msra.mxu0 0.0
        %1948 = vmatprep.subr.mxu0 0.0
        %1949 = vmatpush1.msra.mxu0 0.0
        %1950 = vmatprep.subr.mxu0 0.0
        %1951 = vmatpush1.msra.mxu0 0.0
        %1952 = vmatprep.subr.mxu0 0.0
        %1953 = vmatpush1.msra.mxu0 0.0
        %1954 = vmatprep.subr.mxu0 0.0
        %1955 = vmatpush1.msra.mxu0 0.0
        %1956 = vmatprep.subr.mxu0 0.0
        %1957 = vmatpush1.msra.mxu0 0.0
        %1958 = vmatprep.subr.mxu0 0.0
        %1959 = vmatpush1.msra.mxu0 0.0
        %1960 = vmatprep.subr.mxu0 0.0
        %1961 = vmatpush1.msra.mxu0 0.0
        %1962 = vmatprep.subr.mxu0 0.0
        %1963 = vmatpush1.msra.mxu0 0.0
        %1964 = vmatprep.subr.mxu0 0.0
        %1965 = vmatpush1.msra.mxu0 0.0
        %1966 = vmatprep.subr.mxu0 0.0
        %1967 = vmatpush1.msra.mxu0 0.0
        %1968 = vmatprep.subr.mxu0 0.0
        %1969 = vmatpush1.msra.mxu0 0.0
        %1970 = vmatprep.subr.mxu0 0.0
        %1971 = vmatpush1.msra.mxu0 0.0
        %1972 = vmatprep.subr.mxu0 0.0
        %1973 = vmatpush1.msra.mxu0 0.0
        %1974 = vmatprep.subr.mxu0 0.0
        %1975 = vmatpush1.msra.mxu0 0.0
        %1976 = vmatprep.subr.mxu0 0.0
        %1977 = vmatpush1.msra.mxu0 0.0
        %1978 = vmatprep.subr.mxu0 0.0
        %1979 = vmatpush1.msra.mxu0 0.0
        %1980 = vmatprep.subr.mxu0 0.0
        %1981 = vmatpush1.msra.mxu0 0.0
        %1982 = vmatprep.subr.mxu0 0.0
        %1983 = vmatpush1.msra.mxu0 0.0
        %1984 = vmatprep.subr.mxu0 0.0
        %1985 = vmatpush1.msra.mxu0 0.0
        %1986 = vmatprep.subr.mxu0 0.0
        %1987 = vmatpush1.msra.mxu0 0.0
        %1988 = vmatprep.subr.mxu0 0.0
        %1989 = vmatpush1.msra.mxu0 0.0
        %1990 = vmatprep.subr.mxu0 0.0
        %1991 = vmatpush1.msra.mxu0 0.0
        %1992 = vmatprep.subr.mxu0 0.0
        %1993 = vmatpush1.msra.mxu0 0.0
        %1994 = vmatprep.subr.mxu0 0.0
        %1995 = vmatpush1.msra.mxu0 0.0
        %1996 = vmatprep.subr.mxu0 0.0
        %1997 = vmatpush1.msra.mxu0 0.0
        %1998 = vmatprep.subr.mxu0 0.0
        %1999 = vmatpush1.msra.mxu0 0.0
        %2000 = vmatprep.subr.mxu0 0.0
        %2001 = vmatpush1.msra.mxu0 0.0
        %2002 = vmatprep.subr.mxu0 0.0
        %2003 = vmatpush1.msra.mxu0 0.0
        %2004 = vmatprep.subr.mxu0 0.0
        %2005 = vmatpush1.msra.mxu0 0.0
        %2006 = vmatprep.mubr.f32.mxu0 0.0
        %2007 = vmatmul.mubr.f32.gmra.mrb[0].mxu0 %v1937
        %v2008 = vpop.f32.mrb[0].mxu0
        %v2009 = vadd.f32 0.0, %v2008
        %v2010 = vpop.f32.mrb[0].mxu0
        %2011 = vmatprep.mubr.f32.mxu0 0.0
        %2012 = vmatmul.mubr.f32.gmra.mrb[0].mxu0 %v1940
        %v2013 = vpop.f32.mrb[0].mxu0
        %v2014 = vadd.f32 0.0, %v2013
        %v2015 = vpop.f32.mrb[0].mxu0
        %2016 = vdwg.mxu0
        %2019 = vrot.lane.b32.xlu0 %v991, 112
        %v2020 = vpop.permute.xlu0 %2019
        %2021 = vrot.lane.b32.xlu0 %v996, 112
        %v2022 = vpop.permute.xlu0 %2021
        %v2026 = vsel %vm1018, %v1924, 0
        %v2029 = vsel %vm1018, %v1925, 0
        %2031 = vmatprep.subr.mxu0 0.0
        %2032 = vmatpush1.msra.mxu0 %v2020
        %2033 = vmatprep.subr.mxu0 0.0
        %2034 = vmatpush1.msra.mxu0 %v2022
        %2035 = vmatprep.subr.mxu0 0.0
        %2036 = vmatpush1.msra.mxu0 0.0
        %2037 = vmatprep.subr.mxu0 0.0
        %2038 = vmatpush1.msra.mxu0 0.0
        %2039 = vmatprep.subr.mxu0 0.0
        %2040 = vmatpush1.msra.mxu0 0.0
        %2041 = vmatprep.subr.mxu0 0.0
        %2042 = vmatpush1.msra.mxu0 0.0
        %2043 = vmatprep.subr.mxu0 0.0
        %2044 = vmatpush1.msra.mxu0 0.0
        %2045 = vmatprep.subr.mxu0 0.0
        %2046 = vmatpush1.msra.mxu0 0.0
        %2047 = vmatprep.subr.mxu0 0.0
        %2048 = vmatpush1.msra.mxu0 0.0
        %2049 = vmatprep.subr.mxu0 0.0
        %2050 = vmatpush1.msra.mxu0 0.0
        %2051 = vmatprep.subr.mxu0 0.0
        %2052 = vmatpush1.msra.mxu0 0.0
        %2053 = vmatprep.subr.mxu0 0.0
        %2054 = vmatpush1.msra.mxu0 0.0
        %2055 = vmatprep.subr.mxu0 0.0
        %2056 = vmatpush1.msra.mxu0 0.0
        %2057 = vmatprep.subr.mxu0 0.0
        %2058 = vmatpush1.msra.mxu0 0.0
        %2059 = vmatprep.subr.mxu0 0.0
        %2060 = vmatpush1.msra.mxu0 0.0
        %2061 = vmatprep.subr.mxu0 0.0
        %2062 = vmatpush1.msra.mxu0 0.0
        %2063 = vmatprep.subr.mxu0 0.0
        %2064 = vmatpush1.msra.mxu0 0.0
        %2065 = vmatprep.subr.mxu0 0.0
        %2066 = vmatpush1.msra.mxu0 0.0
        %2067 = vmatprep.subr.mxu0 0.0
        %2068 = vmatpush1.msra.mxu0 0.0
        %2069 = vmatprep.subr.mxu0 0.0
        %2070 = vmatpush1.msra.mxu0 0.0
        %2071 = vmatprep.subr.mxu0 0.0
        %2072 = vmatpush1.msra.mxu0 0.0
        %2073 = vmatprep.subr.mxu0 0.0
        %2074 = vmatpush1.msra.mxu0 0.0
        %2075 = vmatprep.subr.mxu0 0.0
        %2076 = vmatpush1.msra.mxu0 0.0
        %2077 = vmatprep.subr.mxu0 0.0
        %2078 = vmatpush1.msra.mxu0 0.0
        %2079 = vmatprep.subr.mxu0 0.0
        %2080 = vmatpush1.msra.mxu0 0.0
        %2081 = vmatprep.subr.mxu0 0.0
        %2082 = vmatpush1.msra.mxu0 0.0
        %2083 = vmatprep.subr.mxu0 0.0
        %2084 = vmatpush1.msra.mxu0 0.0
        %2085 = vmatprep.subr.mxu0 0.0
        %2086 = vmatpush1.msra.mxu0 0.0
        %2087 = vmatprep.subr.mxu0 0.0
        %2088 = vmatpush1.msra.mxu0 0.0
        %2089 = vmatprep.subr.mxu0 0.0
        %2090 = vmatpush1.msra.mxu0 0.0
        %2091 = vmatprep.subr.mxu0 0.0
        %2092 = vmatpush1.msra.mxu0 0.0
        %2093 = vmatprep.subr.mxu0 0.0
        %2094 = vmatpush1.msra.mxu0 0.0
        %2095 = vmatprep.mubr.f32.mxu0 0.0
        %2096 = vmatmul.mubr.f32.gmra.mrb[0].mxu0 %v2026
        %v2097 = vpop.f32.mrb[0].mxu0
        %v2098 = vadd.f32 0.0, %v2097
        %v2099 = vpop.f32.mrb[0].mxu0
        %2100 = vmatprep.mubr.f32.mxu0 0.0
        %2101 = vmatmul.mubr.f32.gmra.mrb[0].mxu0 %v2029
        %v2102 = vpop.f32.mrb[0].mxu0
        %v2103 = vadd.f32 0.0, %v2102
        %v2104 = vpop.f32.mrb[0].mxu0
        %2105 = vdwg.mxu0
        %2108 = vrot.lane.b32.xlu0 %v1001, 112
        %v2109 = vpop.permute.xlu0 %2108
        %2110 = vrot.lane.b32.xlu0 %v1006, 112
        %v2111 = vpop.permute.xlu0 %2110
        %v2115 = vsel %vm1018, %v1926, 0
        %v2118 = vsel %vm1018, %v1927, 0
        %2120 = vmatprep.subr.mxu0 0.0
        %2121 = vmatpush1.msra.mxu0 %v2109
        %2122 = vmatprep.subr.mxu0 0.0
        %2123 = vmatpush1.msra.mxu0 %v2111
        %2124 = vmatprep.subr.mxu0 0.0
        %2125 = vmatpush1.msra.mxu0 0.0
        %2126 = vmatprep.subr.mxu0 0.0
        %2127 = vmatpush1.msra.mxu0 0.0
        %2128 = vmatprep.subr.mxu0 0.0
        %2129 = vmatpush1.msra.mxu0 0.0
        %2130 = vmatprep.subr.mxu0 0.0
        %2131 = vmatpush1.msra.mxu0 0.0
        %2132 = vmatprep.subr.mxu0 0.0
        %2133 = vmatpush1.msra.mxu0 0.0
        %2134 = vmatprep.subr.mxu0 0.0
        %2135 = vmatpush1.msra.mxu0 0.0
        %2136 = vmatprep.subr.mxu0 0.0
        %2137 = vmatpush1.msra.mxu0 0.0
        %2138 = vmatprep.subr.mxu0 0.0
        %2139 = vmatpush1.msra.mxu0 0.0
        %2140 = vmatprep.subr.mxu0 0.0
        %2141 = vmatpush1.msra.mxu0 0.0
        %2142 = vmatprep.subr.mxu0 0.0
        %2143 = vmatpush1.msra.mxu0 0.0
        %2144 = vmatprep.subr.mxu0 0.0
        %2145 = vmatpush1.msra.mxu0 0.0
        %2146 = vmatprep.subr.mxu0 0.0
        %2147 = vmatpush1.msra.mxu0 0.0
        %2148 = vmatprep.subr.mxu0 0.0
        %2149 = vmatpush1.msra.mxu0 0.0
        %2150 = vmatprep.subr.mxu0 0.0
        %2151 = vmatpush1.msra.mxu0 0.0
        %2152 = vmatprep.subr.mxu0 0.0
        %2153 = vmatpush1.msra.mxu0 0.0
        %2154 = vmatprep.subr.mxu0 0.0
        %2155 = vmatpush1.msra.mxu0 0.0
        %2156 = vmatprep.subr.mxu0 0.0
        %2157 = vmatpush1.msra.mxu0 0.0
        %2158 = vmatprep.subr.mxu0 0.0
        %2159 = vmatpush1.msra.mxu0 0.0
        %2160 = vmatprep.subr.mxu0 0.0
        %2161 = vmatpush1.msra.mxu0 0.0
        %2162 = vmatprep.subr.mxu0 0.0
        %2163 = vmatpush1.msra.mxu0 0.0
        %2164 = vmatprep.subr.mxu0 0.0
        %2165 = vmatpush1.msra.mxu0 0.0
        %2166 = vmatprep.subr.mxu0 0.0
        %2167 = vmatpush1.msra.mxu0 0.0
        %2168 = vmatprep.subr.mxu0 0.0
        %2169 = vmatpush1.msra.mxu0 0.0
        %2170 = vmatprep.subr.mxu0 0.0
        %2171 = vmatpush1.msra.mxu0 0.0
        %2172 = vmatprep.subr.mxu0 0.0
        %2173 = vmatpush1.msra.mxu0 0.0
        %2174 = vmatprep.subr.mxu0 0.0
        %2175 = vmatpush1.msra.mxu0 0.0
        %2176 = vmatprep.subr.mxu0 0.0
        %2177 = vmatpush1.msra.mxu0 0.0
        %2178 = vmatprep.subr.mxu0 0.0
        %2179 = vmatpush1.msra.mxu0 0.0
        %2180 = vmatprep.subr.mxu0 0.0
        %2181 = vmatpush1.msra.mxu0 0.0
        %2182 = vmatprep.subr.mxu0 0.0
        %2183 = vmatpush1.msra.mxu0 0.0
        %2184 = vmatprep.mubr.f32.mxu0 0.0
        %2185 = vmatmul.mubr.f32.gmra.mrb[0].mxu0 %v2115
        %v2186 = vpop.f32.mrb[0].mxu0
        %v2187 = vadd.f32 0.0, %v2186
        %v2188 = vpop.f32.mrb[0].mxu0
        %2189 = vmatprep.mubr.f32.mxu0 0.0
        %2190 = vmatmul.mubr.f32.gmra.mrb[0].mxu0 %v2118
        %v2191 = vpop.f32.mrb[0].mxu0
        %v2192 = vadd.f32 0.0, %v2191
        %v2193 = vpop.f32.mrb[0].mxu0
        %2194 = vdwg.mxu0
        %2201 = vrot.lane.b32.xlu0 %v2009, 16
        %v2202 = vpop.permute.xlu0 %2201
        %2203 = vrot.lane.b32.xlu0 %v2014, 16
        %v2204 = vpop.permute.xlu0 %2203
        %2205 = vrot.lane.b32.xlu0 %v2098, 16
        %v2206 = vpop.permute.xlu0 %2205
        %2207 = vrot.lane.b32.xlu0 %v2103, 16
        %v2208 = vpop.permute.xlu0 %2207
        %2209 = vrot.lane.b32.xlu0 %v2187, 16
        %v2210 = vpop.permute.xlu0 %2209
        %2211 = vrot.lane.b32.xlu0 %v2192, 16
        %v2212 = vpop.permute.xlu0 %2211
        %v2219 = vsel %vm1018, %v1419, %v2202
        %v2220 = vsel %vm1018, %v1424, %v2204
        %v2221 = vsel %vm1018, %v1500, %v2206
        %v2222 = vsel %vm1018, %v1505, %v2208
        %v2223 = vsel %vm1018, %v1581, %v2210
        %v2224 = vsel %vm1018, %v1586, %v2212
        %v2225 = vld [vmem:[#allocation13] sm:$0xff]
        %v2226 = vld [vmem:[#allocation13 + $0x8] sm:$0xff]
        %v2227 = vld [vmem:[#allocation13 + $0x10] sm:$0xff]
        %v2228 = vld [vmem:[#allocation13 + $0x18] sm:$0xff]
        %v2229 = vlaneseq
        %v2230 = vshrl.u32 %v2229, 7
        %v2231 = vsub.s32 4, %v2230
        %v2232 = vrot.slane %v534, %v2231
        %v2234 = vsel %vm544, %v2219, 0
        %v2237 = vsel %vm544, %v2220, 0
        %v2240 = vsel %vm544, %v2221, 0
        %v2243 = vsel %vm544, %v2222, 0
        %v2246 = vsel %vm544, %v2223, 0
        %v2249 = vsel %vm544, %v2224, 0
        %2251 = vmatprep.subr.mxu0 0.0
        %2252 = vmatpush1.msra.mxu0 %v2225
        %2253 = vmatprep.subr.mxu0 0.0
        %2254 = vmatpush1.msra.mxu0 %v2226
        %2255 = vmatprep.subr.mxu0 0.0
        %2256 = vmatpush1.msra.mxu0 %v2227
        %2257 = vmatprep.subr.mxu0 0.0
        %2258 = vmatpush1.msra.mxu0 %v2228
        %2259 = vmatprep.subr.mxu0 0.0
        %2260 = vmatpush1.msra.mxu0 0.0
        %2261 = vmatprep.subr.mxu0 0.0
        %2262 = vmatpush1.msra.mxu0 0.0
        %2263 = vmatprep.subr.mxu0 0.0
        %2264 = vmatpush1.msra.mxu0 0.0
        %2265 = vmatprep.subr.mxu0 0.0
        %2266 = vmatpush1.msra.mxu0 0.0
        %2267 = vmatprep.subr.mxu0 0.0
        %2268 = vmatpush1.msra.mxu0 0.0
        %2269 = vmatprep.subr.mxu0 0.0
        %2270 = vmatpush1.msra.mxu0 0.0
        %2271 = vmatprep.subr.mxu0 0.0
        %2272 = vmatpush1.msra.mxu0 0.0
        %2273 = vmatprep.subr.mxu0 0.0
        %2274 = vmatpush1.msra.mxu0 0.0
        %2275 = vmatprep.subr.mxu0 0.0
        %2276 = vmatpush1.msra.mxu0 0.0
        %2277 = vmatprep.subr.mxu0 0.0
        %2278 = vmatpush1.msra.mxu0 0.0
        %2279 = vmatprep.subr.mxu0 0.0
        %2280 = vmatpush1.msra.mxu0 0.0
        %2281 = vmatprep.subr.mxu0 0.0
        %2282 = vmatpush1.msra.mxu0 0.0
        %2283 = vmatprep.subr.mxu0 0.0
        %2284 = vmatpush1.msra.mxu0 0.0
        %2285 = vmatprep.subr.mxu0 0.0
        %2286 = vmatpush1.msra.mxu0 0.0
        %2287 = vmatprep.subr.mxu0 0.0
        %2288 = vmatpush1.msra.mxu0 0.0
        %2289 = vmatprep.subr.mxu0 0.0
        %2290 = vmatpush1.msra.mxu0 0.0
        %2291 = vmatprep.subr.mxu0 0.0
        %2292 = vmatpush1.msra.mxu0 0.0
        %2293 = vmatprep.subr.mxu0 0.0
        %2294 = vmatpush1.msra.mxu0 0.0
        %2295 = vmatprep.subr.mxu0 0.0
        %2296 = vmatpush1.msra.mxu0 0.0
        %2297 = vmatprep.subr.mxu0 0.0
        %2298 = vmatpush1.msra.mxu0 0.0
        %2299 = vmatprep.subr.mxu0 0.0
        %2300 = vmatpush1.msra.mxu0 0.0
        %2301 = vmatprep.subr.mxu0 0.0
        %2302 = vmatpush1.msra.mxu0 0.0
        %2303 = vmatprep.subr.mxu0 0.0
        %2304 = vmatpush1.msra.mxu0 0.0
        %2305 = vmatprep.subr.mxu0 0.0
        %2306 = vmatpush1.msra.mxu0 0.0
        %2307 = vmatprep.subr.mxu0 0.0
        %2308 = vmatpush1.msra.mxu0 0.0
        %2309 = vmatprep.subr.mxu0 0.0
        %2310 = vmatpush1.msra.mxu0 0.0
        %2311 = vmatprep.subr.mxu0 0.0
        %2312 = vmatpush1.msra.mxu0 0.0
        %2313 = vmatprep.subr.mxu0 0.0
        %2314 = vmatpush1.msra.mxu0 0.0
        %2315 = vmatprep.mubr.f32.mxu0 0.0
        %2316 = vmatmul.mubr.f32.gmra.mrb[0].mxu0 %v2234
        %v2317 = vpop.f32.mrb[0].mxu0
        %v2318 = vadd.f32 %v2232, %v2317
        %v2319 = vpop.f32.mrb[0].mxu0
        %2320 = vmatprep.mubr.f32.mxu0 0.0
        %2321 = vmatmul.mubr.f32.gmra.mrb[0].mxu0 %v2237
        %v2322 = vpop.f32.mrb[0].mxu0
        %v2323 = vadd.f32 %v2232, %v2322
        %v2324 = vpop.f32.mrb[0].mxu0
        %2325 = vmatprep.mubr.f32.mxu0 0.0
        %2326 = vmatmul.mubr.f32.gmra.mrb[0].mxu0 %v2240
        %v2327 = vpop.f32.mrb[0].mxu0
        %v2328 = vadd.f32 %v2232, %v2327
        %v2329 = vpop.f32.mrb[0].mxu0
        %2330 = vmatprep.mubr.f32.mxu0 0.0
        %2331 = vmatmul.mubr.f32.gmra.mrb[0].mxu0 %v2243
        %v2332 = vpop.f32.mrb[0].mxu0
        %v2333 = vadd.f32 %v2232, %v2332
        %v2334 = vpop.f32.mrb[0].mxu0
        %2335 = vmatprep.mubr.f32.mxu0 0.0
        %2336 = vmatmul.mubr.f32.gmra.mrb[0].mxu0 %v2246
        %v2337 = vpop.f32.mrb[0].mxu0
        %v2338 = vadd.f32 %v2232, %v2337
        %v2339 = vpop.f32.mrb[0].mxu0
        %2340 = vmatprep.mubr.f32.mxu0 0.0
        %2341 = vmatmul.mubr.f32.gmra.mrb[0].mxu0 %v2249
        %v2342 = vpop.f32.mrb[0].mxu0
        %v2343 = vadd.f32 %v2232, %v2342
        %v2344 = vpop.f32.mrb[0].mxu0
        %2345 = vdwg.mxu0
        %v2346 = vadd.f32 %v630, %v2318
        %v2347 = vadd.f32 %v635, %v2323
        %v2348 = vadd.f32 %v640, %v2328
        %v2349 = vadd.f32 %v645, %v2333
        %v2350 = vadd.f32 %v650, %v2338
        %v2351 = vadd.f32 %v655, %v2343
        %v2352 = vsel %vm544, %v2346, 0.0
        %2353 = vadd.xlane.f32.xlu0 %v2352
        %v2354 = vpop.xlane.xlu0 %2353
        %v2355 = vsel %vm544, %v2347, 0.0
        %2356 = vadd.xlane.f32.xlu0 %v2355
        %v2357 = vpop.xlane.xlu0 %2356
        %v2358 = vsel %vm544, %v2348, 0.0
        %2359 = vadd.xlane.f32.xlu0 %v2358
        %v2360 = vpop.xlane.xlu0 %2359
        %v2361 = vsel %vm544, %v2349, 0.0
        %2362 = vadd.xlane.f32.xlu0 %v2361
        %v2363 = vpop.xlane.xlu0 %2362
        %v2364 = vsel %vm544, %v2350, 0.0
        %2365 = vadd.xlane.f32.xlu0 %v2364
        %v2366 = vpop.xlane.xlu0 %2365
        %v2367 = vsel %vm544, %v2351, 0.0
        %2368 = vadd.xlane.f32.xlu0 %v2367
        %v2369 = vpop.xlane.xlu0 %2368
        %v2370 = vrcp.pop 32.0
        %v2371 = vmul.f32 %v2354, %v2370
        %v2372 = vmul.f32 %v2357, %v2370
        %v2373 = vmul.f32 %v2360, %v2370
        %v2374 = vmul.f32 %v2363, %v2370
        %v2375 = vmul.f32 %v2366, %v2370
        %v2376 = vmul.f32 %v2369, %v2370
        %v2377 = vsub.f32 %v2346, %v2371
        %v2378 = vsub.f32 %v2347, %v2372
        %v2379 = vsub.f32 %v2348, %v2373
        %v2380 = vsub.f32 %v2349, %v2374
        %v2381 = vsub.f32 %v2350, %v2375
        %v2382 = vsub.f32 %v2351, %v2376
        %v2383 = vmul.f32 %v2377, %v2377
        %v2384 = vmul.f32 %v2378, %v2378
        %v2385 = vmul.f32 %v2379, %v2379
        %v2386 = vmul.f32 %v2380, %v2380
        %v2387 = vmul.f32 %v2381, %v2381
        %v2388 = vmul.f32 %v2382, %v2382
        %v2389 = vsel %vm544, %v2383, 0.0
        %2390 = vadd.xlane.f32.xlu0 %v2389
        %v2391 = vpop.xlane.xlu0 %2390
        %v2392 = vsel %vm544, %v2384, 0.0
        %2393 = vadd.xlane.f32.xlu0 %v2392
        %v2394 = vpop.xlane.xlu0 %2393
        %v2395 = vsel %vm544, %v2385, 0.0
        %2396 = vadd.xlane.f32.xlu0 %v2395
        %v2397 = vpop.xlane.xlu0 %2396
        %v2398 = vsel %vm544, %v2386, 0.0
        %2399 = vadd.xlane.f32.xlu0 %v2398
        %v2400 = vpop.xlane.xlu0 %2399
        %v2401 = vsel %vm544, %v2387, 0.0
        %2402 = vadd.xlane.f32.xlu0 %v2401
        %v2403 = vpop.xlane.xlu0 %2402
        %v2404 = vsel %vm544, %v2388, 0.0
        %2405 = vadd.xlane.f32.xlu0 %v2404
        %v2406 = vpop.xlane.xlu0 %2405
        %v2407 = vmul.f32 %v2391, %v2370
        %v2408 = vmul.f32 %v2394, %v2370
        %v2409 = vmul.f32 %v2397, %v2370
        %v2410 = vmul.f32 %v2400, %v2370
        %v2411 = vmul.f32 %v2403, %v2370
        %v2412 = vmul.f32 %v2406, %v2370
        %v2413 = vadd.f32 %v2407, 1e-05
        %v2414 = vadd.f32 %v2408, 1e-05
        %v2415 = vadd.f32 %v2409, 1e-05
        %v2416 = vadd.f32 %v2410, 1e-05
        %v2417 = vadd.f32 %v2411, 1e-05
        %v2418 = vadd.f32 %v2412, 1e-05
        %v2419 = vrsqrt.pop %v2413
        %v2420 = vrsqrt.pop %v2414
        %v2421 = vrsqrt.pop %v2415
        %v2422 = vrsqrt.pop %v2416
        %v2423 = vrsqrt.pop %v2417
        %v2424 = vrsqrt.pop %v2418
        %v2425 = vmul.f32 %v2377, %v2419
        %v2426 = vmul.f32 %v2378, %v2420
        %v2427 = vmul.f32 %v2379, %v2421
        %v2428 = vmul.f32 %v2380, %v2422
        %v2429 = vmul.f32 %v2381, %v2423
        %v2430 = vmul.f32 %v2382, %v2424
        %v2431 = vlaneseq
        %v2432 = vshrl.u32 %v2431, 7
        %v2433 = vsub.s32 7, %v2432
        %v2434 = vrot.slane %v534, %v2433
        %v2435 = vmul.f32 %v2425, %v2434
        %v2436 = vmul.f32 %v2426, %v2434
        %v2437 = vmul.f32 %v2427, %v2434
        %v2438 = vmul.f32 %v2428, %v2434
        %v2439 = vmul.f32 %v2429, %v2434
        %v2440 = vmul.f32 %v2430, %v2434
        %v2441 = vlaneseq
        %v2442 = vshrl.u32 %v2441, 7
        %v2443 = vsub.s32 0, %v2442
        %v2444 = vrot.slane %v535, %v2443
        %v2445 = vadd.f32 %v2435, %v2444
        %v2446 = vadd.f32 %v2436, %v2444
        %v2447 = vadd.f32 %v2437, %v2444
        %v2448 = vadd.f32 %v2438, %v2444
        %v2449 = vadd.f32 %v2439, %v2444
        %v2450 = vadd.f32 %v2440, %v2444
        %v2451 = vld [vmem:[#allocation14] sm:$0xff]
        %v2452 = vld [vmem:[#allocation14 + $0x8] sm:$0xff]
        %v2453 = vld [vmem:[#allocation14 + $0x10] sm:$0xff]
        %v2454 = vld [vmem:[#allocation14 + $0x18] sm:$0xff]
        %v2455 = vlaneseq
        %v2456 = vshrl.u32 %v2455, 7
        %v2457 = vsub.s32 5, %v2456
        %v2458 = vrot.slane %v534, %v2457
        %v2460 = vsel %vm544, %v2445, 0
        %v2463 = vsel %vm544, %v2446, 0
        %v2466 = vsel %vm544, %v2447, 0
        %v2469 = vsel %vm544, %v2448, 0
        %v2472 = vsel %vm544, %v2449, 0
        %v2475 = vsel %vm544, %v2450, 0
        %2477 = vmatprep.subr.mxu0 0.0
        %2478 = vmatpush1.msra.mxu0 %v2451
        %2479 = vmatprep.subr.mxu0 0.0
        %2480 = vmatpush1.msra.mxu0 %v2452
        %2481 = vmatprep.subr.mxu0 0.0
        %2482 = vmatpush1.msra.mxu0 %v2453
        %2483 = vmatprep.subr.mxu0 0.0
        %2484 = vmatpush1.msra.mxu0 %v2454
        %2485 = vmatprep.subr.mxu0 0.0
        %2486 = vmatpush1.msra.mxu0 0.0
        %2487 = vmatprep.subr.mxu0 0.0
        %2488 = vmatpush1.msra.mxu0 0.0
        %2489 = vmatprep.subr.mxu0 0.0
        %2490 = vmatpush1.msra.mxu0 0.0
        %2491 = vmatprep.subr.mxu0 0.0
        %2492 = vmatpush1.msra.mxu0 0.0
        %2493 = vmatprep.subr.mxu0 0.0
        %2494 = vmatpush1.msra.mxu0 0.0
        %2495 = vmatprep.subr.mxu0 0.0
        %2496 = vmatpush1.msra.mxu0 0.0
        %2497 = vmatprep.subr.mxu0 0.0
        %2498 = vmatpush1.msra.mxu0 0.0
        %2499 = vmatprep.subr.mxu0 0.0
        %2500 = vmatpush1.msra.mxu0 0.0
        %2501 = vmatprep.subr.mxu0 0.0
        %2502 = vmatpush1.msra.mxu0 0.0
        %2503 = vmatprep.subr.mxu0 0.0
        %2504 = vmatpush1.msra.mxu0 0.0
        %2505 = vmatprep.subr.mxu0 0.0
        %2506 = vmatpush1.msra.mxu0 0.0
        %2507 = vmatprep.subr.mxu0 0.0
        %2508 = vmatpush1.msra.mxu0 0.0
        %2509 = vmatprep.subr.mxu0 0.0
        %2510 = vmatpush1.msra.mxu0 0.0
        %2511 = vmatprep.subr.mxu0 0.0
        %2512 = vmatpush1.msra.mxu0 0.0
        %2513 = vmatprep.subr.mxu0 0.0
        %2514 = vmatpush1.msra.mxu0 0.0
        %2515 = vmatprep.subr.mxu0 0.0
        %2516 = vmatpush1.msra.mxu0 0.0
        %2517 = vmatprep.subr.mxu0 0.0
        %2518 = vmatpush1.msra.mxu0 0.0
        %2519 = vmatprep.subr.mxu0 0.0
        %2520 = vmatpush1.msra.mxu0 0.0
        %2521 = vmatprep.subr.mxu0 0.0
        %2522 = vmatpush1.msra.mxu0 0.0
        %2523 = vmatprep.subr.mxu0 0.0
        %2524 = vmatpush1.msra.mxu0 0.0
        %2525 = vmatprep.subr.mxu0 0.0
        %2526 = vmatpush1.msra.mxu0 0.0
        %2527 = vmatprep.subr.mxu0 0.0
        %2528 = vmatpush1.msra.mxu0 0.0
        %2529 = vmatprep.subr.mxu0 0.0
        %2530 = vmatpush1.msra.mxu0 0.0
        %2531 = vmatprep.subr.mxu0 0.0
        %2532 = vmatpush1.msra.mxu0 0.0
        %2533 = vmatprep.subr.mxu0 0.0
        %2534 = vmatpush1.msra.mxu0 0.0
        %2535 = vmatprep.subr.mxu0 0.0
        %2536 = vmatpush1.msra.mxu0 0.0
        %2537 = vmatprep.subr.mxu0 0.0
        %2538 = vmatpush1.msra.mxu0 0.0
        %2539 = vmatprep.subr.mxu0 0.0
        %2540 = vmatpush1.msra.mxu0 0.0
        %2541 = vmatprep.mubr.f32.mxu0 0.0
        %2542 = vmatmul.mubr.f32.gmra.mrb[0].mxu0 %v2460
        %v2543 = vpop.f32.mrb[0].mxu0
        %v2544 = vadd.f32 %v2458, %v2543
        %v2545 = vpop.f32.mrb[0].mxu0
        %2546 = vmatprep.mubr.f32.mxu0 0.0
        %2547 = vmatmul.mubr.f32.gmra.mrb[0].mxu0 %v2463
        %v2548 = vpop.f32.mrb[0].mxu0
        %v2549 = vadd.f32 %v2458, %v2548
        %v2550 = vpop.f32.mrb[0].mxu0
        %2551 = vmatprep.mubr.f32.mxu0 0.0
        %2552 = vmatmul.mubr.f32.gmra.mrb[0].mxu0 %v2466
        %v2553 = vpop.f32.mrb[0].mxu0
        %v2554 = vadd.f32 %v2458, %v2553
        %v2555 = vpop.f32.mrb[0].mxu0
        %2556 = vmatprep.mubr.f32.mxu0 0.0
        %2557 = vmatmul.mubr.f32.gmra.mrb[0].mxu0 %v2469
        %v2558 = vpop.f32.mrb[0].mxu0
        %v2559 = vadd.f32 %v2458, %v2558
        %v2560 = vpop.f32.mrb[0].mxu0
        %2561 = vmatprep.mubr.f32.mxu0 0.0
        %2562 = vmatmul.mubr.f32.gmra.mrb[0].mxu0 %v2472
        %v2563 = vpop.f32.mrb[0].mxu0
        %v2564 = vadd.f32 %v2458, %v2563
        %v2565 = vpop.f32.mrb[0].mxu0
        %2566 = vmatprep.mubr.f32.mxu0 0.0
        %2567 = vmatmul.mubr.f32.gmra.mrb[0].mxu0 %v2475
        %v2568 = vpop.f32.mrb[0].mxu0
        %v2569 = vadd.f32 %v2458, %v2568
        %v2570 = vpop.f32.mrb[0].mxu0
        %2571 = vdwg.mxu0
        %v2572 = vmax.f32 %v2544, 0.0
        %v2573 = vmax.f32 %v2549, 0.0
        %v2574 = vmax.f32 %v2554, 0.0
        %v2575 = vmax.f32 %v2559, 0.0
        %v2576 = vmax.f32 %v2564, 0.0
        %v2577 = vmax.f32 %v2569, 0.0
        %v2578 = vld [vmem:[#allocation16] sm:$0xff]
        %v2579 = vld [vmem:[#allocation16 + $0x8] sm:$0xff]
        %v2580 = vld [vmem:[#allocation16 + $0x10] sm:$0xff]
        %v2581 = vld [vmem:[#allocation16 + $0x18] sm:$0xff]
        %v2582 = vlaneseq
        %v2583 = vshrl.u32 %v2582, 7
        %v2584 = vsub.s32 6, %v2583
        %v2585 = vrot.slane %v534, %v2584
        %v2587 = vsel %vm544, %v2572, 0
        %v2590 = vsel %vm544, %v2573, 0
        %v2593 = vsel %vm544, %v2574, 0
        %v2596 = vsel %vm544, %v2575, 0
        %v2599 = vsel %vm544, %v2576, 0
        %v2602 = vsel %vm544, %v2577, 0
        %2604 = vmatprep.subr.mxu0 0.0
        %2605 = vmatpush1.msra.mxu0 %v2578
        %2606 = vmatprep.subr.mxu0 0.0
        %2607 = vmatpush1.msra.mxu0 %v2579
        %2608 = vmatprep.subr.mxu0 0.0
        %2609 = vmatpush1.msra.mxu0 %v2580
        %2610 = vmatprep.subr.mxu0 0.0
        %2611 = vmatpush1.msra.mxu0 %v2581
        %2612 = vmatprep.subr.mxu0 0.0
        %2613 = vmatpush1.msra.mxu0 0.0
        %2614 = vmatprep.subr.mxu0 0.0
        %2615 = vmatpush1.msra.mxu0 0.0
        %2616 = vmatprep.subr.mxu0 0.0
        %2617 = vmatpush1.msra.mxu0 0.0
        %2618 = vmatprep.subr.mxu0 0.0
        %2619 = vmatpush1.msra.mxu0 0.0
        %2620 = vmatprep.subr.mxu0 0.0
        %2621 = vmatpush1.msra.mxu0 0.0
        %2622 = vmatprep.subr.mxu0 0.0
        %2623 = vmatpush1.msra.mxu0 0.0
        %2624 = vmatprep.subr.mxu0 0.0
        %2625 = vmatpush1.msra.mxu0 0.0
        %2626 = vmatprep.subr.mxu0 0.0
        %2627 = vmatpush1.msra.mxu0 0.0
        %2628 = vmatprep.subr.mxu0 0.0
        %2629 = vmatpush1.msra.mxu0 0.0
        %2630 = vmatprep.subr.mxu0 0.0
        %2631 = vmatpush1.msra.mxu0 0.0
        %2632 = vmatprep.subr.mxu0 0.0
        %2633 = vmatpush1.msra.mxu0 0.0
        %2634 = vmatprep.subr.mxu0 0.0
        %2635 = vmatpush1.msra.mxu0 0.0
        %2636 = vmatprep.subr.mxu0 0.0
        %2637 = vmatpush1.msra.mxu0 0.0
        %2638 = vmatprep.subr.mxu0 0.0
        %2639 = vmatpush1.msra.mxu0 0.0
        %2640 = vmatprep.subr.mxu0 0.0
        %2641 = vmatpush1.msra.mxu0 0.0
        %2642 = vmatprep.subr.mxu0 0.0
        %2643 = vmatpush1.msra.mxu0 0.0
        %2644 = vmatprep.subr.mxu0 0.0
        %2645 = vmatpush1.msra.mxu0 0.0
        %2646 = vmatprep.subr.mxu0 0.0
        %2647 = vmatpush1.msra.mxu0 0.0
        %2648 = vmatprep.subr.mxu0 0.0
        %2649 = vmatpush1.msra.mxu0 0.0
        %2650 = vmatprep.subr.mxu0 0.0
        %2651 = vmatpush1.msra.mxu0 0.0
        %2652 = vmatprep.subr.mxu0 0.0
        %2653 = vmatpush1.msra.mxu0 0.0
        %2654 = vmatprep.subr.mxu0 0.0
        %2655 = vmatpush1.msra.mxu0 0.0
        %2656 = vmatprep.subr.mxu0 0.0
        %2657 = vmatpush1.msra.mxu0 0.0
        %2658 = vmatprep.subr.mxu0 0.0
        %2659 = vmatpush1.msra.mxu0 0.0
        %2660 = vmatprep.subr.mxu0 0.0
        %2661 = vmatpush1.msra.mxu0 0.0
        %2662 = vmatprep.subr.mxu0 0.0
        %2663 = vmatpush1.msra.mxu0 0.0
        %2664 = vmatprep.subr.mxu0 0.0
        %2665 = vmatpush1.msra.mxu0 0.0
        %2666 = vmatprep.subr.mxu0 0.0
        %2667 = vmatpush1.msra.mxu0 0.0
        %2668 = vmatprep.mubr.f32.mxu0 0.0
        %2669 = vmatmul.mubr.f32.gmra.mrb[0].mxu0 %v2587
        %v2670 = vpop.f32.mrb[0].mxu0
        %v2671 = vadd.f32 %v2585, %v2670
        %v2672 = vpop.f32.mrb[0].mxu0
        %2673 = vmatprep.mubr.f32.mxu0 0.0
        %2674 = vmatmul.mubr.f32.gmra.mrb[0].mxu0 %v2590
        %v2675 = vpop.f32.mrb[0].mxu0
        %v2676 = vadd.f32 %v2585, %v2675
        %v2677 = vpop.f32.mrb[0].mxu0
        %2678 = vmatprep.mubr.f32.mxu0 0.0
        %2679 = vmatmul.mubr.f32.gmra.mrb[0].mxu0 %v2593
        %v2680 = vpop.f32.mrb[0].mxu0
        %v2681 = vadd.f32 %v2585, %v2680
        %v2682 = vpop.f32.mrb[0].mxu0
        %2683 = vmatprep.mubr.f32.mxu0 0.0
        %2684 = vmatmul.mubr.f32.gmra.mrb[0].mxu0 %v2596
        %v2685 = vpop.f32.mrb[0].mxu0
        %v2686 = vadd.f32 %v2585, %v2685
        %v2687 = vpop.f32.mrb[0].mxu0
        %2688 = vmatprep.mubr.f32.mxu0 0.0
        %2689 = vmatmul.mubr.f32.gmra.mrb[0].mxu0 %v2599
        %v2690 = vpop.f32.mrb[0].mxu0
        %v2691 = vadd.f32 %v2585, %v2690
        %v2692 = vpop.f32.mrb[0].mxu0
        %2693 = vmatprep.mubr.f32.mxu0 0.0
        %2694 = vmatmul.mubr.f32.gmra.mrb[0].mxu0 %v2602
        %v2695 = vpop.f32.mrb[0].mxu0
        %v2696 = vadd.f32 %v2585, %v2695
        %v2697 = vpop.f32.mrb[0].mxu0
        %2698 = vdwg.mxu0
        %v2699 = vadd.f32 %v2671, %v2445
        %v2700 = vadd.f32 %v2676, %v2446
        %v2701 = vadd.f32 %v2681, %v2447
        %v2702 = vadd.f32 %v2686, %v2448
        %v2703 = vadd.f32 %v2691, %v2449
        %v2704 = vadd.f32 %v2696, %v2450
        %v2705 = vsel %vm544, %v2699, 0.0
        %2706 = vadd.xlane.f32.xlu0 %v2705
        %v2707 = vpop.xlane.xlu0 %2706
        %v2708 = vsel %vm544, %v2700, 0.0
        %2709 = vadd.xlane.f32.xlu0 %v2708
        %v2710 = vpop.xlane.xlu0 %2709
        %v2711 = vsel %vm544, %v2701, 0.0
        %2712 = vadd.xlane.f32.xlu0 %v2711
        %v2713 = vpop.xlane.xlu0 %2712
        %v2714 = vsel %vm544, %v2702, 0.0
        %2715 = vadd.xlane.f32.xlu0 %v2714
        %v2716 = vpop.xlane.xlu0 %2715
        %v2717 = vsel %vm544, %v2703, 0.0
        %2718 = vadd.xlane.f32.xlu0 %v2717
        %v2719 = vpop.xlane.xlu0 %2718
        %v2720 = vsel %vm544, %v2704, 0.0
        %2721 = vadd.xlane.f32.xlu0 %v2720
        %v2722 = vpop.xlane.xlu0 %2721
        %v2723 = vmul.f32 %v2707, %v2370
        %v2724 = vmul.f32 %v2710, %v2370
        %v2725 = vmul.f32 %v2713, %v2370
        %v2726 = vmul.f32 %v2716, %v2370
        %v2727 = vmul.f32 %v2719, %v2370
        %v2728 = vmul.f32 %v2722, %v2370
        %v2729 = vsub.f32 %v2699, %v2723
        %v2730 = vsub.f32 %v2700, %v2724
        %v2731 = vsub.f32 %v2701, %v2725
        %v2732 = vsub.f32 %v2702, %v2726
        %v2733 = vsub.f32 %v2703, %v2727
        %v2734 = vsub.f32 %v2704, %v2728
        %v2735 = vmul.f32 %v2729, %v2729
        %v2736 = vmul.f32 %v2730, %v2730
        %v2737 = vmul.f32 %v2731, %v2731
        %v2738 = vmul.f32 %v2732, %v2732
        %v2739 = vmul.f32 %v2733, %v2733
        %v2740 = vmul.f32 %v2734, %v2734
        %v2741 = vsel %vm544, %v2735, 0.0
        %2742 = vadd.xlane.f32.xlu0 %v2741
        %v2743 = vpop.xlane.xlu0 %2742
        %v2744 = vsel %vm544, %v2736, 0.0
        %2745 = vadd.xlane.f32.xlu0 %v2744
        %v2746 = vpop.xlane.xlu0 %2745
        %v2747 = vsel %vm544, %v2737, 0.0
        %2748 = vadd.xlane.f32.xlu0 %v2747
        %v2749 = vpop.xlane.xlu0 %2748
        %v2750 = vsel %vm544, %v2738, 0.0
        %2751 = vadd.xlane.f32.xlu0 %v2750
        %v2752 = vpop.xlane.xlu0 %2751
        %v2753 = vsel %vm544, %v2739, 0.0
        %2754 = vadd.xlane.f32.xlu0 %v2753
        %v2755 = vpop.xlane.xlu0 %2754
        %v2756 = vsel %vm544, %v2740, 0.0
        %2757 = vadd.xlane.f32.xlu0 %v2756
        %v2758 = vpop.xlane.xlu0 %2757
        %v2759 = vmul.f32 %v2743, %v2370
        %v2760 = vmul.f32 %v2746, %v2370
        %v2761 = vmul.f32 %v2749, %v2370
        %v2762 = vmul.f32 %v2752, %v2370
        %v2763 = vmul.f32 %v2755, %v2370
        %v2764 = vmul.f32 %v2758, %v2370
        %v2765 = vadd.f32 %v2759, 1e-05
        %v2766 = vadd.f32 %v2760, 1e-05
        %v2767 = vadd.f32 %v2761, 1e-05
        %v2768 = vadd.f32 %v2762, 1e-05
        %v2769 = vadd.f32 %v2763, 1e-05
        %v2770 = vadd.f32 %v2764, 1e-05
        %v2771 = vrsqrt.pop %v2765
        %v2772 = vrsqrt.pop %v2766
        %v2773 = vrsqrt.pop %v2767
        %v2774 = vrsqrt.pop %v2768
        %v2775 = vrsqrt.pop %v2769
        %v2776 = vrsqrt.pop %v2770
        %v2777 = vmul.f32 %v2729, %v2771
        %v2778 = vmul.f32 %v2730, %v2772
        %v2779 = vmul.f32 %v2731, %v2773
        %v2780 = vmul.f32 %v2732, %v2774
        %v2781 = vmul.f32 %v2733, %v2775
        %v2782 = vmul.f32 %v2734, %v2776
        %v2783 = vlaneseq
        %v2784 = vshrl.u32 %v2783, 7
        %v2785 = vsub.s32 1, %v2784
        %v2786 = vrot.slane %v535, %v2785
        %v2787 = vmul.f32 %v2777, %v2786
        %v2788 = vmul.f32 %v2778, %v2786
        %v2789 = vmul.f32 %v2779, %v2786
        %v2790 = vmul.f32 %v2780, %v2786
        %v2791 = vmul.f32 %v2781, %v2786
        %v2792 = vmul.f32 %v2782, %v2786
        %v2793 = vlaneseq
        %v2794 = vshrl.u32 %v2793, 7
        %v2795 = vsub.s32 2, %v2794
        %v2796 = vrot.slane %v535, %v2795
        %v2797 = vadd.f32 %v2787, %v2796
        %v2798 = vadd.f32 %v2788, %v2796
        %v2799 = vadd.f32 %v2789, %v2796
        %v2800 = vadd.f32 %v2790, %v2796
        %v2801 = vadd.f32 %v2791, %v2796
        %v2802 = vadd.f32 %v2792, %v2796
        %v2803 = vlaneseq
        %v2804 = vshrl.u32 %v2803, 7
        %v2805 = vsub.s32 3, %v2804
        %v2806 = vrot.slane %v535, %v2805
        %v2807 = vmul.f32 %v2797, %v2806
        %v2808 = vmul.f32 %v2798, %v2806
        %v2809 = vmul.f32 %v2799, %v2806
        %v2810 = vmul.f32 %v2800, %v2806
        %v2811 = vmul.f32 %v2801, %v2806
        %v2812 = vmul.f32 %v2802, %v2806
        %v2813 = vsel %vm544, %v2807, 0.0
        %2814 = vadd.xlane.f32.xlu0 %v2813
        %v2815 = vpop.xlane.xlu0 %2814
        %v2816 = vsel %vm544, %v2808, 0.0
        %2817 = vadd.xlane.f32.xlu0 %v2816
        %v2818 = vpop.xlane.xlu0 %2817
        %v2819 = vsel %vm544, %v2809, 0.0
        %2820 = vadd.xlane.f32.xlu0 %v2819
        %v2821 = vpop.xlane.xlu0 %2820
        %v2822 = vsel %vm544, %v2810, 0.0
        %2823 = vadd.xlane.f32.xlu0 %v2822
        %v2824 = vpop.xlane.xlu0 %2823
        %v2825 = vsel %vm544, %v2811, 0.0
        %2826 = vadd.xlane.f32.xlu0 %v2825
        %v2827 = vpop.xlane.xlu0 %2826
        %v2828 = vsel %vm544, %v2812, 0.0
        %2829 = vadd.xlane.f32.xlu0 %v2828
        %v2830 = vpop.xlane.xlu0 %2829
        %2832 = vset.pattern.permute.xlu0 0
        %2833 = vperm.xlu0 %2832, %v535
        %v2834 = vpop.permute.xlu0 %2833
        %v2835 = vlaneseq
        %v2836 = vshrl.u32 %v2835, 7
        %v2837 = vsub.s32 4, %v2836
        %v2838 = vrot.slane %v2834, %v2837
        %v2840 = vadd.f32 %v2815, %v2838
        %v2841 = vadd.f32 %v2818, %v2838
        %v2842 = vadd.f32 %v2821, %v2838
        %v2843 = vadd.f32 %v2824, %v2838
        %v2844 = vadd.f32 %v2827, %v2838
        %v2845 = vadd.f32 %v2830, %v2838
        %v2846 = vxor.u32 %v2840, 2147483648
        %v2847 = vxor.u32 %v2841, 2147483648
        %v2848 = vxor.u32 %v2842, 2147483648
        %v2849 = vxor.u32 %v2843, 2147483648
        %v2850 = vxor.u32 %v2844, 2147483648
        %v2851 = vxor.u32 %v2845, 2147483648
        %v2852 = vmul.f32 %v2846, 1.442695
        %v2853 = vpow.pop %v2852
        %v2854 = vmul.f32 %v2847, 1.442695
        %v2855 = vpow.pop %v2854
        %v2856 = vmul.f32 %v2848, 1.442695
        %v2857 = vpow.pop %v2856
        %v2858 = vmul.f32 %v2849, 1.442695
        %v2859 = vpow.pop %v2858
        %v2860 = vmul.f32 %v2850, 1.442695
        %v2861 = vpow.pop %v2860
        %v2862 = vmul.f32 %v2851, 1.442695
        %v2863 = vpow.pop %v2862
        %v2864 = vadd.f32 %v2853, 1.0
        %v2865 = vadd.f32 %v2855, 1.0
        %v2866 = vadd.f32 %v2857, 1.0
        %v2867 = vadd.f32 %v2859, 1.0
        %v2868 = vadd.f32 %v2861, 1.0
        %v2869 = vadd.f32 %v2863, 1.0
        %v2870 = vrcp.pop %v2864
        %v2871 = vmul.f32 1.0, %v2870
        %v2872 = vrcp.pop %v2865
        %v2873 = vmul.f32 1.0, %v2872
        %v2874 = vrcp.pop %v2866
        %v2875 = vmul.f32 1.0, %v2874
        %v2876 = vrcp.pop %v2867
        %v2877 = vmul.f32 1.0, %v2876
        %v2878 = vrcp.pop %v2868
        %v2879 = vmul.f32 1.0, %v2878
        %v2880 = vrcp.pop %v2869
        %v2881 = vmul.f32 1.0, %v2880
        %2888 = vset.pattern.permute.xlu0 0
        %2889 = vperm.xlu0 %2888, %v2871
        %v2890 = vpop.permute.xlu0 %2889
        %2891 = vset.pattern.permute.xlu0 0
        %2892 = vperm.xlu0 %2891, %v2873
        %v2893 = vpop.permute.xlu0 %2892
        %2894 = vset.pattern.permute.xlu0 0
        %2895 = vperm.xlu0 %2894, %v2875
        %v2896 = vpop.permute.xlu0 %2895
        %2897 = vset.pattern.permute.xlu0 0
        %2898 = vperm.xlu0 %2897, %v2877
        %v2899 = vpop.permute.xlu0 %2898
        %2900 = vset.pattern.permute.xlu0 0
        %2901 = vperm.xlu0 %2900, %v2879
        %v2902 = vpop.permute.xlu0 %2901
        %2903 = vset.pattern.permute.xlu0 0
        %2904 = vperm.xlu0 %2903, %v2881
        %v2905 = vpop.permute.xlu0 %2904
        %v2906 = vlaneseq
        %v2907 = vshrl.u32 %v2906, 7
        %v2908 = vsub.s32 %v1013, %v2907
        %v2909 = vrot.slane %v2890, %v2908
        %v2910 = vadd.s32 %v1013, 4294967288
        %v2911 = vlaneseq
        %v2912 = vshrl.u32 %v2911, 7
        %v2913 = vsub.s32 %v2910, %v2912
        %v2914 = vrot.slane %v2893, %v2913
        %vm2915 = vcmask 130112
        %v2916 = vsel %vm2915, %v2914, %v2909
        %v2917 = vadd.s32 %v1013, 4294967280
        %v2918 = vlaneseq
        %v2919 = vshrl.u32 %v2918, 7
        %v2920 = vsub.s32 %v2917, %v2919
        %v2921 = vrot.slane %v2896, %v2920
        %vm2922 = vcmask 195712
        %v2923 = vsel %vm2922, %v2921, %v2916
        %v2924 = vadd.s32 %v1013, 4294967272
        %v2925 = vlaneseq
        %v2926 = vshrl.u32 %v2925, 7
        %v2927 = vsub.s32 %v2924, %v2926
        %v2928 = vrot.slane %v2899, %v2927
        %vm2929 = vcmask 261312
        %v2930 = vsel %vm2929, %v2928, %v2923
        %v2931 = vadd.s32 %v1013, 4294967264
        %v2932 = vlaneseq
        %v2933 = vshrl.u32 %v2932, 7
        %v2934 = vsub.s32 %v2931, %v2933
        %v2935 = vrot.slane %v2902, %v2934
        %vm2936 = vcmask 326912
        %v2937 = vsel %vm2936, %v2935, %v2930
        %v2938 = vadd.s32 %v1013, 4294967256
        %v2939 = vlaneseq
        %v2940 = vshrl.u32 %v2939, 7
        %v2941 = vsub.s32 %v2938, %v2940
        %v2942 = vrot.slane %v2905, %v2941
        %vm2943 = vcmask 392512
        %v2944 = vsel %vm2943, %v2942, %v2937
        %vm2946 = vcmask 385024
        %2947 = vst.msk [vmem:[%s519] sm:$0x1] %vm2946, %v2944
        %s2948 = sand.u32 %s261, 1
        %s2949 = scalar_lea.sflag [#allocation4], %s2948
        %s2950 = sand.u32 %s261, 1
        %s2951 = scalar_lea.vmem [#allocation17], %s2950
        // Predicated region
        $region97: #{tpu_custom_call.1} parent=59 // pred_check
          %p2952 = pneg %p271
        $region98: #{tpu_custom_call.1} parent=59 // pred_check_branch
          %2954 = sbr.rel (%p2952) target = $region100
        $region99: #{tpu_custom_call.1} parent=59 // pred_region
          %s2956 = ssub.s32 16, 16
          %2957 = vsyncadd %s2949, %s2956
          %s2958 = smul.addr %s33, 16
          %s2959 = scalar_lea.hbm %s10, %s2958
          %s2961 = sshll.u32 %s2951, 4
          %s2962 = int_to_ptr.vmem [resolvable:$true] %s2961
          %2964 = dma.vmem_to_hbm [thread:$0]  %s2962, 16, %s2959, %s2949
        $region100: #{tpu_custom_call.1} parent=59 // pred_fallthru
          _
      $region60: #{tpu_custom_call.1} parent=5 // pred_fallthru
        _
      %p2965 = scmp.le.s32.totalorder 2, %s28
      // Predicated region
      $region101: #{tpu_custom_call.1} parent=5 // pred_check
        %p2966 = pneg %p2965
      $region102: #{tpu_custom_call.1} parent=5 // pred_check_branch
        %2968 = sbr.rel (%p2966) target = $region104
      $region103: #{tpu_custom_call.1} parent=5 // pred_region
        %s2969 = ssub.s32 %s28, 2
        // Predicated region
        $region105: #{tpu_custom_call.1} parent=103 // pred_check
          %p2970 = pneg %p277
        $region106: #{tpu_custom_call.1} parent=103 // pred_check_branch
          %2972 = sbr.rel (%p2970) target = $region108
        $region107: #{tpu_custom_call.1} parent=103 // pred_region
          %s2973 = sand.u32 %s262, 1
          %s2974 = scalar_lea.sflag [#allocation4], %s2973
          %s2975 = sand.u32 %s262, 1
          %s2976 = scalar_lea.vmem [#allocation17], %s2975
          %2977 = dma.done %s2974, 16
        $region108: #{tpu_custom_call.1} parent=103 // pred_fallthru
          _
      $region104: #{tpu_custom_call.1} parent=5 // pred_fallthru
        _
    $region6: #{tpu_custom_call.1} parent=1 // loop_footer
      %s32 = sadd.s32 1, %s28
    $region7: #{tpu_custom_call.1} parent=1 // loop_footer_branch
      %27 = sbr.rel target = $region3
    $region8: #{tpu_custom_call.1} parent=1 // loop_exit
      _
    %2978 = vsyncpa [#allocation3], 1
    %s2979 = scalar_lea.sflag [#allocation3], 1
    %2980 = vsyncpa %s2979, 1
    %2981 = vsyncpa [#allocation6], 1
    %s2982 = scalar_lea.sflag [#allocation6], 1
    %2983 = vsyncpa %s2982, 1
    %2984 = vsyncpa [#allocation9], 1
    %2985 = vsyncpa [#allocation12], 1
    %2986 = vsyncpa [#allocation15], 1
    %2987 = vsyncpa [#allocation4], 1
    %s2988 = scalar_lea.sflag [#allocation4], 1
    %2989 = vsyncpa %s2988, 1

</llo_original>
